<compile_context>
chip_gen: v7x
topology: tpu7x:2x2x1
jax: 0.10.0
libtpu: 0.0.40
codegen_flags: <defaults>
</compile_context>

<pallas_src>
import functools

import jax
import jax.numpy as jnp
from jax import lax
from jax.experimental import pallas as pl
from jax.experimental.pallas import tpu as pltpu

EPS = 1e-5


def _vmem_limit_bytes():
    """Generation-aware scoped-VMEM limit: ~3/4 of physical VMEM, capped at 100 MiB.

    v5e/v6e (128 MiB physical) -> 96 MiB; v7x (64 MiB physical) -> 48 MiB.
    """
    cap = 128 * 1024 * 1024
    try:
        cap = int(pltpu.get_tpu_info().vmem_capacity_bytes)
    except Exception:  # older jax / query unavailable -> conservative default
        pass
    return int(min((cap * 3) // 4, 100 * 1024 * 1024))


def _row_tile(H, W):
    """Row tile TH for the 1x1 passes.

    Needs TH | H, at least 2 tiles (dual-TC balance + real pipelining) and
    TH*W a multiple of 128 so the channel-major (C, TH*W) blocks stay
    lane-aligned.  Falls back to whole images otherwise.
    """
    for th in (64, 32, 16, 8):
        if H % th == 0 and H // th >= 2 and (th * W) % 128 == 0:
            return th
    return H


# -----------------------------------------------------------------------------
# kernels
# -----------------------------------------------------------------------------
def _stats(y):
    """Per-channel (sum, sum_sq) of an (M, C) f32 matrix -> (2, C)."""
    s0 = jnp.sum(y, axis=0, keepdims=True)
    s1 = jnp.sum(y * y, axis=0, keepdims=True)
    return jnp.concatenate([s0, s1], axis=0)


def _conv1x1_in_kernel(x_ref, w_ref, y_ref, st_ref, *, cdt):
    """Pass 1: channel-major input tile -> y1 = x^T @ w1 (NHWC-flat) + stats.

    x_ref : (1, Cin, S)  channel-major rows (S = TH*W)   -- NCHW fold-in
    w_ref : (Cin, Cout)
    y_ref : (1, S, Cout) stored in store_dtype
    st_ref: (1, 1, 2, Cout) f32 partial (sum, sum_sq)
    """
    _, cin, s = x_ref.shape
    xt = jnp.transpose(x_ref[...].reshape(cin, s))          # (S, Cin), in-VMEM XLU transpose
    y = jnp.dot(xt.astype(cdt), w_ref[...], preferred_element_type=jnp.float32)
    y_ref[...] = y.reshape(y_ref.shape).astype(y_ref.dtype)
    st_ref[...] = _stats(y).reshape(st_ref.shape)


def _bn_relu_conv3x3_kernel(y_ref, w2_ref, sc_ref, bs_ref, o_ref, st_ref, pad_ref, *, cdt):
    """Pass 2: a = relu(bn1(y1)); y2 = conv3x3(a) (pad=1) via 9 window matmuls.

    y_ref  : (1, H*W, C) ; w2_ref: (3, 3, C, Cout)
    pad_ref: (H+2, W+2, C) VMEM scratch holding the zero-padded activation.
    """
    hp2, wp2, c = pad_ref.shape
    H, W = hp2 - 2, wp2 - 2
    a = jnp.maximum(
        y_ref[...].astype(jnp.float32).reshape(H * W, c) * sc_ref[...] + bs_ref[...],
        0.0).astype(cdt)

    # Build the zero-padded activation in the persistent scratch.  W is padded
    # in-register (one small concat); H is padded by zeroing the two border
    # rows and writing rows [1, H+1) -- stores only offset along the untiled
    # major dim.  Re-done every grid step so a "parallel" grid stays correct.
    zcol = jnp.zeros((H, 1, c), cdt)
    zrow = jnp.zeros((1, wp2, c), cdt)
    pad_ref[0:1, :, :] = zrow
    pad_ref[hp2 - 1:hp2, :, :] = zrow
    pad_ref[1:H + 1, :, :] = jnp.concatenate([zcol, a.reshape(H, W, c), zcol], axis=1)

    # 9 shifted matmuls reading static windows of the padded scratch; the first
    # tap seeds the accumulator (no zero-fill + add).
    acc = None
    for dy in range(3):
        for dx in range(3):
            tap = pad_ref[dy:dy + H, dx:dx + W, :].reshape(H * W, c)
            part = jnp.dot(tap, w2_ref[dy, dx], preferred_element_type=jnp.float32)
            acc = part if acc is None else acc + part
    o_ref[...] = acc.reshape(o_ref.shape).astype(o_ref.dtype)
    st_ref[...] = _stats(acc).reshape(st_ref.shape)


def _bn_relu_conv1x1_kernel(y_ref, w_ref, sc_ref, bs_ref, o_ref, st_ref, *, cdt):
    """Pass 3: a = relu(bn2(y2)); y3 = a @ w3 + per-tile stats (NHWC-flat tiles)."""
    _, s, c = y_ref.shape
    a = jnp.maximum(
        y_ref[...].astype(jnp.float32).reshape(s, c) * sc_ref[...] + bs_ref[...], 0.0)
    o = jnp.dot(a.astype(cdt), w_ref[...], preferred_element_type=jnp.float32)
    o_ref[...] = o.reshape(o_ref.shape).astype(o_ref.dtype)
    st_ref[...] = _stats(o).reshape(st_ref.shape)


def _bn_add_relu_kernel(y3_ref, x_ref, sc_ref, bs_ref, o_ref):
    """Pass 4 (identity shortcut): o = relu(bn3(y3) + x), written channel-major."""
    _, s, c = y3_ref.shape
    y = y3_ref[...].astype(jnp.float32).reshape(s, c) * sc_ref[...] + bs_ref[...]
    z = jnp.maximum(jnp.transpose(y) + x_ref[...].reshape(c, s), 0.0)     # (C, S)
    o_ref[...] = z.reshape(o_ref.shape)


def _bn_down_add_relu_kernel(y3_ref, x_ref, wd_ref, sc_ref, bs_ref, bd_ref, o_ref, *, cdt):
    """Pass 4 (projected shortcut): o = relu(bn3(y3) + (wd @ x + bd)), channel-major."""
    _, s, c = y3_ref.shape
    cin = x_ref.shape[1]
    y = y3_ref[...].astype(jnp.float32).reshape(s, c) * sc_ref[...] + bs_ref[...]
    x2 = x_ref[...].reshape(cin, s).astype(cdt)
    short = jnp.dot(wd_ref[...], x2, preferred_element_type=jnp.float32) + bd_ref[...]
    o_ref[...] = jnp.maximum(jnp.transpose(y) + short, 0.0).reshape(o_ref.shape)


# -----------------------------------------------------------------------------
# wrapper
# -----------------------------------------------------------------------------
def _fold_bn(partial_stats, count, gamma, beta):
    """Reduce per-tile (sum, sum_sq) -> folded per-channel scale/bias (1, C)."""
    c = partial_stats.shape[-1]
    s = jnp.sum(partial_stats.reshape(-1, 2, c), axis=0)       # (2, C)
    mean = s[0] / count
    var = jnp.maximum(s[1] / count - mean * mean, 0.0)         # biased var (training-mode BN)
    scale = gamma * lax.rsqrt(var + EPS)
    bias = beta - mean * scale
    return scale.reshape(1, -1), bias.reshape(1, -1)


def residual_block(x_nchw, params, *, compute_dtype=jnp.float32, store_dtype=None):
    """x_nchw: (N, Cin, H, W) f32 -> (N, Cout, H, W) f32.

    compute_dtype: matmul operand dtype (bf16 for the MXU path, f32 for exact checks).
    store_dtype:   dtype of the y1/y2/y3 inter-pass activations in HBM
                   (defaults to compute_dtype; bf16 halves inter-pass DMA traffic).
    """
    w1, b1, w2, b2, w3, b3, wd, bd, g1, be1, g2, be2, g3, be3 = params
    del b1, b2, b3                       # exactly cancelled by the following batch norms
    N, Cin, H, W = x_nchw.shape
    Cout = w1.shape[0]
    cdt = compute_dtype
    sdt = compute_dtype if store_dtype is None else store_dtype
    S_all = H * W
    count = N * S_all
    has_down = Cin != Cout

    TH = _row_tile(H, W)
    n_th = H // TH
    S = TH * W                           # spatial elements per row tile

    # Free (bitcast) layout view: channel-major input with spatial flattened.
    x_cm = x_nchw.reshape(N, Cin, S_all)

    # Channels-last / OI weight layouts (contraction dim adjacent), cast once for the MXU.
    w1_k = jnp.transpose(w1[:, :, 0, 0], (1, 0)).astype(cdt)   # (Cin, Cout)
    w2_k = jnp.transpose(w2, (2, 3, 1, 0)).astype(cdt)         # (ky, kx, Cout, Cout)
    w3_k = jnp.transpose(w3[:, :, 0, 0], (1, 0)).astype(cdt)   # (Cout, Cout)

    vmem_limit = _vmem_limit_bytes()
    cp_rows = pltpu.CompilerParams(dimension_semantics=("parallel", "parallel"),
                                   vmem_limit_bytes=vmem_limit)
    cp_img = pltpu.CompilerParams(dimension_semantics=("parallel",),
                                  vmem_limit_bytes=vmem_limit)

    grid_rows = (n_th, N)                # row-tile axis first: primary parallel dim

    def cm_spec(c):                      # channel-major (N, c, H*W) row tile
        return pl.BlockSpec((1, c, S), lambda h, n: (n, 0, h))

    def act_spec(c):                     # NHWC-flat (N, H*W, c) row tile
        return pl.BlockSpec((1, S, c), lambda h, n: (n, h, 0))

    def full_rows(shape):
        zeros = (0,) * len(shape)
        return pl.BlockSpec(shape, lambda h, n: zeros)

    st_rows_spec = pl.BlockSpec((1, 1, 2, Cout), lambda h, n: (n, h, 0, 0))
    st_rows_shape = jax.ShapeDtypeStruct((N, n_th, 2, Cout), jnp.float32)
    act_shape = jax.ShapeDtypeStruct((N, S_all, Cout), sdt)

    # ---- pass 1: conv1 (1x1), NCHW->NHWC folded in-kernel, + per-tile stats --
    y1, st1 = pl.pallas_call(
        functools.partial(_conv1x1_in_kernel, cdt=cdt),
        grid=grid_rows,
        in_specs=[cm_spec(Cin), full_rows(w1_k.shape)],
        out_specs=[act_spec(Cout), st_rows_spec],
        out_shape=(act_shape, st_rows_shape),
        compiler_params=cp_rows,
    )(x_cm, w1_k)
    sc1, bs1 = _fold_bn(st1, count, g1, be1)

    # ---- pass 2: bn1 + relu + conv2 (3x3, pad=1) + stats (whole image) -------
    # TODO(synk): row-tile pass 2 with a 1-row halo for very large images on v7x.
    img_spec = pl.BlockSpec((1, S_all, Cout), lambda n: (n, 0, 0))
    full_img = lambda shape: pl.BlockSpec(shape, lambda n: (0,) * len(shape))
    st_img_spec = pl.BlockSpec((1, 2, Cout), lambda n: (n, 0, 0))
    st_img_shape = jax.ShapeDtypeStruct((N, 2, Cout), jnp.float32)
    y2, st2 = pl.pallas_call(
        functools.partial(_bn_relu_conv3x3_kernel, cdt=cdt),
        grid=(N,),
        in_specs=[img_spec, full_img(w2_k.shape),
                  full_img((1, Cout)), full_img((1, Cout))],
        out_specs=[img_spec, st_img_spec],
        out_shape=(act_shape, st_img_shape),
        scratch_shapes=[pltpu.VMEM((H + 2, W + 2, Cout), cdt)],
        compiler_params=cp_img,
    )(y1, w2_k, sc1, bs1)
    sc2, bs2 = _fold_bn(st2, count, g2, be2)

    # ---- pass 3: bn2 + relu + conv3 (1x1) + stats -----------------------------
    y3, st3 = pl.pallas_call(
        functools.partial(_bn_relu_conv1x1_kernel, cdt=cdt),
        grid=grid_rows,
        in_specs=[act_spec(Cout), full_rows(w3_k.shape),
                  full_rows((1, Cout)), full_rows((1, Cout))],
        out_specs=[act_spec(Cout), st_rows_spec],
        out_shape=(act_shape, st_rows_shape),
        compiler_params=cp_rows,
    )(y2, w3_k, sc2, bs2)
    sc3, bs3 = _fold_bn(st3, count, g3, be3)

    # ---- pass 4: bn3 + shortcut + relu, written channel-major (NCHW) ---------
    out_shape_cm = jax.ShapeDtypeStruct((N, Cout, S_all), jnp.float32)
    if has_down:
        wd_k = wd[:, :, 0, 0].astype(cdt)                      # (Cout, Cin), OI
        bd_k = bd.reshape(Cout, 1).astype(jnp.float32)
        out_cm = pl.pallas_call(
            functools.partial(_bn_down_add_relu_kernel, cdt=cdt),
            grid=grid_rows,
            in_specs=[act_spec(Cout), cm_spec(Cin), full_rows(wd_k.shape),
                      full_rows((1, Cout)), full_rows((1, Cout)), full_rows((Cout, 1))],
            out_specs=cm_spec(Cout),
            out_shape=out_shape_cm,
            compiler_params=cp_rows,
        )(y3, x_cm, wd_k, sc3, bs3, bd_k)
    else:
        out_cm = pl.pallas_call(
            _bn_add_relu_kernel,
            grid=grid_rows,
            in_specs=[act_spec(Cout), cm_spec(Cout),
                      full_rows((1, Cout)), full_rows((1, Cout))],
            out_specs=cm_spec(Cout),
            out_shape=out_shape_cm,
            compiler_params=cp_rows,
        )(y3, x_cm, sc3, bs3)

    return out_cm.reshape(N, Cout, H, W)                       # free bitcast back to NCHW


# ---------------- pure-JAX reference (NCHW, mirrors the PyTorch module) --------
def _conv_nchw(x, w, b, pad):
    y = lax.conv_general_dilated(x, w, (1, 1), [(pad, pad), (pad, pad)],
                                 dimension_numbers=('NCHW', 'OIHW', 'NCHW'))
    return y + b[None, :, None, None]


def _bn_nchw(x, g, be):
    mean = x.mean(axis=(0, 2, 3), keepdims=True)
    var = ((x - mean) ** 2).mean(axis=(0, 2, 3), keepdims=True)
    return (x - mean) * lax.rsqrt(var + EPS) * g[None, :, None, None] + be[None, :, None, None]


def residual_block_ref(x, params):
    w1, b1, w2, b2, w3, b3, wd, bd, g1, be1, g2, be2, g3, be3 = params
    cin, cout = w1.shape[1], w1.shape[0]
    shortcut = x
    y = jax.nn.relu(_bn_nchw(_conv_nchw(x, w1, b1, 0), g1, be1))
    y = jax.nn.relu(_bn_nchw(_conv_nchw(y, w2, b2, 1), g2, be2))
    y = _bn_nchw(_conv_nchw(y, w3, b3, 0), g3, be3)
    if cin != cout:
        shortcut = _conv_nchw(shortcut, wd, bd, 0)
    return jax.nn.relu(y + shortcut)


if __name__ == "__main__":
    N, Cin, Cout, H, W = 2, 4, 8, 16, 16

    key = jax.random.PRNGKey(0)
    ks = jax.random.split(key, 16)
    f = jnp.float32

    x = jax.random.normal(ks[0], (N, Cin, H, W), f)

    w1 = jax.random.normal(ks[1], (Cout, Cin, 1, 1), f) * 0.3
    b1 = jax.random.normal(ks[2], (Cout,), f) * 0.1
    w2 = jax.random.normal(ks[3], (Cout, Cout, 3, 3), f) * 0.1
    b2 = jax.random.normal(ks[4], (Cout,), f) * 0.1
    w3 = jax.random.normal(ks[5], (Cout, Cout, 1, 1), f) * 0.3
    b3 = jax.random.normal(ks[6], (Cout,), f) * 0.1
    wd = jax.random.normal(ks[7], (Cout, Cin, 1, 1), f) * 0.3
    bd = jax.random.normal(ks[8], (Cout,), f) * 0.1
    g1 = 1.0 + 0.1 * jax.random.normal(ks[9], (Cout,), f)
    be1 = 0.05 * jax.random.normal(ks[10], (Cout,), f)
    g2 = 1.0 + 0.1 * jax.random.normal(ks[11], (Cout,), f)
    be2 = 0.05 * jax.random.normal(ks[12], (Cout,), f)
    g3 = 1.0 + 0.1 * jax.random.normal(ks[13], (Cout,), f)
    be3 = 0.05 * jax.random.normal(ks[14], (Cout,), f)

    params = (w1, b1, w2, b2, w3, b3, wd, bd, g1, be1, g2, be2, g3, be3)
    ref = residual_block_ref(x, params)

    # exact-semantics check (f32 matmuls, f32 inter-pass storage)
    out_f32 = jax.block_until_ready(
        jax.jit(functools.partial(residual_block, compute_dtype=jnp.float32))(x, params))
    assert out_f32.shape == (N, Cout, H, W), out_f32.shape
    if not jnp.allclose(out_f32, ref, rtol=1e-3, atol=1e-3):
        raise AssertionError("f32 Pallas kernel output does not match JAX reference")

    # bf16 MXU path with bf16 inter-pass storage (f32 accumulation / f32 BN stats)
    out_bf16 = jax.block_until_ready(
        jax.jit(functools.partial(residual_block,
                                  compute_dtype=jnp.bfloat16,
                                  store_dtype=jnp.bfloat16))(x, params))
    if not jnp.allclose(out_bf16, ref, rtol=1e-1, atol=1e-1):
        raise AssertionError("bf16 Pallas kernel output diverged from JAX reference")

    # identity-shortcut branch (in_channels == out_channels)
    x_id = jax.random.normal(ks[15], (N, Cout, H, W), f)
    w1_id = jax.random.normal(ks[1], (Cout, Cout, 1, 1), f) * 0.3
    params_id = (w1_id, b1, w2, b2, w3, b3, wd, bd, g1, be1, g2, be2, g3, be3)
    out_id = jax.block_until_ready(jax.jit(residual_block)(x_id, params_id))
    ref_id = residual_block_ref(x_id, params_id)
    if not jnp.allclose(out_id, ref_id, rtol=1e-3, atol=1e-3):
        raise AssertionError("identity-shortcut Pallas kernel does not match JAX reference")

    print("KERNEL_OK")
</pallas_src>

<mosaic_0001>
module attributes {stable_mosaic.version = 11 : i64} {
  func.func @_conv1x1_in_kernel(%arg0: i32, %arg1: i32, %arg2: memref<1x4x128xf32, #tpu.memory_space<vmem>>, %arg3: memref<4x8xf32, #tpu.memory_space<vmem>>, %arg4: memref<1x128x8xf32, #tpu.memory_space<vmem>>, %arg5: memref<1x1x2x8xf32, #tpu.memory_space<vmem>>) attributes {dimension_semantics = [#tpu.dimension_semantics<parallel>, #tpu.dimension_semantics<parallel>], iteration_bounds = array<i64: 2, 2>, scalar_prefetch = 0 : i64, scratch_operands = 0 : i64, tpu.core_type = #tpu.core_type<tc>, window_params = [{transform_indices = @transform_0, window_bounds = array<i64: 1, 4, 128>}, {pipeline_mode = #tpu.pipeline_mode<synchronous>, transform_indices = @transform_1, window_bounds = array<i64: 4, 8>}, {transform_indices = @transform_2, window_bounds = array<i64: 1, 128, 8>}, {transform_indices = @transform_3, window_bounds = array<i64: 1, 1, 2, 8>}]} {
    %c0 = arith.constant 0 : index
    %c0_0 = arith.constant 0 : index
    %c0_1 = arith.constant 0 : index
    %0 = vector.load %arg2[%c0, %c0_0, %c0_1] : memref<1x4x128xf32, #tpu.memory_space<vmem>>, vector<1x4x128xf32>
    %1 = vector.shape_cast %0 : vector<1x4x128xf32> to vector<4x128xf32>
    %2 = tpu.transpose %1, [1, 0] : vector<4x128xf32> -> vector<128x4xf32>
    %c0_2 = arith.constant 0 : index
    %c0_3 = arith.constant 0 : index
    %3 = vector.load %arg3[%c0_2, %c0_3] : memref<4x8xf32, #tpu.memory_space<vmem>>, vector<4x8xf32>
    %cst = arith.constant dense<0.000000e+00> : vector<128x8xf32>
    %4 = tpu.matmul %2, %3, %cst {dimension_numbers = #tpu.dot_dimension_numbers<[1], [0], [0], [1], [0, 0, 1, 1], [], []>} : vector<128x4xf32>, vector<4x8xf32>, vector<128x8xf32> -> vector<128x8xf32>
    %5 = vector.shape_cast %4 : vector<128x8xf32> to vector<1x128x8xf32>
    %c0_4 = arith.constant 0 : index
    %c0_5 = arith.constant 0 : index
    %c0_6 = arith.constant 0 : index
    %6 = vector.load %arg4[%c0_4, %c0_5, %c0_6] : memref<1x128x8xf32, #tpu.memory_space<vmem>>, vector<1x128x8xf32>
    tpu.vector_store %arg4[%c0_4, %c0_5, %c0_6], %5 {strides = array<i32>} : memref<1x128x8xf32, #tpu.memory_space<vmem>>, vector<1x128x8xf32>,
    %cst_7 = arith.constant dense<0.000000e+00> : vector<8xf32>
    %7 = vector.multi_reduction <add>, %4, %cst_7 [0] : vector<128x8xf32> to vector<8xf32>
    %8 = vector.shape_cast %7 : vector<8xf32> to vector<1x8xf32>
    %9 = arith.mulf %4, %4 : vector<128x8xf32>
    %cst_8 = arith.constant dense<0.000000e+00> : vector<8xf32>
    %10 = vector.multi_reduction <add>, %9, %cst_8 [0] : vector<128x8xf32> to vector<8xf32>
    %11 = vector.shape_cast %10 : vector<8xf32> to vector<1x8xf32>
    %12 = tpu.concatenate %8, %11 in 0 : vector<1x8xf32>, vector<1x8xf32> -> vector<2x8xf32>
    %13 = vector.shape_cast %12 : vector<2x8xf32> to vector<1x1x2x8xf32>
    %c0_9 = arith.constant 0 : index
    %c0_10 = arith.constant 0 : index
    %c0_11 = arith.constant 0 : index
    %c0_12 = arith.constant 0 : index
    %14 = vector.load %arg5[%c0_9, %c0_10, %c0_11, %c0_12] : memref<1x1x2x8xf32, #tpu.memory_space<vmem>>, vector<1x1x2x8xf32>
    tpu.vector_store %arg5[%c0_9, %c0_10, %c0_11, %c0_12], %13 {strides = array<i32>} : memref<1x1x2x8xf32, #tpu.memory_space<vmem>>, vector<1x1x2x8xf32>,
    return
  }
  func.func @transform_0(%arg0: i32, %arg1: i32) -> (i32, i32, i32) {
    %c0_i32 = arith.constant 0 : i32
    %c0_i32_0 = arith.constant 0 : i32
    return %arg1, %c0_i32, %arg0 : i32, i32, i32
  }
  func.func @transform_1(%arg0: i32, %arg1: i32) -> (i32, i32) {
    %c0_i32 = arith.constant 0 : i32
    %c0_i32_0 = arith.constant 0 : i32
    %c0_i32_1 = arith.constant 0 : i32
    return %c0_i32, %c0_i32_0 : i32, i32
  }
  func.func @transform_2(%arg0: i32, %arg1: i32) -> (i32, i32, i32) {
    %c0_i32 = arith.constant 0 : i32
    %c0_i32_0 = arith.constant 0 : i32
    return %arg1, %arg0, %c0_i32 : i32, i32, i32
  }
  func.func @transform_3(%arg0: i32, %arg1: i32) -> (i32, i32, i32, i32) {
    %c0_i32 = arith.constant 0 : i32
    %c0_i32_0 = arith.constant 0 : i32
    %c0_i32_1 = arith.constant 0 : i32
    return %arg1, %arg0, %c0_i32, %c0_i32_0 : i32, i32, i32, i32
  }
}

module attributes {stable_mosaic.version = 11 : i64} {
  func.func @_bn_relu_conv3x3_kernel(%arg0: i32, %arg1: memref<1x256x8xf32, #tpu.memory_space<vmem>>, %arg2: memref<3x3x8x8xf32, #tpu.memory_space<vmem>>, %arg3: memref<1x8xf32, #tpu.memory_space<vmem>>, %arg4: memref<1x8xf32, #tpu.memory_space<vmem>>, %arg5: memref<1x256x8xf32, #tpu.memory_space<vmem>>, %arg6: memref<1x2x8xf32, #tpu.memory_space<vmem>>, %arg7: memref<18x18x8xf32, #tpu.memory_space<vmem>>) attributes {dimension_semantics = [#tpu.dimension_semantics<parallel>], iteration_bounds = array<i64: 2>, scalar_prefetch = 0 : i64, scratch_operands = 1 : i64, tpu.core_type = #tpu.core_type<tc>, window_params = [{transform_indices = @transform_0, window_bounds = array<i64: 1, 256, 8>}, {pipeline_mode = #tpu.pipeline_mode<synchronous>, transform_indices = @transform_1, window_bounds = array<i64: 3, 3, 8, 8>}, {pipeline_mode = #tpu.pipeline_mode<synchronous>, transform_indices = @transform_2, window_bounds = array<i64: 1, 8>}, {pipeline_mode = #tpu.pipeline_mode<synchronous>, transform_indices = @transform_3, window_bounds = array<i64: 1, 8>}, {transform_indices = @transform_4, window_bounds = array<i64: 1, 256, 8>}, {transform_indices = @transform_5, window_bounds = array<i64: 1, 2, 8>}]} {
    %c0 = arith.constant 0 : index
    %c0_0 = arith.constant 0 : index
    %c0_1 = arith.constant 0 : index
    %0 = vector.load %arg1[%c0, %c0_0, %c0_1] : memref<1x256x8xf32, #tpu.memory_space<vmem>>, vector<1x256x8xf32>
    %1 = vector.shape_cast %0 : vector<1x256x8xf32> to vector<256x8xf32>
    %c0_2 = arith.constant 0 : index
    %c0_3 = arith.constant 0 : index
    %2 = vector.load %arg3[%c0_2, %c0_3] : memref<1x8xf32, #tpu.memory_space<vmem>>, vector<1x8xf32>
    %3 = vector.broadcast %2 : vector<1x8xf32> to vector<256x8xf32>
    %4 = arith.mulf %1, %3 : vector<256x8xf32>
    %c0_4 = arith.constant 0 : index
    %c0_5 = arith.constant 0 : index
    %5 = vector.load %arg4[%c0_4, %c0_5] : memref<1x8xf32, #tpu.memory_space<vmem>>, vector<1x8xf32>
    %6 = vector.broadcast %5 : vector<1x8xf32> to vector<256x8xf32>
    %7 = arith.addf %4, %6 : vector<256x8xf32>
    %cst = arith.constant 0.000000e+00 : f32
    %8 = vector.broadcast %cst : f32 to vector<256x8xf32>
    %9 = arith.maximumf %7, %8 : vector<256x8xf32>
    %cst_6 = arith.constant 0.000000e+00 : f32
    %10 = vector.broadcast %cst_6 : f32 to vector<16x1x8xf32>
    %cst_7 = arith.constant 0.000000e+00 : f32
    %11 = vector.broadcast %cst_7 : f32 to vector<1x18x8xf32>
    %c0_8 = arith.constant 0 : index
    %c0_9 = arith.constant 0 : index
    %c0_10 = arith.constant 0 : index
    %12 = vector.load %arg7[%c0_8, %c0_9, %c0_10] : memref<18x18x8xf32, #tpu.memory_space<vmem>>, vector<1x18x8xf32>
    tpu.vector_store %arg7[%c0_8, %c0_9, %c0_10], %11 {strides = array<i32>} : memref<18x18x8xf32, #tpu.memory_space<vmem>>, vector<1x18x8xf32>,
    %c17 = arith.constant 17 : index
    %c0_11 = arith.constant 0 : index
    %c0_12 = arith.constant 0 : index
    %13 = vector.load %arg7[%c17, %c0_11, %c0_12] : memref<18x18x8xf32, #tpu.memory_space<vmem>>, vector<1x18x8xf32>
    tpu.vector_store %arg7[%c17, %c0_11, %c0_12], %11 {strides = array<i32>} : memref<18x18x8xf32, #tpu.memory_space<vmem>>, vector<1x18x8xf32>,
    %14 = vector.shape_cast %9 : vector<256x8xf32> to vector<16x16x8xf32>
    %15 = tpu.concatenate %10, %14, %10 in 1 : vector<16x1x8xf32>, vector<16x16x8xf32>, vector<16x1x8xf32> -> vector<16x18x8xf32>
    %c1 = arith.constant 1 : index
    %c0_13 = arith.constant 0 : index
    %c0_14 = arith.constant 0 : index
    %16 = vector.load %arg7[%c1, %c0_13, %c0_14] : memref<18x18x8xf32, #tpu.memory_space<vmem>>, vector<16x18x8xf32>
    tpu.vector_store %arg7[%c1, %c0_13, %c0_14], %15 {strides = array<i32>} : memref<18x18x8xf32, #tpu.memory_space<vmem>>, vector<16x18x8xf32>,
    %c0_15 = arith.constant 0 : index
    %c0_16 = arith.constant 0 : index
    %c0_17 = arith.constant 0 : index
    %17 = vector.load %arg7[%c0_15, %c0_16, %c0_17] : memref<18x18x8xf32, #tpu.memory_space<vmem>>, vector<16x16x8xf32>
    %18 = vector.shape_cast %17 : vector<16x16x8xf32> to vector<256x8xf32>
    %c0_18 = arith.constant 0 : index
    %c0_19 = arith.constant 0 : index
    %c0_20 = arith.constant 0 : index
    %c0_21 = arith.constant 0 : index
    %19 = vector.load %arg2[%c0_18, %c0_19, %c0_20, %c0_21] : memref<3x3x8x8xf32, #tpu.memory_space<vmem>>, vector<1x1x8x8xf32>
    %20 = vector.shape_cast %19 : vector<1x1x8x8xf32> to vector<8x8xf32>
    %cst_22 = arith.constant dense<0.000000e+00> : vector<256x8xf32>
    %21 = tpu.matmul %18, %20, %cst_22 {dimension_numbers = #tpu.dot_dimension_numbers<[1], [0], [0], [1], [0, 0, 1, 1], [], []>} : vector<256x8xf32>, vector<8x8xf32>, vector<256x8xf32> -> vector<256x8xf32>
    %c0_23 = arith.constant 0 : index
    %c1_24 = arith.constant 1 : index
    %c0_25 = arith.constant 0 : index
    %22 = vector.load %arg7[%c0_23, %c1_24, %c0_25] : memref<18x18x8xf32, #tpu.memory_space<vmem>>, vector<16x16x8xf32>
    %23 = vector.shape_cast %22 : vector<16x16x8xf32> to vector<256x8xf32>
    %c0_26 = arith.constant 0 : index
    %c1_27 = arith.constant 1 : index
    %c0_28 = arith.constant 0 : index
    %c0_29 = arith.constant 0 : index
    %24 = vector.load %arg2[%c0_26, %c1_27, %c0_28, %c0_29] : memref<3x3x8x8xf32, #tpu.memory_space<vmem>>, vector<1x1x8x8xf32>
    %25 = vector.shape_cast %24 : vector<1x1x8x8xf32> to vector<8x8xf32>
    %cst_30 = arith.constant dense<0.000000e+00> : vector<256x8xf32>
    %26 = tpu.matmul %23, %25, %cst_30 {dimension_numbers = #tpu.dot_dimension_numbers<[1], [0], [0], [1], [0, 0, 1, 1], [], []>} : vector<256x8xf32>, vector<8x8xf32>, vector<256x8xf32> -> vector<256x8xf32>
    %27 = arith.addf %21, %26 : vector<256x8xf32>
    %c0_31 = arith.constant 0 : index
    %c2 = arith.constant 2 : index
    %c0_32 = arith.constant 0 : index
    %28 = vector.load %arg7[%c0_31, %c2, %c0_32] : memref<18x18x8xf32, #tpu.memory_space<vmem>>, vector<16x16x8xf32>
    %29 = vector.shape_cast %28 : vector<16x16x8xf32> to vector<256x8xf32>
    %c0_33 = arith.constant 0 : index
    %c2_34 = arith.constant 2 : index
    %c0_35 = arith.constant 0 : index
    %c0_36 = arith.constant 0 : index
    %30 = vector.load %arg2[%c0_33, %c2_34, %c0_35, %c0_36] : memref<3x3x8x8xf32, #tpu.memory_space<vmem>>, vector<1x1x8x8xf32>
    %31 = vector.shape_cast %30 : vector<1x1x8x8xf32> to vector<8x8xf32>
    %cst_37 = arith.constant dense<0.000000e+00> : vector<256x8xf32>
    %32 = tpu.matmul %29, %31, %cst_37 {dimension_numbers = #tpu.dot_dimension_numbers<[1], [0], [0], [1], [0, 0, 1, 1], [], []>} : vector<256x8xf32>, vector<8x8xf32>, vector<256x8xf32> -> vector<256x8xf32>
    %33 = arith.addf %27, %32 : vector<256x8xf32>
    %c1_38 = arith.constant 1 : index
    %c0_39 = arith.constant 0 : index
    %c0_40 = arith.constant 0 : index
    %34 = vector.load %arg7[%c1_38, %c0_39, %c0_40] : memref<18x18x8xf32, #tpu.memory_space<vmem>>, vector<16x16x8xf32>
    %35 = vector.shape_cast %34 : vector<16x16x8xf32> to vector<256x8xf32>
    %c1_41 = arith.constant 1 : index
    %c0_42 = arith.constant 0 : index
    %c0_43 = arith.constant 0 : index
    %c0_44 = arith.constant 0 : index
    %36 = vector.load %arg2[%c1_41, %c0_42, %c0_43, %c0_44] : memref<3x3x8x8xf32, #tpu.memory_space<vmem>>, vector<1x1x8x8xf32>
    %37 = vector.shape_cast %36 : vector<1x1x8x8xf32> to vector<8x8xf32>
    %cst_45 = arith.constant dense<0.000000e+00> : vector<256x8xf32>
    %38 = tpu.matmul %35, %37, %cst_45 {dimension_numbers = #tpu.dot_dimension_numbers<[1], [0], [0], [1], [0, 0, 1, 1], [], []>} : vector<256x8xf32>, vector<8x8xf32>, vector<256x8xf32> -> vector<256x8xf32>
    %39 = arith.addf %33, %38 : vector<256x8xf32>
    %c1_46 = arith.constant 1 : index
    %c1_47 = arith.constant 1 : index
    %c0_48 = arith.constant 0 : index
    %40 = vector.load %arg7[%c1_46, %c1_47, %c0_48] : memref<18x18x8xf32, #tpu.memory_space<vmem>>, vector<16x16x8xf32>
    %41 = vector.shape_cast %40 : vector<16x16x8xf32> to vector<256x8xf32>
    %c1_49 = arith.constant 1 : index
    %c1_50 = arith.constant 1 : index
    %c0_51 = arith.constant 0 : index
    %c0_52 = arith.constant 0 : index
    %42 = vector.load %arg2[%c1_49, %c1_50, %c0_51, %c0_52] : memref<3x3x8x8xf32, #tpu.memory_space<vmem>>, vector<1x1x8x8xf32>
    %43 = vector.shape_cast %42 : vector<1x1x8x8xf32> to vector<8x8xf32>
    %cst_53 = arith.constant dense<0.000000e+00> : vector<256x8xf32>
    %44 = tpu.matmul %41, %43, %cst_53 {dimension_numbers = #tpu.dot_dimension_numbers<[1], [0], [0], [1], [0, 0, 1, 1], [], []>} : vector<256x8xf32>, vector<8x8xf32>, vector<256x8xf32> -> vector<256x8xf32>
    %45 = arith.addf %39, %44 : vector<256x8xf32>
    %c1_54 = arith.constant 1 : index
    %c2_55 = arith.constant 2 : index
    %c0_56 = arith.constant 0 : index
    %46 = vector.load %arg7[%c1_54, %c2_55, %c0_56] : memref<18x18x8xf32, #tpu.memory_space<vmem>>, vector<16x16x8xf32>
    %47 = vector.shape_cast %46 : vector<16x16x8xf32> to vector<256x8xf32>
    %c1_57 = arith.constant 1 : index
    %c2_58 = arith.constant 2 : index
    %c0_59 = arith.constant 0 : index
    %c0_60 = arith.constant 0 : index
    %48 = vector.load %arg2[%c1_57, %c2_58, %c0_59, %c0_60] : memref<3x3x8x8xf32, #tpu.memory_space<vmem>>, vector<1x1x8x8xf32>
    %49 = vector.shape_cast %48 : vector<1x1x8x8xf32> to vector<8x8xf32>
    %cst_61 = arith.constant dense<0.000000e+00> : vector<256x8xf32>
    %50 = tpu.matmul %47, %49, %cst_61 {dimension_numbers = #tpu.dot_dimension_numbers<[1], [0], [0], [1], [0, 0, 1, 1], [], []>} : vector<256x8xf32>, vector<8x8xf32>, vector<256x8xf32> -> vector<256x8xf32>
    %51 = arith.addf %45, %50 : vector<256x8xf32>
    %c2_62 = arith.constant 2 : index
    %c0_63 = arith.constant 0 : index
    %c0_64 = arith.constant 0 : index
    %52 = vector.load %arg7[%c2_62, %c0_63, %c0_64] : memref<18x18x8xf32, #tpu.memory_space<vmem>>, vector<16x16x8xf32>
    %53 = vector.shape_cast %52 : vector<16x16x8xf32> to vector<256x8xf32>
    %c2_65 = arith.constant 2 : index
    %c0_66 = arith.constant 0 : index
    %c0_67 = arith.constant 0 : index
    %c0_68 = arith.constant 0 : index
    %54 = vector.load %arg2[%c2_65, %c0_66, %c0_67, %c0_68] : memref<3x3x8x8xf32, #tpu.memory_space<vmem>>, vector<1x1x8x8xf32>
    %55 = vector.shape_cast %54 : vector<1x1x8x8xf32> to vector<8x8xf32>
    %cst_69 = arith.constant dense<0.000000e+00> : vector<256x8xf32>
    %56 = tpu.matmul %53, %55, %cst_69 {dimension_numbers = #tpu.dot_dimension_numbers<[1], [0], [0], [1], [0, 0, 1, 1], [], []>} : vector<256x8xf32>, vector<8x8xf32>, vector<256x8xf32> -> vector<256x8xf32>
    %57 = arith.addf %51, %56 : vector<256x8xf32>
    %c2_70 = arith.constant 2 : index
    %c1_71 = arith.constant 1 : index
    %c0_72 = arith.constant 0 : index
    %58 = vector.load %arg7[%c2_70, %c1_71, %c0_72] : memref<18x18x8xf32, #tpu.memory_space<vmem>>, vector<16x16x8xf32>
    %59 = vector.shape_cast %58 : vector<16x16x8xf32> to vector<256x8xf32>
    %c2_73 = arith.constant 2 : index
    %c1_74 = arith.constant 1 : index
    %c0_75 = arith.constant 0 : index
    %c0_76 = arith.constant 0 : index
    %60 = vector.load %arg2[%c2_73, %c1_74, %c0_75, %c0_76] : memref<3x3x8x8xf32, #tpu.memory_space<vmem>>, vector<1x1x8x8xf32>
    %61 = vector.shape_cast %60 : vector<1x1x8x8xf32> to vector<8x8xf32>
    %cst_77 = arith.constant dense<0.000000e+00> : vector<256x8xf32>
    %62 = tpu.matmul %59, %61, %cst_77 {dimension_numbers = #tpu.dot_dimension_numbers<[1], [0], [0], [1], [0, 0, 1, 1], [], []>} : vector<256x8xf32>, vector<8x8xf32>, vector<256x8xf32> -> vector<256x8xf32>
    %63 = arith.addf %57, %62 : vector<256x8xf32>
    %c2_78 = arith.constant 2 : index
    %c2_79 = arith.constant 2 : index
    %c0_80 = arith.constant 0 : index
    %64 = vector.load %arg7[%c2_78, %c2_79, %c0_80] : memref<18x18x8xf32, #tpu.memory_space<vmem>>, vector<16x16x8xf32>
    %65 = vector.shape_cast %64 : vector<16x16x8xf32> to vector<256x8xf32>
    %c2_81 = arith.constant 2 : index
    %c2_82 = arith.constant 2 : index
    %c0_83 = arith.constant 0 : index
    %c0_84 = arith.constant 0 : index
    %66 = vector.load %arg2[%c2_81, %c2_82, %c0_83, %c0_84] : memref<3x3x8x8xf32, #tpu.memory_space<vmem>>, vector<1x1x8x8xf32>
    %67 = vector.shape_cast %66 : vector<1x1x8x8xf32> to vector<8x8xf32>
    %cst_85 = arith.constant dense<0.000000e+00> : vector<256x8xf32>
    %68 = tpu.matmul %65, %67, %cst_85 {dimension_numbers = #tpu.dot_dimension_numbers<[1], [0], [0], [1], [0, 0, 1, 1], [], []>} : vector<256x8xf32>, vector<8x8xf32>, vector<256x8xf32> -> vector<256x8xf32>
    %69 = arith.addf %63, %68 : vector<256x8xf32>
    %70 = vector.shape_cast %69 : vector<256x8xf32> to vector<1x256x8xf32>
    %c0_86 = arith.constant 0 : index
    %c0_87 = arith.constant 0 : index
    %c0_88 = arith.constant 0 : index
    %71 = vector.load %arg5[%c0_86, %c0_87, %c0_88] : memref<1x256x8xf32, #tpu.memory_space<vmem>>, vector<1x256x8xf32>
    tpu.vector_store %arg5[%c0_86, %c0_87, %c0_88], %70 {strides = array<i32>} : memref<1x256x8xf32, #tpu.memory_space<vmem>>, vector<1x256x8xf32>,
    %cst_89 = arith.constant dense<0.000000e+00> : vector<8xf32>
    %72 = vector.multi_reduction <add>, %69, %cst_89 [0] : vector<256x8xf32> to vector<8xf32>
    %73 = vector.shape_cast %72 : vector<8xf32> to vector<1x8xf32>
    %74 = arith.mulf %69, %69 : vector<256x8xf32>
    %cst_90 = arith.constant dense<0.000000e+00> : vector<8xf32>
    %75 = vector.multi_reduction <add>, %74, %cst_90 [0] : vector<256x8xf32> to vector<8xf32>
    %76 = vector.shape_cast %75 : vector<8xf32> to vector<1x8xf32>
    %77 = tpu.concatenate %73, %76 in 0 : vector<1x8xf32>, vector<1x8xf32> -> vector<2x8xf32>
    %78 = vector.shape_cast %77 : vector<2x8xf32> to vector<1x2x8xf32>
    %c0_91 = arith.constant 0 : index
    %c0_92 = arith.constant 0 : index
    %c0_93 = arith.constant 0 : index
    %79 = vector.load %arg6[%c0_91, %c0_92, %c0_93] : memref<1x2x8xf32, #tpu.memory_space<vmem>>, vector<1x2x8xf32>
    tpu.vector_store %arg6[%c0_91, %c0_92, %c0_93], %78 {strides = array<i32>} : memref<1x2x8xf32, #tpu.memory_space<vmem>>, vector<1x2x8xf32>,
    return
  }
  func.func @transform_0(%arg0: i32) -> (i32, i32, i32) {
    %c0_i32 = arith.constant 0 : i32
    %c0_i32_0 = arith.constant 0 : i32
    %c0_i32_1 = arith.constant 0 : i32
    return %arg0, %c0_i32, %c0_i32_0 : i32, i32, i32
  }
  func.func @transform_1(%arg0: i32) -> (i32, i32, i32, i32) {
    %c0_i32 = arith.constant 0 : i32
    %c0_i32_0 = arith.constant 0 : i32
    %c0_i32_1 = arith.constant 0 : i32
    %c0_i32_2 = arith.constant 0 : i32
    %c0_i32_3 = arith.constant 0 : i32
    return %c0_i32, %c0_i32_0, %c0_i32_1, %c0_i32_2 : i32, i32, i32, i32
  }
  func.func @transform_2(%arg0: i32) -> (i32, i32) {
    %c0_i32 = arith.constant 0 : i32
    %c0_i32_0 = arith.constant 0 : i32
    %c0_i32_1 = arith.constant 0 : i32
    return %c0_i32, %c0_i32_0 : i32, i32
  }
  func.func @transform_3(%arg0: i32) -> (i32, i32) {
    %c0_i32 = arith.constant 0 : i32
    %c0_i32_0 = arith.constant 0 : i32
    %c0_i32_1 = arith.constant 0 : i32
    return %c0_i32, %c0_i32_0 : i32, i32
  }
  func.func @transform_4(%arg0: i32) -> (i32, i32, i32) {
    %c0_i32 = arith.constant 0 : i32
    %c0_i32_0 = arith.constant 0 : i32
    %c0_i32_1 = arith.constant 0 : i32
    return %arg0, %c0_i32, %c0_i32_0 : i32, i32, i32
  }
  func.func @transform_5(%arg0: i32) -> (i32, i32, i32) {
    %c0_i32 = arith.constant 0 : i32
    %c0_i32_0 = arith.constant 0 : i32
    %c0_i32_1 = arith.constant 0 : i32
    return %arg0, %c0_i32, %c0_i32_0 : i32, i32, i32
  }
}

module attributes {stable_mosaic.version = 11 : i64} {
  func.func @_bn_relu_conv1x1_kernel(%arg0: i32, %arg1: i32, %arg2: memref<1x128x8xf32, #tpu.memory_space<vmem>>, %arg3: memref<8x8xf32, #tpu.memory_space<vmem>>, %arg4: memref<1x8xf32, #tpu.memory_space<vmem>>, %arg5: memref<1x8xf32, #tpu.memory_space<vmem>>, %arg6: memref<1x128x8xf32, #tpu.memory_space<vmem>>, %arg7: memref<1x1x2x8xf32, #tpu.memory_space<vmem>>) attributes {dimension_semantics = [#tpu.dimension_semantics<parallel>, #tpu.dimension_semantics<parallel>], iteration_bounds = array<i64: 2, 2>, scalar_prefetch = 0 : i64, scratch_operands = 0 : i64, tpu.core_type = #tpu.core_type<tc>, window_params = [{transform_indices = @transform_0, window_bounds = array<i64: 1, 128, 8>}, {pipeline_mode = #tpu.pipeline_mode<synchronous>, transform_indices = @transform_1, window_bounds = array<i64: 8, 8>}, {pipeline_mode = #tpu.pipeline_mode<synchronous>, transform_indices = @transform_2, window_bounds = array<i64: 1, 8>}, {pipeline_mode = #tpu.pipeline_mode<synchronous>, transform_indices = @transform_3, window_bounds = array<i64: 1, 8>}, {transform_indices = @transform_4, window_bounds = array<i64: 1, 128, 8>}, {transform_indices = @transform_5, window_bounds = array<i64: 1, 1, 2, 8>}]} {
    %c0 = arith.constant 0 : index
    %c0_0 = arith.constant 0 : index
    %c0_1 = arith.constant 0 : index
    %0 = vector.load %arg2[%c0, %c0_0, %c0_1] : memref<1x128x8xf32, #tpu.memory_space<vmem>>, vector<1x128x8xf32>
    %1 = vector.shape_cast %0 : vector<1x128x8xf32> to vector<128x8xf32>
    %c0_2 = arith.constant 0 : index
    %c0_3 = arith.constant 0 : index
    %2 = vector.load %arg4[%c0_2, %c0_3] : memref<1x8xf32, #tpu.memory_space<vmem>>, vector<1x8xf32>
    %3 = vector.broadcast %2 : vector<1x8xf32> to vector<128x8xf32>
    %4 = arith.mulf %1, %3 : vector<128x8xf32>
    %c0_4 = arith.constant 0 : index
    %c0_5 = arith.constant 0 : index
    %5 = vector.load %arg5[%c0_4, %c0_5] : memref<1x8xf32, #tpu.memory_space<vmem>>, vector<1x8xf32>
    %6 = vector.broadcast %5 : vector<1x8xf32> to vector<128x8xf32>
    %7 = arith.addf %4, %6 : vector<128x8xf32>
    %cst = arith.constant 0.000000e+00 : f32
    %8 = vector.broadcast %cst : f32 to vector<128x8xf32>
    %9 = arith.maximumf %7, %8 : vector<128x8xf32>
    %c0_6 = arith.constant 0 : index
    %c0_7 = arith.constant 0 : index
    %10 = vector.load %arg3[%c0_6, %c0_7] : memref<8x8xf32, #tpu.memory_space<vmem>>, vector<8x8xf32>
    %cst_8 = arith.constant dense<0.000000e+00> : vector<128x8xf32>
    %11 = tpu.matmul %9, %10, %cst_8 {dimension_numbers = #tpu.dot_dimension_numbers<[1], [0], [0], [1], [0, 0, 1, 1], [], []>} : vector<128x8xf32>, vector<8x8xf32>, vector<128x8xf32> -> vector<128x8xf32>
    %12 = vector.shape_cast %11 : vector<128x8xf32> to vector<1x128x8xf32>
    %c0_9 = arith.constant 0 : index
    %c0_10 = arith.constant 0 : index
    %c0_11 = arith.constant 0 : index
    %13 = vector.load %arg6[%c0_9, %c0_10, %c0_11] : memref<1x128x8xf32, #tpu.memory_space<vmem>>, vector<1x128x8xf32>
    tpu.vector_store %arg6[%c0_9, %c0_10, %c0_11], %12 {strides = array<i32>} : memref<1x128x8xf32, #tpu.memory_space<vmem>>, vector<1x128x8xf32>,
    %cst_12 = arith.constant dense<0.000000e+00> : vector<8xf32>
    %14 = vector.multi_reduction <add>, %11, %cst_12 [0] : vector<128x8xf32> to vector<8xf32>
    %15 = vector.shape_cast %14 : vector<8xf32> to vector<1x8xf32>
    %16 = arith.mulf %11, %11 : vector<128x8xf32>
    %cst_13 = arith.constant dense<0.000000e+00> : vector<8xf32>
    %17 = vector.multi_reduction <add>, %16, %cst_13 [0] : vector<128x8xf32> to vector<8xf32>
    %18 = vector.shape_cast %17 : vector<8xf32> to vector<1x8xf32>
    %19 = tpu.concatenate %15, %18 in 0 : vector<1x8xf32>, vector<1x8xf32> -> vector<2x8xf32>
    %20 = vector.shape_cast %19 : vector<2x8xf32> to vector<1x1x2x8xf32>
    %c0_14 = arith.constant 0 : index
    %c0_15 = arith.constant 0 : index
    %c0_16 = arith.constant 0 : index
    %c0_17 = arith.constant 0 : index
    %21 = vector.load %arg7[%c0_14, %c0_15, %c0_16, %c0_17] : memref<1x1x2x8xf32, #tpu.memory_space<vmem>>, vector<1x1x2x8xf32>
    tpu.vector_store %arg7[%c0_14, %c0_15, %c0_16, %c0_17], %20 {strides = array<i32>} : memref<1x1x2x8xf32, #tpu.memory_space<vmem>>, vector<1x1x2x8xf32>,
    return
  }
  func.func @transform_0(%arg0: i32, %arg1: i32) -> (i32, i32, i32) {
    %c0_i32 = arith.constant 0 : i32
    %c0_i32_0 = arith.constant 0 : i32
    return %arg1, %arg0, %c0_i32 : i32, i32, i32
  }
  func.func @transform_1(%arg0: i32, %arg1: i32) -> (i32, i32) {
    %c0_i32 = arith.constant 0 : i32
    %c0_i32_0 = arith.constant 0 : i32
    %c0_i32_1 = arith.constant 0 : i32
    return %c0_i32, %c0_i32_0 : i32, i32
  }
  func.func @transform_2(%arg0: i32, %arg1: i32) -> (i32, i32) {
    %c0_i32 = arith.constant 0 : i32
    %c0_i32_0 = arith.constant 0 : i32
    %c0_i32_1 = arith.constant 0 : i32
    return %c0_i32, %c0_i32_0 : i32, i32
  }
  func.func @transform_3(%arg0: i32, %arg1: i32) -> (i32, i32) {
    %c0_i32 = arith.constant 0 : i32
    %c0_i32_0 = arith.constant 0 : i32
    %c0_i32_1 = arith.constant 0 : i32
    return %c0_i32, %c0_i32_0 : i32, i32
  }
  func.func @transform_4(%arg0: i32, %arg1: i32) -> (i32, i32, i32) {
    %c0_i32 = arith.constant 0 : i32
    %c0_i32_0 = arith.constant 0 : i32
    return %arg1, %arg0, %c0_i32 : i32, i32, i32
  }
  func.func @transform_5(%arg0: i32, %arg1: i32) -> (i32, i32, i32, i32) {
    %c0_i32 = arith.constant 0 : i32
    %c0_i32_0 = arith.constant 0 : i32
    %c0_i32_1 = arith.constant 0 : i32
    return %arg1, %arg0, %c0_i32, %c0_i32_0 : i32, i32, i32, i32
  }
}

module attributes {stable_mosaic.version = 11 : i64} {
  func.func @_bn_down_add_relu_kernel(%arg0: i32, %arg1: i32, %arg2: memref<1x128x8xf32, #tpu.memory_space<vmem>>, %arg3: memref<1x4x128xf32, #tpu.memory_space<vmem>>, %arg4: memref<8x4xf32, #tpu.memory_space<vmem>>, %arg5: memref<1x8xf32, #tpu.memory_space<vmem>>, %arg6: memref<1x8xf32, #tpu.memory_space<vmem>>, %arg7: memref<8x1xf32, #tpu.memory_space<vmem>>, %arg8: memref<1x8x128xf32, #tpu.memory_space<vmem>>) attributes {dimension_semantics = [#tpu.dimension_semantics<parallel>, #tpu.dimension_semantics<parallel>], iteration_bounds = array<i64: 2, 2>, scalar_prefetch = 0 : i64, scratch_operands = 0 : i64, tpu.core_type = #tpu.core_type<tc>, window_params = [{transform_indices = @transform_0, window_bounds = array<i64: 1, 128, 8>}, {transform_indices = @transform_1, window_bounds = array<i64: 1, 4, 128>}, {pipeline_mode = #tpu.pipeline_mode<synchronous>, transform_indices = @transform_2, window_bounds = array<i64: 8, 4>}, {pipeline_mode = #tpu.pipeline_mode<synchronous>, transform_indices = @transform_3, window_bounds = array<i64: 1, 8>}, {pipeline_mode = #tpu.pipeline_mode<synchronous>, transform_indices = @transform_4, window_bounds = array<i64: 1, 8>}, {pipeline_mode = #tpu.pipeline_mode<synchronous>, transform_indices = @transform_5, window_bounds = array<i64: 8, 1>}, {transform_indices = @transform_6, window_bounds = array<i64: 1, 8, 128>}]} {
    %c0 = arith.constant 0 : index
    %c0_0 = arith.constant 0 : index
    %c0_1 = arith.constant 0 : index
    %0 = vector.load %arg2[%c0, %c0_0, %c0_1] : memref<1x128x8xf32, #tpu.memory_space<vmem>>, vector<1x128x8xf32>
    %1 = vector.shape_cast %0 : vector<1x128x8xf32> to vector<128x8xf32>
    %c0_2 = arith.constant 0 : index
    %c0_3 = arith.constant 0 : index
    %2 = vector.load %arg5[%c0_2, %c0_3] : memref<1x8xf32, #tpu.memory_space<vmem>>, vector<1x8xf32>
    %3 = vector.broadcast %2 : vector<1x8xf32> to vector<128x8xf32>
    %4 = arith.mulf %1, %3 : vector<128x8xf32>
    %c0_4 = arith.constant 0 : index
    %c0_5 = arith.constant 0 : index
    %5 = vector.load %arg6[%c0_4, %c0_5] : memref<1x8xf32, #tpu.memory_space<vmem>>, vector<1x8xf32>
    %6 = vector.broadcast %5 : vector<1x8xf32> to vector<128x8xf32>
    %7 = arith.addf %4, %6 : vector<128x8xf32>
    %c0_6 = arith.constant 0 : index
    %c0_7 = arith.constant 0 : index
    %c0_8 = arith.constant 0 : index
    %8 = vector.load %arg3[%c0_6, %c0_7, %c0_8] : memref<1x4x128xf32, #tpu.memory_space<vmem>>, vector<1x4x128xf32>
    %9 = vector.shape_cast %8 : vector<1x4x128xf32> to vector<4x128xf32>
    %c0_9 = arith.constant 0 : index
    %c0_10 = arith.constant 0 : index
    %10 = vector.load %arg4[%c0_9, %c0_10] : memref<8x4xf32, #tpu.memory_space<vmem>>, vector<8x4xf32>
    %cst = arith.constant dense<0.000000e+00> : vector<8x128xf32>
    %11 = tpu.matmul %10, %9, %cst {dimension_numbers = #tpu.dot_dimension_numbers<[1], [0], [0], [1], [0, 0, 1, 1], [], []>} : vector<8x4xf32>, vector<4x128xf32>, vector<8x128xf32> -> vector<8x128xf32>
    %c0_11 = arith.constant 0 : index
    %c0_12 = arith.constant 0 : index
    %12 = vector.load %arg7[%c0_11, %c0_12] : memref<8x1xf32, #tpu.memory_space<vmem>>, vector<8x1xf32>
    %13 = vector.broadcast %12 : vector<8x1xf32> to vector<8x128xf32>
    %14 = arith.addf %11, %13 : vector<8x128xf32>
    %15 = tpu.transpose %7, [1, 0] : vector<128x8xf32> -> vector<8x128xf32>
    %16 = arith.addf %15, %14 : vector<8x128xf32>
    %cst_13 = arith.constant 0.000000e+00 : f32
    %17 = vector.broadcast %cst_13 : f32 to vector<8x128xf32>
    %18 = arith.maximumf %16, %17 : vector<8x128xf32>
    %19 = vector.shape_cast %18 : vector<8x128xf32> to vector<1x8x128xf32>
    %c0_14 = arith.constant 0 : index
    %c0_15 = arith.constant 0 : index
    %c0_16 = arith.constant 0 : index
    %20 = vector.load %arg8[%c0_14, %c0_15, %c0_16] : memref<1x8x128xf32, #tpu.memory_space<vmem>>, vector<1x8x128xf32>
    tpu.vector_store %arg8[%c0_14, %c0_15, %c0_16], %19 {strides = array<i32>} : memref<1x8x128xf32, #tpu.memory_space<vmem>>, vector<1x8x128xf32>,
    return
  }
  func.func @transform_0(%arg0: i32, %arg1: i32) -> (i32, i32, i32) {
    %c0_i32 = arith.constant 0 : i32
    %c0_i32_0 = arith.constant 0 : i32
    return %arg1, %arg0, %c0_i32 : i32, i32, i32
  }
  func.func @transform_1(%arg0: i32, %arg1: i32) -> (i32, i32, i32) {
    %c0_i32 = arith.constant 0 : i32
    %c0_i32_0 = arith.constant 0 : i32
    return %arg1, %c0_i32, %arg0 : i32, i32, i32
  }
  func.func @transform_2(%arg0: i32, %arg1: i32) -> (i32, i32) {
    %c0_i32 = arith.constant 0 : i32
    %c0_i32_0 = arith.constant 0 : i32
    %c0_i32_1 = arith.constant 0 : i32
    return %c0_i32, %c0_i32_0 : i32, i32
  }
  func.func @transform_3(%arg0: i32, %arg1: i32) -> (i32, i32) {
    %c0_i32 = arith.constant 0 : i32
    %c0_i32_0 = arith.constant 0 : i32
    %c0_i32_1 = arith.constant 0 : i32
    return %c0_i32, %c0_i32_0 : i32, i32
  }
  func.func @transform_4(%arg0: i32, %arg1: i32) -> (i32, i32) {
    %c0_i32 = arith.constant 0 : i32
    %c0_i32_0 = arith.constant 0 : i32
    %c0_i32_1 = arith.constant 0 : i32
    return %c0_i32, %c0_i32_0 : i32, i32
  }
  func.func @transform_5(%arg0: i32, %arg1: i32) -> (i32, i32) {
    %c0_i32 = arith.constant 0 : i32
    %c0_i32_0 = arith.constant 0 : i32
    %c0_i32_1 = arith.constant 0 : i32
    return %c0_i32, %c0_i32_0 : i32, i32
  }
  func.func @transform_6(%arg0: i32, %arg1: i32) -> (i32, i32, i32) {
    %c0_i32 = arith.constant 0 : i32
    %c0_i32_0 = arith.constant 0 : i32
    return %arg1, %c0_i32, %arg0 : i32, i32, i32
  }
}

</mosaic_0001>

<llo_original>
// kernel: residual_block.4
$region0: #{residual_block.4}
  #allocation0 [shape = 'u32[]', space=smem, size = 0x4, offset = 0x4, fixed_abs, tag = 'smem constant byte address 0x4 - core index']
  #allocation1 [shape = 'u32[144,128]{1,0:T(1,128)}', space=vmem, size = 0x12000, scoped, tag = 'internal scratch']
  %s0 = inlined_call_operand.hbm [shape: f32[2,4,256], index: 0, kind: input, shape index: {}]
  %s1 = inlined_call_operand.hbm [shape: f32[4,8], index: 1, kind: input, shape index: {}]
  %s2 = inlined_call_operand.hbm [shape: f32[2,256,8], index: 2, kind: output, shape index: {0}]
  %s3 = inlined_call_operand.hbm [shape: f32[2,2,2,8], index: 3, kind: output, shape index: {1}]
  %4 = xla_tuple %s2, %s3
  %s5 = sld [smem:[#allocation0]]
  $region57: #{residual_block.4} parent=0
    _
  %s7 = ssub.s32 1, %s5
  %s8 = scalar_select 0, %s7, %s5
  $region1: #{residual_block.4} parent=0
    #allocation2 [shape = 'u8[4096]{0}', space=vmem, size = 0x1000, scoped, tag = 'input window, operand 0']
    #allocation3 [shape = 's32[2]{0}', space=sflag, size = 0x8, scoped, tag = 'scoped memory for residual_block.4']
    #allocation4 [shape = 's32[2]{0}', space=sflag, size = 0x8, scoped, tag = 'scoped memory for residual_block.4']
    #allocation5 [shape = 'u8[2048]{0}', space=vmem, size = 0x800, scoped, tag = 'input window, operand 1, single buffered']
    #allocation6 [shape = 's32[1]{0}', space=sflag, size = 0x4, scoped, tag = 'scoped memory for residual_block.4']
    #allocation7 [shape = 'u8[131072]{0}', space=vmem, size = 0x20000, scoped, tag = 'output window, operand 0']
    #allocation8 [shape = 'u8[2048]{0}', space=vmem, size = 0x800, scoped, tag = 'output window, operand 1']
    #allocation9 [shape = 's32[2]{0}', space=sflag, size = 0x8, scoped, tag = 'scoped memory for residual_block.4']
    %9 = vsyncpa [#allocation3], 0
    %s10 = scalar_lea.sflag [#allocation3], 1
    %11 = vsyncpa %s10, 0
    %12 = vsyncpa [#allocation6], 0
    %13 = vsyncpa [#allocation4], 0
    %s14 = scalar_lea.sflag [#allocation4], 1
    %15 = vsyncpa %s14, 0
    %16 = vsyncpa [#allocation9], 0
    %s17 = scalar_lea.sflag [#allocation9], 1
    %18 = vsyncpa %s17, 0
    loop: start=0, step=1, limit=6
    $region2: #{residual_block.4} parent=1 // loop_pre_header
      _
    $region3: #{residual_block.4} parent=1 // loop_header
      %s20 = sphi 0, %s24
      %p21 = scmp.ge.s32.totalorder %s20, 6
      %s27 = sphi 0, %s39
      %s28 = sphi 0, %s35
      %s29 = sphi 0, %s27
      %s30 = sphi 0, %s28
      %s31 = sphi 0, %s29
      %s32 = sphi 0, %s30
      %s44 = sphi 0, %s46
      %s47 = sphi 0, %s44
      %s48 = sphi 0, %s47
      %s64 = sphi 0, %s48
      %s68 = sphi 0, %s68
      %s70 = sphi 0, %s68
      %s71 = sphi 0, %s70
      %s85 = sphi 0, %s71
      %s93 = sphi 0, %s95
      %s96 = sphi 0, %s93
      %s97 = sphi 0, %s96
      %s113 = sphi 0, %s97
      %s121 = sphi 0, %s123
      %s124 = sphi 0, %s121
      %s125 = sphi 0, %s124
      %s141 = sphi 0, %s125
    $region4: #{residual_block.4} parent=1 // loop_header_branch
      %23 = sbr.rel (%p21) target = $region8
    $region5: #{residual_block.4} parent=1 // loop_body
      %s25 = ssub.s32 %s20, 1
      %s26 = ssub.s32 %s20, 2
      %s33 = sadd.s32 1, %s28
      %p34 = scmp.ge.s32.totalorder %s33, 2
      %s35 = scalar_select %p34, 0, %s33
      %s36 = sadd.s32 1, %s27
      %s37 = scalar_select %p34, %s36, %s27
      %p38 = scmp.ge.s32.totalorder %s37, 2
      %s39 = scalar_select %p38, 0, %s37
      %s40 = ssub.s32 %s28, %s35
      %s41 = ssub.s32 %s27, %s39
      %s42 = sor.u32 %s40, %s41
      %p43 = scmp.eq.s32.totalorder %s42, 0
      %s45 = sadd.s32 %s44, 1
      %s46 = scalar_select %p43, %s44, %s45
      %p49 = pneg %p43
      %p50 = scmp.eq.s32.totalorder %s20, 3
      %p51 = por %p49, %p50
      %p52 = scmp.ne.s32.totalorder %s44, %s47
      %p53 = scmp.eq.s32.totalorder %s20, 0
      %p54 = por %p52, %p53
      %p55 = scmp.ne.s32.totalorder %s44, %s47
      %p56 = scmp.eq.s32.totalorder %s25, 3
      %p57 = por %p55, %p56
      %p58 = scmp.ne.s32.totalorder %s47, %s48
      %p59 = scmp.eq.s32.totalorder %s25, 0
      %p60 = por %p58, %p59
      %p61 = scmp.ne.s32.totalorder %s47, %s48
      %p62 = scmp.eq.s32.totalorder %s26, 3
      %p63 = por %p61, %p62
      %p65 = scmp.ne.s32.totalorder %s48, %s64
      %p66 = scmp.eq.s32.totalorder %s26, 0
      %p67 = por %p65, %p66
      %s69 = sadd.s32 %s68, 1
      %p72 = scmp.eq.s32.totalorder %s20, 3
      %p73 = scmp.ne.s32.totalorder %s68, %s70
      %p74 = scmp.eq.s32.totalorder %s20, 0
      %p75 = por %p73, %p74
      %p76 = scmp.ne.s32.totalorder %s68, %s70
      %p77 = scmp.eq.s32.totalorder %s25, 3
      %p78 = por %p76, %p77
      %p79 = scmp.ne.s32.totalorder %s70, %s71
      %p80 = scmp.eq.s32.totalorder %s25, 0
      %p81 = por %p79, %p80
      %p82 = scmp.ne.s32.totalorder %s70, %s71
      %p83 = scmp.eq.s32.totalorder %s26, 3
      %p84 = por %p82, %p83
      %p86 = scmp.ne.s32.totalorder %s71, %s85
      %p87 = scmp.eq.s32.totalorder %s26, 0
      %p88 = por %p86, %p87
      %s89 = ssub.s32 %s28, %s35
      %s90 = ssub.s32 %s27, %s39
      %s91 = sor.u32 %s89, %s90
      %p92 = scmp.eq.s32.totalorder %s91, 0
      %s94 = sadd.s32 %s93, 1
      %s95 = scalar_select %p92, %s93, %s94
      %p98 = pneg %p92
      %p99 = scmp.eq.s32.totalorder %s20, 3
      %p100 = por %p98, %p99
      %p101 = scmp.ne.s32.totalorder %s93, %s96
      %p102 = scmp.eq.s32.totalorder %s20, 0
      %p103 = por %p101, %p102
      %p104 = scmp.ne.s32.totalorder %s93, %s96
      %p105 = scmp.eq.s32.totalorder %s25, 3
      %p106 = por %p104, %p105
      %p107 = scmp.ne.s32.totalorder %s96, %s97
      %p108 = scmp.eq.s32.totalorder %s25, 0
      %p109 = por %p107, %p108
      %p110 = scmp.ne.s32.totalorder %s96, %s97
      %p111 = scmp.eq.s32.totalorder %s26, 3
      %p112 = por %p110, %p111
      %p114 = scmp.ne.s32.totalorder %s97, %s113
      %p115 = scmp.eq.s32.totalorder %s26, 0
      %p116 = por %p114, %p115
      %s117 = ssub.s32 %s28, %s35
      %s118 = ssub.s32 %s27, %s39
      %s119 = sor.u32 %s117, %s118
      %p120 = scmp.eq.s32.totalorder %s119, 0
      %s122 = sadd.s32 %s121, 1
      %s123 = scalar_select %p120, %s121, %s122
      %p126 = pneg %p120
      %p127 = scmp.eq.s32.totalorder %s20, 3
      %p128 = por %p126, %p127
      %p129 = scmp.ne.s32.totalorder %s121, %s124
      %p130 = scmp.eq.s32.totalorder %s20, 0
      %p131 = por %p129, %p130
      %p132 = scmp.ne.s32.totalorder %s121, %s124
      %p133 = scmp.eq.s32.totalorder %s25, 3
      %p134 = por %p132, %p133
      %p135 = scmp.ne.s32.totalorder %s124, %s125
      %p136 = scmp.eq.s32.totalorder %s25, 0
      %p137 = por %p135, %p136
      %p138 = scmp.ne.s32.totalorder %s124, %s125
      %p139 = scmp.eq.s32.totalorder %s26, 3
      %p140 = por %p138, %p139
      %p142 = scmp.ne.s32.totalorder %s125, %s141
      %p143 = scmp.eq.s32.totalorder %s26, 0
      %p144 = por %p142, %p143
      %p145 = scmp.le.s32.totalorder 1, %s20
      %p146 = scmp.lt.s32.totalorder %s20, 5
      %p147 = pnand %p145, %p146
      %p148 = pneg %p147
      // Predicated region
      $region9: #{residual_block.4} parent=5 // pred_check
        _
      $region10: #{residual_block.4} parent=5 // pred_check_branch
        %150 = sbr.rel (%p147) target = $region12
      $region11: #{residual_block.4} parent=5 // pred_region
        %s151 = ssub.s32 %s20, 1
        // Predicated region
        $region13: #{residual_block.4} parent=11 // pred_check
          %p152 = pneg %p81
        $region14: #{residual_block.4} parent=11 // pred_check_branch
          %154 = sbr.rel (%p152) target = $region16
        $region15: #{residual_block.4} parent=11 // pred_region
          %s156 = ssub.s32 64, 64
          %157 = vsyncadd [#allocation6], %s156
          %s159 = sshll.u32 [#allocation5], 4
          %s160 = int_to_ptr.vmem [resolvable:$true] %s159
          %162 = dma.hbm_to_vmem [thread:$0]  %s1, 64, %s160, [#allocation6]
        $region16: #{residual_block.4} parent=11 // pred_fallthru
          _
      $region12: #{residual_block.4} parent=5 // pred_fallthru
        _
      %p163 = scmp.lt.s32.totalorder %s20, 4
      // Predicated region
      $region17: #{residual_block.4} parent=5 // pred_check
        %p164 = pneg %p163
      $region18: #{residual_block.4} parent=5 // pred_check_branch
        %166 = sbr.rel (%p164) target = $region20
      $region19: #{residual_block.4} parent=5 // pred_region
        // Predicated region
        $region21: #{residual_block.4} parent=19 // pred_check
          %p167 = pneg %p54
        $region22: #{residual_block.4} parent=19 // pred_check_branch
          %169 = sbr.rel (%p167) target = $region24
        $region23: #{residual_block.4} parent=19 // pred_region
          %s170 = sand.u32 %s44, 1
          %s171 = scalar_lea.sflag [#allocation3], %s170
          %s172 = sand.u32 %s44, 1
          %s173 = smul.addr %s172, 4
          %s174 = scalar_lea.vmem [#allocation2], %s173
          %s176 = ssub.s32 64, 64
          %177 = vsyncadd %s171, %s176
          %s178 = smul.addr %s28, 2
          %s179 = sadd.s32 %s27, %s178
          %s180 = smul.addr %s179, 64
          %s181 = scalar_lea.hbm %s0, %s180
          %s183 = sshll.u32 %s174, 4
          %s184 = int_to_ptr.vmem [resolvable:$true] %s183
          %186 = dma.hbm_to_vmem [thread:$0]  %s181, 64, %s184, %s171
        $region24: #{residual_block.4} parent=19 // pred_fallthru
          _
      $region20: #{residual_block.4} parent=5 // pred_fallthru
        _
      %p187 = scmp.le.s32.totalorder 1, %s20
      %p188 = scmp.lt.s32.totalorder %s20, 5
      %p189 = pnand %p187, %p188
      %p190 = pneg %p189
      // Predicated region
      $region25: #{residual_block.4} parent=5 // pred_check
        _
      $region26: #{residual_block.4} parent=5 // pred_check_branch
        %192 = sbr.rel (%p189) target = $region28
      $region27: #{residual_block.4} parent=5 // pred_region
        %s193 = ssub.s32 %s20, 1
        %s194 = sand.u32 %s47, 1
        %s195 = scalar_lea.sflag [#allocation3], %s194
        %s196 = sand.u32 %s47, 1
        %s197 = smul.addr %s196, 4
        %s198 = scalar_lea.vmem [#allocation2], %s197
        // Predicated region
        $region29: #{residual_block.4} parent=27 // pred_check
          %p199 = pneg %p60
        $region30: #{residual_block.4} parent=27 // pred_check_branch
          %201 = sbr.rel (%p199) target = $region32
        $region31: #{residual_block.4} parent=27 // pred_region
          %202 = dma.done %s195, 64
        $region32: #{residual_block.4} parent=27 // pred_fallthru
          _
        // Predicated region
        $region33: #{residual_block.4} parent=27 // pred_check
          %p203 = pneg %p81
        $region34: #{residual_block.4} parent=27 // pred_check_branch
          %205 = sbr.rel (%p203) target = $region36
        $region35: #{residual_block.4} parent=27 // pred_region
          %206 = dma.done [#allocation6], 64
        $region36: #{residual_block.4} parent=27 // pred_fallthru
          _
        %s207 = sand.u32 %s47, 1
        %s208 = scalar_lea.sflag [#allocation3], %s207
        %s209 = sand.u32 %s47, 1
        %s210 = smul.addr %s209, 4
        %s211 = scalar_lea.vmem [#allocation2], %s210
        %p212 = pneg %p60
        %p213 = pneg %p57
        %p214 = pneg %p81
        %p215 = pneg %p78
        %p216 = pneg %p109
        %p217 = pneg %p106
        %s218 = sand.u32 %s96, 1
        %s219 = scalar_lea.sflag [#allocation4], %s218
        %s220 = sand.u32 %s96, 1
        %s221 = smul.addr %s220, 128
        %s222 = scalar_lea.vmem [#allocation7], %s221
        %p223 = pneg %p137
        %p224 = pneg %p134
        %s225 = sand.u32 %s124, 1
        %s226 = scalar_lea.sflag [#allocation9], %s225
        %s227 = sand.u32 %s124, 1
        %s228 = smul.addr %s227, 2
        %s229 = scalar_lea.vmem [#allocation8], %s228
        %s230 = smul.u32 16, %s29
        %v231 = vld [vmem:[%s198] sm:$0xf]
        %232 = vxpose.xlu0.b32.start [1/16] %v231, 128
        %233 = vxpose.xlu0.b32.cont [2/16] 0.0, 128
        %234 = vxpose.xlu0.b32.cont [3/16] 0.0, 128
        %235 = vxpose.xlu0.b32.cont [4/16] 0.0, 128
        %236 = vxpose.xlu0.b32.cont [5/16] 0.0, 128
        %237 = vxpose.xlu0.b32.cont [6/16] 0.0, 128
        %238 = vxpose.xlu0.b32.cont [7/16] 0.0, 128
        %239 = vxpose.xlu0.b32.cont [8/16] 0.0, 128
        %240 = vxpose.xlu0.b32.cont [9/16] 0.0, 128
        %241 = vxpose.xlu0.b32.cont [10/16] 0.0, 128
        %242 = vxpose.xlu0.b32.cont [11/16] 0.0, 128
        %243 = vxpose.xlu0.b32.cont [12/16] 0.0, 128
        %244 = vxpose.xlu0.b32.cont [13/16] 0.0, 128
        %245 = vxpose.xlu0.b32.cont [14/16] 0.0, 128
        %246 = vxpose.xlu0.b32.cont [15/16] 0.0, 128
        %247 = vxpose.xlu0.b32.end [16/16] 0.0, 128
        %v248 = vpop.trf.xlu0
        %v249 = vpop.trf.xlu0
        %v250 = vpop.trf.xlu0
        %v251 = vpop.trf.xlu0
        %v252 = vpop.trf.xlu0
        %v253 = vpop.trf.xlu0
        %v254 = vpop.trf.xlu0
        %v255 = vpop.trf.xlu0
        %v256 = vpop.trf.xlu0
        %v257 = vpop.trf.xlu0
        %v258 = vpop.trf.xlu0
        %v259 = vpop.trf.xlu0
        %v260 = vpop.trf.xlu0
        %v261 = vpop.trf.xlu0
        %v262 = vpop.trf.xlu0
        %v263 = vpop.trf.xlu0
        %v264 = vld [vmem:[#allocation5] sm:$0xf]
        %vm265 = vcmask 31744
        %v267 = vsel %vm265, %v248, 0
        %v270 = vsel %vm265, %v249, 0
        %v273 = vsel %vm265, %v250, 0
        %v276 = vsel %vm265, %v251, 0
        %v279 = vsel %vm265, %v252, 0
        %v282 = vsel %vm265, %v253, 0
        %v285 = vsel %vm265, %v254, 0
        %v288 = vsel %vm265, %v255, 0
        %v291 = vsel %vm265, %v256, 0
        %v294 = vsel %vm265, %v257, 0
        %v297 = vsel %vm265, %v258, 0
        %v300 = vsel %vm265, %v259, 0
        %v303 = vsel %vm265, %v260, 0
        %v306 = vsel %vm265, %v261, 0
        %v309 = vsel %vm265, %v262, 0
        %v312 = vsel %vm265, %v263, 0
        %vm314 = vcmask 1043456
        %v316 = vsel %vm314, %v264, 0
        %318 = vmatprep.subr.mxu0 0.0
        %319 = vmatpush1.msra.mxu0 %v316
        %320 = vmatprep.subr.mxu0 0.0
        %321 = vmatpush1.msra.mxu0 0.0
        %322 = vmatprep.subr.mxu0 0.0
        %323 = vmatpush1.msra.mxu0 0.0
        %324 = vmatprep.subr.mxu0 0.0
        %325 = vmatpush1.msra.mxu0 0.0
        %326 = vmatprep.subr.mxu0 0.0
        %327 = vmatpush1.msra.mxu0 0.0
        %328 = vmatprep.subr.mxu0 0.0
        %329 = vmatpush1.msra.mxu0 0.0
        %330 = vmatprep.subr.mxu0 0.0
        %331 = vmatpush1.msra.mxu0 0.0
        %332 = vmatprep.subr.mxu0 0.0
        %333 = vmatpush1.msra.mxu0 0.0
        %334 = vmatprep.subr.mxu0 0.0
        %335 = vmatpush1.msra.mxu0 0.0
        %336 = vmatprep.subr.mxu0 0.0
        %337 = vmatpush1.msra.mxu0 0.0
        %338 = vmatprep.subr.mxu0 0.0
        %339 = vmatpush1.msra.mxu0 0.0
        %340 = vmatprep.subr.mxu0 0.0
        %341 = vmatpush1.msra.mxu0 0.0
        %342 = vmatprep.subr.mxu0 0.0
        %343 = vmatpush1.msra.mxu0 0.0
        %344 = vmatprep.subr.mxu0 0.0
        %345 = vmatpush1.msra.mxu0 0.0
        %346 = vmatprep.subr.mxu0 0.0
        %347 = vmatpush1.msra.mxu0 0.0
        %348 = vmatprep.subr.mxu0 0.0
        %349 = vmatpush1.msra.mxu0 0.0
        %350 = vmatprep.subr.mxu0 0.0
        %351 = vmatpush1.msra.mxu0 0.0
        %352 = vmatprep.subr.mxu0 0.0
        %353 = vmatpush1.msra.mxu0 0.0
        %354 = vmatprep.subr.mxu0 0.0
        %355 = vmatpush1.msra.mxu0 0.0
        %356 = vmatprep.subr.mxu0 0.0
        %357 = vmatpush1.msra.mxu0 0.0
        %358 = vmatprep.subr.mxu0 0.0
        %359 = vmatpush1.msra.mxu0 0.0
        %360 = vmatprep.subr.mxu0 0.0
        %361 = vmatpush1.msra.mxu0 0.0
        %362 = vmatprep.subr.mxu0 0.0
        %363 = vmatpush1.msra.mxu0 0.0
        %364 = vmatprep.subr.mxu0 0.0
        %365 = vmatpush1.msra.mxu0 0.0
        %366 = vmatprep.subr.mxu0 0.0
        %367 = vmatpush1.msra.mxu0 0.0
        %368 = vmatprep.subr.mxu0 0.0
        %369 = vmatpush1.msra.mxu0 0.0
        %370 = vmatprep.subr.mxu0 0.0
        %371 = vmatpush1.msra.mxu0 0.0
        %372 = vmatprep.subr.mxu0 0.0
        %373 = vmatpush1.msra.mxu0 0.0
        %374 = vmatprep.subr.mxu0 0.0
        %375 = vmatpush1.msra.mxu0 0.0
        %376 = vmatprep.subr.mxu0 0.0
        %377 = vmatpush1.msra.mxu0 0.0
        %378 = vmatprep.subr.mxu0 0.0
        %379 = vmatpush1.msra.mxu0 0.0
        %380 = vmatprep.subr.mxu0 0.0
        %381 = vmatpush1.msra.mxu0 0.0
        %382 = vmatprep.mubr.f32.mxu0 0.0
        %383 = vmatmul.mubr.f32.gmra.mrb[0].mxu0 %v267
        %v384 = vpop.f32.mrb[0].mxu0
        %v385 = vadd.f32 0.0, %v384
        %v386 = vpop.f32.mrb[0].mxu0
        %387 = vmatprep.mubr.f32.mxu0 0.0
        %388 = vmatmul.mubr.f32.gmra.mrb[0].mxu0 %v270
        %v389 = vpop.f32.mrb[0].mxu0
        %v390 = vadd.f32 0.0, %v389
        %v391 = vpop.f32.mrb[0].mxu0
        %392 = vmatprep.mubr.f32.mxu0 0.0
        %393 = vmatmul.mubr.f32.gmra.mrb[0].mxu0 %v273
        %v394 = vpop.f32.mrb[0].mxu0
        %v395 = vadd.f32 0.0, %v394
        %v396 = vpop.f32.mrb[0].mxu0
        %397 = vmatprep.mubr.f32.mxu0 0.0
        %398 = vmatmul.mubr.f32.gmra.mrb[0].mxu0 %v276
        %v399 = vpop.f32.mrb[0].mxu0
        %v400 = vadd.f32 0.0, %v399
        %v401 = vpop.f32.mrb[0].mxu0
        %402 = vmatprep.mubr.f32.mxu0 0.0
        %403 = vmatmul.mubr.f32.gmra.mrb[0].mxu0 %v279
        %v404 = vpop.f32.mrb[0].mxu0
        %v405 = vadd.f32 0.0, %v404
        %v406 = vpop.f32.mrb[0].mxu0
        %407 = vmatprep.mubr.f32.mxu0 0.0
        %408 = vmatmul.mubr.f32.gmra.mrb[0].mxu0 %v282
        %v409 = vpop.f32.mrb[0].mxu0
        %v410 = vadd.f32 0.0, %v409
        %v411 = vpop.f32.mrb[0].mxu0
        %412 = vmatprep.mubr.f32.mxu0 0.0
        %413 = vmatmul.mubr.f32.gmra.mrb[0].mxu0 %v285
        %v414 = vpop.f32.mrb[0].mxu0
        %v415 = vadd.f32 0.0, %v414
        %v416 = vpop.f32.mrb[0].mxu0
        %417 = vmatprep.mubr.f32.mxu0 0.0
        %418 = vmatmul.mubr.f32.gmra.mrb[0].mxu0 %v288
        %v419 = vpop.f32.mrb[0].mxu0
        %v420 = vadd.f32 0.0, %v419
        %v421 = vpop.f32.mrb[0].mxu0
        %422 = vmatprep.mubr.f32.mxu0 0.0
        %423 = vmatmul.mubr.f32.gmra.mrb[0].mxu0 %v291
        %v424 = vpop.f32.mrb[0].mxu0
        %v425 = vadd.f32 0.0, %v424
        %v426 = vpop.f32.mrb[0].mxu0
        %427 = vmatprep.mubr.f32.mxu0 0.0
        %428 = vmatmul.mubr.f32.gmra.mrb[0].mxu0 %v294
        %v429 = vpop.f32.mrb[0].mxu0
        %v430 = vadd.f32 0.0, %v429
        %v431 = vpop.f32.mrb[0].mxu0
        %432 = vmatprep.mubr.f32.mxu0 0.0
        %433 = vmatmul.mubr.f32.gmra.mrb[0].mxu0 %v297
        %v434 = vpop.f32.mrb[0].mxu0
        %v435 = vadd.f32 0.0, %v434
        %v436 = vpop.f32.mrb[0].mxu0
        %437 = vmatprep.mubr.f32.mxu0 0.0
        %438 = vmatmul.mubr.f32.gmra.mrb[0].mxu0 %v300
        %v439 = vpop.f32.mrb[0].mxu0
        %v440 = vadd.f32 0.0, %v439
        %v441 = vpop.f32.mrb[0].mxu0
        %442 = vmatprep.mubr.f32.mxu0 0.0
        %443 = vmatmul.mubr.f32.gmra.mrb[0].mxu0 %v303
        %v444 = vpop.f32.mrb[0].mxu0
        %v445 = vadd.f32 0.0, %v444
        %v446 = vpop.f32.mrb[0].mxu0
        %447 = vmatprep.mubr.f32.mxu0 0.0
        %448 = vmatmul.mubr.f32.gmra.mrb[0].mxu0 %v306
        %v449 = vpop.f32.mrb[0].mxu0
        %v450 = vadd.f32 0.0, %v449
        %v451 = vpop.f32.mrb[0].mxu0
        %452 = vmatprep.mubr.f32.mxu0 0.0
        %453 = vmatmul.mubr.f32.gmra.mrb[0].mxu0 %v309
        %v454 = vpop.f32.mrb[0].mxu0
        %v455 = vadd.f32 0.0, %v454
        %v456 = vpop.f32.mrb[0].mxu0
        %457 = vmatprep.mubr.f32.mxu0 0.0
        %458 = vmatmul.mubr.f32.gmra.mrb[0].mxu0 %v312
        %v459 = vpop.f32.mrb[0].mxu0
        %v460 = vadd.f32 0.0, %v459
        %v461 = vpop.f32.mrb[0].mxu0
        %462 = vdwg.mxu0
        %vm463 = vcmask 64512
        %464 = vst.msk [vmem:[%s222] sm:$0xff] %vm463, %v385
        %465 = vst.msk [vmem:[%s222 + $0x8] sm:$0xff] %vm463, %v390
        %466 = vst.msk [vmem:[%s222 + $0x10] sm:$0xff] %vm463, %v395
        %467 = vst.msk [vmem:[%s222 + $0x18] sm:$0xff] %vm463, %v400
        %468 = vst.msk [vmem:[%s222 + $0x20] sm:$0xff] %vm463, %v405
        %469 = vst.msk [vmem:[%s222 + $0x28] sm:$0xff] %vm463, %v410
        %470 = vst.msk [vmem:[%s222 + $0x30] sm:$0xff] %vm463, %v415
        %471 = vst.msk [vmem:[%s222 + $0x38] sm:$0xff] %vm463, %v420
        %472 = vst.msk [vmem:[%s222 + $0x40] sm:$0xff] %vm463, %v425
        %473 = vst.msk [vmem:[%s222 + $0x48] sm:$0xff] %vm463, %v430
        %474 = vst.msk [vmem:[%s222 + $0x50] sm:$0xff] %vm463, %v435
        %475 = vst.msk [vmem:[%s222 + $0x58] sm:$0xff] %vm463, %v440
        %476 = vst.msk [vmem:[%s222 + $0x60] sm:$0xff] %vm463, %v445
        %477 = vst.msk [vmem:[%s222 + $0x68] sm:$0xff] %vm463, %v450
        %478 = vst.msk [vmem:[%s222 + $0x70] sm:$0xff] %vm463, %v455
        %479 = vst.msk [vmem:[%s222 + $0x78] sm:$0xff] %vm463, %v460
        %v480 = vsel %vm463, %v385, 0.0
        %v481 = vsel %vm463, %v390, 0.0
        %v482 = vadd.f32 %v480, %v481
        %v483 = vsel %vm463, %v395, 0.0
        %v484 = vadd.f32 %v482, %v483
        %v485 = vsel %vm463, %v400, 0.0
        %v486 = vadd.f32 %v484, %v485
        %v487 = vsel %vm463, %v405, 0.0
        %v488 = vadd.f32 %v486, %v487
        %v489 = vsel %vm463, %v410, 0.0
        %v490 = vadd.f32 %v488, %v489
        %v491 = vsel %vm463, %v415, 0.0
        %v492 = vadd.f32 %v490, %v491
        %v493 = vsel %vm463, %v420, 0.0
        %v494 = vadd.f32 %v492, %v493
        %v495 = vsel %vm463, %v425, 0.0
        %v496 = vadd.f32 %v494, %v495
        %v497 = vsel %vm463, %v430, 0.0
        %v498 = vadd.f32 %v496, %v497
        %v499 = vsel %vm463, %v435, 0.0
        %v500 = vadd.f32 %v498, %v499
        %v501 = vsel %vm463, %v440, 0.0
        %v502 = vadd.f32 %v500, %v501
        %v503 = vsel %vm463, %v445, 0.0
        %v504 = vadd.f32 %v502, %v503
        %v505 = vsel %vm463, %v450, 0.0
        %v506 = vadd.f32 %v504, %v505
        %v507 = vsel %vm463, %v455, 0.0
        %v508 = vadd.f32 %v506, %v507
        %v509 = vsel %vm463, %v460, 0.0
        %v510 = vadd.f32 %v508, %v509
        %v511 = vrot.slane %v510, 4
        %v512 = vadd.f32 %v510, %v511
        %v513 = vrot.slane %v512, 2
        %v514 = vadd.f32 %v512, %v513
        %v515 = vrot.slane %v514, 1
        %v516 = vadd.f32 %v514, %v515
        %v517 = vmul.f32 %v385, %v385
        %v518 = vmul.f32 %v390, %v390
        %v519 = vmul.f32 %v395, %v395
        %v520 = vmul.f32 %v400, %v400
        %v521 = vmul.f32 %v405, %v405
        %v522 = vmul.f32 %v410, %v410
        %v523 = vmul.f32 %v415, %v415
        %v524 = vmul.f32 %v420, %v420
        %v525 = vmul.f32 %v425, %v425
        %v526 = vmul.f32 %v430, %v430
        %v527 = vmul.f32 %v435, %v435
        %v528 = vmul.f32 %v440, %v440
        %v529 = vmul.f32 %v445, %v445
        %v530 = vmul.f32 %v450, %v450
        %v531 = vmul.f32 %v455, %v455
        %v532 = vmul.f32 %v460, %v460
        %v533 = vsel %vm463, %v517, 0.0
        %v534 = vsel %vm463, %v518, 0.0
        %v535 = vadd.f32 %v533, %v534
        %v536 = vsel %vm463, %v519, 0.0
        %v537 = vadd.f32 %v535, %v536
        %v538 = vsel %vm463, %v520, 0.0
        %v539 = vadd.f32 %v537, %v538
        %v540 = vsel %vm463, %v521, 0.0
        %v541 = vadd.f32 %v539, %v540
        %v542 = vsel %vm463, %v522, 0.0
        %v543 = vadd.f32 %v541, %v542
        %v544 = vsel %vm463, %v523, 0.0
        %v545 = vadd.f32 %v543, %v544
        %v546 = vsel %vm463, %v524, 0.0
        %v547 = vadd.f32 %v545, %v546
        %v548 = vsel %vm463, %v525, 0.0
        %v549 = vadd.f32 %v547, %v548
        %v550 = vsel %vm463, %v526, 0.0
        %v551 = vadd.f32 %v549, %v550
        %v552 = vsel %vm463, %v527, 0.0
        %v553 = vadd.f32 %v551, %v552
        %v554 = vsel %vm463, %v528, 0.0
        %v555 = vadd.f32 %v553, %v554
        %v556 = vsel %vm463, %v529, 0.0
        %v557 = vadd.f32 %v555, %v556
        %v558 = vsel %vm463, %v530, 0.0
        %v559 = vadd.f32 %v557, %v558
        %v560 = vsel %vm463, %v531, 0.0
        %v561 = vadd.f32 %v559, %v560
        %v562 = vsel %vm463, %v532, 0.0
        %v563 = vadd.f32 %v561, %v562
        %v564 = vrot.slane %v563, 4
        %v565 = vadd.f32 %v563, %v564
        %v566 = vrot.slane %v565, 2
        %v567 = vadd.f32 %v565, %v566
        %v568 = vrot.slane %v567, 1
        %v569 = vadd.f32 %v567, %v568
        %vm570 = vcmask 1040384
        %v571 = vsel %vm570, %v516, %v569
        %vm572 = vcmask 58368
        %573 = vst.msk [vmem:[%s229] sm:$0x3] %vm572, %v571
        %s574 = sand.u32 %s96, 1
        %s575 = scalar_lea.sflag [#allocation4], %s574
        %s576 = sand.u32 %s96, 1
        %s577 = smul.addr %s576, 128
        %s578 = scalar_lea.vmem [#allocation7], %s577
        %s579 = sand.u32 %s124, 1
        %s580 = scalar_lea.sflag [#allocation9], %s579
        %s581 = sand.u32 %s124, 1
        %s582 = smul.addr %s581, 2
        %s583 = scalar_lea.vmem [#allocation8], %s582
        // Predicated region
        $region37: #{residual_block.4} parent=27 // pred_check
          %p584 = pneg %p106
        $region38: #{residual_block.4} parent=27 // pred_check_branch
          %586 = sbr.rel (%p584) target = $region40
        $region39: #{residual_block.4} parent=27 // pred_region
          %s587 = smul.u32 16, %s29
          %s589 = ssub.s32 2048, 2048
          %590 = vsyncadd %s575, %s589
          %s591 = smul.addr %s30, 32
          %s592 = sadd.s32 %s587, %s591
          %s593 = smul.addr %s592, 128
          %s594 = scalar_lea.hbm %s2, %s593
          %s595 = sshll.u32 %s578, 4
          %s596 = int_to_ptr.vmem [resolvable:$true] %s595
          %601 = dma.vmem_to_hbm [thread:$0]  %s596, 2048, %s594, %s575, 128, 128, 8
        $region40: #{residual_block.4} parent=27 // pred_fallthru
          _
        // Predicated region
        $region41: #{residual_block.4} parent=27 // pred_check
          %p602 = pneg %p134
        $region42: #{residual_block.4} parent=27 // pred_check_branch
          %604 = sbr.rel (%p602) target = $region44
        $region43: #{residual_block.4} parent=27 // pred_region
          %s606 = ssub.s32 32, 32
          %607 = vsyncadd %s580, %s606
          %s608 = smul.addr %s30, 2
          %s609 = sadd.s32 %s29, %s608
          %s610 = smul.addr %s609, 32
          %s611 = scalar_lea.hbm %s3, %s610
          %s613 = sshll.u32 %s583, 4
          %s614 = int_to_ptr.vmem [resolvable:$true] %s613
          %616 = dma.vmem_to_hbm [thread:$0]  %s614, 32, %s611, %s580
        $region44: #{residual_block.4} parent=27 // pred_fallthru
          _
      $region28: #{residual_block.4} parent=5 // pred_fallthru
        _
      %p617 = scmp.le.s32.totalorder 2, %s20
      // Predicated region
      $region45: #{residual_block.4} parent=5 // pred_check
        %p618 = pneg %p617
      $region46: #{residual_block.4} parent=5 // pred_check_branch
        %620 = sbr.rel (%p618) target = $region48
      $region47: #{residual_block.4} parent=5 // pred_region
        %s621 = ssub.s32 %s20, 2
        // Predicated region
        $region49: #{residual_block.4} parent=47 // pred_check
          %p622 = pneg %p112
        $region50: #{residual_block.4} parent=47 // pred_check_branch
          %624 = sbr.rel (%p622) target = $region52
        $region51: #{residual_block.4} parent=47 // pred_region
          %s625 = sand.u32 %s97, 1
          %s626 = scalar_lea.sflag [#allocation4], %s625
          %s627 = sand.u32 %s97, 1
          %s628 = smul.addr %s627, 128
          %s629 = scalar_lea.vmem [#allocation7], %s628
          %630 = dma.done %s626, 2048
        $region52: #{residual_block.4} parent=47 // pred_fallthru
          _
        // Predicated region
        $region53: #{residual_block.4} parent=47 // pred_check
          %p631 = pneg %p140
        $region54: #{residual_block.4} parent=47 // pred_check_branch
          %633 = sbr.rel (%p631) target = $region56
        $region55: #{residual_block.4} parent=47 // pred_region
          %s634 = sand.u32 %s125, 1
          %s635 = scalar_lea.sflag [#allocation9], %s634
          %s636 = sand.u32 %s125, 1
          %s637 = smul.addr %s636, 2
          %s638 = scalar_lea.vmem [#allocation8], %s637
          %639 = dma.done %s635, 32
        $region56: #{residual_block.4} parent=47 // pred_fallthru
          _
      $region48: #{residual_block.4} parent=5 // pred_fallthru
        _
    $region6: #{residual_block.4} parent=1 // loop_footer
      %s24 = sadd.s32 1, %s20
    $region7: #{residual_block.4} parent=1 // loop_footer_branch
      %19 = sbr.rel target = $region3
    $region8: #{residual_block.4} parent=1 // loop_exit
      _
    %640 = vsyncpa [#allocation3], 1
    %s641 = scalar_lea.sflag [#allocation3], 1
    %642 = vsyncpa %s641, 1
    %643 = vsyncpa [#allocation6], 1
    %644 = vsyncpa [#allocation4], 1
    %s645 = scalar_lea.sflag [#allocation4], 1
    %646 = vsyncpa %s645, 1
    %647 = vsyncpa [#allocation9], 1
    %s648 = scalar_lea.sflag [#allocation9], 1
    %649 = vsyncpa %s648, 1

// kernel: residual_block.6
$region0: #{residual_block.6}
  #allocation0 [shape = 'u32[]', space=smem, size = 0x4, offset = 0x4, fixed_abs, tag = 'smem constant byte address 0x4 - core index']
  #allocation1 [shape = 'u32[144,128]{1,0:T(1,128)}', space=vmem, size = 0x12000, scoped, tag = 'internal scratch']
  %s0 = inlined_call_operand.hbm [shape: f32[2,256,8], index: 0, kind: input, shape index: {}]
  %s1 = inlined_call_operand.hbm [shape: f32[8,8], index: 1, kind: input, shape index: {}]
  %s2 = inlined_call_operand.hbm [shape: f32[1,8], index: 2, kind: input, shape index: {}]
  %s3 = inlined_call_operand.hbm [shape: f32[1,8], index: 3, kind: input, shape index: {}]
  %s4 = inlined_call_operand.hbm [shape: f32[2,256,8], index: 4, kind: output, shape index: {0}]
  %s5 = inlined_call_operand.hbm [shape: f32[2,2,2,8], index: 5, kind: output, shape index: {1}]
  %6 = xla_tuple %s4, %s5
  %s7 = sld [smem:[#allocation0]]
  $region73: #{residual_block.6} parent=0
    _
  %s9 = ssub.s32 1, %s7
  %s10 = scalar_select 0, %s9, %s7
  $region1: #{residual_block.6} parent=0
    #allocation2 [shape = 'u8[131072]{0}', space=vmem, size = 0x20000, scoped, tag = 'input window, operand 0']
    #allocation3 [shape = 's32[2]{0}', space=sflag, size = 0x8, scoped, tag = 'scoped memory for residual_block.6']
    #allocation4 [shape = 's32[2]{0}', space=sflag, size = 0x8, scoped, tag = 'scoped memory for residual_block.6']
    #allocation5 [shape = 'u8[4096]{0}', space=vmem, size = 0x1000, scoped, tag = 'input window, operand 1, single buffered']
    #allocation6 [shape = 's32[1]{0}', space=sflag, size = 0x4, scoped, tag = 'scoped memory for residual_block.6']
    #allocation7 [shape = 'u8[512]{0}', space=vmem, size = 0x400, scoped, tag = 'input window, operand 2, single buffered']
    #allocation8 [shape = 'u8[512]{0}', space=vmem, size = 0x400, scoped, tag = 'input window, operand 3, single buffered']
    #allocation9 [shape = 's32[1]{0}', space=sflag, size = 0x4, scoped, tag = 'scoped memory for residual_block.6']
    #allocation10 [shape = 'u8[131072]{0}', space=vmem, size = 0x20000, scoped, tag = 'output window, operand 0']
    #allocation11 [shape = 'u8[2048]{0}', space=vmem, size = 0x800, scoped, tag = 'output window, operand 1']
    #allocation12 [shape = 's32[2]{0}', space=sflag, size = 0x8, scoped, tag = 'scoped memory for residual_block.6']
    %11 = vsyncpa [#allocation3], 0
    %s12 = scalar_lea.sflag [#allocation3], 1
    %13 = vsyncpa %s12, 0
    %14 = vsyncpa [#allocation6], 0
    %15 = vsyncpa [#allocation9], 0
    %16 = vsyncpa [#allocation4], 0
    %s17 = scalar_lea.sflag [#allocation4], 1
    %18 = vsyncpa %s17, 0
    %19 = vsyncpa [#allocation12], 0
    %s20 = scalar_lea.sflag [#allocation12], 1
    %21 = vsyncpa %s20, 0
    loop: start=0, step=1, limit=6
    $region2: #{residual_block.6} parent=1 // loop_pre_header
      _
    $region3: #{residual_block.6} parent=1 // loop_header
      %s23 = sphi 0, %s27
      %p24 = scmp.ge.s32.totalorder %s23, 6
      %s30 = sphi 0, %s42
      %s31 = sphi 0, %s38
      %s32 = sphi 0, %s30
      %s33 = sphi 0, %s31
      %s34 = sphi 0, %s32
      %s35 = sphi 0, %s33
      %s47 = sphi 0, %s49
      %s50 = sphi 0, %s47
      %s51 = sphi 0, %s50
      %s67 = sphi 0, %s51
      %s71 = sphi 0, %s71
      %s73 = sphi 0, %s71
      %s74 = sphi 0, %s73
      %s88 = sphi 0, %s74
      %s92 = sphi 0, %s92
      %s94 = sphi 0, %s92
      %s95 = sphi 0, %s94
      %s109 = sphi 0, %s95
      %s113 = sphi 0, %s113
      %s115 = sphi 0, %s113
      %s116 = sphi 0, %s115
      %s130 = sphi 0, %s116
      %s138 = sphi 0, %s140
      %s141 = sphi 0, %s138
      %s142 = sphi 0, %s141
      %s158 = sphi 0, %s142
      %s166 = sphi 0, %s168
      %s169 = sphi 0, %s166
      %s170 = sphi 0, %s169
      %s186 = sphi 0, %s170
    $region4: #{residual_block.6} parent=1 // loop_header_branch
      %26 = sbr.rel (%p24) target = $region8
    $region5: #{residual_block.6} parent=1 // loop_body
      %s28 = ssub.s32 %s23, 1
      %s29 = ssub.s32 %s23, 2
      %s36 = sadd.s32 1, %s31
      %p37 = scmp.ge.s32.totalorder %s36, 2
      %s38 = scalar_select %p37, 0, %s36
      %s39 = sadd.s32 1, %s30
      %s40 = scalar_select %p37, %s39, %s30
      %p41 = scmp.ge.s32.totalorder %s40, 2
      %s42 = scalar_select %p41, 0, %s40
      %s43 = ssub.s32 %s31, %s38
      %s44 = ssub.s32 %s30, %s42
      %s45 = sor.u32 %s43, %s44
      %p46 = scmp.eq.s32.totalorder %s45, 0
      %s48 = sadd.s32 %s47, 1
      %s49 = scalar_select %p46, %s47, %s48
      %p52 = pneg %p46
      %p53 = scmp.eq.s32.totalorder %s23, 3
      %p54 = por %p52, %p53
      %p55 = scmp.ne.s32.totalorder %s47, %s50
      %p56 = scmp.eq.s32.totalorder %s23, 0
      %p57 = por %p55, %p56
      %p58 = scmp.ne.s32.totalorder %s47, %s50
      %p59 = scmp.eq.s32.totalorder %s28, 3
      %p60 = por %p58, %p59
      %p61 = scmp.ne.s32.totalorder %s50, %s51
      %p62 = scmp.eq.s32.totalorder %s28, 0
      %p63 = por %p61, %p62
      %p64 = scmp.ne.s32.totalorder %s50, %s51
      %p65 = scmp.eq.s32.totalorder %s29, 3
      %p66 = por %p64, %p65
      %p68 = scmp.ne.s32.totalorder %s51, %s67
      %p69 = scmp.eq.s32.totalorder %s29, 0
      %p70 = por %p68, %p69
      %s72 = sadd.s32 %s71, 1
      %p75 = scmp.eq.s32.totalorder %s23, 3
      %p76 = scmp.ne.s32.totalorder %s71, %s73
      %p77 = scmp.eq.s32.totalorder %s23, 0
      %p78 = por %p76, %p77
      %p79 = scmp.ne.s32.totalorder %s71, %s73
      %p80 = scmp.eq.s32.totalorder %s28, 3
      %p81 = por %p79, %p80
      %p82 = scmp.ne.s32.totalorder %s73, %s74
      %p83 = scmp.eq.s32.totalorder %s28, 0
      %p84 = por %p82, %p83
      %p85 = scmp.ne.s32.totalorder %s73, %s74
      %p86 = scmp.eq.s32.totalorder %s29, 3
      %p87 = por %p85, %p86
      %p89 = scmp.ne.s32.totalorder %s74, %s88
      %p90 = scmp.eq.s32.totalorder %s29, 0
      %p91 = por %p89, %p90
      %s93 = sadd.s32 %s92, 1
      %p96 = scmp.eq.s32.totalorder %s23, 3
      %p97 = scmp.ne.s32.totalorder %s92, %s94
      %p98 = scmp.eq.s32.totalorder %s23, 0
      %p99 = por %p97, %p98
      %p100 = scmp.ne.s32.totalorder %s92, %s94
      %p101 = scmp.eq.s32.totalorder %s28, 3
      %p102 = por %p100, %p101
      %p103 = scmp.ne.s32.totalorder %s94, %s95
      %p104 = scmp.eq.s32.totalorder %s28, 0
      %p105 = por %p103, %p104
      %p106 = scmp.ne.s32.totalorder %s94, %s95
      %p107 = scmp.eq.s32.totalorder %s29, 3
      %p108 = por %p106, %p107
      %p110 = scmp.ne.s32.totalorder %s95, %s109
      %p111 = scmp.eq.s32.totalorder %s29, 0
      %p112 = por %p110, %p111
      %s114 = sadd.s32 %s113, 1
      %p117 = scmp.eq.s32.totalorder %s23, 3
      %p118 = scmp.ne.s32.totalorder %s113, %s115
      %p119 = scmp.eq.s32.totalorder %s23, 0
      %p120 = por %p118, %p119
      %p121 = scmp.ne.s32.totalorder %s113, %s115
      %p122 = scmp.eq.s32.totalorder %s28, 3
      %p123 = por %p121, %p122
      %p124 = scmp.ne.s32.totalorder %s115, %s116
      %p125 = scmp.eq.s32.totalorder %s28, 0
      %p126 = por %p124, %p125
      %p127 = scmp.ne.s32.totalorder %s115, %s116
      %p128 = scmp.eq.s32.totalorder %s29, 3
      %p129 = por %p127, %p128
      %p131 = scmp.ne.s32.totalorder %s116, %s130
      %p132 = scmp.eq.s32.totalorder %s29, 0
      %p133 = por %p131, %p132
      %s134 = ssub.s32 %s31, %s38
      %s135 = ssub.s32 %s30, %s42
      %s136 = sor.u32 %s134, %s135
      %p137 = scmp.eq.s32.totalorder %s136, 0
      %s139 = sadd.s32 %s138, 1
      %s140 = scalar_select %p137, %s138, %s139
      %p143 = pneg %p137
      %p144 = scmp.eq.s32.totalorder %s23, 3
      %p145 = por %p143, %p144
      %p146 = scmp.ne.s32.totalorder %s138, %s141
      %p147 = scmp.eq.s32.totalorder %s23, 0
      %p148 = por %p146, %p147
      %p149 = scmp.ne.s32.totalorder %s138, %s141
      %p150 = scmp.eq.s32.totalorder %s28, 3
      %p151 = por %p149, %p150
      %p152 = scmp.ne.s32.totalorder %s141, %s142
      %p153 = scmp.eq.s32.totalorder %s28, 0
      %p154 = por %p152, %p153
      %p155 = scmp.ne.s32.totalorder %s141, %s142
      %p156 = scmp.eq.s32.totalorder %s29, 3
      %p157 = por %p155, %p156
      %p159 = scmp.ne.s32.totalorder %s142, %s158
      %p160 = scmp.eq.s32.totalorder %s29, 0
      %p161 = por %p159, %p160
      %s162 = ssub.s32 %s31, %s38
      %s163 = ssub.s32 %s30, %s42
      %s164 = sor.u32 %s162, %s163
      %p165 = scmp.eq.s32.totalorder %s164, 0
      %s167 = sadd.s32 %s166, 1
      %s168 = scalar_select %p165, %s166, %s167
      %p171 = pneg %p165
      %p172 = scmp.eq.s32.totalorder %s23, 3
      %p173 = por %p171, %p172
      %p174 = scmp.ne.s32.totalorder %s166, %s169
      %p175 = scmp.eq.s32.totalorder %s23, 0
      %p176 = por %p174, %p175
      %p177 = scmp.ne.s32.totalorder %s166, %s169
      %p178 = scmp.eq.s32.totalorder %s28, 3
      %p179 = por %p177, %p178
      %p180 = scmp.ne.s32.totalorder %s169, %s170
      %p181 = scmp.eq.s32.totalorder %s28, 0
      %p182 = por %p180, %p181
      %p183 = scmp.ne.s32.totalorder %s169, %s170
      %p184 = scmp.eq.s32.totalorder %s29, 3
      %p185 = por %p183, %p184
      %p187 = scmp.ne.s32.totalorder %s170, %s186
      %p188 = scmp.eq.s32.totalorder %s29, 0
      %p189 = por %p187, %p188
      %p190 = scmp.le.s32.totalorder 1, %s23
      %p191 = scmp.lt.s32.totalorder %s23, 5
      %p192 = pnand %p190, %p191
      %p193 = pneg %p192
      // Predicated region
      $region9: #{residual_block.6} parent=5 // pred_check
        _
      $region10: #{residual_block.6} parent=5 // pred_check_branch
        %195 = sbr.rel (%p192) target = $region12
      $region11: #{residual_block.6} parent=5 // pred_region
        %s196 = ssub.s32 %s23, 1
        // Predicated region
        $region13: #{residual_block.6} parent=11 // pred_check
          %p197 = pneg %p84
        $region14: #{residual_block.6} parent=11 // pred_check_branch
          %199 = sbr.rel (%p197) target = $region16
        $region15: #{residual_block.6} parent=11 // pred_region
          %s201 = ssub.s32 128, 128
          %202 = vsyncadd [#allocation6], %s201
          %s204 = sshll.u32 [#allocation5], 4
          %s205 = int_to_ptr.vmem [resolvable:$true] %s204
          %207 = dma.hbm_to_vmem [thread:$0]  %s1, 128, %s205, [#allocation6]
        $region16: #{residual_block.6} parent=11 // pred_fallthru
          _
        // Predicated region
        $region17: #{residual_block.6} parent=11 // pred_check
          %p208 = pneg %p105
        $region18: #{residual_block.6} parent=11 // pred_check_branch
          %210 = sbr.rel (%p208) target = $region20
        $region19: #{residual_block.6} parent=11 // pred_region
          %s212 = ssub.s32 16, 16
          %213 = vsyncadd [#allocation6], %s212
          %s215 = sshll.u32 [#allocation7], 4
          %s216 = int_to_ptr.vmem [resolvable:$true] %s215
          %218 = dma.hbm_to_vmem [thread:$0]  %s2, 16, %s216, [#allocation6]
        $region20: #{residual_block.6} parent=11 // pred_fallthru
          _
        // Predicated region
        $region21: #{residual_block.6} parent=11 // pred_check
          %p219 = pneg %p126
        $region22: #{residual_block.6} parent=11 // pred_check_branch
          %221 = sbr.rel (%p219) target = $region24
        $region23: #{residual_block.6} parent=11 // pred_region
          %s223 = ssub.s32 16, 16
          %224 = vsyncadd [#allocation9], %s223
          %s226 = sshll.u32 [#allocation8], 4
          %s227 = int_to_ptr.vmem [resolvable:$true] %s226
          %229 = dma.hbm_to_vmem [thread:$0]  %s3, 16, %s227, [#allocation9]
        $region24: #{residual_block.6} parent=11 // pred_fallthru
          _
      $region12: #{residual_block.6} parent=5 // pred_fallthru
        _
      %p230 = scmp.lt.s32.totalorder %s23, 4
      // Predicated region
      $region25: #{residual_block.6} parent=5 // pred_check
        %p231 = pneg %p230
      $region26: #{residual_block.6} parent=5 // pred_check_branch
        %233 = sbr.rel (%p231) target = $region28
      $region27: #{residual_block.6} parent=5 // pred_region
        // Predicated region
        $region29: #{residual_block.6} parent=27 // pred_check
          %p234 = pneg %p57
        $region30: #{residual_block.6} parent=27 // pred_check_branch
          %236 = sbr.rel (%p234) target = $region32
        $region31: #{residual_block.6} parent=27 // pred_region
          %s237 = sand.u32 %s47, 1
          %s238 = scalar_lea.sflag [#allocation3], %s237
          %s239 = sand.u32 %s47, 1
          %s240 = smul.addr %s239, 128
          %s241 = scalar_lea.vmem [#allocation2], %s240
          %s242 = smul.u32 16, %s30
          %s244 = ssub.s32 2048, 2048
          %245 = vsyncadd %s238, %s244
          %s246 = smul.addr %s31, 32
          %s247 = sadd.s32 %s242, %s246
          %s248 = smul.addr %s247, 128
          %s249 = scalar_lea.hbm %s0, %s248
          %s250 = sshll.u32 %s241, 4
          %s251 = int_to_ptr.vmem [resolvable:$true] %s250
          %256 = dma.hbm_to_vmem [thread:$0]  %s249, 2048, %s251, %s238, 128, 128, 8
        $region32: #{residual_block.6} parent=27 // pred_fallthru
          _
      $region28: #{residual_block.6} parent=5 // pred_fallthru
        _
      %p257 = scmp.le.s32.totalorder 1, %s23
      %p258 = scmp.lt.s32.totalorder %s23, 5
      %p259 = pnand %p257, %p258
      %p260 = pneg %p259
      // Predicated region
      $region33: #{residual_block.6} parent=5 // pred_check
        _
      $region34: #{residual_block.6} parent=5 // pred_check_branch
        %262 = sbr.rel (%p259) target = $region36
      $region35: #{residual_block.6} parent=5 // pred_region
        %s263 = ssub.s32 %s23, 1
        %s264 = sand.u32 %s50, 1
        %s265 = scalar_lea.sflag [#allocation3], %s264
        %s266 = sand.u32 %s50, 1
        %s267 = smul.addr %s266, 128
        %s268 = scalar_lea.vmem [#allocation2], %s267
        // Predicated region
        $region37: #{residual_block.6} parent=35 // pred_check
          %p269 = pneg %p63
        $region38: #{residual_block.6} parent=35 // pred_check_branch
          %271 = sbr.rel (%p269) target = $region40
        $region39: #{residual_block.6} parent=35 // pred_region
          %272 = dma.done %s265, 2048
        $region40: #{residual_block.6} parent=35 // pred_fallthru
          _
        // Predicated region
        $region41: #{residual_block.6} parent=35 // pred_check
          %p273 = pneg %p84
        $region42: #{residual_block.6} parent=35 // pred_check_branch
          %275 = sbr.rel (%p273) target = $region44
        $region43: #{residual_block.6} parent=35 // pred_region
          %276 = dma.done [#allocation6], 128
        $region44: #{residual_block.6} parent=35 // pred_fallthru
          _
        // Predicated region
        $region45: #{residual_block.6} parent=35 // pred_check
          %p277 = pneg %p105
        $region46: #{residual_block.6} parent=35 // pred_check_branch
          %279 = sbr.rel (%p277) target = $region48
        $region47: #{residual_block.6} parent=35 // pred_region
          %280 = dma.done [#allocation6], 16
        $region48: #{residual_block.6} parent=35 // pred_fallthru
          _
        // Predicated region
        $region49: #{residual_block.6} parent=35 // pred_check
          %p281 = pneg %p126
        $region50: #{residual_block.6} parent=35 // pred_check_branch
          %283 = sbr.rel (%p281) target = $region52
        $region51: #{residual_block.6} parent=35 // pred_region
          %284 = dma.done [#allocation9], 16
        $region52: #{residual_block.6} parent=35 // pred_fallthru
          _
        %s285 = sand.u32 %s50, 1
        %s286 = scalar_lea.sflag [#allocation3], %s285
        %s287 = sand.u32 %s50, 1
        %s288 = smul.addr %s287, 128
        %s289 = scalar_lea.vmem [#allocation2], %s288
        %p290 = pneg %p63
        %p291 = pneg %p60
        %p292 = pneg %p84
        %p293 = pneg %p81
        %p294 = pneg %p105
        %p295 = pneg %p102
        %p296 = pneg %p126
        %p297 = pneg %p123
        %p298 = pneg %p154
        %p299 = pneg %p151
        %s300 = sand.u32 %s141, 1
        %s301 = scalar_lea.sflag [#allocation4], %s300
        %s302 = sand.u32 %s141, 1
        %s303 = smul.addr %s302, 128
        %s304 = scalar_lea.vmem [#allocation10], %s303
        %p305 = pneg %p182
        %p306 = pneg %p179
        %s307 = sand.u32 %s169, 1
        %s308 = scalar_lea.sflag [#allocation12], %s307
        %s309 = sand.u32 %s169, 1
        %s310 = smul.addr %s309, 2
        %s311 = scalar_lea.vmem [#allocation11], %s310
        %s312 = smul.u32 16, %s32
        %s313 = smul.u32 16, %s32
        %v314 = vld [vmem:[%s268] sm:$0xff]
        %v315 = vld [vmem:[%s268 + $0x8] sm:$0xff]
        %v316 = vld [vmem:[%s268 + $0x10] sm:$0xff]
        %v317 = vld [vmem:[%s268 + $0x18] sm:$0xff]
        %v318 = vld [vmem:[%s268 + $0x20] sm:$0xff]
        %v319 = vld [vmem:[%s268 + $0x28] sm:$0xff]
        %v320 = vld [vmem:[%s268 + $0x30] sm:$0xff]
        %v321 = vld [vmem:[%s268 + $0x38] sm:$0xff]
        %v322 = vld [vmem:[%s268 + $0x40] sm:$0xff]
        %v323 = vld [vmem:[%s268 + $0x48] sm:$0xff]
        %v324 = vld [vmem:[%s268 + $0x50] sm:$0xff]
        %v325 = vld [vmem:[%s268 + $0x58] sm:$0xff]
        %v326 = vld [vmem:[%s268 + $0x60] sm:$0xff]
        %v327 = vld [vmem:[%s268 + $0x68] sm:$0xff]
        %v328 = vld [vmem:[%s268 + $0x70] sm:$0xff]
        %v329 = vld [vmem:[%s268 + $0x78] sm:$0xff]
        %v330 = vld [vmem:[#allocation7] sm:$0x1]
        %v332 = vlaneseq
        %v333 = vshrl.u32 %v332, 7
        %v334 = vsub.s32 0, %v333
        %v335 = vrot.slane %v330, %v334
        %v337 = vmul.f32 %v314, %v335
        %v338 = vmul.f32 %v315, %v335
        %v339 = vmul.f32 %v316, %v335
        %v340 = vmul.f32 %v317, %v335
        %v341 = vmul.f32 %v318, %v335
        %v342 = vmul.f32 %v319, %v335
        %v343 = vmul.f32 %v320, %v335
        %v344 = vmul.f32 %v321, %v335
        %v345 = vmul.f32 %v322, %v335
        %v346 = vmul.f32 %v323, %v335
        %v347 = vmul.f32 %v324, %v335
        %v348 = vmul.f32 %v325, %v335
        %v349 = vmul.f32 %v326, %v335
        %v350 = vmul.f32 %v327, %v335
        %v351 = vmul.f32 %v328, %v335
        %v352 = vmul.f32 %v329, %v335
        %v353 = vld [vmem:[#allocation8] sm:$0x1]
        %v355 = vlaneseq
        %v356 = vshrl.u32 %v355, 7
        %v357 = vsub.s32 0, %v356
        %v358 = vrot.slane %v353, %v357
        %v360 = vadd.f32 %v337, %v358
        %v361 = vadd.f32 %v338, %v358
        %v362 = vadd.f32 %v339, %v358
        %v363 = vadd.f32 %v340, %v358
        %v364 = vadd.f32 %v341, %v358
        %v365 = vadd.f32 %v342, %v358
        %v366 = vadd.f32 %v343, %v358
        %v367 = vadd.f32 %v344, %v358
        %v368 = vadd.f32 %v345, %v358
        %v369 = vadd.f32 %v346, %v358
        %v370 = vadd.f32 %v347, %v358
        %v371 = vadd.f32 %v348, %v358
        %v372 = vadd.f32 %v349, %v358
        %v373 = vadd.f32 %v350, %v358
        %v374 = vadd.f32 %v351, %v358
        %v375 = vadd.f32 %v352, %v358
        %v376 = vmax.f32 %v360, 0.0
        %v377 = vmax.f32 %v361, 0.0
        %v378 = vmax.f32 %v362, 0.0
        %v379 = vmax.f32 %v363, 0.0
        %v380 = vmax.f32 %v364, 0.0
        %v381 = vmax.f32 %v365, 0.0
        %v382 = vmax.f32 %v366, 0.0
        %v383 = vmax.f32 %v367, 0.0
        %v384 = vmax.f32 %v368, 0.0
        %v385 = vmax.f32 %v369, 0.0
        %v386 = vmax.f32 %v370, 0.0
        %v387 = vmax.f32 %v371, 0.0
        %v388 = vmax.f32 %v372, 0.0
        %v389 = vmax.f32 %v373, 0.0
        %v390 = vmax.f32 %v374, 0.0
        %v391 = vmax.f32 %v375, 0.0
        %v392 = vld [vmem:[#allocation5] sm:$0xff]
        %vm393 = vcmask 64512
        %v395 = vsel %vm393, %v376, 0
        %v398 = vsel %vm393, %v377, 0
        %v401 = vsel %vm393, %v378, 0
        %v404 = vsel %vm393, %v379, 0
        %v407 = vsel %vm393, %v380, 0
        %v410 = vsel %vm393, %v381, 0
        %v413 = vsel %vm393, %v382, 0
        %v416 = vsel %vm393, %v383, 0
        %v419 = vsel %vm393, %v384, 0
        %v422 = vsel %vm393, %v385, 0
        %v425 = vsel %vm393, %v386, 0
        %v428 = vsel %vm393, %v387, 0
        %v431 = vsel %vm393, %v388, 0
        %v434 = vsel %vm393, %v389, 0
        %v437 = vsel %vm393, %v390, 0
        %v440 = vsel %vm393, %v391, 0
        %442 = vmatprep.subr.mxu0 0.0
        %443 = vmatpush1.msra.mxu0 %v392
        %444 = vmatprep.subr.mxu0 0.0
        %445 = vmatpush1.msra.mxu0 0.0
        %446 = vmatprep.subr.mxu0 0.0
        %447 = vmatpush1.msra.mxu0 0.0
        %448 = vmatprep.subr.mxu0 0.0
        %449 = vmatpush1.msra.mxu0 0.0
        %450 = vmatprep.subr.mxu0 0.0
        %451 = vmatpush1.msra.mxu0 0.0
        %452 = vmatprep.subr.mxu0 0.0
        %453 = vmatpush1.msra.mxu0 0.0
        %454 = vmatprep.subr.mxu0 0.0
        %455 = vmatpush1.msra.mxu0 0.0
        %456 = vmatprep.subr.mxu0 0.0
        %457 = vmatpush1.msra.mxu0 0.0
        %458 = vmatprep.subr.mxu0 0.0
        %459 = vmatpush1.msra.mxu0 0.0
        %460 = vmatprep.subr.mxu0 0.0
        %461 = vmatpush1.msra.mxu0 0.0
        %462 = vmatprep.subr.mxu0 0.0
        %463 = vmatpush1.msra.mxu0 0.0
        %464 = vmatprep.subr.mxu0 0.0
        %465 = vmatpush1.msra.mxu0 0.0
        %466 = vmatprep.subr.mxu0 0.0
        %467 = vmatpush1.msra.mxu0 0.0
        %468 = vmatprep.subr.mxu0 0.0
        %469 = vmatpush1.msra.mxu0 0.0
        %470 = vmatprep.subr.mxu0 0.0
        %471 = vmatpush1.msra.mxu0 0.0
        %472 = vmatprep.subr.mxu0 0.0
        %473 = vmatpush1.msra.mxu0 0.0
        %474 = vmatprep.subr.mxu0 0.0
        %475 = vmatpush1.msra.mxu0 0.0
        %476 = vmatprep.subr.mxu0 0.0
        %477 = vmatpush1.msra.mxu0 0.0
        %478 = vmatprep.subr.mxu0 0.0
        %479 = vmatpush1.msra.mxu0 0.0
        %480 = vmatprep.subr.mxu0 0.0
        %481 = vmatpush1.msra.mxu0 0.0
        %482 = vmatprep.subr.mxu0 0.0
        %483 = vmatpush1.msra.mxu0 0.0
        %484 = vmatprep.subr.mxu0 0.0
        %485 = vmatpush1.msra.mxu0 0.0
        %486 = vmatprep.subr.mxu0 0.0
        %487 = vmatpush1.msra.mxu0 0.0
        %488 = vmatprep.subr.mxu0 0.0
        %489 = vmatpush1.msra.mxu0 0.0
        %490 = vmatprep.subr.mxu0 0.0
        %491 = vmatpush1.msra.mxu0 0.0
        %492 = vmatprep.subr.mxu0 0.0
        %493 = vmatpush1.msra.mxu0 0.0
        %494 = vmatprep.subr.mxu0 0.0
        %495 = vmatpush1.msra.mxu0 0.0
        %496 = vmatprep.subr.mxu0 0.0
        %497 = vmatpush1.msra.mxu0 0.0
        %498 = vmatprep.subr.mxu0 0.0
        %499 = vmatpush1.msra.mxu0 0.0
        %500 = vmatprep.subr.mxu0 0.0
        %501 = vmatpush1.msra.mxu0 0.0
        %502 = vmatprep.subr.mxu0 0.0
        %503 = vmatpush1.msra.mxu0 0.0
        %504 = vmatprep.subr.mxu0 0.0
        %505 = vmatpush1.msra.mxu0 0.0
        %506 = vmatprep.mubr.f32.mxu0 0.0
        %507 = vmatmul.mubr.f32.gmra.mrb[0].mxu0 %v395
        %v508 = vpop.f32.mrb[0].mxu0
        %v509 = vadd.f32 0.0, %v508
        %v510 = vpop.f32.mrb[0].mxu0
        %511 = vmatprep.mubr.f32.mxu0 0.0
        %512 = vmatmul.mubr.f32.gmra.mrb[0].mxu0 %v398
        %v513 = vpop.f32.mrb[0].mxu0
        %v514 = vadd.f32 0.0, %v513
        %v515 = vpop.f32.mrb[0].mxu0
        %516 = vmatprep.mubr.f32.mxu0 0.0
        %517 = vmatmul.mubr.f32.gmra.mrb[0].mxu0 %v401
        %v518 = vpop.f32.mrb[0].mxu0
        %v519 = vadd.f32 0.0, %v518
        %v520 = vpop.f32.mrb[0].mxu0
        %521 = vmatprep.mubr.f32.mxu0 0.0
        %522 = vmatmul.mubr.f32.gmra.mrb[0].mxu0 %v404
        %v523 = vpop.f32.mrb[0].mxu0
        %v524 = vadd.f32 0.0, %v523
        %v525 = vpop.f32.mrb[0].mxu0
        %526 = vmatprep.mubr.f32.mxu0 0.0
        %527 = vmatmul.mubr.f32.gmra.mrb[0].mxu0 %v407
        %v528 = vpop.f32.mrb[0].mxu0
        %v529 = vadd.f32 0.0, %v528
        %v530 = vpop.f32.mrb[0].mxu0
        %531 = vmatprep.mubr.f32.mxu0 0.0
        %532 = vmatmul.mubr.f32.gmra.mrb[0].mxu0 %v410
        %v533 = vpop.f32.mrb[0].mxu0
        %v534 = vadd.f32 0.0, %v533
        %v535 = vpop.f32.mrb[0].mxu0
        %536 = vmatprep.mubr.f32.mxu0 0.0
        %537 = vmatmul.mubr.f32.gmra.mrb[0].mxu0 %v413
        %v538 = vpop.f32.mrb[0].mxu0
        %v539 = vadd.f32 0.0, %v538
        %v540 = vpop.f32.mrb[0].mxu0
        %541 = vmatprep.mubr.f32.mxu0 0.0
        %542 = vmatmul.mubr.f32.gmra.mrb[0].mxu0 %v416
        %v543 = vpop.f32.mrb[0].mxu0
        %v544 = vadd.f32 0.0, %v543
        %v545 = vpop.f32.mrb[0].mxu0
        %546 = vmatprep.mubr.f32.mxu0 0.0
        %547 = vmatmul.mubr.f32.gmra.mrb[0].mxu0 %v419
        %v548 = vpop.f32.mrb[0].mxu0
        %v549 = vadd.f32 0.0, %v548
        %v550 = vpop.f32.mrb[0].mxu0
        %551 = vmatprep.mubr.f32.mxu0 0.0
        %552 = vmatmul.mubr.f32.gmra.mrb[0].mxu0 %v422
        %v553 = vpop.f32.mrb[0].mxu0
        %v554 = vadd.f32 0.0, %v553
        %v555 = vpop.f32.mrb[0].mxu0
        %556 = vmatprep.mubr.f32.mxu0 0.0
        %557 = vmatmul.mubr.f32.gmra.mrb[0].mxu0 %v425
        %v558 = vpop.f32.mrb[0].mxu0
        %v559 = vadd.f32 0.0, %v558
        %v560 = vpop.f32.mrb[0].mxu0
        %561 = vmatprep.mubr.f32.mxu0 0.0
        %562 = vmatmul.mubr.f32.gmra.mrb[0].mxu0 %v428
        %v563 = vpop.f32.mrb[0].mxu0
        %v564 = vadd.f32 0.0, %v563
        %v565 = vpop.f32.mrb[0].mxu0
        %566 = vmatprep.mubr.f32.mxu0 0.0
        %567 = vmatmul.mubr.f32.gmra.mrb[0].mxu0 %v431
        %v568 = vpop.f32.mrb[0].mxu0
        %v569 = vadd.f32 0.0, %v568
        %v570 = vpop.f32.mrb[0].mxu0
        %571 = vmatprep.mubr.f32.mxu0 0.0
        %572 = vmatmul.mubr.f32.gmra.mrb[0].mxu0 %v434
        %v573 = vpop.f32.mrb[0].mxu0
        %v574 = vadd.f32 0.0, %v573
        %v575 = vpop.f32.mrb[0].mxu0
        %576 = vmatprep.mubr.f32.mxu0 0.0
        %577 = vmatmul.mubr.f32.gmra.mrb[0].mxu0 %v437
        %v578 = vpop.f32.mrb[0].mxu0
        %v579 = vadd.f32 0.0, %v578
        %v580 = vpop.f32.mrb[0].mxu0
        %581 = vmatprep.mubr.f32.mxu0 0.0
        %582 = vmatmul.mubr.f32.gmra.mrb[0].mxu0 %v440
        %v583 = vpop.f32.mrb[0].mxu0
        %v584 = vadd.f32 0.0, %v583
        %v585 = vpop.f32.mrb[0].mxu0
        %586 = vdwg.mxu0
        %587 = vst.msk [vmem:[%s304] sm:$0xff] %vm393, %v509
        %588 = vst.msk [vmem:[%s304 + $0x8] sm:$0xff] %vm393, %v514
        %589 = vst.msk [vmem:[%s304 + $0x10] sm:$0xff] %vm393, %v519
        %590 = vst.msk [vmem:[%s304 + $0x18] sm:$0xff] %vm393, %v524
        %591 = vst.msk [vmem:[%s304 + $0x20] sm:$0xff] %vm393, %v529
        %592 = vst.msk [vmem:[%s304 + $0x28] sm:$0xff] %vm393, %v534
        %593 = vst.msk [vmem:[%s304 + $0x30] sm:$0xff] %vm393, %v539
        %594 = vst.msk [vmem:[%s304 + $0x38] sm:$0xff] %vm393, %v544
        %595 = vst.msk [vmem:[%s304 + $0x40] sm:$0xff] %vm393, %v549
        %596 = vst.msk [vmem:[%s304 + $0x48] sm:$0xff] %vm393, %v554
        %597 = vst.msk [vmem:[%s304 + $0x50] sm:$0xff] %vm393, %v559
        %598 = vst.msk [vmem:[%s304 + $0x58] sm:$0xff] %vm393, %v564
        %599 = vst.msk [vmem:[%s304 + $0x60] sm:$0xff] %vm393, %v569
        %600 = vst.msk [vmem:[%s304 + $0x68] sm:$0xff] %vm393, %v574
        %601 = vst.msk [vmem:[%s304 + $0x70] sm:$0xff] %vm393, %v579
        %602 = vst.msk [vmem:[%s304 + $0x78] sm:$0xff] %vm393, %v584
        %v603 = vsel %vm393, %v509, 0.0
        %v604 = vsel %vm393, %v514, 0.0
        %v605 = vadd.f32 %v603, %v604
        %v606 = vsel %vm393, %v519, 0.0
        %v607 = vadd.f32 %v605, %v606
        %v608 = vsel %vm393, %v524, 0.0
        %v609 = vadd.f32 %v607, %v608
        %v610 = vsel %vm393, %v529, 0.0
        %v611 = vadd.f32 %v609, %v610
        %v612 = vsel %vm393, %v534, 0.0
        %v613 = vadd.f32 %v611, %v612
        %v614 = vsel %vm393, %v539, 0.0
        %v615 = vadd.f32 %v613, %v614
        %v616 = vsel %vm393, %v544, 0.0
        %v617 = vadd.f32 %v615, %v616
        %v618 = vsel %vm393, %v549, 0.0
        %v619 = vadd.f32 %v617, %v618
        %v620 = vsel %vm393, %v554, 0.0
        %v621 = vadd.f32 %v619, %v620
        %v622 = vsel %vm393, %v559, 0.0
        %v623 = vadd.f32 %v621, %v622
        %v624 = vsel %vm393, %v564, 0.0
        %v625 = vadd.f32 %v623, %v624
        %v626 = vsel %vm393, %v569, 0.0
        %v627 = vadd.f32 %v625, %v626
        %v628 = vsel %vm393, %v574, 0.0
        %v629 = vadd.f32 %v627, %v628
        %v630 = vsel %vm393, %v579, 0.0
        %v631 = vadd.f32 %v629, %v630
        %v632 = vsel %vm393, %v584, 0.0
        %v633 = vadd.f32 %v631, %v632
        %v634 = vrot.slane %v633, 4
        %v635 = vadd.f32 %v633, %v634
        %v636 = vrot.slane %v635, 2
        %v637 = vadd.f32 %v635, %v636
        %v638 = vrot.slane %v637, 1
        %v639 = vadd.f32 %v637, %v638
        %v640 = vmul.f32 %v509, %v509
        %v641 = vmul.f32 %v514, %v514
        %v642 = vmul.f32 %v519, %v519
        %v643 = vmul.f32 %v524, %v524
        %v644 = vmul.f32 %v529, %v529
        %v645 = vmul.f32 %v534, %v534
        %v646 = vmul.f32 %v539, %v539
        %v647 = vmul.f32 %v544, %v544
        %v648 = vmul.f32 %v549, %v549
        %v649 = vmul.f32 %v554, %v554
        %v650 = vmul.f32 %v559, %v559
        %v651 = vmul.f32 %v564, %v564
        %v652 = vmul.f32 %v569, %v569
        %v653 = vmul.f32 %v574, %v574
        %v654 = vmul.f32 %v579, %v579
        %v655 = vmul.f32 %v584, %v584
        %v656 = vsel %vm393, %v640, 0.0
        %v657 = vsel %vm393, %v641, 0.0
        %v658 = vadd.f32 %v656, %v657
        %v659 = vsel %vm393, %v642, 0.0
        %v660 = vadd.f32 %v658, %v659
        %v661 = vsel %vm393, %v643, 0.0
        %v662 = vadd.f32 %v660, %v661
        %v663 = vsel %vm393, %v644, 0.0
        %v664 = vadd.f32 %v662, %v663
        %v665 = vsel %vm393, %v645, 0.0
        %v666 = vadd.f32 %v664, %v665
        %v667 = vsel %vm393, %v646, 0.0
        %v668 = vadd.f32 %v666, %v667
        %v669 = vsel %vm393, %v647, 0.0
        %v670 = vadd.f32 %v668, %v669
        %v671 = vsel %vm393, %v648, 0.0
        %v672 = vadd.f32 %v670, %v671
        %v673 = vsel %vm393, %v649, 0.0
        %v674 = vadd.f32 %v672, %v673
        %v675 = vsel %vm393, %v650, 0.0
        %v676 = vadd.f32 %v674, %v675
        %v677 = vsel %vm393, %v651, 0.0
        %v678 = vadd.f32 %v676, %v677
        %v679 = vsel %vm393, %v652, 0.0
        %v680 = vadd.f32 %v678, %v679
        %v681 = vsel %vm393, %v653, 0.0
        %v682 = vadd.f32 %v680, %v681
        %v683 = vsel %vm393, %v654, 0.0
        %v684 = vadd.f32 %v682, %v683
        %v685 = vsel %vm393, %v655, 0.0
        %v686 = vadd.f32 %v684, %v685
        %v687 = vrot.slane %v686, 4
        %v688 = vadd.f32 %v686, %v687
        %v689 = vrot.slane %v688, 2
        %v690 = vadd.f32 %v688, %v689
        %v691 = vrot.slane %v690, 1
        %v692 = vadd.f32 %v690, %v691
        %vm693 = vcmask 1040384
        %v694 = vsel %vm693, %v639, %v692
        %vm695 = vcmask 58368
        %696 = vst.msk [vmem:[%s311] sm:$0x3] %vm695, %v694
        %s697 = sand.u32 %s141, 1
        %s698 = scalar_lea.sflag [#allocation4], %s697
        %s699 = sand.u32 %s141, 1
        %s700 = smul.addr %s699, 128
        %s701 = scalar_lea.vmem [#allocation10], %s700
        %s702 = sand.u32 %s169, 1
        %s703 = scalar_lea.sflag [#allocation12], %s702
        %s704 = sand.u32 %s169, 1
        %s705 = smul.addr %s704, 2
        %s706 = scalar_lea.vmem [#allocation11], %s705
        // Predicated region
        $region53: #{residual_block.6} parent=35 // pred_check
          %p707 = pneg %p151
        $region54: #{residual_block.6} parent=35 // pred_check_branch
          %709 = sbr.rel (%p707) target = $region56
        $region55: #{residual_block.6} parent=35 // pred_region
          %s710 = smul.u32 16, %s32
          %s712 = ssub.s32 2048, 2048
          %713 = vsyncadd %s698, %s712
          %s714 = smul.addr %s33, 32
          %s715 = sadd.s32 %s710, %s714
          %s716 = smul.addr %s715, 128
          %s717 = scalar_lea.hbm %s4, %s716
          %s718 = sshll.u32 %s701, 4
          %s719 = int_to_ptr.vmem [resolvable:$true] %s718
          %724 = dma.vmem_to_hbm [thread:$0]  %s719, 2048, %s717, %s698, 128, 128, 8
        $region56: #{residual_block.6} parent=35 // pred_fallthru
          _
        // Predicated region
        $region57: #{residual_block.6} parent=35 // pred_check
          %p725 = pneg %p179
        $region58: #{residual_block.6} parent=35 // pred_check_branch
          %727 = sbr.rel (%p725) target = $region60
        $region59: #{residual_block.6} parent=35 // pred_region
          %s729 = ssub.s32 32, 32
          %730 = vsyncadd %s703, %s729
          %s731 = smul.addr %s33, 2
          %s732 = sadd.s32 %s32, %s731
          %s733 = smul.addr %s732, 32
          %s734 = scalar_lea.hbm %s5, %s733
          %s736 = sshll.u32 %s706, 4
          %s737 = int_to_ptr.vmem [resolvable:$true] %s736
          %739 = dma.vmem_to_hbm [thread:$0]  %s737, 32, %s734, %s703
        $region60: #{residual_block.6} parent=35 // pred_fallthru
          _
      $region36: #{residual_block.6} parent=5 // pred_fallthru
        _
      %p740 = scmp.le.s32.totalorder 2, %s23
      // Predicated region
      $region61: #{residual_block.6} parent=5 // pred_check
        %p741 = pneg %p740
      $region62: #{residual_block.6} parent=5 // pred_check_branch
        %743 = sbr.rel (%p741) target = $region64
      $region63: #{residual_block.6} parent=5 // pred_region
        %s744 = ssub.s32 %s23, 2
        // Predicated region
        $region65: #{residual_block.6} parent=63 // pred_check
          %p745 = pneg %p157
        $region66: #{residual_block.6} parent=63 // pred_check_branch
          %747 = sbr.rel (%p745) target = $region68
        $region67: #{residual_block.6} parent=63 // pred_region
          %s748 = sand.u32 %s142, 1
          %s749 = scalar_lea.sflag [#allocation4], %s748
          %s750 = sand.u32 %s142, 1
          %s751 = smul.addr %s750, 128
          %s752 = scalar_lea.vmem [#allocation10], %s751
          %753 = dma.done %s749, 2048
        $region68: #{residual_block.6} parent=63 // pred_fallthru
          _
        // Predicated region
        $region69: #{residual_block.6} parent=63 // pred_check
          %p754 = pneg %p185
        $region70: #{residual_block.6} parent=63 // pred_check_branch
          %756 = sbr.rel (%p754) target = $region72
        $region71: #{residual_block.6} parent=63 // pred_region
          %s757 = sand.u32 %s170, 1
          %s758 = scalar_lea.sflag [#allocation12], %s757
          %s759 = sand.u32 %s170, 1
          %s760 = smul.addr %s759, 2
          %s761 = scalar_lea.vmem [#allocation11], %s760
          %762 = dma.done %s758, 32
        $region72: #{residual_block.6} parent=63 // pred_fallthru
          _
      $region64: #{residual_block.6} parent=5 // pred_fallthru
        _
    $region6: #{residual_block.6} parent=1 // loop_footer
      %s27 = sadd.s32 1, %s23
    $region7: #{residual_block.6} parent=1 // loop_footer_branch
      %22 = sbr.rel target = $region3
    $region8: #{residual_block.6} parent=1 // loop_exit
      _
    %763 = vsyncpa [#allocation3], 1
    %s764 = scalar_lea.sflag [#allocation3], 1
    %765 = vsyncpa %s764, 1
    %766 = vsyncpa [#allocation6], 1
    %767 = vsyncpa [#allocation9], 1
    %768 = vsyncpa [#allocation4], 1
    %s769 = scalar_lea.sflag [#allocation4], 1
    %770 = vsyncpa %s769, 1
    %771 = vsyncpa [#allocation12], 1
    %s772 = scalar_lea.sflag [#allocation12], 1
    %773 = vsyncpa %s772, 1

// kernel: residual_block.7
$region0: #{residual_block.7}
  #allocation0 [shape = 'u32[]', space=smem, size = 0x4, offset = 0x4, fixed_abs, tag = 'smem constant byte address 0x4 - core index']
  #allocation1 [shape = 'u32[144,128]{1,0:T(1,128)}', space=vmem, size = 0x12000, scoped, tag = 'internal scratch']
  %s0 = inlined_call_operand.hbm [shape: f32[2,256,8], index: 0, kind: input, shape index: {}]
  %s1 = inlined_call_operand.hbm [shape: f32[2,4,256], index: 1, kind: input, shape index: {}]
  %s2 = inlined_call_operand.hbm [shape: f32[8,4], index: 2, kind: input, shape index: {}]
  %s3 = inlined_call_operand.hbm [shape: f32[1,8], index: 3, kind: input, shape index: {}]
  %s4 = inlined_call_operand.hbm [shape: f32[1,8], index: 4, kind: input, shape index: {}]
  %s5 = inlined_call_operand.hbm [shape: f32[8,1], index: 5, kind: input, shape index: {}]
  %s6 = inlined_call_operand.hbm [shape: f32[2,8,256], index: 6, kind: output, shape index: {}]
  %s7 = sld [smem:[#allocation0]]
  $region81: #{residual_block.7} parent=0
    _
  %s9 = ssub.s32 1, %s7
  %s10 = scalar_select 0, %s9, %s7
  $region1: #{residual_block.7} parent=0
    #allocation2 [shape = 'u8[131072]{0}', space=vmem, size = 0x20000, scoped, tag = 'input window, operand 0']
    #allocation3 [shape = 's32[2]{0}', space=sflag, size = 0x8, scoped, tag = 'scoped memory for residual_block.7']
    #allocation4 [shape = 's32[2]{0}', space=sflag, size = 0x8, scoped, tag = 'scoped memory for residual_block.7']
    #allocation5 [shape = 'u8[4096]{0}', space=vmem, size = 0x1000, scoped, tag = 'input window, operand 1']
    #allocation6 [shape = 's32[2]{0}', space=sflag, size = 0x8, scoped, tag = 'scoped memory for residual_block.7']
    #allocation7 [shape = 'u8[4096]{0}', space=vmem, size = 0x1000, scoped, tag = 'input window, operand 2, single buffered']
    #allocation8 [shape = 'u8[512]{0}', space=vmem, size = 0x400, scoped, tag = 'input window, operand 3, single buffered']
    #allocation9 [shape = 's32[1]{0}', space=sflag, size = 0x4, scoped, tag = 'scoped memory for residual_block.7']
    #allocation10 [shape = 'u8[512]{0}', space=vmem, size = 0x400, scoped, tag = 'input window, operand 4, single buffered']
    #allocation11 [shape = 'u8[4096]{0}', space=vmem, size = 0x1000, scoped, tag = 'input window, operand 5, single buffered']
    #allocation12 [shape = 's32[1]{0}', space=sflag, size = 0x4, scoped, tag = 'scoped memory for residual_block.7']
    #allocation13 [shape = 'u8[8192]{0}', space=vmem, size = 0x2000, scoped, tag = 'output window, operand 0']
    %11 = vsyncpa [#allocation3], 0
    %s12 = scalar_lea.sflag [#allocation3], 1
    %13 = vsyncpa %s12, 0
    %14 = vsyncpa [#allocation6], 0
    %s15 = scalar_lea.sflag [#allocation6], 1
    %16 = vsyncpa %s15, 0
    %17 = vsyncpa [#allocation9], 0
    %18 = vsyncpa [#allocation12], 0
    %19 = vsyncpa [#allocation4], 0
    %s20 = scalar_lea.sflag [#allocation4], 1
    %21 = vsyncpa %s20, 0
    loop: start=0, step=1, limit=6
    $region2: #{residual_block.7} parent=1 // loop_pre_header
      _
    $region3: #{residual_block.7} parent=1 // loop_header
      %s23 = sphi 0, %s27
      %p24 = scmp.ge.s32.totalorder %s23, 6
      %s30 = sphi 0, %s42
      %s31 = sphi 0, %s38
      %s32 = sphi 0, %s30
      %s33 = sphi 0, %s31
      %s34 = sphi 0, %s32
      %s35 = sphi 0, %s33
      %s47 = sphi 0, %s49
      %s50 = sphi 0, %s47
      %s51 = sphi 0, %s50
      %s67 = sphi 0, %s51
      %s75 = sphi 0, %s77
      %s78 = sphi 0, %s75
      %s79 = sphi 0, %s78
      %s95 = sphi 0, %s79
      %s99 = sphi 0, %s99
      %s101 = sphi 0, %s99
      %s102 = sphi 0, %s101
      %s116 = sphi 0, %s102
      %s120 = sphi 0, %s120
      %s122 = sphi 0, %s120
      %s123 = sphi 0, %s122
      %s137 = sphi 0, %s123
      %s141 = sphi 0, %s141
      %s143 = sphi 0, %s141
      %s144 = sphi 0, %s143
      %s158 = sphi 0, %s144
      %s162 = sphi 0, %s162
      %s164 = sphi 0, %s162
      %s165 = sphi 0, %s164
      %s179 = sphi 0, %s165
      %s187 = sphi 0, %s189
      %s190 = sphi 0, %s187
      %s191 = sphi 0, %s190
      %s207 = sphi 0, %s191
    $region4: #{residual_block.7} parent=1 // loop_header_branch
      %26 = sbr.rel (%p24) target = $region8
    $region5: #{residual_block.7} parent=1 // loop_body
      %s28 = ssub.s32 %s23, 1
      %s29 = ssub.s32 %s23, 2
      %s36 = sadd.s32 1, %s31
      %p37 = scmp.ge.s32.totalorder %s36, 2
      %s38 = scalar_select %p37, 0, %s36
      %s39 = sadd.s32 1, %s30
      %s40 = scalar_select %p37, %s39, %s30
      %p41 = scmp.ge.s32.totalorder %s40, 2
      %s42 = scalar_select %p41, 0, %s40
      %s43 = ssub.s32 %s31, %s38
      %s44 = ssub.s32 %s30, %s42
      %s45 = sor.u32 %s43, %s44
      %p46 = scmp.eq.s32.totalorder %s45, 0
      %s48 = sadd.s32 %s47, 1
      %s49 = scalar_select %p46, %s47, %s48
      %p52 = pneg %p46
      %p53 = scmp.eq.s32.totalorder %s23, 3
      %p54 = por %p52, %p53
      %p55 = scmp.ne.s32.totalorder %s47, %s50
      %p56 = scmp.eq.s32.totalorder %s23, 0
      %p57 = por %p55, %p56
      %p58 = scmp.ne.s32.totalorder %s47, %s50
      %p59 = scmp.eq.s32.totalorder %s28, 3
      %p60 = por %p58, %p59
      %p61 = scmp.ne.s32.totalorder %s50, %s51
      %p62 = scmp.eq.s32.totalorder %s28, 0
      %p63 = por %p61, %p62
      %p64 = scmp.ne.s32.totalorder %s50, %s51
      %p65 = scmp.eq.s32.totalorder %s29, 3
      %p66 = por %p64, %p65
      %p68 = scmp.ne.s32.totalorder %s51, %s67
      %p69 = scmp.eq.s32.totalorder %s29, 0
      %p70 = por %p68, %p69
      %s71 = ssub.s32 %s31, %s38
      %s72 = ssub.s32 %s30, %s42
      %s73 = sor.u32 %s71, %s72
      %p74 = scmp.eq.s32.totalorder %s73, 0
      %s76 = sadd.s32 %s75, 1
      %s77 = scalar_select %p74, %s75, %s76
      %p80 = pneg %p74
      %p81 = scmp.eq.s32.totalorder %s23, 3
      %p82 = por %p80, %p81
      %p83 = scmp.ne.s32.totalorder %s75, %s78
      %p84 = scmp.eq.s32.totalorder %s23, 0
      %p85 = por %p83, %p84
      %p86 = scmp.ne.s32.totalorder %s75, %s78
      %p87 = scmp.eq.s32.totalorder %s28, 3
      %p88 = por %p86, %p87
      %p89 = scmp.ne.s32.totalorder %s78, %s79
      %p90 = scmp.eq.s32.totalorder %s28, 0
      %p91 = por %p89, %p90
      %p92 = scmp.ne.s32.totalorder %s78, %s79
      %p93 = scmp.eq.s32.totalorder %s29, 3
      %p94 = por %p92, %p93
      %p96 = scmp.ne.s32.totalorder %s79, %s95
      %p97 = scmp.eq.s32.totalorder %s29, 0
      %p98 = por %p96, %p97
      %s100 = sadd.s32 %s99, 1
      %p103 = scmp.eq.s32.totalorder %s23, 3
      %p104 = scmp.ne.s32.totalorder %s99, %s101
      %p105 = scmp.eq.s32.totalorder %s23, 0
      %p106 = por %p104, %p105
      %p107 = scmp.ne.s32.totalorder %s99, %s101
      %p108 = scmp.eq.s32.totalorder %s28, 3
      %p109 = por %p107, %p108
      %p110 = scmp.ne.s32.totalorder %s101, %s102
      %p111 = scmp.eq.s32.totalorder %s28, 0
      %p112 = por %p110, %p111
      %p113 = scmp.ne.s32.totalorder %s101, %s102
      %p114 = scmp.eq.s32.totalorder %s29, 3
      %p115 = por %p113, %p114
      %p117 = scmp.ne.s32.totalorder %s102, %s116
      %p118 = scmp.eq.s32.totalorder %s29, 0
      %p119 = por %p117, %p118
      %s121 = sadd.s32 %s120, 1
      %p124 = scmp.eq.s32.totalorder %s23, 3
      %p125 = scmp.ne.s32.totalorder %s120, %s122
      %p126 = scmp.eq.s32.totalorder %s23, 0
      %p127 = por %p125, %p126
      %p128 = scmp.ne.s32.totalorder %s120, %s122
      %p129 = scmp.eq.s32.totalorder %s28, 3
      %p130 = por %p128, %p129
      %p131 = scmp.ne.s32.totalorder %s122, %s123
      %p132 = scmp.eq.s32.totalorder %s28, 0
      %p133 = por %p131, %p132
      %p134 = scmp.ne.s32.totalorder %s122, %s123
      %p135 = scmp.eq.s32.totalorder %s29, 3
      %p136 = por %p134, %p135
      %p138 = scmp.ne.s32.totalorder %s123, %s137
      %p139 = scmp.eq.s32.totalorder %s29, 0
      %p140 = por %p138, %p139
      %s142 = sadd.s32 %s141, 1
      %p145 = scmp.eq.s32.totalorder %s23, 3
      %p146 = scmp.ne.s32.totalorder %s141, %s143
      %p147 = scmp.eq.s32.totalorder %s23, 0
      %p148 = por %p146, %p147
      %p149 = scmp.ne.s32.totalorder %s141, %s143
      %p150 = scmp.eq.s32.totalorder %s28, 3
      %p151 = por %p149, %p150
      %p152 = scmp.ne.s32.totalorder %s143, %s144
      %p153 = scmp.eq.s32.totalorder %s28, 0
      %p154 = por %p152, %p153
      %p155 = scmp.ne.s32.totalorder %s143, %s144
      %p156 = scmp.eq.s32.totalorder %s29, 3
      %p157 = por %p155, %p156
      %p159 = scmp.ne.s32.totalorder %s144, %s158
      %p160 = scmp.eq.s32.totalorder %s29, 0
      %p161 = por %p159, %p160
      %s163 = sadd.s32 %s162, 1
      %p166 = scmp.eq.s32.totalorder %s23, 3
      %p167 = scmp.ne.s32.totalorder %s162, %s164
      %p168 = scmp.eq.s32.totalorder %s23, 0
      %p169 = por %p167, %p168
      %p170 = scmp.ne.s32.totalorder %s162, %s164
      %p171 = scmp.eq.s32.totalorder %s28, 3
      %p172 = por %p170, %p171
      %p173 = scmp.ne.s32.totalorder %s164, %s165
      %p174 = scmp.eq.s32.totalorder %s28, 0
      %p175 = por %p173, %p174
      %p176 = scmp.ne.s32.totalorder %s164, %s165
      %p177 = scmp.eq.s32.totalorder %s29, 3
      %p178 = por %p176, %p177
      %p180 = scmp.ne.s32.totalorder %s165, %s179
      %p181 = scmp.eq.s32.totalorder %s29, 0
      %p182 = por %p180, %p181
      %s183 = ssub.s32 %s31, %s38
      %s184 = ssub.s32 %s30, %s42
      %s185 = sor.u32 %s183, %s184
      %p186 = scmp.eq.s32.totalorder %s185, 0
      %s188 = sadd.s32 %s187, 1
      %s189 = scalar_select %p186, %s187, %s188
      %p192 = pneg %p186
      %p193 = scmp.eq.s32.totalorder %s23, 3
      %p194 = por %p192, %p193
      %p195 = scmp.ne.s32.totalorder %s187, %s190
      %p196 = scmp.eq.s32.totalorder %s23, 0
      %p197 = por %p195, %p196
      %p198 = scmp.ne.s32.totalorder %s187, %s190
      %p199 = scmp.eq.s32.totalorder %s28, 3
      %p200 = por %p198, %p199
      %p201 = scmp.ne.s32.totalorder %s190, %s191
      %p202 = scmp.eq.s32.totalorder %s28, 0
      %p203 = por %p201, %p202
      %p204 = scmp.ne.s32.totalorder %s190, %s191
      %p205 = scmp.eq.s32.totalorder %s29, 3
      %p206 = por %p204, %p205
      %p208 = scmp.ne.s32.totalorder %s191, %s207
      %p209 = scmp.eq.s32.totalorder %s29, 0
      %p210 = por %p208, %p209
      %p211 = scmp.le.s32.totalorder 1, %s23
      %p212 = scmp.lt.s32.totalorder %s23, 5
      %p213 = pnand %p211, %p212
      %p214 = pneg %p213
      // Predicated region
      $region9: #{residual_block.7} parent=5 // pred_check
        _
      $region10: #{residual_block.7} parent=5 // pred_check_branch
        %216 = sbr.rel (%p213) target = $region12
      $region11: #{residual_block.7} parent=5 // pred_region
        %s217 = ssub.s32 %s23, 1
        // Predicated region
        $region13: #{residual_block.7} parent=11 // pred_check
          %p218 = pneg %p112
        $region14: #{residual_block.7} parent=11 // pred_check_branch
          %220 = sbr.rel (%p218) target = $region16
        $region15: #{residual_block.7} parent=11 // pred_region
          %s222 = ssub.s32 128, 128
          %223 = vsyncadd [#allocation6], %s222
          %s225 = sshll.u32 [#allocation7], 4
          %s226 = int_to_ptr.vmem [resolvable:$true] %s225
          %228 = dma.hbm_to_vmem [thread:$0]  %s2, 128, %s226, [#allocation6]
        $region16: #{residual_block.7} parent=11 // pred_fallthru
          _
        // Predicated region
        $region17: #{residual_block.7} parent=11 // pred_check
          %p229 = pneg %p133
        $region18: #{residual_block.7} parent=11 // pred_check_branch
          %231 = sbr.rel (%p229) target = $region20
        $region19: #{residual_block.7} parent=11 // pred_region
          %s233 = ssub.s32 16, 16
          %234 = vsyncadd [#allocation9], %s233
          %s236 = sshll.u32 [#allocation8], 4
          %s237 = int_to_ptr.vmem [resolvable:$true] %s236
          %239 = dma.hbm_to_vmem [thread:$0]  %s3, 16, %s237, [#allocation9]
        $region20: #{residual_block.7} parent=11 // pred_fallthru
          _
        // Predicated region
        $region21: #{residual_block.7} parent=11 // pred_check
          %p240 = pneg %p154
        $region22: #{residual_block.7} parent=11 // pred_check_branch
          %242 = sbr.rel (%p240) target = $region24
        $region23: #{residual_block.7} parent=11 // pred_region
          %s244 = ssub.s32 16, 16
          %245 = vsyncadd [#allocation9], %s244
          %s247 = sshll.u32 [#allocation10], 4
          %s248 = int_to_ptr.vmem [resolvable:$true] %s247
          %250 = dma.hbm_to_vmem [thread:$0]  %s4, 16, %s248, [#allocation9]
        $region24: #{residual_block.7} parent=11 // pred_fallthru
          _
        // Predicated region
        $region25: #{residual_block.7} parent=11 // pred_check
          %p251 = pneg %p175
        $region26: #{residual_block.7} parent=11 // pred_check_branch
          %253 = sbr.rel (%p251) target = $region28
        $region27: #{residual_block.7} parent=11 // pred_region
          %s255 = ssub.s32 128, 128
          %256 = vsyncadd [#allocation12], %s255
          %s258 = sshll.u32 [#allocation11], 4
          %s259 = int_to_ptr.vmem [resolvable:$true] %s258
          %261 = dma.hbm_to_vmem [thread:$0]  %s5, 128, %s259, [#allocation12]
        $region28: #{residual_block.7} parent=11 // pred_fallthru
          _
      $region12: #{residual_block.7} parent=5 // pred_fallthru
        _
      %p262 = scmp.lt.s32.totalorder %s23, 4
      // Predicated region
      $region29: #{residual_block.7} parent=5 // pred_check
        %p263 = pneg %p262
      $region30: #{residual_block.7} parent=5 // pred_check_branch
        %265 = sbr.rel (%p263) target = $region32
      $region31: #{residual_block.7} parent=5 // pred_region
        // Predicated region
        $region33: #{residual_block.7} parent=31 // pred_check
          %p266 = pneg %p57
        $region34: #{residual_block.7} parent=31 // pred_check_branch
          %268 = sbr.rel (%p266) target = $region36
        $region35: #{residual_block.7} parent=31 // pred_region
          %s269 = sand.u32 %s47, 1
          %s270 = scalar_lea.sflag [#allocation3], %s269
          %s271 = sand.u32 %s47, 1
          %s272 = smul.addr %s271, 128
          %s273 = scalar_lea.vmem [#allocation2], %s272
          %s274 = smul.u32 16, %s30
          %s276 = ssub.s32 2048, 2048
          %277 = vsyncadd %s270, %s276
          %s278 = smul.addr %s31, 32
          %s279 = sadd.s32 %s274, %s278
          %s280 = smul.addr %s279, 128
          %s281 = scalar_lea.hbm %s0, %s280
          %s282 = sshll.u32 %s273, 4
          %s283 = int_to_ptr.vmem [resolvable:$true] %s282
          %288 = dma.hbm_to_vmem [thread:$0]  %s281, 2048, %s283, %s270, 128, 128, 8
        $region36: #{residual_block.7} parent=31 // pred_fallthru
          _
        // Predicated region
        $region37: #{residual_block.7} parent=31 // pred_check
          %p289 = pneg %p85
        $region38: #{residual_block.7} parent=31 // pred_check_branch
          %291 = sbr.rel (%p289) target = $region40
        $region39: #{residual_block.7} parent=31 // pred_region
          %s292 = sand.u32 %s23, 1
          %s293 = scalar_lea.sflag [#allocation6], %s292
          %s294 = sand.u32 %s75, 1
          %s295 = smul.addr %s294, 4
          %s296 = scalar_lea.vmem [#allocation5], %s295
          %s298 = ssub.s32 64, 64
          %299 = vsyncadd %s293, %s298
          %s300 = smul.addr %s31, 2
          %s301 = sadd.s32 %s30, %s300
          %s302 = smul.addr %s301, 64
          %s303 = scalar_lea.hbm %s1, %s302
          %s305 = sshll.u32 %s296, 4
          %s306 = int_to_ptr.vmem [resolvable:$true] %s305
          %308 = dma.hbm_to_vmem [thread:$0]  %s303, 64, %s306, %s293
        $region40: #{residual_block.7} parent=31 // pred_fallthru
          _
      $region32: #{residual_block.7} parent=5 // pred_fallthru
        _
      %p309 = scmp.le.s32.totalorder 1, %s23
      %p310 = scmp.lt.s32.totalorder %s23, 5
      %p311 = pnand %p309, %p310
      %p312 = pneg %p311
      // Predicated region
      $region41: #{residual_block.7} parent=5 // pred_check
        _
      $region42: #{residual_block.7} parent=5 // pred_check_branch
        %314 = sbr.rel (%p311) target = $region44
      $region43: #{residual_block.7} parent=5 // pred_region
        %s315 = ssub.s32 %s23, 1
        %s316 = sand.u32 %s50, 1
        %s317 = scalar_lea.sflag [#allocation3], %s316
        %s318 = sand.u32 %s50, 1
        %s319 = smul.addr %s318, 128
        %s320 = scalar_lea.vmem [#allocation2], %s319
        // Predicated region
        $region45: #{residual_block.7} parent=43 // pred_check
          %p321 = pneg %p63
        $region46: #{residual_block.7} parent=43 // pred_check_branch
          %323 = sbr.rel (%p321) target = $region48
        $region47: #{residual_block.7} parent=43 // pred_region
          %324 = dma.done %s317, 2048
        $region48: #{residual_block.7} parent=43 // pred_fallthru
          _
        %s325 = sand.u32 %s28, 1
        %s326 = scalar_lea.sflag [#allocation6], %s325
        %s327 = sand.u32 %s78, 1
        %s328 = smul.addr %s327, 4
        %s329 = scalar_lea.vmem [#allocation5], %s328
        // Predicated region
        $region49: #{residual_block.7} parent=43 // pred_check
          %p330 = pneg %p91
        $region50: #{residual_block.7} parent=43 // pred_check_branch
          %332 = sbr.rel (%p330) target = $region52
        $region51: #{residual_block.7} parent=43 // pred_region
          %333 = dma.done %s326, 64
        $region52: #{residual_block.7} parent=43 // pred_fallthru
          _
        // Predicated region
        $region53: #{residual_block.7} parent=43 // pred_check
          %p334 = pneg %p112
        $region54: #{residual_block.7} parent=43 // pred_check_branch
          %336 = sbr.rel (%p334) target = $region56
        $region55: #{residual_block.7} parent=43 // pred_region
          %337 = dma.done [#allocation6], 128
        $region56: #{residual_block.7} parent=43 // pred_fallthru
          _
        // Predicated region
        $region57: #{residual_block.7} parent=43 // pred_check
          %p338 = pneg %p133
        $region58: #{residual_block.7} parent=43 // pred_check_branch
          %340 = sbr.rel (%p338) target = $region60
        $region59: #{residual_block.7} parent=43 // pred_region
          %341 = dma.done [#allocation9], 16
        $region60: #{residual_block.7} parent=43 // pred_fallthru
          _
        // Predicated region
        $region61: #{residual_block.7} parent=43 // pred_check
          %p342 = pneg %p154
        $region62: #{residual_block.7} parent=43 // pred_check_branch
          %344 = sbr.rel (%p342) target = $region64
        $region63: #{residual_block.7} parent=43 // pred_region
          %345 = dma.done [#allocation9], 16
        $region64: #{residual_block.7} parent=43 // pred_fallthru
          _
        // Predicated region
        $region65: #{residual_block.7} parent=43 // pred_check
          %p346 = pneg %p175
        $region66: #{residual_block.7} parent=43 // pred_check_branch
          %348 = sbr.rel (%p346) target = $region68
        $region67: #{residual_block.7} parent=43 // pred_region
          %349 = dma.done [#allocation12], 128
        $region68: #{residual_block.7} parent=43 // pred_fallthru
          _
        %s350 = sand.u32 %s50, 1
        %s351 = scalar_lea.sflag [#allocation3], %s350
        %s352 = sand.u32 %s50, 1
        %s353 = smul.addr %s352, 128
        %s354 = scalar_lea.vmem [#allocation2], %s353
        %p355 = pneg %p63
        %p356 = pneg %p60
        %s357 = sand.u32 %s28, 1
        %s358 = scalar_lea.sflag [#allocation6], %s357
        %s359 = sand.u32 %s78, 1
        %s360 = smul.addr %s359, 4
        %s361 = scalar_lea.vmem [#allocation5], %s360
        %p362 = pneg %p91
        %p363 = pneg %p88
        %p364 = pneg %p112
        %p365 = pneg %p109
        %p366 = pneg %p133
        %p367 = pneg %p130
        %p368 = pneg %p154
        %p369 = pneg %p151
        %p370 = pneg %p175
        %p371 = pneg %p172
        %p372 = pneg %p203
        %p373 = pneg %p200
        %s374 = sand.u32 %s190, 1
        %s375 = scalar_lea.sflag [#allocation4], %s374
        %s376 = sand.u32 %s190, 1
        %s377 = smul.addr %s376, 8
        %s378 = scalar_lea.vmem [#allocation13], %s377
        %s379 = smul.u32 16, %s32
        %v380 = vld [vmem:[%s320] sm:$0xff]
        %v381 = vld [vmem:[%s320 + $0x8] sm:$0xff]
        %v382 = vld [vmem:[%s320 + $0x10] sm:$0xff]
        %v383 = vld [vmem:[%s320 + $0x18] sm:$0xff]
        %v384 = vld [vmem:[%s320 + $0x20] sm:$0xff]
        %v385 = vld [vmem:[%s320 + $0x28] sm:$0xff]
        %v386 = vld [vmem:[%s320 + $0x30] sm:$0xff]
        %v387 = vld [vmem:[%s320 + $0x38] sm:$0xff]
        %v388 = vld [vmem:[%s320 + $0x40] sm:$0xff]
        %v389 = vld [vmem:[%s320 + $0x48] sm:$0xff]
        %v390 = vld [vmem:[%s320 + $0x50] sm:$0xff]
        %v391 = vld [vmem:[%s320 + $0x58] sm:$0xff]
        %v392 = vld [vmem:[%s320 + $0x60] sm:$0xff]
        %v393 = vld [vmem:[%s320 + $0x68] sm:$0xff]
        %v394 = vld [vmem:[%s320 + $0x70] sm:$0xff]
        %v395 = vld [vmem:[%s320 + $0x78] sm:$0xff]
        %v396 = vld [vmem:[#allocation8] sm:$0x1]
        %v398 = vlaneseq
        %v399 = vshrl.u32 %v398, 7
        %v400 = vsub.s32 0, %v399
        %v401 = vrot.slane %v396, %v400
        %v403 = vmul.f32 %v380, %v401
        %v404 = vmul.f32 %v381, %v401
        %v405 = vmul.f32 %v382, %v401
        %v406 = vmul.f32 %v383, %v401
        %v407 = vmul.f32 %v384, %v401
        %v408 = vmul.f32 %v385, %v401
        %v409 = vmul.f32 %v386, %v401
        %v410 = vmul.f32 %v387, %v401
        %v411 = vmul.f32 %v388, %v401
        %v412 = vmul.f32 %v389, %v401
        %v413 = vmul.f32 %v390, %v401
        %v414 = vmul.f32 %v391, %v401
        %v415 = vmul.f32 %v392, %v401
        %v416 = vmul.f32 %v393, %v401
        %v417 = vmul.f32 %v394, %v401
        %v418 = vmul.f32 %v395, %v401
        %v419 = vld [vmem:[#allocation10] sm:$0x1]
        %v421 = vlaneseq
        %v422 = vshrl.u32 %v421, 7
        %v423 = vsub.s32 0, %v422
        %v424 = vrot.slane %v419, %v423
        %v426 = vadd.f32 %v403, %v424
        %v427 = vadd.f32 %v404, %v424
        %v428 = vadd.f32 %v405, %v424
        %v429 = vadd.f32 %v406, %v424
        %v430 = vadd.f32 %v407, %v424
        %v431 = vadd.f32 %v408, %v424
        %v432 = vadd.f32 %v409, %v424
        %v433 = vadd.f32 %v410, %v424
        %v434 = vadd.f32 %v411, %v424
        %v435 = vadd.f32 %v412, %v424
        %v436 = vadd.f32 %v413, %v424
        %v437 = vadd.f32 %v414, %v424
        %v438 = vadd.f32 %v415, %v424
        %v439 = vadd.f32 %v416, %v424
        %v440 = vadd.f32 %v417, %v424
        %v441 = vadd.f32 %v418, %v424
        %v442 = vld [vmem:[%s329] sm:$0xf]
        %v443 = vld [vmem:[#allocation7] sm:$0xff]
        %v444 = vld [vmem:[#allocation11] sm:$0xff]
        %446 = vset.pattern.permute.xlu0 0
        %447 = vperm.xlu0 %446, %v444
        %v448 = vpop.permute.xlu0 %447
        %vm450 = vcmask 31744
        %v452 = vsel %vm450, %v443, 0
        %vm454 = vcmask 1043456
        %v456 = vsel %vm454, %v442, 0
        %458 = vmatprep.subr.mxu0 0.0
        %459 = vmatpush1.msra.mxu0 %v456
        %460 = vmatprep.subr.mxu0 0.0
        %461 = vmatpush1.msra.mxu0 0.0
        %462 = vmatprep.subr.mxu0 0.0
        %463 = vmatpush1.msra.mxu0 0.0
        %464 = vmatprep.subr.mxu0 0.0
        %465 = vmatpush1.msra.mxu0 0.0
        %466 = vmatprep.subr.mxu0 0.0
        %467 = vmatpush1.msra.mxu0 0.0
        %468 = vmatprep.subr.mxu0 0.0
        %469 = vmatpush1.msra.mxu0 0.0
        %470 = vmatprep.subr.mxu0 0.0
        %471 = vmatpush1.msra.mxu0 0.0
        %472 = vmatprep.subr.mxu0 0.0
        %473 = vmatpush1.msra.mxu0 0.0
        %474 = vmatprep.subr.mxu0 0.0
        %475 = vmatpush1.msra.mxu0 0.0
        %476 = vmatprep.subr.mxu0 0.0
        %477 = vmatpush1.msra.mxu0 0.0
        %478 = vmatprep.subr.mxu0 0.0
        %479 = vmatpush1.msra.mxu0 0.0
        %480 = vmatprep.subr.mxu0 0.0
        %481 = vmatpush1.msra.mxu0 0.0
        %482 = vmatprep.subr.mxu0 0.0
        %483 = vmatpush1.msra.mxu0 0.0
        %484 = vmatprep.subr.mxu0 0.0
        %485 = vmatpush1.msra.mxu0 0.0
        %486 = vmatprep.subr.mxu0 0.0
        %487 = vmatpush1.msra.mxu0 0.0
        %488 = vmatprep.subr.mxu0 0.0
        %489 = vmatpush1.msra.mxu0 0.0
        %490 = vmatprep.subr.mxu0 0.0
        %491 = vmatpush1.msra.mxu0 0.0
        %492 = vmatprep.subr.mxu0 0.0
        %493 = vmatpush1.msra.mxu0 0.0
        %494 = vmatprep.subr.mxu0 0.0
        %495 = vmatpush1.msra.mxu0 0.0
        %496 = vmatprep.subr.mxu0 0.0
        %497 = vmatpush1.msra.mxu0 0.0
        %498 = vmatprep.subr.mxu0 0.0
        %499 = vmatpush1.msra.mxu0 0.0
        %500 = vmatprep.subr.mxu0 0.0
        %501 = vmatpush1.msra.mxu0 0.0
        %502 = vmatprep.subr.mxu0 0.0
        %503 = vmatpush1.msra.mxu0 0.0
        %504 = vmatprep.subr.mxu0 0.0
        %505 = vmatpush1.msra.mxu0 0.0
        %506 = vmatprep.subr.mxu0 0.0
        %507 = vmatpush1.msra.mxu0 0.0
        %508 = vmatprep.subr.mxu0 0.0
        %509 = vmatpush1.msra.mxu0 0.0
        %510 = vmatprep.subr.mxu0 0.0
        %511 = vmatpush1.msra.mxu0 0.0
        %512 = vmatprep.subr.mxu0 0.0
        %513 = vmatpush1.msra.mxu0 0.0
        %514 = vmatprep.subr.mxu0 0.0
        %515 = vmatpush1.msra.mxu0 0.0
        %516 = vmatprep.subr.mxu0 0.0
        %517 = vmatpush1.msra.mxu0 0.0
        %518 = vmatprep.subr.mxu0 0.0
        %519 = vmatpush1.msra.mxu0 0.0
        %520 = vmatprep.subr.mxu0 0.0
        %521 = vmatpush1.msra.mxu0 0.0
        %522 = vmatprep.mubr.f32.mxu0 0.0
        %523 = vmatmul.mubr.f32.gmra.mrb[0].mxu0 %v452
        %v524 = vpop.f32.mrb[0].mxu0
        %v525 = vadd.f32 %v448, %v524
        %v526 = vpop.f32.mrb[0].mxu0
        %527 = vdwg.mxu0
        %528 = vxpose.xlu0.b32.start [1/16] %v426, 128
        %529 = vxpose.xlu0.b32.cont [2/16] %v427, 128
        %530 = vxpose.xlu0.b32.cont [3/16] %v428, 128
        %531 = vxpose.xlu0.b32.cont [4/16] %v429, 128
        %532 = vxpose.xlu0.b32.cont [5/16] %v430, 128
        %533 = vxpose.xlu0.b32.cont [6/16] %v431, 128
        %534 = vxpose.xlu0.b32.cont [7/16] %v432, 128
        %535 = vxpose.xlu0.b32.cont [8/16] %v433, 128
        %536 = vxpose.xlu0.b32.cont [9/16] %v434, 128
        %537 = vxpose.xlu0.b32.cont [10/16] %v435, 128
        %538 = vxpose.xlu0.b32.cont [11/16] %v436, 128
        %539 = vxpose.xlu0.b32.cont [12/16] %v437, 128
        %540 = vxpose.xlu0.b32.cont [13/16] %v438, 128
        %541 = vxpose.xlu0.b32.cont [14/16] %v439, 128
        %542 = vxpose.xlu0.b32.cont [15/16] %v440, 128
        %543 = vxpose.xlu0.b32.end [16/16] %v441, 128
        %v544 = vpop.trf.xlu0
        %v545 = vpop.trf.xlu0
        %v546 = vpop.trf.xlu0
        %v547 = vpop.trf.xlu0
        %v548 = vpop.trf.xlu0
        %v549 = vpop.trf.xlu0
        %v550 = vpop.trf.xlu0
        %v551 = vpop.trf.xlu0
        %v552 = vpop.trf.xlu0
        %v553 = vpop.trf.xlu0
        %v554 = vpop.trf.xlu0
        %v555 = vpop.trf.xlu0
        %v556 = vpop.trf.xlu0
        %v557 = vpop.trf.xlu0
        %v558 = vpop.trf.xlu0
        %v559 = vpop.trf.xlu0
        %v560 = vadd.f32 %v544, %v525
        %v561 = vmax.f32 %v560, 0.0
        %562 = vst [vmem:[%s378] sm:$0xff] %v561
        %s563 = sand.u32 %s190, 1
        %s564 = scalar_lea.sflag [#allocation4], %s563
        %s565 = sand.u32 %s190, 1
        %s566 = smul.addr %s565, 8
        %s567 = scalar_lea.vmem [#allocation13], %s566
        // Predicated region
        $region69: #{residual_block.7} parent=43 // pred_check
          %p568 = pneg %p200
        $region70: #{residual_block.7} parent=43 // pred_check_branch
          %570 = sbr.rel (%p568) target = $region72
        $region71: #{residual_block.7} parent=43 // pred_region
          %s572 = ssub.s32 128, 128
          %573 = vsyncadd %s564, %s572
          %s574 = smul.addr %s33, 2
          %s575 = sadd.s32 %s32, %s574
          %s576 = smul.addr %s575, 128
          %s577 = scalar_lea.hbm %s6, %s576
          %s579 = sshll.u32 %s567, 4
          %s580 = int_to_ptr.vmem [resolvable:$true] %s579
          %582 = dma.vmem_to_hbm [thread:$0]  %s580, 128, %s577, %s564
        $region72: #{residual_block.7} parent=43 // pred_fallthru
          _
      $region44: #{residual_block.7} parent=5 // pred_fallthru
        _
      %p583 = scmp.le.s32.totalorder 2, %s23
      // Predicated region
      $region73: #{residual_block.7} parent=5 // pred_check
        %p584 = pneg %p583
      $region74: #{residual_block.7} parent=5 // pred_check_branch
        %586 = sbr.rel (%p584) target = $region76
      $region75: #{residual_block.7} parent=5 // pred_region
        %s587 = ssub.s32 %s23, 2
        // Predicated region
        $region77: #{residual_block.7} parent=75 // pred_check
          %p588 = pneg %p206
        $region78: #{residual_block.7} parent=75 // pred_check_branch
          %590 = sbr.rel (%p588) target = $region80
        $region79: #{residual_block.7} parent=75 // pred_region
          %s591 = sand.u32 %s191, 1
          %s592 = scalar_lea.sflag [#allocation4], %s591
          %s593 = sand.u32 %s191, 1
          %s594 = smul.addr %s593, 8
          %s595 = scalar_lea.vmem [#allocation13], %s594
          %596 = dma.done %s592, 128
        $region80: #{residual_block.7} parent=75 // pred_fallthru
          _
      $region76: #{residual_block.7} parent=5 // pred_fallthru
        _
    $region6: #{residual_block.7} parent=1 // loop_footer
      %s27 = sadd.s32 1, %s23
    $region7: #{residual_block.7} parent=1 // loop_footer_branch
      %22 = sbr.rel target = $region3
    $region8: #{residual_block.7} parent=1 // loop_exit
      _
    %597 = vsyncpa [#allocation3], 1
    %s598 = scalar_lea.sflag [#allocation3], 1
    %599 = vsyncpa %s598, 1
    %600 = vsyncpa [#allocation6], 1
    %s601 = scalar_lea.sflag [#allocation6], 1
    %602 = vsyncpa %s601, 1
    %603 = vsyncpa [#allocation9], 1
    %604 = vsyncpa [#allocation12], 1
    %605 = vsyncpa [#allocation4], 1
    %s606 = scalar_lea.sflag [#allocation4], 1
    %607 = vsyncpa %s606, 1

// kernel: residual_block.5
$region0: #{residual_block.5}
  #allocation0 [shape = 'u32[]', space=smem, size = 0x4, offset = 0x4, fixed_abs, tag = 'smem constant byte address 0x4 - core index']
  #allocation1 [shape = 'u32[144,128]{1,0:T(1,128)}', space=vmem, size = 0x12000, scoped, tag = 'internal scratch']
  #allocation2 [shape = 'f32[18,18,8]{2,1,0:T(8,128)}', space=vmem, size = 0x36000, scoped, tag = 'scratch operand']
  %s0 = inlined_call_operand.hbm [shape: f32[2,256,8], index: 0, kind: input, shape index: {}]
  %s1 = inlined_call_operand.hbm [shape: f32[3,3,8,8], index: 1, kind: input, shape index: {}]
  %s2 = inlined_call_operand.hbm [shape: f32[1,8], index: 2, kind: input, shape index: {}]
  %s3 = inlined_call_operand.hbm [shape: f32[1,8], index: 3, kind: input, shape index: {}]
  %s4 = inlined_call_operand.hbm [shape: f32[2,256,8], index: 4, kind: output, shape index: {0}]
  %s5 = inlined_call_operand.hbm [shape: f32[2,2,8], index: 5, kind: output, shape index: {1}]
  %6 = xla_tuple %s4, %s5
  %s7 = sld [smem:[#allocation0]]
  $region73: #{residual_block.5} parent=0
    _
  %s9 = ssub.s32 1, %s7
  %s10 = scalar_select 0, %s9, %s7
  $region1: #{residual_block.5} parent=0
    #allocation3 [shape = 'u8[262144]{0}', space=vmem, size = 0x40000, scoped, tag = 'input window, operand 0']
    #allocation4 [shape = 's32[2]{0}', space=sflag, size = 0x8, scoped, tag = 'scoped memory for residual_block.5']
    #allocation5 [shape = 's32[2]{0}', space=sflag, size = 0x8, scoped, tag = 'scoped memory for residual_block.5']
    #allocation6 [shape = 'u8[36864]{0}', space=vmem, size = 0x9000, scoped, tag = 'input window, operand 1, single buffered']
    #allocation7 [shape = 's32[1]{0}', space=sflag, size = 0x4, scoped, tag = 'scoped memory for residual_block.5']
    #allocation8 [shape = 'u8[512]{0}', space=vmem, size = 0x400, scoped, tag = 'input window, operand 2, single buffered']
    #allocation9 [shape = 'u8[512]{0}', space=vmem, size = 0x400, scoped, tag = 'input window, operand 3, single buffered']
    #allocation10 [shape = 's32[1]{0}', space=sflag, size = 0x4, scoped, tag = 'scoped memory for residual_block.5']
    #allocation11 [shape = 'u8[262144]{0}', space=vmem, size = 0x40000, scoped, tag = 'output window, operand 0']
    #allocation12 [shape = 'u8[2048]{0}', space=vmem, size = 0x800, scoped, tag = 'output window, operand 1']
    #allocation13 [shape = 's32[2]{0}', space=sflag, size = 0x8, scoped, tag = 'scoped memory for residual_block.5']
    %11 = vsyncpa [#allocation4], 0
    %s12 = scalar_lea.sflag [#allocation4], 1
    %13 = vsyncpa %s12, 0
    %14 = vsyncpa [#allocation7], 0
    %15 = vsyncpa [#allocation10], 0
    %16 = vsyncpa [#allocation5], 0
    %s17 = scalar_lea.sflag [#allocation5], 1
    %18 = vsyncpa %s17, 0
    %19 = vsyncpa [#allocation13], 0
    %s20 = scalar_lea.sflag [#allocation13], 1
    %21 = vsyncpa %s20, 0
    loop: start=0, step=1, limit=4
    $region2: #{residual_block.5} parent=1 // loop_pre_header
      _
    $region3: #{residual_block.5} parent=1 // loop_header
      %s23 = sphi 0, %s27
      %p24 = scmp.ge.s32.totalorder %s23, 4
      %s33 = sphi 0, %s35
      %s36 = sphi 0, %s33
      %s37 = sphi 0, %s36
      %s53 = sphi 0, %s37
      %s57 = sphi 0, %s57
      %s59 = sphi 0, %s57
      %s60 = sphi 0, %s59
      %s74 = sphi 0, %s60
      %s78 = sphi 0, %s78
      %s80 = sphi 0, %s78
      %s81 = sphi 0, %s80
      %s95 = sphi 0, %s81
      %s99 = sphi 0, %s99
      %s101 = sphi 0, %s99
      %s102 = sphi 0, %s101
      %s116 = sphi 0, %s102
      %s122 = sphi 0, %s124
      %s125 = sphi 0, %s122
      %s126 = sphi 0, %s125
      %s142 = sphi 0, %s126
      %s148 = sphi 0, %s150
      %s151 = sphi 0, %s148
      %s152 = sphi 0, %s151
      %s168 = sphi 0, %s152
    $region4: #{residual_block.5} parent=1 // loop_header_branch
      %26 = sbr.rel (%p24) target = $region8
    $region5: #{residual_block.5} parent=1 // loop_body
      %s28 = ssub.s32 %s23, 1
      %s29 = ssub.s32 %s23, 2
      %s30 = sadd.s32 %s23, 1
      %s31 = ssub.s32 %s23, %s30
      %p32 = scmp.eq.s32.totalorder %s31, 0
      %s34 = sadd.s32 %s33, 1
      %s35 = scalar_select %p32, %s33, %s34
      %p38 = pneg %p32
      %p39 = scmp.eq.s32.totalorder %s23, 1
      %p40 = por %p38, %p39
      %p41 = scmp.ne.s32.totalorder %s33, %s36
      %p42 = scmp.eq.s32.totalorder %s23, 0
      %p43 = por %p41, %p42
      %p44 = scmp.ne.s32.totalorder %s33, %s36
      %p45 = scmp.eq.s32.totalorder %s28, 1
      %p46 = por %p44, %p45
      %p47 = scmp.ne.s32.totalorder %s36, %s37
      %p48 = scmp.eq.s32.totalorder %s28, 0
      %p49 = por %p47, %p48
      %p50 = scmp.ne.s32.totalorder %s36, %s37
      %p51 = scmp.eq.s32.totalorder %s29, 1
      %p52 = por %p50, %p51
      %p54 = scmp.ne.s32.totalorder %s37, %s53
      %p55 = scmp.eq.s32.totalorder %s29, 0
      %p56 = por %p54, %p55
      %s58 = sadd.s32 %s57, 1
      %p61 = scmp.eq.s32.totalorder %s23, 1
      %p62 = scmp.ne.s32.totalorder %s57, %s59
      %p63 = scmp.eq.s32.totalorder %s23, 0
      %p64 = por %p62, %p63
      %p65 = scmp.ne.s32.totalorder %s57, %s59
      %p66 = scmp.eq.s32.totalorder %s28, 1
      %p67 = por %p65, %p66
      %p68 = scmp.ne.s32.totalorder %s59, %s60
      %p69 = scmp.eq.s32.totalorder %s28, 0
      %p70 = por %p68, %p69
      %p71 = scmp.ne.s32.totalorder %s59, %s60
      %p72 = scmp.eq.s32.totalorder %s29, 1
      %p73 = por %p71, %p72
      %p75 = scmp.ne.s32.totalorder %s60, %s74
      %p76 = scmp.eq.s32.totalorder %s29, 0
      %p77 = por %p75, %p76
      %s79 = sadd.s32 %s78, 1
      %p82 = scmp.eq.s32.totalorder %s23, 1
      %p83 = scmp.ne.s32.totalorder %s78, %s80
      %p84 = scmp.eq.s32.totalorder %s23, 0
      %p85 = por %p83, %p84
      %p86 = scmp.ne.s32.totalorder %s78, %s80
      %p87 = scmp.eq.s32.totalorder %s28, 1
      %p88 = por %p86, %p87
      %p89 = scmp.ne.s32.totalorder %s80, %s81
      %p90 = scmp.eq.s32.totalorder %s28, 0
      %p91 = por %p89, %p90
      %p92 = scmp.ne.s32.totalorder %s80, %s81
      %p93 = scmp.eq.s32.totalorder %s29, 1
      %p94 = por %p92, %p93
      %p96 = scmp.ne.s32.totalorder %s81, %s95
      %p97 = scmp.eq.s32.totalorder %s29, 0
      %p98 = por %p96, %p97
      %s100 = sadd.s32 %s99, 1
      %p103 = scmp.eq.s32.totalorder %s23, 1
      %p104 = scmp.ne.s32.totalorder %s99, %s101
      %p105 = scmp.eq.s32.totalorder %s23, 0
      %p106 = por %p104, %p105
      %p107 = scmp.ne.s32.totalorder %s99, %s101
      %p108 = scmp.eq.s32.totalorder %s28, 1
      %p109 = por %p107, %p108
      %p110 = scmp.ne.s32.totalorder %s101, %s102
      %p111 = scmp.eq.s32.totalorder %s28, 0
      %p112 = por %p110, %p111
      %p113 = scmp.ne.s32.totalorder %s101, %s102
      %p114 = scmp.eq.s32.totalorder %s29, 1
      %p115 = por %p113, %p114
      %p117 = scmp.ne.s32.totalorder %s102, %s116
      %p118 = scmp.eq.s32.totalorder %s29, 0
      %p119 = por %p117, %p118
      %s120 = ssub.s32 %s23, %s30
      %p121 = scmp.eq.s32.totalorder %s120, 0
      %s123 = sadd.s32 %s122, 1
      %s124 = scalar_select %p121, %s122, %s123
      %p127 = pneg %p121
      %p128 = scmp.eq.s32.totalorder %s23, 1
      %p129 = por %p127, %p128
      %p130 = scmp.ne.s32.totalorder %s122, %s125
      %p131 = scmp.eq.s32.totalorder %s23, 0
      %p132 = por %p130, %p131
      %p133 = scmp.ne.s32.totalorder %s122, %s125
      %p134 = scmp.eq.s32.totalorder %s28, 1
      %p135 = por %p133, %p134
      %p136 = scmp.ne.s32.totalorder %s125, %s126
      %p137 = scmp.eq.s32.totalorder %s28, 0
      %p138 = por %p136, %p137
      %p139 = scmp.ne.s32.totalorder %s125, %s126
      %p140 = scmp.eq.s32.totalorder %s29, 1
      %p141 = por %p139, %p140
      %p143 = scmp.ne.s32.totalorder %s126, %s142
      %p144 = scmp.eq.s32.totalorder %s29, 0
      %p145 = por %p143, %p144
      %s146 = ssub.s32 %s23, %s30
      %p147 = scmp.eq.s32.totalorder %s146, 0
      %s149 = sadd.s32 %s148, 1
      %s150 = scalar_select %p147, %s148, %s149
      %p153 = pneg %p147
      %p154 = scmp.eq.s32.totalorder %s23, 1
      %p155 = por %p153, %p154
      %p156 = scmp.ne.s32.totalorder %s148, %s151
      %p157 = scmp.eq.s32.totalorder %s23, 0
      %p158 = por %p156, %p157
      %p159 = scmp.ne.s32.totalorder %s148, %s151
      %p160 = scmp.eq.s32.totalorder %s28, 1
      %p161 = por %p159, %p160
      %p162 = scmp.ne.s32.totalorder %s151, %s152
      %p163 = scmp.eq.s32.totalorder %s28, 0
      %p164 = por %p162, %p163
      %p165 = scmp.ne.s32.totalorder %s151, %s152
      %p166 = scmp.eq.s32.totalorder %s29, 1
      %p167 = por %p165, %p166
      %p169 = scmp.ne.s32.totalorder %s152, %s168
      %p170 = scmp.eq.s32.totalorder %s29, 0
      %p171 = por %p169, %p170
      %p172 = scmp.le.s32.totalorder 1, %s23
      %p173 = scmp.lt.s32.totalorder %s23, 3
      %p174 = pnand %p172, %p173
      %p175 = pneg %p174
      // Predicated region
      $region9: #{residual_block.5} parent=5 // pred_check
        _
      $region10: #{residual_block.5} parent=5 // pred_check_branch
        %177 = sbr.rel (%p174) target = $region12
      $region11: #{residual_block.5} parent=5 // pred_region
        %s178 = ssub.s32 %s23, 1
        // Predicated region
        $region13: #{residual_block.5} parent=11 // pred_check
          %p179 = pneg %p70
        $region14: #{residual_block.5} parent=11 // pred_check_branch
          %181 = sbr.rel (%p179) target = $region16
        $region15: #{residual_block.5} parent=11 // pred_region
          %s183 = ssub.s32 1152, 1152
          %184 = vsyncadd [#allocation7], %s183
          %s185 = sshll.u32 [#allocation6], 4
          %s186 = int_to_ptr.vmem [resolvable:$true] %s185
          %191 = dma.hbm_to_vmem [thread:$0]  %s1, 1152, %s186, [#allocation7], 128, 128, 8
        $region16: #{residual_block.5} parent=11 // pred_fallthru
          _
        // Predicated region
        $region17: #{residual_block.5} parent=11 // pred_check
          %p192 = pneg %p91
        $region18: #{residual_block.5} parent=11 // pred_check_branch
          %194 = sbr.rel (%p192) target = $region20
        $region19: #{residual_block.5} parent=11 // pred_region
          %s196 = ssub.s32 16, 16
          %197 = vsyncadd [#allocation7], %s196
          %s199 = sshll.u32 [#allocation8], 4
          %s200 = int_to_ptr.vmem [resolvable:$true] %s199
          %202 = dma.hbm_to_vmem [thread:$0]  %s2, 16, %s200, [#allocation7]
        $region20: #{residual_block.5} parent=11 // pred_fallthru
          _
        // Predicated region
        $region21: #{residual_block.5} parent=11 // pred_check
          %p203 = pneg %p112
        $region22: #{residual_block.5} parent=11 // pred_check_branch
          %205 = sbr.rel (%p203) target = $region24
        $region23: #{residual_block.5} parent=11 // pred_region
          %s207 = ssub.s32 16, 16
          %208 = vsyncadd [#allocation10], %s207
          %s210 = sshll.u32 [#allocation9], 4
          %s211 = int_to_ptr.vmem [resolvable:$true] %s210
          %213 = dma.hbm_to_vmem [thread:$0]  %s3, 16, %s211, [#allocation10]
        $region24: #{residual_block.5} parent=11 // pred_fallthru
          _
      $region12: #{residual_block.5} parent=5 // pred_fallthru
        _
      %p214 = scmp.lt.s32.totalorder %s23, 2
      // Predicated region
      $region25: #{residual_block.5} parent=5 // pred_check
        %p215 = pneg %p214
      $region26: #{residual_block.5} parent=5 // pred_check_branch
        %217 = sbr.rel (%p215) target = $region28
      $region27: #{residual_block.5} parent=5 // pred_region
        // Predicated region
        $region29: #{residual_block.5} parent=27 // pred_check
          %p218 = pneg %p43
        $region30: #{residual_block.5} parent=27 // pred_check_branch
          %220 = sbr.rel (%p218) target = $region32
        $region31: #{residual_block.5} parent=27 // pred_region
          %s221 = sand.u32 %s33, 1
          %s222 = scalar_lea.sflag [#allocation4], %s221
          %s223 = sand.u32 %s33, 1
          %s224 = smul.addr %s223, 256
          %s225 = scalar_lea.vmem [#allocation3], %s224
          %s227 = ssub.s32 4096, 4096
          %228 = vsyncadd %s222, %s227
          %s229 = smul.addr %s23, 32
          %s230 = smul.addr %s229, 128
          %s231 = scalar_lea.hbm %s0, %s230
          %s232 = sshll.u32 %s225, 4
          %s233 = int_to_ptr.vmem [resolvable:$true] %s232
          %238 = dma.hbm_to_vmem [thread:$0]  %s231, 4096, %s233, %s222, 128, 128, 8
        $region32: #{residual_block.5} parent=27 // pred_fallthru
          _
      $region28: #{residual_block.5} parent=5 // pred_fallthru
        _
      %p239 = scmp.le.s32.totalorder 1, %s23
      %p240 = scmp.lt.s32.totalorder %s23, 3
      %p241 = pnand %p239, %p240
      %p242 = pneg %p241
      // Predicated region
      $region33: #{residual_block.5} parent=5 // pred_check
        _
      $region34: #{residual_block.5} parent=5 // pred_check_branch
        %244 = sbr.rel (%p241) target = $region36
      $region35: #{residual_block.5} parent=5 // pred_region
        %s245 = ssub.s32 %s23, 1
        %s246 = sand.u32 %s36, 1
        %s247 = scalar_lea.sflag [#allocation4], %s246
        %s248 = sand.u32 %s36, 1
        %s249 = smul.addr %s248, 256
        %s250 = scalar_lea.vmem [#allocation3], %s249
        // Predicated region
        $region37: #{residual_block.5} parent=35 // pred_check
          %p251 = pneg %p49
        $region38: #{residual_block.5} parent=35 // pred_check_branch
          %253 = sbr.rel (%p251) target = $region40
        $region39: #{residual_block.5} parent=35 // pred_region
          %254 = dma.done %s247, 4096
        $region40: #{residual_block.5} parent=35 // pred_fallthru
          _
        // Predicated region
        $region41: #{residual_block.5} parent=35 // pred_check
          %p255 = pneg %p70
        $region42: #{residual_block.5} parent=35 // pred_check_branch
          %257 = sbr.rel (%p255) target = $region44
        $region43: #{residual_block.5} parent=35 // pred_region
          %258 = dma.done [#allocation7], 1152
        $region44: #{residual_block.5} parent=35 // pred_fallthru
          _
        // Predicated region
        $region45: #{residual_block.5} parent=35 // pred_check
          %p259 = pneg %p91
        $region46: #{residual_block.5} parent=35 // pred_check_branch
          %261 = sbr.rel (%p259) target = $region48
        $region47: #{residual_block.5} parent=35 // pred_region
          %262 = dma.done [#allocation7], 16
        $region48: #{residual_block.5} parent=35 // pred_fallthru
          _
        // Predicated region
        $region49: #{residual_block.5} parent=35 // pred_check
          %p263 = pneg %p112
        $region50: #{residual_block.5} parent=35 // pred_check_branch
          %265 = sbr.rel (%p263) target = $region52
        $region51: #{residual_block.5} parent=35 // pred_region
          %266 = dma.done [#allocation10], 16
        $region52: #{residual_block.5} parent=35 // pred_fallthru
          _
        %s267 = sand.u32 %s36, 1
        %s268 = scalar_lea.sflag [#allocation4], %s267
        %s269 = sand.u32 %s36, 1
        %s270 = smul.addr %s269, 256
        %s271 = scalar_lea.vmem [#allocation3], %s270
        %p272 = pneg %p49
        %p273 = pneg %p46
        %p274 = pneg %p70
        %p275 = pneg %p67
        %p276 = pneg %p91
        %p277 = pneg %p88
        %p278 = pneg %p112
        %p279 = pneg %p109
        %p280 = pneg %p138
        %p281 = pneg %p135
        %s282 = sand.u32 %s125, 1
        %s283 = scalar_lea.sflag [#allocation5], %s282
        %s284 = sand.u32 %s125, 1
        %s285 = smul.addr %s284, 256
        %s286 = scalar_lea.vmem [#allocation11], %s285
        %p287 = pneg %p164
        %p288 = pneg %p161
        %s289 = sand.u32 %s151, 1
        %s290 = scalar_lea.sflag [#allocation13], %s289
        %s291 = sand.u32 %s151, 1
        %s292 = smul.addr %s291, 2
        %s293 = scalar_lea.vmem [#allocation12], %s292
        %v294 = vld [vmem:[%s250] sm:$0xff]
        %v295 = vld [vmem:[%s250 + $0x8] sm:$0xff]
        %v296 = vld [vmem:[%s250 + $0x10] sm:$0xff]
        %v297 = vld [vmem:[%s250 + $0x18] sm:$0xff]
        %v298 = vld [vmem:[%s250 + $0x20] sm:$0xff]
        %v299 = vld [vmem:[%s250 + $0x28] sm:$0xff]
        %v300 = vld [vmem:[%s250 + $0x30] sm:$0xff]
        %v301 = vld [vmem:[%s250 + $0x38] sm:$0xff]
        %v302 = vld [vmem:[%s250 + $0x40] sm:$0xff]
        %v303 = vld [vmem:[%s250 + $0x48] sm:$0xff]
        %v304 = vld [vmem:[%s250 + $0x50] sm:$0xff]
        %v305 = vld [vmem:[%s250 + $0x58] sm:$0xff]
        %v306 = vld [vmem:[%s250 + $0x60] sm:$0xff]
        %v307 = vld [vmem:[%s250 + $0x68] sm:$0xff]
        %v308 = vld [vmem:[%s250 + $0x70] sm:$0xff]
        %v309 = vld [vmem:[%s250 + $0x78] sm:$0xff]
        %v310 = vld [vmem:[%s250 + $0x80] sm:$0xff]
        %v311 = vld [vmem:[%s250 + $0x88] sm:$0xff]
        %v312 = vld [vmem:[%s250 + $0x90] sm:$0xff]
        %v313 = vld [vmem:[%s250 + $0x98] sm:$0xff]
        %v314 = vld [vmem:[%s250 + $0xa0] sm:$0xff]
        %v315 = vld [vmem:[%s250 + $0xa8] sm:$0xff]
        %v316 = vld [vmem:[%s250 + $0xb0] sm:$0xff]
        %v317 = vld [vmem:[%s250 + $0xb8] sm:$0xff]
        %v318 = vld [vmem:[%s250 + $0xc0] sm:$0xff]
        %v319 = vld [vmem:[%s250 + $0xc8] sm:$0xff]
        %v320 = vld [vmem:[%s250 + $0xd0] sm:$0xff]
        %v321 = vld [vmem:[%s250 + $0xd8] sm:$0xff]
        %v322 = vld [vmem:[%s250 + $0xe0] sm:$0xff]
        %v323 = vld [vmem:[%s250 + $0xe8] sm:$0xff]
        %v324 = vld [vmem:[%s250 + $0xf0] sm:$0xff]
        %v325 = vld [vmem:[%s250 + $0xf8] sm:$0xff]
        %v326 = vld [vmem:[#allocation8] sm:$0x1]
        %v328 = vlaneseq
        %v329 = vshrl.u32 %v328, 7
        %v330 = vsub.s32 0, %v329
        %v331 = vrot.slane %v326, %v330
        %v333 = vmul.f32 %v294, %v331
        %v334 = vmul.f32 %v295, %v331
        %v335 = vmul.f32 %v296, %v331
        %v336 = vmul.f32 %v297, %v331
        %v337 = vmul.f32 %v298, %v331
        %v338 = vmul.f32 %v299, %v331
        %v339 = vmul.f32 %v300, %v331
        %v340 = vmul.f32 %v301, %v331
        %v341 = vmul.f32 %v302, %v331
        %v342 = vmul.f32 %v303, %v331
        %v343 = vmul.f32 %v304, %v331
        %v344 = vmul.f32 %v305, %v331
        %v345 = vmul.f32 %v306, %v331
        %v346 = vmul.f32 %v307, %v331
        %v347 = vmul.f32 %v308, %v331
        %v348 = vmul.f32 %v309, %v331
        %v349 = vmul.f32 %v310, %v331
        %v350 = vmul.f32 %v311, %v331
        %v351 = vmul.f32 %v312, %v331
        %v352 = vmul.f32 %v313, %v331
        %v353 = vmul.f32 %v314, %v331
        %v354 = vmul.f32 %v315, %v331
        %v355 = vmul.f32 %v316, %v331
        %v356 = vmul.f32 %v317, %v331
        %v357 = vmul.f32 %v318, %v331
        %v358 = vmul.f32 %v319, %v331
        %v359 = vmul.f32 %v320, %v331
        %v360 = vmul.f32 %v321, %v331
        %v361 = vmul.f32 %v322, %v331
        %v362 = vmul.f32 %v323, %v331
        %v363 = vmul.f32 %v324, %v331
        %v364 = vmul.f32 %v325, %v331
        %v365 = vld [vmem:[#allocation9] sm:$0x1]
        %v367 = vlaneseq
        %v368 = vshrl.u32 %v367, 7
        %v369 = vsub.s32 0, %v368
        %v370 = vrot.slane %v365, %v369
        %v372 = vadd.f32 %v333, %v370
        %v373 = vadd.f32 %v334, %v370
        %v374 = vadd.f32 %v335, %v370
        %v375 = vadd.f32 %v336, %v370
        %v376 = vadd.f32 %v337, %v370
        %v377 = vadd.f32 %v338, %v370
        %v378 = vadd.f32 %v339, %v370
        %v379 = vadd.f32 %v340, %v370
        %v380 = vadd.f32 %v341, %v370
        %v381 = vadd.f32 %v342, %v370
        %v382 = vadd.f32 %v343, %v370
        %v383 = vadd.f32 %v344, %v370
        %v384 = vadd.f32 %v345, %v370
        %v385 = vadd.f32 %v346, %v370
        %v386 = vadd.f32 %v347, %v370
        %v387 = vadd.f32 %v348, %v370
        %v388 = vadd.f32 %v349, %v370
        %v389 = vadd.f32 %v350, %v370
        %v390 = vadd.f32 %v351, %v370
        %v391 = vadd.f32 %v352, %v370
        %v392 = vadd.f32 %v353, %v370
        %v393 = vadd.f32 %v354, %v370
        %v394 = vadd.f32 %v355, %v370
        %v395 = vadd.f32 %v356, %v370
        %v396 = vadd.f32 %v357, %v370
        %v397 = vadd.f32 %v358, %v370
        %v398 = vadd.f32 %v359, %v370
        %v399 = vadd.f32 %v360, %v370
        %v400 = vadd.f32 %v361, %v370
        %v401 = vadd.f32 %v362, %v370
        %v402 = vadd.f32 %v363, %v370
        %v403 = vadd.f32 %v364, %v370
        %v404 = vmax.f32 %v372, 0.0
        %v405 = vmax.f32 %v373, 0.0
        %v406 = vmax.f32 %v374, 0.0
        %v407 = vmax.f32 %v375, 0.0
        %v408 = vmax.f32 %v376, 0.0
        %v409 = vmax.f32 %v377, 0.0
        %v410 = vmax.f32 %v378, 0.0
        %v411 = vmax.f32 %v379, 0.0
        %v412 = vmax.f32 %v380, 0.0
        %v413 = vmax.f32 %v381, 0.0
        %v414 = vmax.f32 %v382, 0.0
        %v415 = vmax.f32 %v383, 0.0
        %v416 = vmax.f32 %v384, 0.0
        %v417 = vmax.f32 %v385, 0.0
        %v418 = vmax.f32 %v386, 0.0
        %v419 = vmax.f32 %v387, 0.0
        %v420 = vmax.f32 %v388, 0.0
        %v421 = vmax.f32 %v389, 0.0
        %v422 = vmax.f32 %v390, 0.0
        %v423 = vmax.f32 %v391, 0.0
        %v424 = vmax.f32 %v392, 0.0
        %v425 = vmax.f32 %v393, 0.0
        %v426 = vmax.f32 %v394, 0.0
        %v427 = vmax.f32 %v395, 0.0
        %v428 = vmax.f32 %v396, 0.0
        %v429 = vmax.f32 %v397, 0.0
        %v430 = vmax.f32 %v398, 0.0
        %v431 = vmax.f32 %v399, 0.0
        %v432 = vmax.f32 %v400, 0.0
        %v433 = vmax.f32 %v401, 0.0
        %v434 = vmax.f32 %v402, 0.0
        %v435 = vmax.f32 %v403, 0.0
        %vm436 = vcmask 64512
        %437 = vst.msk [vmem:[#allocation2] sm:$0xff] %vm436, 0.0
        %438 = vst.msk [vmem:[#allocation2 + $0x8] sm:$0xff] %vm436, 0.0
        %vm439 = vcmask 58368
        %440 = vst.msk [vmem:[#allocation2 + $0x10] sm:$0x3] %vm439, 0.0
        %s441 = scalar_lea.vmem [#allocation2], 408
        %442 = vst.msk [vmem:[%s441] sm:$0xff] %vm436, 0.0
        %443 = vst.msk [vmem:[%s441 + $0x8] sm:$0xff] %vm436, 0.0
        %444 = vst.msk [vmem:[%s441 + $0x10] sm:$0x3] %vm439, 0.0
        %vm477 = vcmask 1040384
        %v478 = vrot.slane %v404, 7
        %v479 = vrot.slane %v405, 7
        %v480 = vsel %vm477, %v478, %v479
        %v481 = vrot.slane %v406, 7
        %v482 = vrot.slane %v407, 7
        %v483 = vsel %vm477, %v481, %v482
        %v484 = vrot.slane %v408, 7
        %v485 = vrot.slane %v409, 7
        %v486 = vsel %vm477, %v484, %v485
        %v487 = vrot.slane %v410, 7
        %v488 = vrot.slane %v411, 7
        %v489 = vsel %vm477, %v487, %v488
        %v490 = vrot.slane %v412, 7
        %v491 = vrot.slane %v413, 7
        %v492 = vsel %vm477, %v490, %v491
        %v493 = vrot.slane %v414, 7
        %v494 = vrot.slane %v415, 7
        %v495 = vsel %vm477, %v493, %v494
        %v496 = vrot.slane %v416, 7
        %v497 = vrot.slane %v417, 7
        %v498 = vsel %vm477, %v496, %v497
        %v499 = vrot.slane %v418, 7
        %v500 = vrot.slane %v419, 7
        %v501 = vsel %vm477, %v499, %v500
        %v502 = vrot.slane %v420, 7
        %v503 = vrot.slane %v421, 7
        %v504 = vsel %vm477, %v502, %v503
        %v505 = vrot.slane %v422, 7
        %v506 = vrot.slane %v423, 7
        %v507 = vsel %vm477, %v505, %v506
        %v508 = vrot.slane %v424, 7
        %v509 = vrot.slane %v425, 7
        %v510 = vsel %vm477, %v508, %v509
        %v511 = vrot.slane %v426, 7
        %v512 = vrot.slane %v427, 7
        %v513 = vsel %vm477, %v511, %v512
        %v514 = vrot.slane %v428, 7
        %v515 = vrot.slane %v429, 7
        %v516 = vsel %vm477, %v514, %v515
        %v517 = vrot.slane %v430, 7
        %v518 = vrot.slane %v431, 7
        %v519 = vsel %vm477, %v517, %v518
        %v520 = vrot.slane %v432, 7
        %v521 = vrot.slane %v433, 7
        %v522 = vsel %vm477, %v520, %v521
        %v523 = vrot.slane %v434, 7
        %v524 = vrot.slane %v435, 7
        %v525 = vsel %vm477, %v523, %v524
        %v574 = vsel %vm477, 0.0, %v478
        %v575 = vsel %vm477, 0.0, %v481
        %v576 = vsel %vm477, 0.0, %v484
        %v577 = vsel %vm477, 0.0, %v487
        %v578 = vsel %vm477, 0.0, %v490
        %v579 = vsel %vm477, 0.0, %v493
        %v580 = vsel %vm477, 0.0, %v496
        %v581 = vsel %vm477, 0.0, %v499
        %v582 = vsel %vm477, 0.0, %v502
        %v583 = vsel %vm477, 0.0, %v505
        %v584 = vsel %vm477, 0.0, %v508
        %v585 = vsel %vm477, 0.0, %v511
        %v586 = vsel %vm477, 0.0, %v514
        %v587 = vsel %vm477, 0.0, %v517
        %v588 = vsel %vm477, 0.0, %v520
        %v589 = vsel %vm477, 0.0, %v523
        %v590 = vsel %vm477, %v479, 0.0
        %v591 = vsel %vm477, %v482, 0.0
        %v592 = vsel %vm477, %v485, 0.0
        %v593 = vsel %vm477, %v488, 0.0
        %v594 = vsel %vm477, %v491, 0.0
        %v595 = vsel %vm477, %v494, 0.0
        %v596 = vsel %vm477, %v497, 0.0
        %v597 = vsel %vm477, %v500, 0.0
        %v598 = vsel %vm477, %v503, 0.0
        %v599 = vsel %vm477, %v506, 0.0
        %v600 = vsel %vm477, %v509, 0.0
        %v601 = vsel %vm477, %v512, 0.0
        %v602 = vsel %vm477, %v515, 0.0
        %v603 = vsel %vm477, %v518, 0.0
        %v604 = vsel %vm477, %v521, 0.0
        %v605 = vsel %vm477, %v524, 0.0
        %s606 = scalar_lea.vmem [#allocation2], 24
        %607 = vst.msk [vmem:[%s606] sm:$0xff] %vm436, %v574
        %608 = vst.msk [vmem:[%s606 + $0x8] sm:$0xff] %vm436, %v480
        %609 = vst.msk [vmem:[%s606 + $0x10] sm:$0x3] %vm439, %v590
        %610 = vst.msk [vmem:[%s606 + $0x18] sm:$0xff] %vm436, %v575
        %611 = vst.msk [vmem:[%s606 + $0x20] sm:$0xff] %vm436, %v483
        %612 = vst.msk [vmem:[%s606 + $0x28] sm:$0x3] %vm439, %v591
        %613 = vst.msk [vmem:[%s606 + $0x30] sm:$0xff] %vm436, %v576
        %614 = vst.msk [vmem:[%s606 + $0x38] sm:$0xff] %vm436, %v486
        %615 = vst.msk [vmem:[%s606 + $0x40] sm:$0x3] %vm439, %v592
        %616 = vst.msk [vmem:[%s606 + $0x48] sm:$0xff] %vm436, %v577
        %617 = vst.msk [vmem:[%s606 + $0x50] sm:$0xff] %vm436, %v489
        %618 = vst.msk [vmem:[%s606 + $0x58] sm:$0x3] %vm439, %v593
        %619 = vst.msk [vmem:[%s606 + $0x60] sm:$0xff] %vm436, %v578
        %620 = vst.msk [vmem:[%s606 + $0x68] sm:$0xff] %vm436, %v492
        %621 = vst.msk [vmem:[%s606 + $0x70] sm:$0x3] %vm439, %v594
        %622 = vst.msk [vmem:[%s606 + $0x78] sm:$0xff] %vm436, %v579
        %623 = vst.msk [vmem:[%s606 + $0x80] sm:$0xff] %vm436, %v495
        %624 = vst.msk [vmem:[%s606 + $0x88] sm:$0x3] %vm439, %v595
        %625 = vst.msk [vmem:[%s606 + $0x90] sm:$0xff] %vm436, %v580
        %626 = vst.msk [vmem:[%s606 + $0x98] sm:$0xff] %vm436, %v498
        %627 = vst.msk [vmem:[%s606 + $0xa0] sm:$0x3] %vm439, %v596
        %628 = vst.msk [vmem:[%s606 + $0xa8] sm:$0xff] %vm436, %v581
        %629 = vst.msk [vmem:[%s606 + $0xb0] sm:$0xff] %vm436, %v501
        %630 = vst.msk [vmem:[%s606 + $0xb8] sm:$0x3] %vm439, %v597
        %631 = vst.msk [vmem:[%s606 + $0xc0] sm:$0xff] %vm436, %v582
        %632 = vst.msk [vmem:[%s606 + $0xc8] sm:$0xff] %vm436, %v504
        %633 = vst.msk [vmem:[%s606 + $0xd0] sm:$0x3] %vm439, %v598
        %634 = vst.msk [vmem:[%s606 + $0xd8] sm:$0xff] %vm436, %v583
        %635 = vst.msk [vmem:[%s606 + $0xe0] sm:$0xff] %vm436, %v507
        %636 = vst.msk [vmem:[%s606 + $0xe8] sm:$0x3] %vm439, %v599
        %637 = vst.msk [vmem:[%s606 + $0xf0] sm:$0xff] %vm436, %v584
        %638 = vst.msk [vmem:[%s606 + $0xf8] sm:$0xff] %vm436, %v510
        %639 = vst.msk [vmem:[%s606 + $0x100] sm:$0x3] %vm439, %v600
        %640 = vst.msk [vmem:[%s606 + $0x108] sm:$0xff] %vm436, %v585
        %641 = vst.msk [vmem:[%s606 + $0x110] sm:$0xff] %vm436, %v513
        %642 = vst.msk [vmem:[%s606 + $0x118] sm:$0x3] %vm439, %v601
        %643 = vst.msk [vmem:[%s606 + $0x120] sm:$0xff] %vm436, %v586
        %644 = vst.msk [vmem:[%s606 + $0x128] sm:$0xff] %vm436, %v516
        %645 = vst.msk [vmem:[%s606 + $0x130] sm:$0x3] %vm439, %v602
        %646 = vst.msk [vmem:[%s606 + $0x138] sm:$0xff] %vm436, %v587
        %647 = vst.msk [vmem:[%s606 + $0x140] sm:$0xff] %vm436, %v519
        %648 = vst.msk [vmem:[%s606 + $0x148] sm:$0x3] %vm439, %v603
        %649 = vst.msk [vmem:[%s606 + $0x150] sm:$0xff] %vm436, %v588
        %650 = vst.msk [vmem:[%s606 + $0x158] sm:$0xff] %vm436, %v522
        %651 = vst.msk [vmem:[%s606 + $0x160] sm:$0x3] %vm439, %v604
        %652 = vst.msk [vmem:[%s606 + $0x168] sm:$0xff] %vm436, %v589
        %653 = vst.msk [vmem:[%s606 + $0x170] sm:$0xff] %vm436, %v525
        %654 = vst.msk [vmem:[%s606 + $0x178] sm:$0x3] %vm439, %v605
        %v655 = vld [vmem:[#allocation2] sm:$0xff]
        %v656 = vld [vmem:[#allocation2 + $0x8] sm:$0xff]
        %v657 = vld [vmem:[#allocation2 + $0x18] sm:$0xff]
        %v658 = vld [vmem:[#allocation2 + $0x20] sm:$0xff]
        %v659 = vld [vmem:[#allocation2 + $0x30] sm:$0xff]
        %v660 = vld [vmem:[#allocation2 + $0x38] sm:$0xff]
        %v661 = vld [vmem:[#allocation2 + $0x48] sm:$0xff]
        %v662 = vld [vmem:[#allocation2 + $0x50] sm:$0xff]
        %v663 = vld [vmem:[#allocation2 + $0x60] sm:$0xff]
        %v664 = vld [vmem:[#allocation2 + $0x68] sm:$0xff]
        %v665 = vld [vmem:[#allocation2 + $0x78] sm:$0xff]
        %v666 = vld [vmem:[#allocation2 + $0x80] sm:$0xff]
        %v667 = vld [vmem:[#allocation2 + $0x90] sm:$0xff]
        %v668 = vld [vmem:[#allocation2 + $0x98] sm:$0xff]
        %v669 = vld [vmem:[#allocation2 + $0xa8] sm:$0xff]
        %v670 = vld [vmem:[#allocation2 + $0xb0] sm:$0xff]
        %v671 = vld [vmem:[#allocation2 + $0xc0] sm:$0xff]
        %v672 = vld [vmem:[#allocation2 + $0xc8] sm:$0xff]
        %v673 = vld [vmem:[#allocation2 + $0xd8] sm:$0xff]
        %v674 = vld [vmem:[#allocation2 + $0xe0] sm:$0xff]
        %v675 = vld [vmem:[#allocation2 + $0xf0] sm:$0xff]
        %v676 = vld [vmem:[#allocation2 + $0xf8] sm:$0xff]
        %v677 = vld [vmem:[#allocation2 + $0x108] sm:$0xff]
        %v678 = vld [vmem:[#allocation2 + $0x110] sm:$0xff]
        %v679 = vld [vmem:[#allocation2 + $0x120] sm:$0xff]
        %v680 = vld [vmem:[#allocation2 + $0x128] sm:$0xff]
        %v681 = vld [vmem:[#allocation2 + $0x138] sm:$0xff]
        %v682 = vld [vmem:[#allocation2 + $0x140] sm:$0xff]
        %v683 = vld [vmem:[#allocation2 + $0x150] sm:$0xff]
        %v684 = vld [vmem:[#allocation2 + $0x158] sm:$0xff]
        %v685 = vld [vmem:[#allocation2 + $0x168] sm:$0xff]
        %v686 = vld [vmem:[#allocation2 + $0x170] sm:$0xff]
        %v687 = vld [vmem:[#allocation6] sm:$0xff]
        %v688 = vld [vmem:[#allocation2 + $0x1] sm:$0xff]
        %v689 = vld [vmem:[#allocation2 + $0x9] sm:$0xff]
        %v690 = vld [vmem:[#allocation2 + $0x19] sm:$0xff]
        %v691 = vld [vmem:[#allocation2 + $0x21] sm:$0xff]
        %v692 = vld [vmem:[#allocation2 + $0x31] sm:$0xff]
        %v693 = vld [vmem:[#allocation2 + $0x39] sm:$0xff]
        %v694 = vld [vmem:[#allocation2 + $0x49] sm:$0xff]
        %v695 = vld [vmem:[#allocation2 + $0x51] sm:$0xff]
        %v696 = vld [vmem:[#allocation2 + $0x61] sm:$0xff]
        %v697 = vld [vmem:[#allocation2 + $0x69] sm:$0xff]
        %v698 = vld [vmem:[#allocation2 + $0x79] sm:$0xff]
        %v699 = vld [vmem:[#allocation2 + $0x81] sm:$0xff]
        %v700 = vld [vmem:[#allocation2 + $0x91] sm:$0xff]
        %v701 = vld [vmem:[#allocation2 + $0x99] sm:$0xff]
        %v702 = vld [vmem:[#allocation2 + $0xa9] sm:$0xff]
        %v703 = vld [vmem:[#allocation2 + $0xb1] sm:$0xff]
        %v704 = vld [vmem:[#allocation2 + $0xc1] sm:$0xff]
        %v705 = vld [vmem:[#allocation2 + $0xc9] sm:$0xff]
        %v706 = vld [vmem:[#allocation2 + $0xd9] sm:$0xff]
        %v707 = vld [vmem:[#allocation2 + $0xe1] sm:$0xff]
        %v708 = vld [vmem:[#allocation2 + $0xf1] sm:$0xff]
        %v709 = vld [vmem:[#allocation2 + $0xf9] sm:$0xff]
        %v710 = vld [vmem:[#allocation2 + $0x109] sm:$0xff]
        %v711 = vld [vmem:[#allocation2 + $0x111] sm:$0xff]
        %v712 = vld [vmem:[#allocation2 + $0x121] sm:$0xff]
        %v713 = vld [vmem:[#allocation2 + $0x129] sm:$0xff]
        %v714 = vld [vmem:[#allocation2 + $0x139] sm:$0xff]
        %v715 = vld [vmem:[#allocation2 + $0x141] sm:$0xff]
        %v716 = vld [vmem:[#allocation2 + $0x151] sm:$0xff]
        %v717 = vld [vmem:[#allocation2 + $0x159] sm:$0xff]
        %v718 = vld [vmem:[#allocation2 + $0x169] sm:$0xff]
        %v719 = vld [vmem:[#allocation2 + $0x171] sm:$0xff]
        %s720 = scalar_lea.vmem [#allocation6], 8
        %v721 = vld [vmem:[%s720] sm:$0xff]
        %v723 = vsel %vm436, %v688, 0
        %v726 = vsel %vm436, %v689, 0
        %v729 = vsel %vm436, %v690, 0
        %v732 = vsel %vm436, %v691, 0
        %v735 = vsel %vm436, %v692, 0
        %v738 = vsel %vm436, %v693, 0
        %v741 = vsel %vm436, %v694, 0
        %v744 = vsel %vm436, %v695, 0
        %v747 = vsel %vm436, %v696, 0
        %v750 = vsel %vm436, %v697, 0
        %v753 = vsel %vm436, %v698, 0
        %v756 = vsel %vm436, %v699, 0
        %v759 = vsel %vm436, %v700, 0
        %v762 = vsel %vm436, %v701, 0
        %v765 = vsel %vm436, %v702, 0
        %v768 = vsel %vm436, %v703, 0
        %v771 = vsel %vm436, %v704, 0
        %v774 = vsel %vm436, %v705, 0
        %v777 = vsel %vm436, %v706, 0
        %v780 = vsel %vm436, %v707, 0
        %v783 = vsel %vm436, %v708, 0
        %v786 = vsel %vm436, %v709, 0
        %v789 = vsel %vm436, %v710, 0
        %v792 = vsel %vm436, %v711, 0
        %v795 = vsel %vm436, %v712, 0
        %v798 = vsel %vm436, %v713, 0
        %v801 = vsel %vm436, %v714, 0
        %v804 = vsel %vm436, %v715, 0
        %v807 = vsel %vm436, %v716, 0
        %v810 = vsel %vm436, %v717, 0
        %v813 = vsel %vm436, %v718, 0
        %v816 = vsel %vm436, %v719, 0
        %818 = vmatprep.subr.mxu0 0.0
        %819 = vmatpush1.msra.mxu0 %v721
        %820 = vmatprep.subr.mxu0 0.0
        %821 = vmatpush1.msra.mxu0 0.0
        %822 = vmatprep.subr.mxu0 0.0
        %823 = vmatpush1.msra.mxu0 0.0
        %824 = vmatprep.subr.mxu0 0.0
        %825 = vmatpush1.msra.mxu0 0.0
        %826 = vmatprep.subr.mxu0 0.0
        %827 = vmatpush1.msra.mxu0 0.0
        %828 = vmatprep.subr.mxu0 0.0
        %829 = vmatpush1.msra.mxu0 0.0
        %830 = vmatprep.subr.mxu0 0.0
        %831 = vmatpush1.msra.mxu0 0.0
        %832 = vmatprep.subr.mxu0 0.0
        %833 = vmatpush1.msra.mxu0 0.0
        %834 = vmatprep.subr.mxu0 0.0
        %835 = vmatpush1.msra.mxu0 0.0
        %836 = vmatprep.subr.mxu0 0.0
        %837 = vmatpush1.msra.mxu0 0.0
        %838 = vmatprep.subr.mxu0 0.0
        %839 = vmatpush1.msra.mxu0 0.0
        %840 = vmatprep.subr.mxu0 0.0
        %841 = vmatpush1.msra.mxu0 0.0
        %842 = vmatprep.subr.mxu0 0.0
        %843 = vmatpush1.msra.mxu0 0.0
        %844 = vmatprep.subr.mxu0 0.0
        %845 = vmatpush1.msra.mxu0 0.0
        %846 = vmatprep.subr.mxu0 0.0
        %847 = vmatpush1.msra.mxu0 0.0
        %848 = vmatprep.subr.mxu0 0.0
        %849 = vmatpush1.msra.mxu0 0.0
        %850 = vmatprep.subr.mxu0 0.0
        %851 = vmatpush1.msra.mxu0 0.0
        %852 = vmatprep.subr.mxu0 0.0
        %853 = vmatpush1.msra.mxu0 0.0
        %854 = vmatprep.subr.mxu0 0.0
        %855 = vmatpush1.msra.mxu0 0.0
        %856 = vmatprep.subr.mxu0 0.0
        %857 = vmatpush1.msra.mxu0 0.0
        %858 = vmatprep.subr.mxu0 0.0
        %859 = vmatpush1.msra.mxu0 0.0
        %860 = vmatprep.subr.mxu0 0.0
        %861 = vmatpush1.msra.mxu0 0.0
        %862 = vmatprep.subr.mxu0 0.0
        %863 = vmatpush1.msra.mxu0 0.0
        %864 = vmatprep.subr.mxu0 0.0
        %865 = vmatpush1.msra.mxu0 0.0
        %866 = vmatprep.subr.mxu0 0.0
        %867 = vmatpush1.msra.mxu0 0.0
        %868 = vmatprep.subr.mxu0 0.0
        %869 = vmatpush1.msra.mxu0 0.0
        %870 = vmatprep.subr.mxu0 0.0
        %871 = vmatpush1.msra.mxu0 0.0
        %872 = vmatprep.subr.mxu0 0.0
        %873 = vmatpush1.msra.mxu0 0.0
        %874 = vmatprep.subr.mxu0 0.0
        %875 = vmatpush1.msra.mxu0 0.0
        %876 = vmatprep.subr.mxu0 0.0
        %877 = vmatpush1.msra.mxu0 0.0
        %878 = vmatprep.subr.mxu0 0.0
        %879 = vmatpush1.msra.mxu0 0.0
        %880 = vmatprep.subr.mxu0 0.0
        %881 = vmatpush1.msra.mxu0 0.0
        %882 = vmatprep.mubr.f32.mxu0 0.0
        %883 = vmatmul.mubr.f32.gmra.mrb[0].mxu0 %v723
        %v884 = vpop.f32.mrb[0].mxu0
        %v885 = vadd.f32 0.0, %v884
        %v886 = vpop.f32.mrb[0].mxu0
        %887 = vmatprep.mubr.f32.mxu0 0.0
        %888 = vmatmul.mubr.f32.gmra.mrb[0].mxu0 %v726
        %v889 = vpop.f32.mrb[0].mxu0
        %v890 = vadd.f32 0.0, %v889
        %v891 = vpop.f32.mrb[0].mxu0
        %892 = vmatprep.mubr.f32.mxu0 0.0
        %893 = vmatmul.mubr.f32.gmra.mrb[0].mxu0 %v729
        %v894 = vpop.f32.mrb[0].mxu0
        %v895 = vadd.f32 0.0, %v894
        %v896 = vpop.f32.mrb[0].mxu0
        %897 = vmatprep.mubr.f32.mxu0 0.0
        %898 = vmatmul.mubr.f32.gmra.mrb[0].mxu0 %v732
        %v899 = vpop.f32.mrb[0].mxu0
        %v900 = vadd.f32 0.0, %v899
        %v901 = vpop.f32.mrb[0].mxu0
        %902 = vmatprep.mubr.f32.mxu0 0.0
        %903 = vmatmul.mubr.f32.gmra.mrb[0].mxu0 %v735
        %v904 = vpop.f32.mrb[0].mxu0
        %v905 = vadd.f32 0.0, %v904
        %v906 = vpop.f32.mrb[0].mxu0
        %907 = vmatprep.mubr.f32.mxu0 0.0
        %908 = vmatmul.mubr.f32.gmra.mrb[0].mxu0 %v738
        %v909 = vpop.f32.mrb[0].mxu0
        %v910 = vadd.f32 0.0, %v909
        %v911 = vpop.f32.mrb[0].mxu0
        %912 = vmatprep.mubr.f32.mxu0 0.0
        %913 = vmatmul.mubr.f32.gmra.mrb[0].mxu0 %v741
        %v914 = vpop.f32.mrb[0].mxu0
        %v915 = vadd.f32 0.0, %v914
        %v916 = vpop.f32.mrb[0].mxu0
        %917 = vmatprep.mubr.f32.mxu0 0.0
        %918 = vmatmul.mubr.f32.gmra.mrb[0].mxu0 %v744
        %v919 = vpop.f32.mrb[0].mxu0
        %v920 = vadd.f32 0.0, %v919
        %v921 = vpop.f32.mrb[0].mxu0
        %922 = vmatprep.mubr.f32.mxu0 0.0
        %923 = vmatmul.mubr.f32.gmra.mrb[0].mxu0 %v747
        %v924 = vpop.f32.mrb[0].mxu0
        %v925 = vadd.f32 0.0, %v924
        %v926 = vpop.f32.mrb[0].mxu0
        %927 = vmatprep.mubr.f32.mxu0 0.0
        %928 = vmatmul.mubr.f32.gmra.mrb[0].mxu0 %v750
        %v929 = vpop.f32.mrb[0].mxu0
        %v930 = vadd.f32 0.0, %v929
        %v931 = vpop.f32.mrb[0].mxu0
        %932 = vmatprep.mubr.f32.mxu0 0.0
        %933 = vmatmul.mubr.f32.gmra.mrb[0].mxu0 %v753
        %v934 = vpop.f32.mrb[0].mxu0
        %v935 = vadd.f32 0.0, %v934
        %v936 = vpop.f32.mrb[0].mxu0
        %937 = vmatprep.mubr.f32.mxu0 0.0
        %938 = vmatmul.mubr.f32.gmra.mrb[0].mxu0 %v756
        %v939 = vpop.f32.mrb[0].mxu0
        %v940 = vadd.f32 0.0, %v939
        %v941 = vpop.f32.mrb[0].mxu0
        %942 = vmatprep.mubr.f32.mxu0 0.0
        %943 = vmatmul.mubr.f32.gmra.mrb[0].mxu0 %v759
        %v944 = vpop.f32.mrb[0].mxu0
        %v945 = vadd.f32 0.0, %v944
        %v946 = vpop.f32.mrb[0].mxu0
        %947 = vmatprep.mubr.f32.mxu0 0.0
        %948 = vmatmul.mubr.f32.gmra.mrb[0].mxu0 %v762
        %v949 = vpop.f32.mrb[0].mxu0
        %v950 = vadd.f32 0.0, %v949
        %v951 = vpop.f32.mrb[0].mxu0
        %952 = vmatprep.mubr.f32.mxu0 0.0
        %953 = vmatmul.mubr.f32.gmra.mrb[0].mxu0 %v765
        %v954 = vpop.f32.mrb[0].mxu0
        %v955 = vadd.f32 0.0, %v954
        %v956 = vpop.f32.mrb[0].mxu0
        %957 = vmatprep.mubr.f32.mxu0 0.0
        %958 = vmatmul.mubr.f32.gmra.mrb[0].mxu0 %v768
        %v959 = vpop.f32.mrb[0].mxu0
        %v960 = vadd.f32 0.0, %v959
        %v961 = vpop.f32.mrb[0].mxu0
        %962 = vmatprep.mubr.f32.mxu0 0.0
        %963 = vmatmul.mubr.f32.gmra.mrb[0].mxu0 %v771
        %v964 = vpop.f32.mrb[0].mxu0
        %v965 = vadd.f32 0.0, %v964
        %v966 = vpop.f32.mrb[0].mxu0
        %967 = vmatprep.mubr.f32.mxu0 0.0
        %968 = vmatmul.mubr.f32.gmra.mrb[0].mxu0 %v774
        %v969 = vpop.f32.mrb[0].mxu0
        %v970 = vadd.f32 0.0, %v969
        %v971 = vpop.f32.mrb[0].mxu0
        %972 = vmatprep.mubr.f32.mxu0 0.0
        %973 = vmatmul.mubr.f32.gmra.mrb[0].mxu0 %v777
        %v974 = vpop.f32.mrb[0].mxu0
        %v975 = vadd.f32 0.0, %v974
        %v976 = vpop.f32.mrb[0].mxu0
        %977 = vmatprep.mubr.f32.mxu0 0.0
        %978 = vmatmul.mubr.f32.gmra.mrb[0].mxu0 %v780
        %v979 = vpop.f32.mrb[0].mxu0
        %v980 = vadd.f32 0.0, %v979
        %v981 = vpop.f32.mrb[0].mxu0
        %982 = vmatprep.mubr.f32.mxu0 0.0
        %983 = vmatmul.mubr.f32.gmra.mrb[0].mxu0 %v783
        %v984 = vpop.f32.mrb[0].mxu0
        %v985 = vadd.f32 0.0, %v984
        %v986 = vpop.f32.mrb[0].mxu0
        %987 = vmatprep.mubr.f32.mxu0 0.0
        %988 = vmatmul.mubr.f32.gmra.mrb[0].mxu0 %v786
        %v989 = vpop.f32.mrb[0].mxu0
        %v990 = vadd.f32 0.0, %v989
        %v991 = vpop.f32.mrb[0].mxu0
        %992 = vmatprep.mubr.f32.mxu0 0.0
        %993 = vmatmul.mubr.f32.gmra.mrb[0].mxu0 %v789
        %v994 = vpop.f32.mrb[0].mxu0
        %v995 = vadd.f32 0.0, %v994
        %v996 = vpop.f32.mrb[0].mxu0
        %997 = vmatprep.mubr.f32.mxu0 0.0
        %998 = vmatmul.mubr.f32.gmra.mrb[0].mxu0 %v792
        %v999 = vpop.f32.mrb[0].mxu0
        %v1000 = vadd.f32 0.0, %v999
        %v1001 = vpop.f32.mrb[0].mxu0
        %1002 = vmatprep.mubr.f32.mxu0 0.0
        %1003 = vmatmul.mubr.f32.gmra.mrb[0].mxu0 %v795
        %v1004 = vpop.f32.mrb[0].mxu0
        %v1005 = vadd.f32 0.0, %v1004
        %v1006 = vpop.f32.mrb[0].mxu0
        %1007 = vmatprep.mubr.f32.mxu0 0.0
        %1008 = vmatmul.mubr.f32.gmra.mrb[0].mxu0 %v798
        %v1009 = vpop.f32.mrb[0].mxu0
        %v1010 = vadd.f32 0.0, %v1009
        %v1011 = vpop.f32.mrb[0].mxu0
        %1012 = vmatprep.mubr.f32.mxu0 0.0
        %1013 = vmatmul.mubr.f32.gmra.mrb[0].mxu0 %v801
        %v1014 = vpop.f32.mrb[0].mxu0
        %v1015 = vadd.f32 0.0, %v1014
        %v1016 = vpop.f32.mrb[0].mxu0
        %1017 = vmatprep.mubr.f32.mxu0 0.0
        %1018 = vmatmul.mubr.f32.gmra.mrb[0].mxu0 %v804
        %v1019 = vpop.f32.mrb[0].mxu0
        %v1020 = vadd.f32 0.0, %v1019
        %v1021 = vpop.f32.mrb[0].mxu0
        %1022 = vmatprep.mubr.f32.mxu0 0.0
        %1023 = vmatmul.mubr.f32.gmra.mrb[0].mxu0 %v807
        %v1024 = vpop.f32.mrb[0].mxu0
        %v1025 = vadd.f32 0.0, %v1024
        %v1026 = vpop.f32.mrb[0].mxu0
        %1027 = vmatprep.mubr.f32.mxu0 0.0
        %1028 = vmatmul.mubr.f32.gmra.mrb[0].mxu0 %v810
        %v1029 = vpop.f32.mrb[0].mxu0
        %v1030 = vadd.f32 0.0, %v1029
        %v1031 = vpop.f32.mrb[0].mxu0
        %1032 = vmatprep.mubr.f32.mxu0 0.0
        %1033 = vmatmul.mubr.f32.gmra.mrb[0].mxu0 %v813
        %v1034 = vpop.f32.mrb[0].mxu0
        %v1035 = vadd.f32 0.0, %v1034
        %v1036 = vpop.f32.mrb[0].mxu0
        %1037 = vmatprep.mubr.f32.mxu0 0.0
        %1038 = vmatmul.mubr.f32.gmra.mrb[0].mxu0 %v816
        %v1039 = vpop.f32.mrb[0].mxu0
        %v1040 = vadd.f32 0.0, %v1039
        %v1041 = vpop.f32.mrb[0].mxu0
        %1042 = vdwg.mxu0
        %v1044 = vsel %vm436, %v655, 0
        %v1047 = vsel %vm436, %v656, 0
        %v1050 = vsel %vm436, %v657, 0
        %v1053 = vsel %vm436, %v658, 0
        %v1056 = vsel %vm436, %v659, 0
        %v1059 = vsel %vm436, %v660, 0
        %v1062 = vsel %vm436, %v661, 0
        %v1065 = vsel %vm436, %v662, 0
        %v1068 = vsel %vm436, %v663, 0
        %v1071 = vsel %vm436, %v664, 0
        %v1074 = vsel %vm436, %v665, 0
        %v1077 = vsel %vm436, %v666, 0
        %v1080 = vsel %vm436, %v667, 0
        %v1083 = vsel %vm436, %v668, 0
        %v1086 = vsel %vm436, %v669, 0
        %v1089 = vsel %vm436, %v670, 0
        %v1092 = vsel %vm436, %v671, 0
        %v1095 = vsel %vm436, %v672, 0
        %v1098 = vsel %vm436, %v673, 0
        %v1101 = vsel %vm436, %v674, 0
        %v1104 = vsel %vm436, %v675, 0
        %v1107 = vsel %vm436, %v676, 0
        %v1110 = vsel %vm436, %v677, 0
        %v1113 = vsel %vm436, %v678, 0
        %v1116 = vsel %vm436, %v679, 0
        %v1119 = vsel %vm436, %v680, 0
        %v1122 = vsel %vm436, %v681, 0
        %v1125 = vsel %vm436, %v682, 0
        %v1128 = vsel %vm436, %v683, 0
        %v1131 = vsel %vm436, %v684, 0
        %v1134 = vsel %vm436, %v685, 0
        %v1137 = vsel %vm436, %v686, 0
        %1139 = vmatprep.subr.mxu0 0.0
        %1140 = vmatpush1.msra.mxu0 %v687
        %1141 = vmatprep.subr.mxu0 0.0
        %1142 = vmatpush1.msra.mxu0 0.0
        %1143 = vmatprep.subr.mxu0 0.0
        %1144 = vmatpush1.msra.mxu0 0.0
        %1145 = vmatprep.subr.mxu0 0.0
        %1146 = vmatpush1.msra.mxu0 0.0
        %1147 = vmatprep.subr.mxu0 0.0
        %1148 = vmatpush1.msra.mxu0 0.0
        %1149 = vmatprep.subr.mxu0 0.0
        %1150 = vmatpush1.msra.mxu0 0.0
        %1151 = vmatprep.subr.mxu0 0.0
        %1152 = vmatpush1.msra.mxu0 0.0
        %1153 = vmatprep.subr.mxu0 0.0
        %1154 = vmatpush1.msra.mxu0 0.0
        %1155 = vmatprep.subr.mxu0 0.0
        %1156 = vmatpush1.msra.mxu0 0.0
        %1157 = vmatprep.subr.mxu0 0.0
        %1158 = vmatpush1.msra.mxu0 0.0
        %1159 = vmatprep.subr.mxu0 0.0
        %1160 = vmatpush1.msra.mxu0 0.0
        %1161 = vmatprep.subr.mxu0 0.0
        %1162 = vmatpush1.msra.mxu0 0.0
        %1163 = vmatprep.subr.mxu0 0.0
        %1164 = vmatpush1.msra.mxu0 0.0
        %1165 = vmatprep.subr.mxu0 0.0
        %1166 = vmatpush1.msra.mxu0 0.0
        %1167 = vmatprep.subr.mxu0 0.0
        %1168 = vmatpush1.msra.mxu0 0.0
        %1169 = vmatprep.subr.mxu0 0.0
        %1170 = vmatpush1.msra.mxu0 0.0
        %1171 = vmatprep.subr.mxu0 0.0
        %1172 = vmatpush1.msra.mxu0 0.0
        %1173 = vmatprep.subr.mxu0 0.0
        %1174 = vmatpush1.msra.mxu0 0.0
        %1175 = vmatprep.subr.mxu0 0.0
        %1176 = vmatpush1.msra.mxu0 0.0
        %1177 = vmatprep.subr.mxu0 0.0
        %1178 = vmatpush1.msra.mxu0 0.0
        %1179 = vmatprep.subr.mxu0 0.0
        %1180 = vmatpush1.msra.mxu0 0.0
        %1181 = vmatprep.subr.mxu0 0.0
        %1182 = vmatpush1.msra.mxu0 0.0
        %1183 = vmatprep.subr.mxu0 0.0
        %1184 = vmatpush1.msra.mxu0 0.0
        %1185 = vmatprep.subr.mxu0 0.0
        %1186 = vmatpush1.msra.mxu0 0.0
        %1187 = vmatprep.subr.mxu0 0.0
        %1188 = vmatpush1.msra.mxu0 0.0
        %1189 = vmatprep.subr.mxu0 0.0
        %1190 = vmatpush1.msra.mxu0 0.0
        %1191 = vmatprep.subr.mxu0 0.0
        %1192 = vmatpush1.msra.mxu0 0.0
        %1193 = vmatprep.subr.mxu0 0.0
        %1194 = vmatpush1.msra.mxu0 0.0
        %1195 = vmatprep.subr.mxu0 0.0
        %1196 = vmatpush1.msra.mxu0 0.0
        %1197 = vmatprep.subr.mxu0 0.0
        %1198 = vmatpush1.msra.mxu0 0.0
        %1199 = vmatprep.subr.mxu0 0.0
        %1200 = vmatpush1.msra.mxu0 0.0
        %1201 = vmatprep.subr.mxu0 0.0
        %1202 = vmatpush1.msra.mxu0 0.0
        %1203 = vmatprep.mubr.f32.mxu0 0.0
        %1204 = vmatmul.mubr.f32.gmra.mrb[0].mxu0 %v1044
        %v1205 = vpop.f32.mrb[0].mxu0
        %v1206 = vadd.f32 %v885, %v1205
        %v1207 = vpop.f32.mrb[0].mxu0
        %1208 = vmatprep.mubr.f32.mxu0 0.0
        %1209 = vmatmul.mubr.f32.gmra.mrb[0].mxu0 %v1047
        %v1210 = vpop.f32.mrb[0].mxu0
        %v1211 = vadd.f32 %v890, %v1210
        %v1212 = vpop.f32.mrb[0].mxu0
        %1213 = vmatprep.mubr.f32.mxu0 0.0
        %1214 = vmatmul.mubr.f32.gmra.mrb[0].mxu0 %v1050
        %v1215 = vpop.f32.mrb[0].mxu0
        %v1216 = vadd.f32 %v895, %v1215
        %v1217 = vpop.f32.mrb[0].mxu0
        %1218 = vmatprep.mubr.f32.mxu0 0.0
        %1219 = vmatmul.mubr.f32.gmra.mrb[0].mxu0 %v1053
        %v1220 = vpop.f32.mrb[0].mxu0
        %v1221 = vadd.f32 %v900, %v1220
        %v1222 = vpop.f32.mrb[0].mxu0
        %1223 = vmatprep.mubr.f32.mxu0 0.0
        %1224 = vmatmul.mubr.f32.gmra.mrb[0].mxu0 %v1056
        %v1225 = vpop.f32.mrb[0].mxu0
        %v1226 = vadd.f32 %v905, %v1225
        %v1227 = vpop.f32.mrb[0].mxu0
        %1228 = vmatprep.mubr.f32.mxu0 0.0
        %1229 = vmatmul.mubr.f32.gmra.mrb[0].mxu0 %v1059
        %v1230 = vpop.f32.mrb[0].mxu0
        %v1231 = vadd.f32 %v910, %v1230
        %v1232 = vpop.f32.mrb[0].mxu0
        %1233 = vmatprep.mubr.f32.mxu0 0.0
        %1234 = vmatmul.mubr.f32.gmra.mrb[0].mxu0 %v1062
        %v1235 = vpop.f32.mrb[0].mxu0
        %v1236 = vadd.f32 %v915, %v1235
        %v1237 = vpop.f32.mrb[0].mxu0
        %1238 = vmatprep.mubr.f32.mxu0 0.0
        %1239 = vmatmul.mubr.f32.gmra.mrb[0].mxu0 %v1065
        %v1240 = vpop.f32.mrb[0].mxu0
        %v1241 = vadd.f32 %v920, %v1240
        %v1242 = vpop.f32.mrb[0].mxu0
        %1243 = vmatprep.mubr.f32.mxu0 0.0
        %1244 = vmatmul.mubr.f32.gmra.mrb[0].mxu0 %v1068
        %v1245 = vpop.f32.mrb[0].mxu0
        %v1246 = vadd.f32 %v925, %v1245
        %v1247 = vpop.f32.mrb[0].mxu0
        %1248 = vmatprep.mubr.f32.mxu0 0.0
        %1249 = vmatmul.mubr.f32.gmra.mrb[0].mxu0 %v1071
        %v1250 = vpop.f32.mrb[0].mxu0
        %v1251 = vadd.f32 %v930, %v1250
        %v1252 = vpop.f32.mrb[0].mxu0
        %1253 = vmatprep.mubr.f32.mxu0 0.0
        %1254 = vmatmul.mubr.f32.gmra.mrb[0].mxu0 %v1074
        %v1255 = vpop.f32.mrb[0].mxu0
        %v1256 = vadd.f32 %v935, %v1255
        %v1257 = vpop.f32.mrb[0].mxu0
        %1258 = vmatprep.mubr.f32.mxu0 0.0
        %1259 = vmatmul.mubr.f32.gmra.mrb[0].mxu0 %v1077
        %v1260 = vpop.f32.mrb[0].mxu0
        %v1261 = vadd.f32 %v940, %v1260
        %v1262 = vpop.f32.mrb[0].mxu0
        %1263 = vmatprep.mubr.f32.mxu0 0.0
        %1264 = vmatmul.mubr.f32.gmra.mrb[0].mxu0 %v1080
        %v1265 = vpop.f32.mrb[0].mxu0
        %v1266 = vadd.f32 %v945, %v1265
        %v1267 = vpop.f32.mrb[0].mxu0
        %1268 = vmatprep.mubr.f32.mxu0 0.0
        %1269 = vmatmul.mubr.f32.gmra.mrb[0].mxu0 %v1083
        %v1270 = vpop.f32.mrb[0].mxu0
        %v1271 = vadd.f32 %v950, %v1270
        %v1272 = vpop.f32.mrb[0].mxu0
        %1273 = vmatprep.mubr.f32.mxu0 0.0
        %1274 = vmatmul.mubr.f32.gmra.mrb[0].mxu0 %v1086
        %v1275 = vpop.f32.mrb[0].mxu0
        %v1276 = vadd.f32 %v955, %v1275
        %v1277 = vpop.f32.mrb[0].mxu0
        %1278 = vmatprep.mubr.f32.mxu0 0.0
        %1279 = vmatmul.mubr.f32.gmra.mrb[0].mxu0 %v1089
        %v1280 = vpop.f32.mrb[0].mxu0
        %v1281 = vadd.f32 %v960, %v1280
        %v1282 = vpop.f32.mrb[0].mxu0
        %1283 = vmatprep.mubr.f32.mxu0 0.0
        %1284 = vmatmul.mubr.f32.gmra.mrb[0].mxu0 %v1092
        %v1285 = vpop.f32.mrb[0].mxu0
        %v1286 = vadd.f32 %v965, %v1285
        %v1287 = vpop.f32.mrb[0].mxu0
        %1288 = vmatprep.mubr.f32.mxu0 0.0
        %1289 = vmatmul.mubr.f32.gmra.mrb[0].mxu0 %v1095
        %v1290 = vpop.f32.mrb[0].mxu0
        %v1291 = vadd.f32 %v970, %v1290
        %v1292 = vpop.f32.mrb[0].mxu0
        %1293 = vmatprep.mubr.f32.mxu0 0.0
        %1294 = vmatmul.mubr.f32.gmra.mrb[0].mxu0 %v1098
        %v1295 = vpop.f32.mrb[0].mxu0
        %v1296 = vadd.f32 %v975, %v1295
        %v1297 = vpop.f32.mrb[0].mxu0
        %1298 = vmatprep.mubr.f32.mxu0 0.0
        %1299 = vmatmul.mubr.f32.gmra.mrb[0].mxu0 %v1101
        %v1300 = vpop.f32.mrb[0].mxu0
        %v1301 = vadd.f32 %v980, %v1300
        %v1302 = vpop.f32.mrb[0].mxu0
        %1303 = vmatprep.mubr.f32.mxu0 0.0
        %1304 = vmatmul.mubr.f32.gmra.mrb[0].mxu0 %v1104
        %v1305 = vpop.f32.mrb[0].mxu0
        %v1306 = vadd.f32 %v985, %v1305
        %v1307 = vpop.f32.mrb[0].mxu0
        %1308 = vmatprep.mubr.f32.mxu0 0.0
        %1309 = vmatmul.mubr.f32.gmra.mrb[0].mxu0 %v1107
        %v1310 = vpop.f32.mrb[0].mxu0
        %v1311 = vadd.f32 %v990, %v1310
        %v1312 = vpop.f32.mrb[0].mxu0
        %1313 = vmatprep.mubr.f32.mxu0 0.0
        %1314 = vmatmul.mubr.f32.gmra.mrb[0].mxu0 %v1110
        %v1315 = vpop.f32.mrb[0].mxu0
        %v1316 = vadd.f32 %v995, %v1315
        %v1317 = vpop.f32.mrb[0].mxu0
        %1318 = vmatprep.mubr.f32.mxu0 0.0
        %1319 = vmatmul.mubr.f32.gmra.mrb[0].mxu0 %v1113
        %v1320 = vpop.f32.mrb[0].mxu0
        %v1321 = vadd.f32 %v1000, %v1320
        %v1322 = vpop.f32.mrb[0].mxu0
        %1323 = vmatprep.mubr.f32.mxu0 0.0
        %1324 = vmatmul.mubr.f32.gmra.mrb[0].mxu0 %v1116
        %v1325 = vpop.f32.mrb[0].mxu0
        %v1326 = vadd.f32 %v1005, %v1325
        %v1327 = vpop.f32.mrb[0].mxu0
        %1328 = vmatprep.mubr.f32.mxu0 0.0
        %1329 = vmatmul.mubr.f32.gmra.mrb[0].mxu0 %v1119
        %v1330 = vpop.f32.mrb[0].mxu0
        %v1331 = vadd.f32 %v1010, %v1330
        %v1332 = vpop.f32.mrb[0].mxu0
        %1333 = vmatprep.mubr.f32.mxu0 0.0
        %1334 = vmatmul.mubr.f32.gmra.mrb[0].mxu0 %v1122
        %v1335 = vpop.f32.mrb[0].mxu0
        %v1336 = vadd.f32 %v1015, %v1335
        %v1337 = vpop.f32.mrb[0].mxu0
        %1338 = vmatprep.mubr.f32.mxu0 0.0
        %1339 = vmatmul.mubr.f32.gmra.mrb[0].mxu0 %v1125
        %v1340 = vpop.f32.mrb[0].mxu0
        %v1341 = vadd.f32 %v1020, %v1340
        %v1342 = vpop.f32.mrb[0].mxu0
        %1343 = vmatprep.mubr.f32.mxu0 0.0
        %1344 = vmatmul.mubr.f32.gmra.mrb[0].mxu0 %v1128
        %v1345 = vpop.f32.mrb[0].mxu0
        %v1346 = vadd.f32 %v1025, %v1345
        %v1347 = vpop.f32.mrb[0].mxu0
        %1348 = vmatprep.mubr.f32.mxu0 0.0
        %1349 = vmatmul.mubr.f32.gmra.mrb[0].mxu0 %v1131
        %v1350 = vpop.f32.mrb[0].mxu0
        %v1351 = vadd.f32 %v1030, %v1350
        %v1352 = vpop.f32.mrb[0].mxu0
        %1353 = vmatprep.mubr.f32.mxu0 0.0
        %1354 = vmatmul.mubr.f32.gmra.mrb[0].mxu0 %v1134
        %v1355 = vpop.f32.mrb[0].mxu0
        %v1356 = vadd.f32 %v1035, %v1355
        %v1357 = vpop.f32.mrb[0].mxu0
        %1358 = vmatprep.mubr.f32.mxu0 0.0
        %1359 = vmatmul.mubr.f32.gmra.mrb[0].mxu0 %v1137
        %v1360 = vpop.f32.mrb[0].mxu0
        %v1361 = vadd.f32 %v1040, %v1360
        %v1362 = vpop.f32.mrb[0].mxu0
        %1363 = vdwg.mxu0
        %v1364 = vld [vmem:[#allocation2 + $0x2] sm:$0xff]
        %v1365 = vld [vmem:[#allocation2 + $0xa] sm:$0xff]
        %v1366 = vld [vmem:[#allocation2 + $0x1a] sm:$0xff]
        %v1367 = vld [vmem:[#allocation2 + $0x22] sm:$0xff]
        %v1368 = vld [vmem:[#allocation2 + $0x32] sm:$0xff]
        %v1369 = vld [vmem:[#allocation2 + $0x3a] sm:$0xff]
        %v1370 = vld [vmem:[#allocation2 + $0x4a] sm:$0xff]
        %v1371 = vld [vmem:[#allocation2 + $0x52] sm:$0xff]
        %v1372 = vld [vmem:[#allocation2 + $0x62] sm:$0xff]
        %v1373 = vld [vmem:[#allocation2 + $0x6a] sm:$0xff]
        %v1374 = vld [vmem:[#allocation2 + $0x7a] sm:$0xff]
        %v1375 = vld [vmem:[#allocation2 + $0x82] sm:$0xff]
        %v1376 = vld [vmem:[#allocation2 + $0x92] sm:$0xff]
        %v1377 = vld [vmem:[#allocation2 + $0x9a] sm:$0xff]
        %v1378 = vld [vmem:[#allocation2 + $0xaa] sm:$0xff]
        %v1379 = vld [vmem:[#allocation2 + $0xb2] sm:$0xff]
        %v1380 = vld [vmem:[#allocation2 + $0xc2] sm:$0xff]
        %v1381 = vld [vmem:[#allocation2 + $0xca] sm:$0xff]
        %v1382 = vld [vmem:[#allocation2 + $0xda] sm:$0xff]
        %v1383 = vld [vmem:[#allocation2 + $0xe2] sm:$0xff]
        %v1384 = vld [vmem:[#allocation2 + $0xf2] sm:$0xff]
        %v1385 = vld [vmem:[#allocation2 + $0xfa] sm:$0xff]
        %v1386 = vld [vmem:[#allocation2 + $0x10a] sm:$0xff]
        %v1387 = vld [vmem:[#allocation2 + $0x112] sm:$0xff]
        %v1388 = vld [vmem:[#allocation2 + $0x122] sm:$0xff]
        %v1389 = vld [vmem:[#allocation2 + $0x12a] sm:$0xff]
        %v1390 = vld [vmem:[#allocation2 + $0x13a] sm:$0xff]
        %v1391 = vld [vmem:[#allocation2 + $0x142] sm:$0xff]
        %v1392 = vld [vmem:[#allocation2 + $0x152] sm:$0xff]
        %v1393 = vld [vmem:[#allocation2 + $0x15a] sm:$0xff]
        %v1394 = vld [vmem:[#allocation2 + $0x16a] sm:$0xff]
        %v1395 = vld [vmem:[#allocation2 + $0x172] sm:$0xff]
        %s1396 = scalar_lea.vmem [#allocation6], 16
        %v1397 = vld [vmem:[%s1396] sm:$0xff]
        %v1399 = vsel %vm436, %v1364, 0
        %v1402 = vsel %vm436, %v1365, 0
        %v1405 = vsel %vm436, %v1366, 0
        %v1408 = vsel %vm436, %v1367, 0
        %v1411 = vsel %vm436, %v1368, 0
        %v1414 = vsel %vm436, %v1369, 0
        %v1417 = vsel %vm436, %v1370, 0
        %v1420 = vsel %vm436, %v1371, 0
        %v1423 = vsel %vm436, %v1372, 0
        %v1426 = vsel %vm436, %v1373, 0
        %v1429 = vsel %vm436, %v1374, 0
        %v1432 = vsel %vm436, %v1375, 0
        %v1435 = vsel %vm436, %v1376, 0
        %v1438 = vsel %vm436, %v1377, 0
        %v1441 = vsel %vm436, %v1378, 0
        %v1444 = vsel %vm436, %v1379, 0
        %v1447 = vsel %vm436, %v1380, 0
        %v1450 = vsel %vm436, %v1381, 0
        %v1453 = vsel %vm436, %v1382, 0
        %v1456 = vsel %vm436, %v1383, 0
        %v1459 = vsel %vm436, %v1384, 0
        %v1462 = vsel %vm436, %v1385, 0
        %v1465 = vsel %vm436, %v1386, 0
        %v1468 = vsel %vm436, %v1387, 0
        %v1471 = vsel %vm436, %v1388, 0
        %v1474 = vsel %vm436, %v1389, 0
        %v1477 = vsel %vm436, %v1390, 0
        %v1480 = vsel %vm436, %v1391, 0
        %v1483 = vsel %vm436, %v1392, 0
        %v1486 = vsel %vm436, %v1393, 0
        %v1489 = vsel %vm436, %v1394, 0
        %v1492 = vsel %vm436, %v1395, 0
        %1494 = vmatprep.subr.mxu0 0.0
        %1495 = vmatpush1.msra.mxu0 %v1397
        %1496 = vmatprep.subr.mxu0 0.0
        %1497 = vmatpush1.msra.mxu0 0.0
        %1498 = vmatprep.subr.mxu0 0.0
        %1499 = vmatpush1.msra.mxu0 0.0
        %1500 = vmatprep.subr.mxu0 0.0
        %1501 = vmatpush1.msra.mxu0 0.0
        %1502 = vmatprep.subr.mxu0 0.0
        %1503 = vmatpush1.msra.mxu0 0.0
        %1504 = vmatprep.subr.mxu0 0.0
        %1505 = vmatpush1.msra.mxu0 0.0
        %1506 = vmatprep.subr.mxu0 0.0
        %1507 = vmatpush1.msra.mxu0 0.0
        %1508 = vmatprep.subr.mxu0 0.0
        %1509 = vmatpush1.msra.mxu0 0.0
        %1510 = vmatprep.subr.mxu0 0.0
        %1511 = vmatpush1.msra.mxu0 0.0
        %1512 = vmatprep.subr.mxu0 0.0
        %1513 = vmatpush1.msra.mxu0 0.0
        %1514 = vmatprep.subr.mxu0 0.0
        %1515 = vmatpush1.msra.mxu0 0.0
        %1516 = vmatprep.subr.mxu0 0.0
        %1517 = vmatpush1.msra.mxu0 0.0
        %1518 = vmatprep.subr.mxu0 0.0
        %1519 = vmatpush1.msra.mxu0 0.0
        %1520 = vmatprep.subr.mxu0 0.0
        %1521 = vmatpush1.msra.mxu0 0.0
        %1522 = vmatprep.subr.mxu0 0.0
        %1523 = vmatpush1.msra.mxu0 0.0
        %1524 = vmatprep.subr.mxu0 0.0
        %1525 = vmatpush1.msra.mxu0 0.0
        %1526 = vmatprep.subr.mxu0 0.0
        %1527 = vmatpush1.msra.mxu0 0.0
        %1528 = vmatprep.subr.mxu0 0.0
        %1529 = vmatpush1.msra.mxu0 0.0
        %1530 = vmatprep.subr.mxu0 0.0
        %1531 = vmatpush1.msra.mxu0 0.0
        %1532 = vmatprep.subr.mxu0 0.0
        %1533 = vmatpush1.msra.mxu0 0.0
        %1534 = vmatprep.subr.mxu0 0.0
        %1535 = vmatpush1.msra.mxu0 0.0
        %1536 = vmatprep.subr.mxu0 0.0
        %1537 = vmatpush1.msra.mxu0 0.0
        %1538 = vmatprep.subr.mxu0 0.0
        %1539 = vmatpush1.msra.mxu0 0.0
        %1540 = vmatprep.subr.mxu0 0.0
        %1541 = vmatpush1.msra.mxu0 0.0
        %1542 = vmatprep.subr.mxu0 0.0
        %1543 = vmatpush1.msra.mxu0 0.0
        %1544 = vmatprep.subr.mxu0 0.0
        %1545 = vmatpush1.msra.mxu0 0.0
        %1546 = vmatprep.subr.mxu0 0.0
        %1547 = vmatpush1.msra.mxu0 0.0
        %1548 = vmatprep.subr.mxu0 0.0
        %1549 = vmatpush1.msra.mxu0 0.0
        %1550 = vmatprep.subr.mxu0 0.0
        %1551 = vmatpush1.msra.mxu0 0.0
        %1552 = vmatprep.subr.mxu0 0.0
        %1553 = vmatpush1.msra.mxu0 0.0
        %1554 = vmatprep.subr.mxu0 0.0
        %1555 = vmatpush1.msra.mxu0 0.0
        %1556 = vmatprep.subr.mxu0 0.0
        %1557 = vmatpush1.msra.mxu0 0.0
        %1558 = vmatprep.mubr.f32.mxu0 0.0
        %1559 = vmatmul.mubr.f32.gmra.mrb[0].mxu0 %v1399
        %v1560 = vpop.f32.mrb[0].mxu0
        %v1561 = vadd.f32 0.0, %v1560
        %v1562 = vpop.f32.mrb[0].mxu0
        %1563 = vmatprep.mubr.f32.mxu0 0.0
        %1564 = vmatmul.mubr.f32.gmra.mrb[0].mxu0 %v1402
        %v1565 = vpop.f32.mrb[0].mxu0
        %v1566 = vadd.f32 0.0, %v1565
        %v1567 = vpop.f32.mrb[0].mxu0
        %1568 = vmatprep.mubr.f32.mxu0 0.0
        %1569 = vmatmul.mubr.f32.gmra.mrb[0].mxu0 %v1405
        %v1570 = vpop.f32.mrb[0].mxu0
        %v1571 = vadd.f32 0.0, %v1570
        %v1572 = vpop.f32.mrb[0].mxu0
        %1573 = vmatprep.mubr.f32.mxu0 0.0
        %1574 = vmatmul.mubr.f32.gmra.mrb[0].mxu0 %v1408
        %v1575 = vpop.f32.mrb[0].mxu0
        %v1576 = vadd.f32 0.0, %v1575
        %v1577 = vpop.f32.mrb[0].mxu0
        %1578 = vmatprep.mubr.f32.mxu0 0.0
        %1579 = vmatmul.mubr.f32.gmra.mrb[0].mxu0 %v1411
        %v1580 = vpop.f32.mrb[0].mxu0
        %v1581 = vadd.f32 0.0, %v1580
        %v1582 = vpop.f32.mrb[0].mxu0
        %1583 = vmatprep.mubr.f32.mxu0 0.0
        %1584 = vmatmul.mubr.f32.gmra.mrb[0].mxu0 %v1414
        %v1585 = vpop.f32.mrb[0].mxu0
        %v1586 = vadd.f32 0.0, %v1585
        %v1587 = vpop.f32.mrb[0].mxu0
        %1588 = vmatprep.mubr.f32.mxu0 0.0
        %1589 = vmatmul.mubr.f32.gmra.mrb[0].mxu0 %v1417
        %v1590 = vpop.f32.mrb[0].mxu0
        %v1591 = vadd.f32 0.0, %v1590
        %v1592 = vpop.f32.mrb[0].mxu0
        %1593 = vmatprep.mubr.f32.mxu0 0.0
        %1594 = vmatmul.mubr.f32.gmra.mrb[0].mxu0 %v1420
        %v1595 = vpop.f32.mrb[0].mxu0
        %v1596 = vadd.f32 0.0, %v1595
        %v1597 = vpop.f32.mrb[0].mxu0
        %1598 = vmatprep.mubr.f32.mxu0 0.0
        %1599 = vmatmul.mubr.f32.gmra.mrb[0].mxu0 %v1423
        %v1600 = vpop.f32.mrb[0].mxu0
        %v1601 = vadd.f32 0.0, %v1600
        %v1602 = vpop.f32.mrb[0].mxu0
        %1603 = vmatprep.mubr.f32.mxu0 0.0
        %1604 = vmatmul.mubr.f32.gmra.mrb[0].mxu0 %v1426
        %v1605 = vpop.f32.mrb[0].mxu0
        %v1606 = vadd.f32 0.0, %v1605
        %v1607 = vpop.f32.mrb[0].mxu0
        %1608 = vmatprep.mubr.f32.mxu0 0.0
        %1609 = vmatmul.mubr.f32.gmra.mrb[0].mxu0 %v1429
        %v1610 = vpop.f32.mrb[0].mxu0
        %v1611 = vadd.f32 0.0, %v1610
        %v1612 = vpop.f32.mrb[0].mxu0
        %1613 = vmatprep.mubr.f32.mxu0 0.0
        %1614 = vmatmul.mubr.f32.gmra.mrb[0].mxu0 %v1432
        %v1615 = vpop.f32.mrb[0].mxu0
        %v1616 = vadd.f32 0.0, %v1615
        %v1617 = vpop.f32.mrb[0].mxu0
        %1618 = vmatprep.mubr.f32.mxu0 0.0
        %1619 = vmatmul.mubr.f32.gmra.mrb[0].mxu0 %v1435
        %v1620 = vpop.f32.mrb[0].mxu0
        %v1621 = vadd.f32 0.0, %v1620
        %v1622 = vpop.f32.mrb[0].mxu0
        %1623 = vmatprep.mubr.f32.mxu0 0.0
        %1624 = vmatmul.mubr.f32.gmra.mrb[0].mxu0 %v1438
        %v1625 = vpop.f32.mrb[0].mxu0
        %v1626 = vadd.f32 0.0, %v1625
        %v1627 = vpop.f32.mrb[0].mxu0
        %1628 = vmatprep.mubr.f32.mxu0 0.0
        %1629 = vmatmul.mubr.f32.gmra.mrb[0].mxu0 %v1441
        %v1630 = vpop.f32.mrb[0].mxu0
        %v1631 = vadd.f32 0.0, %v1630
        %v1632 = vpop.f32.mrb[0].mxu0
        %1633 = vmatprep.mubr.f32.mxu0 0.0
        %1634 = vmatmul.mubr.f32.gmra.mrb[0].mxu0 %v1444
        %v1635 = vpop.f32.mrb[0].mxu0
        %v1636 = vadd.f32 0.0, %v1635
        %v1637 = vpop.f32.mrb[0].mxu0
        %1638 = vmatprep.mubr.f32.mxu0 0.0
        %1639 = vmatmul.mubr.f32.gmra.mrb[0].mxu0 %v1447
        %v1640 = vpop.f32.mrb[0].mxu0
        %v1641 = vadd.f32 0.0, %v1640
        %v1642 = vpop.f32.mrb[0].mxu0
        %1643 = vmatprep.mubr.f32.mxu0 0.0
        %1644 = vmatmul.mubr.f32.gmra.mrb[0].mxu0 %v1450
        %v1645 = vpop.f32.mrb[0].mxu0
        %v1646 = vadd.f32 0.0, %v1645
        %v1647 = vpop.f32.mrb[0].mxu0
        %1648 = vmatprep.mubr.f32.mxu0 0.0
        %1649 = vmatmul.mubr.f32.gmra.mrb[0].mxu0 %v1453
        %v1650 = vpop.f32.mrb[0].mxu0
        %v1651 = vadd.f32 0.0, %v1650
        %v1652 = vpop.f32.mrb[0].mxu0
        %1653 = vmatprep.mubr.f32.mxu0 0.0
        %1654 = vmatmul.mubr.f32.gmra.mrb[0].mxu0 %v1456
        %v1655 = vpop.f32.mrb[0].mxu0
        %v1656 = vadd.f32 0.0, %v1655
        %v1657 = vpop.f32.mrb[0].mxu0
        %1658 = vmatprep.mubr.f32.mxu0 0.0
        %1659 = vmatmul.mubr.f32.gmra.mrb[0].mxu0 %v1459
        %v1660 = vpop.f32.mrb[0].mxu0
        %v1661 = vadd.f32 0.0, %v1660
        %v1662 = vpop.f32.mrb[0].mxu0
        %1663 = vmatprep.mubr.f32.mxu0 0.0
        %1664 = vmatmul.mubr.f32.gmra.mrb[0].mxu0 %v1462
        %v1665 = vpop.f32.mrb[0].mxu0
        %v1666 = vadd.f32 0.0, %v1665
        %v1667 = vpop.f32.mrb[0].mxu0
        %1668 = vmatprep.mubr.f32.mxu0 0.0
        %1669 = vmatmul.mubr.f32.gmra.mrb[0].mxu0 %v1465
        %v1670 = vpop.f32.mrb[0].mxu0
        %v1671 = vadd.f32 0.0, %v1670
        %v1672 = vpop.f32.mrb[0].mxu0
        %1673 = vmatprep.mubr.f32.mxu0 0.0
        %1674 = vmatmul.mubr.f32.gmra.mrb[0].mxu0 %v1468
        %v1675 = vpop.f32.mrb[0].mxu0
        %v1676 = vadd.f32 0.0, %v1675
        %v1677 = vpop.f32.mrb[0].mxu0
        %1678 = vmatprep.mubr.f32.mxu0 0.0
        %1679 = vmatmul.mubr.f32.gmra.mrb[0].mxu0 %v1471
        %v1680 = vpop.f32.mrb[0].mxu0
        %v1681 = vadd.f32 0.0, %v1680
        %v1682 = vpop.f32.mrb[0].mxu0
        %1683 = vmatprep.mubr.f32.mxu0 0.0
        %1684 = vmatmul.mubr.f32.gmra.mrb[0].mxu0 %v1474
        %v1685 = vpop.f32.mrb[0].mxu0
        %v1686 = vadd.f32 0.0, %v1685
        %v1687 = vpop.f32.mrb[0].mxu0
        %1688 = vmatprep.mubr.f32.mxu0 0.0
        %1689 = vmatmul.mubr.f32.gmra.mrb[0].mxu0 %v1477
        %v1690 = vpop.f32.mrb[0].mxu0
        %v1691 = vadd.f32 0.0, %v1690
        %v1692 = vpop.f32.mrb[0].mxu0
        %1693 = vmatprep.mubr.f32.mxu0 0.0
        %1694 = vmatmul.mubr.f32.gmra.mrb[0].mxu0 %v1480
        %v1695 = vpop.f32.mrb[0].mxu0
        %v1696 = vadd.f32 0.0, %v1695
        %v1697 = vpop.f32.mrb[0].mxu0
        %1698 = vmatprep.mubr.f32.mxu0 0.0
        %1699 = vmatmul.mubr.f32.gmra.mrb[0].mxu0 %v1483
        %v1700 = vpop.f32.mrb[0].mxu0
        %v1701 = vadd.f32 0.0, %v1700
        %v1702 = vpop.f32.mrb[0].mxu0
        %1703 = vmatprep.mubr.f32.mxu0 0.0
        %1704 = vmatmul.mubr.f32.gmra.mrb[0].mxu0 %v1486
        %v1705 = vpop.f32.mrb[0].mxu0
        %v1706 = vadd.f32 0.0, %v1705
        %v1707 = vpop.f32.mrb[0].mxu0
        %1708 = vmatprep.mubr.f32.mxu0 0.0
        %1709 = vmatmul.mubr.f32.gmra.mrb[0].mxu0 %v1489
        %v1710 = vpop.f32.mrb[0].mxu0
        %v1711 = vadd.f32 0.0, %v1710
        %v1712 = vpop.f32.mrb[0].mxu0
        %1713 = vmatprep.mubr.f32.mxu0 0.0
        %1714 = vmatmul.mubr.f32.gmra.mrb[0].mxu0 %v1492
        %v1715 = vpop.f32.mrb[0].mxu0
        %v1716 = vadd.f32 0.0, %v1715
        %v1717 = vpop.f32.mrb[0].mxu0
        %1718 = vdwg.mxu0
        %v1719 = vadd.f32 %v1206, %v1561
        %v1720 = vadd.f32 %v1211, %v1566
        %v1721 = vadd.f32 %v1216, %v1571
        %v1722 = vadd.f32 %v1221, %v1576
        %v1723 = vadd.f32 %v1226, %v1581
        %v1724 = vadd.f32 %v1231, %v1586
        %v1725 = vadd.f32 %v1236, %v1591
        %v1726 = vadd.f32 %v1241, %v1596
        %v1727 = vadd.f32 %v1246, %v1601
        %v1728 = vadd.f32 %v1251, %v1606
        %v1729 = vadd.f32 %v1256, %v1611
        %v1730 = vadd.f32 %v1261, %v1616
        %v1731 = vadd.f32 %v1266, %v1621
        %v1732 = vadd.f32 %v1271, %v1626
        %v1733 = vadd.f32 %v1276, %v1631
        %v1734 = vadd.f32 %v1281, %v1636
        %v1735 = vadd.f32 %v1286, %v1641
        %v1736 = vadd.f32 %v1291, %v1646
        %v1737 = vadd.f32 %v1296, %v1651
        %v1738 = vadd.f32 %v1301, %v1656
        %v1739 = vadd.f32 %v1306, %v1661
        %v1740 = vadd.f32 %v1311, %v1666
        %v1741 = vadd.f32 %v1316, %v1671
        %v1742 = vadd.f32 %v1321, %v1676
        %v1743 = vadd.f32 %v1326, %v1681
        %v1744 = vadd.f32 %v1331, %v1686
        %v1745 = vadd.f32 %v1336, %v1691
        %v1746 = vadd.f32 %v1341, %v1696
        %v1747 = vadd.f32 %v1346, %v1701
        %v1748 = vadd.f32 %v1351, %v1706
        %v1749 = vadd.f32 %v1356, %v1711
        %v1750 = vadd.f32 %v1361, %v1716
        %v1751 = vld [vmem:[%s606] sm:$0xff]
        %v1752 = vld [vmem:[%s606 + $0x8] sm:$0xff]
        %v1753 = vld [vmem:[%s606 + $0x18] sm:$0xff]
        %v1754 = vld [vmem:[%s606 + $0x20] sm:$0xff]
        %v1755 = vld [vmem:[%s606 + $0x30] sm:$0xff]
        %v1756 = vld [vmem:[%s606 + $0x38] sm:$0xff]
        %v1757 = vld [vmem:[%s606 + $0x48] sm:$0xff]
        %v1758 = vld [vmem:[%s606 + $0x50] sm:$0xff]
        %v1759 = vld [vmem:[%s606 + $0x60] sm:$0xff]
        %v1760 = vld [vmem:[%s606 + $0x68] sm:$0xff]
        %v1761 = vld [vmem:[%s606 + $0x78] sm:$0xff]
        %v1762 = vld [vmem:[%s606 + $0x80] sm:$0xff]
        %v1763 = vld [vmem:[%s606 + $0x90] sm:$0xff]
        %v1764 = vld [vmem:[%s606 + $0x98] sm:$0xff]
        %v1765 = vld [vmem:[%s606 + $0xa8] sm:$0xff]
        %v1766 = vld [vmem:[%s606 + $0xb0] sm:$0xff]
        %v1767 = vld [vmem:[%s606 + $0xc0] sm:$0xff]
        %v1768 = vld [vmem:[%s606 + $0xc8] sm:$0xff]
        %v1769 = vld [vmem:[%s606 + $0xd8] sm:$0xff]
        %v1770 = vld [vmem:[%s606 + $0xe0] sm:$0xff]
        %v1771 = vld [vmem:[%s606 + $0xf0] sm:$0xff]
        %v1772 = vld [vmem:[%s606 + $0xf8] sm:$0xff]
        %v1773 = vld [vmem:[%s606 + $0x108] sm:$0xff]
        %v1774 = vld [vmem:[%s606 + $0x110] sm:$0xff]
        %v1775 = vld [vmem:[%s606 + $0x120] sm:$0xff]
        %v1776 = vld [vmem:[%s606 + $0x128] sm:$0xff]
        %v1777 = vld [vmem:[%s606 + $0x138] sm:$0xff]
        %v1778 = vld [vmem:[%s606 + $0x140] sm:$0xff]
        %v1779 = vld [vmem:[%s606 + $0x150] sm:$0xff]
        %v1780 = vld [vmem:[%s606 + $0x158] sm:$0xff]
        %v1781 = vld [vmem:[%s606 + $0x168] sm:$0xff]
        %v1782 = vld [vmem:[%s606 + $0x170] sm:$0xff]
        %s1783 = scalar_lea.vmem [#allocation6], 24
        %v1784 = vld [vmem:[%s1783] sm:$0xff]
        %v1786 = vsel %vm436, %v1751, 0
        %v1789 = vsel %vm436, %v1752, 0
        %v1792 = vsel %vm436, %v1753, 0
        %v1795 = vsel %vm436, %v1754, 0
        %v1798 = vsel %vm436, %v1755, 0
        %v1801 = vsel %vm436, %v1756, 0
        %v1804 = vsel %vm436, %v1757, 0
        %v1807 = vsel %vm436, %v1758, 0
        %v1810 = vsel %vm436, %v1759, 0
        %v1813 = vsel %vm436, %v1760, 0
        %v1816 = vsel %vm436, %v1761, 0
        %v1819 = vsel %vm436, %v1762, 0
        %v1822 = vsel %vm436, %v1763, 0
        %v1825 = vsel %vm436, %v1764, 0
        %v1828 = vsel %vm436, %v1765, 0
        %v1831 = vsel %vm436, %v1766, 0
        %v1834 = vsel %vm436, %v1767, 0
        %v1837 = vsel %vm436, %v1768, 0
        %v1840 = vsel %vm436, %v1769, 0
        %v1843 = vsel %vm436, %v1770, 0
        %v1846 = vsel %vm436, %v1771, 0
        %v1849 = vsel %vm436, %v1772, 0
        %v1852 = vsel %vm436, %v1773, 0
        %v1855 = vsel %vm436, %v1774, 0
        %v1858 = vsel %vm436, %v1775, 0
        %v1861 = vsel %vm436, %v1776, 0
        %v1864 = vsel %vm436, %v1777, 0
        %v1867 = vsel %vm436, %v1778, 0
        %v1870 = vsel %vm436, %v1779, 0
        %v1873 = vsel %vm436, %v1780, 0
        %v1876 = vsel %vm436, %v1781, 0
        %v1879 = vsel %vm436, %v1782, 0
        %1881 = vmatprep.subr.mxu0 0.0
        %1882 = vmatpush1.msra.mxu0 %v1784
        %1883 = vmatprep.subr.mxu0 0.0
        %1884 = vmatpush1.msra.mxu0 0.0
        %1885 = vmatprep.subr.mxu0 0.0
        %1886 = vmatpush1.msra.mxu0 0.0
        %1887 = vmatprep.subr.mxu0 0.0
        %1888 = vmatpush1.msra.mxu0 0.0
        %1889 = vmatprep.subr.mxu0 0.0
        %1890 = vmatpush1.msra.mxu0 0.0
        %1891 = vmatprep.subr.mxu0 0.0
        %1892 = vmatpush1.msra.mxu0 0.0
        %1893 = vmatprep.subr.mxu0 0.0
        %1894 = vmatpush1.msra.mxu0 0.0
        %1895 = vmatprep.subr.mxu0 0.0
        %1896 = vmatpush1.msra.mxu0 0.0
        %1897 = vmatprep.subr.mxu0 0.0
        %1898 = vmatpush1.msra.mxu0 0.0
        %1899 = vmatprep.subr.mxu0 0.0
        %1900 = vmatpush1.msra.mxu0 0.0
        %1901 = vmatprep.subr.mxu0 0.0
        %1902 = vmatpush1.msra.mxu0 0.0
        %1903 = vmatprep.subr.mxu0 0.0
        %1904 = vmatpush1.msra.mxu0 0.0
        %1905 = vmatprep.subr.mxu0 0.0
        %1906 = vmatpush1.msra.mxu0 0.0
        %1907 = vmatprep.subr.mxu0 0.0
        %1908 = vmatpush1.msra.mxu0 0.0
        %1909 = vmatprep.subr.mxu0 0.0
        %1910 = vmatpush1.msra.mxu0 0.0
        %1911 = vmatprep.subr.mxu0 0.0
        %1912 = vmatpush1.msra.mxu0 0.0
        %1913 = vmatprep.subr.mxu0 0.0
        %1914 = vmatpush1.msra.mxu0 0.0
        %1915 = vmatprep.subr.mxu0 0.0
        %1916 = vmatpush1.msra.mxu0 0.0
        %1917 = vmatprep.subr.mxu0 0.0
        %1918 = vmatpush1.msra.mxu0 0.0
        %1919 = vmatprep.subr.mxu0 0.0
        %1920 = vmatpush1.msra.mxu0 0.0
        %1921 = vmatprep.subr.mxu0 0.0
        %1922 = vmatpush1.msra.mxu0 0.0
        %1923 = vmatprep.subr.mxu0 0.0
        %1924 = vmatpush1.msra.mxu0 0.0
        %1925 = vmatprep.subr.mxu0 0.0
        %1926 = vmatpush1.msra.mxu0 0.0
        %1927 = vmatprep.subr.mxu0 0.0
        %1928 = vmatpush1.msra.mxu0 0.0
        %1929 = vmatprep.subr.mxu0 0.0
        %1930 = vmatpush1.msra.mxu0 0.0
        %1931 = vmatprep.subr.mxu0 0.0
        %1932 = vmatpush1.msra.mxu0 0.0
        %1933 = vmatprep.subr.mxu0 0.0
        %1934 = vmatpush1.msra.mxu0 0.0
        %1935 = vmatprep.subr.mxu0 0.0
        %1936 = vmatpush1.msra.mxu0 0.0
        %1937 = vmatprep.subr.mxu0 0.0
        %1938 = vmatpush1.msra.mxu0 0.0
        %1939 = vmatprep.subr.mxu0 0.0
        %1940 = vmatpush1.msra.mxu0 0.0
        %1941 = vmatprep.subr.mxu0 0.0
        %1942 = vmatpush1.msra.mxu0 0.0
        %1943 = vmatprep.subr.mxu0 0.0
        %1944 = vmatpush1.msra.mxu0 0.0
        %1945 = vmatprep.mubr.f32.mxu0 0.0
        %1946 = vmatmul.mubr.f32.gmra.mrb[0].mxu0 %v1786
        %v1947 = vpop.f32.mrb[0].mxu0
        %v1948 = vadd.f32 0.0, %v1947
        %v1949 = vpop.f32.mrb[0].mxu0
        %1950 = vmatprep.mubr.f32.mxu0 0.0
        %1951 = vmatmul.mubr.f32.gmra.mrb[0].mxu0 %v1789
        %v1952 = vpop.f32.mrb[0].mxu0
        %v1953 = vadd.f32 0.0, %v1952
        %v1954 = vpop.f32.mrb[0].mxu0
        %1955 = vmatprep.mubr.f32.mxu0 0.0
        %1956 = vmatmul.mubr.f32.gmra.mrb[0].mxu0 %v1792
        %v1957 = vpop.f32.mrb[0].mxu0
        %v1958 = vadd.f32 0.0, %v1957
        %v1959 = vpop.f32.mrb[0].mxu0
        %1960 = vmatprep.mubr.f32.mxu0 0.0
        %1961 = vmatmul.mubr.f32.gmra.mrb[0].mxu0 %v1795
        %v1962 = vpop.f32.mrb[0].mxu0
        %v1963 = vadd.f32 0.0, %v1962
        %v1964 = vpop.f32.mrb[0].mxu0
        %1965 = vmatprep.mubr.f32.mxu0 0.0
        %1966 = vmatmul.mubr.f32.gmra.mrb[0].mxu0 %v1798
        %v1967 = vpop.f32.mrb[0].mxu0
        %v1968 = vadd.f32 0.0, %v1967
        %v1969 = vpop.f32.mrb[0].mxu0
        %1970 = vmatprep.mubr.f32.mxu0 0.0
        %1971 = vmatmul.mubr.f32.gmra.mrb[0].mxu0 %v1801
        %v1972 = vpop.f32.mrb[0].mxu0
        %v1973 = vadd.f32 0.0, %v1972
        %v1974 = vpop.f32.mrb[0].mxu0
        %1975 = vmatprep.mubr.f32.mxu0 0.0
        %1976 = vmatmul.mubr.f32.gmra.mrb[0].mxu0 %v1804
        %v1977 = vpop.f32.mrb[0].mxu0
        %v1978 = vadd.f32 0.0, %v1977
        %v1979 = vpop.f32.mrb[0].mxu0
        %1980 = vmatprep.mubr.f32.mxu0 0.0
        %1981 = vmatmul.mubr.f32.gmra.mrb[0].mxu0 %v1807
        %v1982 = vpop.f32.mrb[0].mxu0
        %v1983 = vadd.f32 0.0, %v1982
        %v1984 = vpop.f32.mrb[0].mxu0
        %1985 = vmatprep.mubr.f32.mxu0 0.0
        %1986 = vmatmul.mubr.f32.gmra.mrb[0].mxu0 %v1810
        %v1987 = vpop.f32.mrb[0].mxu0
        %v1988 = vadd.f32 0.0, %v1987
        %v1989 = vpop.f32.mrb[0].mxu0
        %1990 = vmatprep.mubr.f32.mxu0 0.0
        %1991 = vmatmul.mubr.f32.gmra.mrb[0].mxu0 %v1813
        %v1992 = vpop.f32.mrb[0].mxu0
        %v1993 = vadd.f32 0.0, %v1992
        %v1994 = vpop.f32.mrb[0].mxu0
        %1995 = vmatprep.mubr.f32.mxu0 0.0
        %1996 = vmatmul.mubr.f32.gmra.mrb[0].mxu0 %v1816
        %v1997 = vpop.f32.mrb[0].mxu0
        %v1998 = vadd.f32 0.0, %v1997
        %v1999 = vpop.f32.mrb[0].mxu0
        %2000 = vmatprep.mubr.f32.mxu0 0.0
        %2001 = vmatmul.mubr.f32.gmra.mrb[0].mxu0 %v1819
        %v2002 = vpop.f32.mrb[0].mxu0
        %v2003 = vadd.f32 0.0, %v2002
        %v2004 = vpop.f32.mrb[0].mxu0
        %2005 = vmatprep.mubr.f32.mxu0 0.0
        %2006 = vmatmul.mubr.f32.gmra.mrb[0].mxu0 %v1822
        %v2007 = vpop.f32.mrb[0].mxu0
        %v2008 = vadd.f32 0.0, %v2007
        %v2009 = vpop.f32.mrb[0].mxu0
        %2010 = vmatprep.mubr.f32.mxu0 0.0
        %2011 = vmatmul.mubr.f32.gmra.mrb[0].mxu0 %v1825
        %v2012 = vpop.f32.mrb[0].mxu0
        %v2013 = vadd.f32 0.0, %v2012
        %v2014 = vpop.f32.mrb[0].mxu0
        %2015 = vmatprep.mubr.f32.mxu0 0.0
        %2016 = vmatmul.mubr.f32.gmra.mrb[0].mxu0 %v1828
        %v2017 = vpop.f32.mrb[0].mxu0
        %v2018 = vadd.f32 0.0, %v2017
        %v2019 = vpop.f32.mrb[0].mxu0
        %2020 = vmatprep.mubr.f32.mxu0 0.0
        %2021 = vmatmul.mubr.f32.gmra.mrb[0].mxu0 %v1831
        %v2022 = vpop.f32.mrb[0].mxu0
        %v2023 = vadd.f32 0.0, %v2022
        %v2024 = vpop.f32.mrb[0].mxu0
        %2025 = vmatprep.mubr.f32.mxu0 0.0
        %2026 = vmatmul.mubr.f32.gmra.mrb[0].mxu0 %v1834
        %v2027 = vpop.f32.mrb[0].mxu0
        %v2028 = vadd.f32 0.0, %v2027
        %v2029 = vpop.f32.mrb[0].mxu0
        %2030 = vmatprep.mubr.f32.mxu0 0.0
        %2031 = vmatmul.mubr.f32.gmra.mrb[0].mxu0 %v1837
        %v2032 = vpop.f32.mrb[0].mxu0
        %v2033 = vadd.f32 0.0, %v2032
        %v2034 = vpop.f32.mrb[0].mxu0
        %2035 = vmatprep.mubr.f32.mxu0 0.0
        %2036 = vmatmul.mubr.f32.gmra.mrb[0].mxu0 %v1840
        %v2037 = vpop.f32.mrb[0].mxu0
        %v2038 = vadd.f32 0.0, %v2037
        %v2039 = vpop.f32.mrb[0].mxu0
        %2040 = vmatprep.mubr.f32.mxu0 0.0
        %2041 = vmatmul.mubr.f32.gmra.mrb[0].mxu0 %v1843
        %v2042 = vpop.f32.mrb[0].mxu0
        %v2043 = vadd.f32 0.0, %v2042
        %v2044 = vpop.f32.mrb[0].mxu0
        %2045 = vmatprep.mubr.f32.mxu0 0.0
        %2046 = vmatmul.mubr.f32.gmra.mrb[0].mxu0 %v1846
        %v2047 = vpop.f32.mrb[0].mxu0
        %v2048 = vadd.f32 0.0, %v2047
        %v2049 = vpop.f32.mrb[0].mxu0
        %2050 = vmatprep.mubr.f32.mxu0 0.0
        %2051 = vmatmul.mubr.f32.gmra.mrb[0].mxu0 %v1849
        %v2052 = vpop.f32.mrb[0].mxu0
        %v2053 = vadd.f32 0.0, %v2052
        %v2054 = vpop.f32.mrb[0].mxu0
        %2055 = vmatprep.mubr.f32.mxu0 0.0
        %2056 = vmatmul.mubr.f32.gmra.mrb[0].mxu0 %v1852
        %v2057 = vpop.f32.mrb[0].mxu0
        %v2058 = vadd.f32 0.0, %v2057
        %v2059 = vpop.f32.mrb[0].mxu0
        %2060 = vmatprep.mubr.f32.mxu0 0.0
        %2061 = vmatmul.mubr.f32.gmra.mrb[0].mxu0 %v1855
        %v2062 = vpop.f32.mrb[0].mxu0
        %v2063 = vadd.f32 0.0, %v2062
        %v2064 = vpop.f32.mrb[0].mxu0
        %2065 = vmatprep.mubr.f32.mxu0 0.0
        %2066 = vmatmul.mubr.f32.gmra.mrb[0].mxu0 %v1858
        %v2067 = vpop.f32.mrb[0].mxu0
        %v2068 = vadd.f32 0.0, %v2067
        %v2069 = vpop.f32.mrb[0].mxu0
        %2070 = vmatprep.mubr.f32.mxu0 0.0
        %2071 = vmatmul.mubr.f32.gmra.mrb[0].mxu0 %v1861
        %v2072 = vpop.f32.mrb[0].mxu0
        %v2073 = vadd.f32 0.0, %v2072
        %v2074 = vpop.f32.mrb[0].mxu0
        %2075 = vmatprep.mubr.f32.mxu0 0.0
        %2076 = vmatmul.mubr.f32.gmra.mrb[0].mxu0 %v1864
        %v2077 = vpop.f32.mrb[0].mxu0
        %v2078 = vadd.f32 0.0, %v2077
        %v2079 = vpop.f32.mrb[0].mxu0
        %2080 = vmatprep.mubr.f32.mxu0 0.0
        %2081 = vmatmul.mubr.f32.gmra.mrb[0].mxu0 %v1867
        %v2082 = vpop.f32.mrb[0].mxu0
        %v2083 = vadd.f32 0.0, %v2082
        %v2084 = vpop.f32.mrb[0].mxu0
        %2085 = vmatprep.mubr.f32.mxu0 0.0
        %2086 = vmatmul.mubr.f32.gmra.mrb[0].mxu0 %v1870
        %v2087 = vpop.f32.mrb[0].mxu0
        %v2088 = vadd.f32 0.0, %v2087
        %v2089 = vpop.f32.mrb[0].mxu0
        %2090 = vmatprep.mubr.f32.mxu0 0.0
        %2091 = vmatmul.mubr.f32.gmra.mrb[0].mxu0 %v1873
        %v2092 = vpop.f32.mrb[0].mxu0
        %v2093 = vadd.f32 0.0, %v2092
        %v2094 = vpop.f32.mrb[0].mxu0
        %2095 = vmatprep.mubr.f32.mxu0 0.0
        %2096 = vmatmul.mubr.f32.gmra.mrb[0].mxu0 %v1876
        %v2097 = vpop.f32.mrb[0].mxu0
        %v2098 = vadd.f32 0.0, %v2097
        %v2099 = vpop.f32.mrb[0].mxu0
        %2100 = vmatprep.mubr.f32.mxu0 0.0
        %2101 = vmatmul.mubr.f32.gmra.mrb[0].mxu0 %v1879
        %v2102 = vpop.f32.mrb[0].mxu0
        %v2103 = vadd.f32 0.0, %v2102
        %v2104 = vpop.f32.mrb[0].mxu0
        %2105 = vdwg.mxu0
        %v2106 = vadd.f32 %v1719, %v1948
        %v2107 = vadd.f32 %v1720, %v1953
        %v2108 = vadd.f32 %v1721, %v1958
        %v2109 = vadd.f32 %v1722, %v1963
        %v2110 = vadd.f32 %v1723, %v1968
        %v2111 = vadd.f32 %v1724, %v1973
        %v2112 = vadd.f32 %v1725, %v1978
        %v2113 = vadd.f32 %v1726, %v1983
        %v2114 = vadd.f32 %v1727, %v1988
        %v2115 = vadd.f32 %v1728, %v1993
        %v2116 = vadd.f32 %v1729, %v1998
        %v2117 = vadd.f32 %v1730, %v2003
        %v2118 = vadd.f32 %v1731, %v2008
        %v2119 = vadd.f32 %v1732, %v2013
        %v2120 = vadd.f32 %v1733, %v2018
        %v2121 = vadd.f32 %v1734, %v2023
        %v2122 = vadd.f32 %v1735, %v2028
        %v2123 = vadd.f32 %v1736, %v2033
        %v2124 = vadd.f32 %v1737, %v2038
        %v2125 = vadd.f32 %v1738, %v2043
        %v2126 = vadd.f32 %v1739, %v2048
        %v2127 = vadd.f32 %v1740, %v2053
        %v2128 = vadd.f32 %v1741, %v2058
        %v2129 = vadd.f32 %v1742, %v2063
        %v2130 = vadd.f32 %v1743, %v2068
        %v2131 = vadd.f32 %v1744, %v2073
        %v2132 = vadd.f32 %v1745, %v2078
        %v2133 = vadd.f32 %v1746, %v2083
        %v2134 = vadd.f32 %v1747, %v2088
        %v2135 = vadd.f32 %v1748, %v2093
        %v2136 = vadd.f32 %v1749, %v2098
        %v2137 = vadd.f32 %v1750, %v2103
        %v2138 = vld [vmem:[%s606 + $0x1] sm:$0xff]
        %v2139 = vld [vmem:[%s606 + $0x9] sm:$0xff]
        %v2140 = vld [vmem:[%s606 + $0x19] sm:$0xff]
        %v2141 = vld [vmem:[%s606 + $0x21] sm:$0xff]
        %v2142 = vld [vmem:[%s606 + $0x31] sm:$0xff]
        %v2143 = vld [vmem:[%s606 + $0x39] sm:$0xff]
        %v2144 = vld [vmem:[%s606 + $0x49] sm:$0xff]
        %v2145 = vld [vmem:[%s606 + $0x51] sm:$0xff]
        %v2146 = vld [vmem:[%s606 + $0x61] sm:$0xff]
        %v2147 = vld [vmem:[%s606 + $0x69] sm:$0xff]
        %v2148 = vld [vmem:[%s606 + $0x79] sm:$0xff]
        %v2149 = vld [vmem:[%s606 + $0x81] sm:$0xff]
        %v2150 = vld [vmem:[%s606 + $0x91] sm:$0xff]
        %v2151 = vld [vmem:[%s606 + $0x99] sm:$0xff]
        %v2152 = vld [vmem:[%s606 + $0xa9] sm:$0xff]
        %v2153 = vld [vmem:[%s606 + $0xb1] sm:$0xff]
        %v2154 = vld [vmem:[%s606 + $0xc1] sm:$0xff]
        %v2155 = vld [vmem:[%s606 + $0xc9] sm:$0xff]
        %v2156 = vld [vmem:[%s606 + $0xd9] sm:$0xff]
        %v2157 = vld [vmem:[%s606 + $0xe1] sm:$0xff]
        %v2158 = vld [vmem:[%s606 + $0xf1] sm:$0xff]
        %v2159 = vld [vmem:[%s606 + $0xf9] sm:$0xff]
        %v2160 = vld [vmem:[%s606 + $0x109] sm:$0xff]
        %v2161 = vld [vmem:[%s606 + $0x111] sm:$0xff]
        %v2162 = vld [vmem:[%s606 + $0x121] sm:$0xff]
        %v2163 = vld [vmem:[%s606 + $0x129] sm:$0xff]
        %v2164 = vld [vmem:[%s606 + $0x139] sm:$0xff]
        %v2165 = vld [vmem:[%s606 + $0x141] sm:$0xff]
        %v2166 = vld [vmem:[%s606 + $0x151] sm:$0xff]
        %v2167 = vld [vmem:[%s606 + $0x159] sm:$0xff]
        %v2168 = vld [vmem:[%s606 + $0x169] sm:$0xff]
        %v2169 = vld [vmem:[%s606 + $0x171] sm:$0xff]
        %s2170 = scalar_lea.vmem [#allocation6], 32
        %v2171 = vld [vmem:[%s2170] sm:$0xff]
        %v2173 = vsel %vm436, %v2138, 0
        %v2176 = vsel %vm436, %v2139, 0
        %v2179 = vsel %vm436, %v2140, 0
        %v2182 = vsel %vm436, %v2141, 0
        %v2185 = vsel %vm436, %v2142, 0
        %v2188 = vsel %vm436, %v2143, 0
        %v2191 = vsel %vm436, %v2144, 0
        %v2194 = vsel %vm436, %v2145, 0
        %v2197 = vsel %vm436, %v2146, 0
        %v2200 = vsel %vm436, %v2147, 0
        %v2203 = vsel %vm436, %v2148, 0
        %v2206 = vsel %vm436, %v2149, 0
        %v2209 = vsel %vm436, %v2150, 0
        %v2212 = vsel %vm436, %v2151, 0
        %v2215 = vsel %vm436, %v2152, 0
        %v2218 = vsel %vm436, %v2153, 0
        %v2221 = vsel %vm436, %v2154, 0
        %v2224 = vsel %vm436, %v2155, 0
        %v2227 = vsel %vm436, %v2156, 0
        %v2230 = vsel %vm436, %v2157, 0
        %v2233 = vsel %vm436, %v2158, 0
        %v2236 = vsel %vm436, %v2159, 0
        %v2239 = vsel %vm436, %v2160, 0
        %v2242 = vsel %vm436, %v2161, 0
        %v2245 = vsel %vm436, %v2162, 0
        %v2248 = vsel %vm436, %v2163, 0
        %v2251 = vsel %vm436, %v2164, 0
        %v2254 = vsel %vm436, %v2165, 0
        %v2257 = vsel %vm436, %v2166, 0
        %v2260 = vsel %vm436, %v2167, 0
        %v2263 = vsel %vm436, %v2168, 0
        %v2266 = vsel %vm436, %v2169, 0
        %2268 = vmatprep.subr.mxu0 0.0
        %2269 = vmatpush1.msra.mxu0 %v2171
        %2270 = vmatprep.subr.mxu0 0.0
        %2271 = vmatpush1.msra.mxu0 0.0
        %2272 = vmatprep.subr.mxu0 0.0
        %2273 = vmatpush1.msra.mxu0 0.0
        %2274 = vmatprep.subr.mxu0 0.0
        %2275 = vmatpush1.msra.mxu0 0.0
        %2276 = vmatprep.subr.mxu0 0.0
        %2277 = vmatpush1.msra.mxu0 0.0
        %2278 = vmatprep.subr.mxu0 0.0
        %2279 = vmatpush1.msra.mxu0 0.0
        %2280 = vmatprep.subr.mxu0 0.0
        %2281 = vmatpush1.msra.mxu0 0.0
        %2282 = vmatprep.subr.mxu0 0.0
        %2283 = vmatpush1.msra.mxu0 0.0
        %2284 = vmatprep.subr.mxu0 0.0
        %2285 = vmatpush1.msra.mxu0 0.0
        %2286 = vmatprep.subr.mxu0 0.0
        %2287 = vmatpush1.msra.mxu0 0.0
        %2288 = vmatprep.subr.mxu0 0.0
        %2289 = vmatpush1.msra.mxu0 0.0
        %2290 = vmatprep.subr.mxu0 0.0
        %2291 = vmatpush1.msra.mxu0 0.0
        %2292 = vmatprep.subr.mxu0 0.0
        %2293 = vmatpush1.msra.mxu0 0.0
        %2294 = vmatprep.subr.mxu0 0.0
        %2295 = vmatpush1.msra.mxu0 0.0
        %2296 = vmatprep.subr.mxu0 0.0
        %2297 = vmatpush1.msra.mxu0 0.0
        %2298 = vmatprep.subr.mxu0 0.0
        %2299 = vmatpush1.msra.mxu0 0.0
        %2300 = vmatprep.subr.mxu0 0.0
        %2301 = vmatpush1.msra.mxu0 0.0
        %2302 = vmatprep.subr.mxu0 0.0
        %2303 = vmatpush1.msra.mxu0 0.0
        %2304 = vmatprep.subr.mxu0 0.0
        %2305 = vmatpush1.msra.mxu0 0.0
        %2306 = vmatprep.subr.mxu0 0.0
        %2307 = vmatpush1.msra.mxu0 0.0
        %2308 = vmatprep.subr.mxu0 0.0
        %2309 = vmatpush1.msra.mxu0 0.0
        %2310 = vmatprep.subr.mxu0 0.0
        %2311 = vmatpush1.msra.mxu0 0.0
        %2312 = vmatprep.subr.mxu0 0.0
        %2313 = vmatpush1.msra.mxu0 0.0
        %2314 = vmatprep.subr.mxu0 0.0
        %2315 = vmatpush1.msra.mxu0 0.0
        %2316 = vmatprep.subr.mxu0 0.0
        %2317 = vmatpush1.msra.mxu0 0.0
        %2318 = vmatprep.subr.mxu0 0.0
        %2319 = vmatpush1.msra.mxu0 0.0
        %2320 = vmatprep.subr.mxu0 0.0
        %2321 = vmatpush1.msra.mxu0 0.0
        %2322 = vmatprep.subr.mxu0 0.0
        %2323 = vmatpush1.msra.mxu0 0.0
        %2324 = vmatprep.subr.mxu0 0.0
        %2325 = vmatpush1.msra.mxu0 0.0
        %2326 = vmatprep.subr.mxu0 0.0
        %2327 = vmatpush1.msra.mxu0 0.0
        %2328 = vmatprep.subr.mxu0 0.0
        %2329 = vmatpush1.msra.mxu0 0.0
        %2330 = vmatprep.subr.mxu0 0.0
        %2331 = vmatpush1.msra.mxu0 0.0
        %2332 = vmatprep.mubr.f32.mxu0 0.0
        %2333 = vmatmul.mubr.f32.gmra.mrb[0].mxu0 %v2173
        %v2334 = vpop.f32.mrb[0].mxu0
        %v2335 = vadd.f32 0.0, %v2334
        %v2336 = vpop.f32.mrb[0].mxu0
        %2337 = vmatprep.mubr.f32.mxu0 0.0
        %2338 = vmatmul.mubr.f32.gmra.mrb[0].mxu0 %v2176
        %v2339 = vpop.f32.mrb[0].mxu0
        %v2340 = vadd.f32 0.0, %v2339
        %v2341 = vpop.f32.mrb[0].mxu0
        %2342 = vmatprep.mubr.f32.mxu0 0.0
        %2343 = vmatmul.mubr.f32.gmra.mrb[0].mxu0 %v2179
        %v2344 = vpop.f32.mrb[0].mxu0
        %v2345 = vadd.f32 0.0, %v2344
        %v2346 = vpop.f32.mrb[0].mxu0
        %2347 = vmatprep.mubr.f32.mxu0 0.0
        %2348 = vmatmul.mubr.f32.gmra.mrb[0].mxu0 %v2182
        %v2349 = vpop.f32.mrb[0].mxu0
        %v2350 = vadd.f32 0.0, %v2349
        %v2351 = vpop.f32.mrb[0].mxu0
        %2352 = vmatprep.mubr.f32.mxu0 0.0
        %2353 = vmatmul.mubr.f32.gmra.mrb[0].mxu0 %v2185
        %v2354 = vpop.f32.mrb[0].mxu0
        %v2355 = vadd.f32 0.0, %v2354
        %v2356 = vpop.f32.mrb[0].mxu0
        %2357 = vmatprep.mubr.f32.mxu0 0.0
        %2358 = vmatmul.mubr.f32.gmra.mrb[0].mxu0 %v2188
        %v2359 = vpop.f32.mrb[0].mxu0
        %v2360 = vadd.f32 0.0, %v2359
        %v2361 = vpop.f32.mrb[0].mxu0
        %2362 = vmatprep.mubr.f32.mxu0 0.0
        %2363 = vmatmul.mubr.f32.gmra.mrb[0].mxu0 %v2191
        %v2364 = vpop.f32.mrb[0].mxu0
        %v2365 = vadd.f32 0.0, %v2364
        %v2366 = vpop.f32.mrb[0].mxu0
        %2367 = vmatprep.mubr.f32.mxu0 0.0
        %2368 = vmatmul.mubr.f32.gmra.mrb[0].mxu0 %v2194
        %v2369 = vpop.f32.mrb[0].mxu0
        %v2370 = vadd.f32 0.0, %v2369
        %v2371 = vpop.f32.mrb[0].mxu0
        %2372 = vmatprep.mubr.f32.mxu0 0.0
        %2373 = vmatmul.mubr.f32.gmra.mrb[0].mxu0 %v2197
        %v2374 = vpop.f32.mrb[0].mxu0
        %v2375 = vadd.f32 0.0, %v2374
        %v2376 = vpop.f32.mrb[0].mxu0
        %2377 = vmatprep.mubr.f32.mxu0 0.0
        %2378 = vmatmul.mubr.f32.gmra.mrb[0].mxu0 %v2200
        %v2379 = vpop.f32.mrb[0].mxu0
        %v2380 = vadd.f32 0.0, %v2379
        %v2381 = vpop.f32.mrb[0].mxu0
        %2382 = vmatprep.mubr.f32.mxu0 0.0
        %2383 = vmatmul.mubr.f32.gmra.mrb[0].mxu0 %v2203
        %v2384 = vpop.f32.mrb[0].mxu0
        %v2385 = vadd.f32 0.0, %v2384
        %v2386 = vpop.f32.mrb[0].mxu0
        %2387 = vmatprep.mubr.f32.mxu0 0.0
        %2388 = vmatmul.mubr.f32.gmra.mrb[0].mxu0 %v2206
        %v2389 = vpop.f32.mrb[0].mxu0
        %v2390 = vadd.f32 0.0, %v2389
        %v2391 = vpop.f32.mrb[0].mxu0
        %2392 = vmatprep.mubr.f32.mxu0 0.0
        %2393 = vmatmul.mubr.f32.gmra.mrb[0].mxu0 %v2209
        %v2394 = vpop.f32.mrb[0].mxu0
        %v2395 = vadd.f32 0.0, %v2394
        %v2396 = vpop.f32.mrb[0].mxu0
        %2397 = vmatprep.mubr.f32.mxu0 0.0
        %2398 = vmatmul.mubr.f32.gmra.mrb[0].mxu0 %v2212
        %v2399 = vpop.f32.mrb[0].mxu0
        %v2400 = vadd.f32 0.0, %v2399
        %v2401 = vpop.f32.mrb[0].mxu0
        %2402 = vmatprep.mubr.f32.mxu0 0.0
        %2403 = vmatmul.mubr.f32.gmra.mrb[0].mxu0 %v2215
        %v2404 = vpop.f32.mrb[0].mxu0
        %v2405 = vadd.f32 0.0, %v2404
        %v2406 = vpop.f32.mrb[0].mxu0
        %2407 = vmatprep.mubr.f32.mxu0 0.0
        %2408 = vmatmul.mubr.f32.gmra.mrb[0].mxu0 %v2218
        %v2409 = vpop.f32.mrb[0].mxu0
        %v2410 = vadd.f32 0.0, %v2409
        %v2411 = vpop.f32.mrb[0].mxu0
        %2412 = vmatprep.mubr.f32.mxu0 0.0
        %2413 = vmatmul.mubr.f32.gmra.mrb[0].mxu0 %v2221
        %v2414 = vpop.f32.mrb[0].mxu0
        %v2415 = vadd.f32 0.0, %v2414
        %v2416 = vpop.f32.mrb[0].mxu0
        %2417 = vmatprep.mubr.f32.mxu0 0.0
        %2418 = vmatmul.mubr.f32.gmra.mrb[0].mxu0 %v2224
        %v2419 = vpop.f32.mrb[0].mxu0
        %v2420 = vadd.f32 0.0, %v2419
        %v2421 = vpop.f32.mrb[0].mxu0
        %2422 = vmatprep.mubr.f32.mxu0 0.0
        %2423 = vmatmul.mubr.f32.gmra.mrb[0].mxu0 %v2227
        %v2424 = vpop.f32.mrb[0].mxu0
        %v2425 = vadd.f32 0.0, %v2424
        %v2426 = vpop.f32.mrb[0].mxu0
        %2427 = vmatprep.mubr.f32.mxu0 0.0
        %2428 = vmatmul.mubr.f32.gmra.mrb[0].mxu0 %v2230
        %v2429 = vpop.f32.mrb[0].mxu0
        %v2430 = vadd.f32 0.0, %v2429
        %v2431 = vpop.f32.mrb[0].mxu0
        %2432 = vmatprep.mubr.f32.mxu0 0.0
        %2433 = vmatmul.mubr.f32.gmra.mrb[0].mxu0 %v2233
        %v2434 = vpop.f32.mrb[0].mxu0
        %v2435 = vadd.f32 0.0, %v2434
        %v2436 = vpop.f32.mrb[0].mxu0
        %2437 = vmatprep.mubr.f32.mxu0 0.0
        %2438 = vmatmul.mubr.f32.gmra.mrb[0].mxu0 %v2236
        %v2439 = vpop.f32.mrb[0].mxu0
        %v2440 = vadd.f32 0.0, %v2439
        %v2441 = vpop.f32.mrb[0].mxu0
        %2442 = vmatprep.mubr.f32.mxu0 0.0
        %2443 = vmatmul.mubr.f32.gmra.mrb[0].mxu0 %v2239
        %v2444 = vpop.f32.mrb[0].mxu0
        %v2445 = vadd.f32 0.0, %v2444
        %v2446 = vpop.f32.mrb[0].mxu0
        %2447 = vmatprep.mubr.f32.mxu0 0.0
        %2448 = vmatmul.mubr.f32.gmra.mrb[0].mxu0 %v2242
        %v2449 = vpop.f32.mrb[0].mxu0
        %v2450 = vadd.f32 0.0, %v2449
        %v2451 = vpop.f32.mrb[0].mxu0
        %2452 = vmatprep.mubr.f32.mxu0 0.0
        %2453 = vmatmul.mubr.f32.gmra.mrb[0].mxu0 %v2245
        %v2454 = vpop.f32.mrb[0].mxu0
        %v2455 = vadd.f32 0.0, %v2454
        %v2456 = vpop.f32.mrb[0].mxu0
        %2457 = vmatprep.mubr.f32.mxu0 0.0
        %2458 = vmatmul.mubr.f32.gmra.mrb[0].mxu0 %v2248
        %v2459 = vpop.f32.mrb[0].mxu0
        %v2460 = vadd.f32 0.0, %v2459
        %v2461 = vpop.f32.mrb[0].mxu0
        %2462 = vmatprep.mubr.f32.mxu0 0.0
        %2463 = vmatmul.mubr.f32.gmra.mrb[0].mxu0 %v2251
        %v2464 = vpop.f32.mrb[0].mxu0
        %v2465 = vadd.f32 0.0, %v2464
        %v2466 = vpop.f32.mrb[0].mxu0
        %2467 = vmatprep.mubr.f32.mxu0 0.0
        %2468 = vmatmul.mubr.f32.gmra.mrb[0].mxu0 %v2254
        %v2469 = vpop.f32.mrb[0].mxu0
        %v2470 = vadd.f32 0.0, %v2469
        %v2471 = vpop.f32.mrb[0].mxu0
        %2472 = vmatprep.mubr.f32.mxu0 0.0
        %2473 = vmatmul.mubr.f32.gmra.mrb[0].mxu0 %v2257
        %v2474 = vpop.f32.mrb[0].mxu0
        %v2475 = vadd.f32 0.0, %v2474
        %v2476 = vpop.f32.mrb[0].mxu0
        %2477 = vmatprep.mubr.f32.mxu0 0.0
        %2478 = vmatmul.mubr.f32.gmra.mrb[0].mxu0 %v2260
        %v2479 = vpop.f32.mrb[0].mxu0
        %v2480 = vadd.f32 0.0, %v2479
        %v2481 = vpop.f32.mrb[0].mxu0
        %2482 = vmatprep.mubr.f32.mxu0 0.0
        %2483 = vmatmul.mubr.f32.gmra.mrb[0].mxu0 %v2263
        %v2484 = vpop.f32.mrb[0].mxu0
        %v2485 = vadd.f32 0.0, %v2484
        %v2486 = vpop.f32.mrb[0].mxu0
        %2487 = vmatprep.mubr.f32.mxu0 0.0
        %2488 = vmatmul.mubr.f32.gmra.mrb[0].mxu0 %v2266
        %v2489 = vpop.f32.mrb[0].mxu0
        %v2490 = vadd.f32 0.0, %v2489
        %v2491 = vpop.f32.mrb[0].mxu0
        %2492 = vdwg.mxu0
        %v2493 = vadd.f32 %v2106, %v2335
        %v2494 = vadd.f32 %v2107, %v2340
        %v2495 = vadd.f32 %v2108, %v2345
        %v2496 = vadd.f32 %v2109, %v2350
        %v2497 = vadd.f32 %v2110, %v2355
        %v2498 = vadd.f32 %v2111, %v2360
        %v2499 = vadd.f32 %v2112, %v2365
        %v2500 = vadd.f32 %v2113, %v2370
        %v2501 = vadd.f32 %v2114, %v2375
        %v2502 = vadd.f32 %v2115, %v2380
        %v2503 = vadd.f32 %v2116, %v2385
        %v2504 = vadd.f32 %v2117, %v2390
        %v2505 = vadd.f32 %v2118, %v2395
        %v2506 = vadd.f32 %v2119, %v2400
        %v2507 = vadd.f32 %v2120, %v2405
        %v2508 = vadd.f32 %v2121, %v2410
        %v2509 = vadd.f32 %v2122, %v2415
        %v2510 = vadd.f32 %v2123, %v2420
        %v2511 = vadd.f32 %v2124, %v2425
        %v2512 = vadd.f32 %v2125, %v2430
        %v2513 = vadd.f32 %v2126, %v2435
        %v2514 = vadd.f32 %v2127, %v2440
        %v2515 = vadd.f32 %v2128, %v2445
        %v2516 = vadd.f32 %v2129, %v2450
        %v2517 = vadd.f32 %v2130, %v2455
        %v2518 = vadd.f32 %v2131, %v2460
        %v2519 = vadd.f32 %v2132, %v2465
        %v2520 = vadd.f32 %v2133, %v2470
        %v2521 = vadd.f32 %v2134, %v2475
        %v2522 = vadd.f32 %v2135, %v2480
        %v2523 = vadd.f32 %v2136, %v2485
        %v2524 = vadd.f32 %v2137, %v2490
        %v2525 = vld [vmem:[%s606 + $0x2] sm:$0xff]
        %v2526 = vld [vmem:[%s606 + $0xa] sm:$0xff]
        %v2527 = vld [vmem:[%s606 + $0x1a] sm:$0xff]
        %v2528 = vld [vmem:[%s606 + $0x22] sm:$0xff]
        %v2529 = vld [vmem:[%s606 + $0x32] sm:$0xff]
        %v2530 = vld [vmem:[%s606 + $0x3a] sm:$0xff]
        %v2531 = vld [vmem:[%s606 + $0x4a] sm:$0xff]
        %v2532 = vld [vmem:[%s606 + $0x52] sm:$0xff]
        %v2533 = vld [vmem:[%s606 + $0x62] sm:$0xff]
        %v2534 = vld [vmem:[%s606 + $0x6a] sm:$0xff]
        %v2535 = vld [vmem:[%s606 + $0x7a] sm:$0xff]
        %v2536 = vld [vmem:[%s606 + $0x82] sm:$0xff]
        %v2537 = vld [vmem:[%s606 + $0x92] sm:$0xff]
        %v2538 = vld [vmem:[%s606 + $0x9a] sm:$0xff]
        %v2539 = vld [vmem:[%s606 + $0xaa] sm:$0xff]
        %v2540 = vld [vmem:[%s606 + $0xb2] sm:$0xff]
        %v2541 = vld [vmem:[%s606 + $0xc2] sm:$0xff]
        %v2542 = vld [vmem:[%s606 + $0xca] sm:$0xff]
        %v2543 = vld [vmem:[%s606 + $0xda] sm:$0xff]
        %v2544 = vld [vmem:[%s606 + $0xe2] sm:$0xff]
        %v2545 = vld [vmem:[%s606 + $0xf2] sm:$0xff]
        %v2546 = vld [vmem:[%s606 + $0xfa] sm:$0xff]
        %v2547 = vld [vmem:[%s606 + $0x10a] sm:$0xff]
        %v2548 = vld [vmem:[%s606 + $0x112] sm:$0xff]
        %v2549 = vld [vmem:[%s606 + $0x122] sm:$0xff]
        %v2550 = vld [vmem:[%s606 + $0x12a] sm:$0xff]
        %v2551 = vld [vmem:[%s606 + $0x13a] sm:$0xff]
        %v2552 = vld [vmem:[%s606 + $0x142] sm:$0xff]
        %v2553 = vld [vmem:[%s606 + $0x152] sm:$0xff]
        %v2554 = vld [vmem:[%s606 + $0x15a] sm:$0xff]
        %v2555 = vld [vmem:[%s606 + $0x16a] sm:$0xff]
        %v2556 = vld [vmem:[%s606 + $0x172] sm:$0xff]
        %s2557 = scalar_lea.vmem [#allocation6], 40
        %v2558 = vld [vmem:[%s2557] sm:$0xff]
        %v2560 = vsel %vm436, %v2525, 0
        %v2563 = vsel %vm436, %v2526, 0
        %v2566 = vsel %vm436, %v2527, 0
        %v2569 = vsel %vm436, %v2528, 0
        %v2572 = vsel %vm436, %v2529, 0
        %v2575 = vsel %vm436, %v2530, 0
        %v2578 = vsel %vm436, %v2531, 0
        %v2581 = vsel %vm436, %v2532, 0
        %v2584 = vsel %vm436, %v2533, 0
        %v2587 = vsel %vm436, %v2534, 0
        %v2590 = vsel %vm436, %v2535, 0
        %v2593 = vsel %vm436, %v2536, 0
        %v2596 = vsel %vm436, %v2537, 0
        %v2599 = vsel %vm436, %v2538, 0
        %v2602 = vsel %vm436, %v2539, 0
        %v2605 = vsel %vm436, %v2540, 0
        %v2608 = vsel %vm436, %v2541, 0
        %v2611 = vsel %vm436, %v2542, 0
        %v2614 = vsel %vm436, %v2543, 0
        %v2617 = vsel %vm436, %v2544, 0
        %v2620 = vsel %vm436, %v2545, 0
        %v2623 = vsel %vm436, %v2546, 0
        %v2626 = vsel %vm436, %v2547, 0
        %v2629 = vsel %vm436, %v2548, 0
        %v2632 = vsel %vm436, %v2549, 0
        %v2635 = vsel %vm436, %v2550, 0
        %v2638 = vsel %vm436, %v2551, 0
        %v2641 = vsel %vm436, %v2552, 0
        %v2644 = vsel %vm436, %v2553, 0
        %v2647 = vsel %vm436, %v2554, 0
        %v2650 = vsel %vm436, %v2555, 0
        %v2653 = vsel %vm436, %v2556, 0
        %2655 = vmatprep.subr.mxu0 0.0
        %2656 = vmatpush1.msra.mxu0 %v2558
        %2657 = vmatprep.subr.mxu0 0.0
        %2658 = vmatpush1.msra.mxu0 0.0
        %2659 = vmatprep.subr.mxu0 0.0
        %2660 = vmatpush1.msra.mxu0 0.0
        %2661 = vmatprep.subr.mxu0 0.0
        %2662 = vmatpush1.msra.mxu0 0.0
        %2663 = vmatprep.subr.mxu0 0.0
        %2664 = vmatpush1.msra.mxu0 0.0
        %2665 = vmatprep.subr.mxu0 0.0
        %2666 = vmatpush1.msra.mxu0 0.0
        %2667 = vmatprep.subr.mxu0 0.0
        %2668 = vmatpush1.msra.mxu0 0.0
        %2669 = vmatprep.subr.mxu0 0.0
        %2670 = vmatpush1.msra.mxu0 0.0
        %2671 = vmatprep.subr.mxu0 0.0
        %2672 = vmatpush1.msra.mxu0 0.0
        %2673 = vmatprep.subr.mxu0 0.0
        %2674 = vmatpush1.msra.mxu0 0.0
        %2675 = vmatprep.subr.mxu0 0.0
        %2676 = vmatpush1.msra.mxu0 0.0
        %2677 = vmatprep.subr.mxu0 0.0
        %2678 = vmatpush1.msra.mxu0 0.0
        %2679 = vmatprep.subr.mxu0 0.0
        %2680 = vmatpush1.msra.mxu0 0.0
        %2681 = vmatprep.subr.mxu0 0.0
        %2682 = vmatpush1.msra.mxu0 0.0
        %2683 = vmatprep.subr.mxu0 0.0
        %2684 = vmatpush1.msra.mxu0 0.0
        %2685 = vmatprep.subr.mxu0 0.0
        %2686 = vmatpush1.msra.mxu0 0.0
        %2687 = vmatprep.subr.mxu0 0.0
        %2688 = vmatpush1.msra.mxu0 0.0
        %2689 = vmatprep.subr.mxu0 0.0
        %2690 = vmatpush1.msra.mxu0 0.0
        %2691 = vmatprep.subr.mxu0 0.0
        %2692 = vmatpush1.msra.mxu0 0.0
        %2693 = vmatprep.subr.mxu0 0.0
        %2694 = vmatpush1.msra.mxu0 0.0
        %2695 = vmatprep.subr.mxu0 0.0
        %2696 = vmatpush1.msra.mxu0 0.0
        %2697 = vmatprep.subr.mxu0 0.0
        %2698 = vmatpush1.msra.mxu0 0.0
        %2699 = vmatprep.subr.mxu0 0.0
        %2700 = vmatpush1.msra.mxu0 0.0
        %2701 = vmatprep.subr.mxu0 0.0
        %2702 = vmatpush1.msra.mxu0 0.0
        %2703 = vmatprep.subr.mxu0 0.0
        %2704 = vmatpush1.msra.mxu0 0.0
        %2705 = vmatprep.subr.mxu0 0.0
        %2706 = vmatpush1.msra.mxu0 0.0
        %2707 = vmatprep.subr.mxu0 0.0
        %2708 = vmatpush1.msra.mxu0 0.0
        %2709 = vmatprep.subr.mxu0 0.0
        %2710 = vmatpush1.msra.mxu0 0.0
        %2711 = vmatprep.subr.mxu0 0.0
        %2712 = vmatpush1.msra.mxu0 0.0
        %2713 = vmatprep.subr.mxu0 0.0
        %2714 = vmatpush1.msra.mxu0 0.0
        %2715 = vmatprep.subr.mxu0 0.0
        %2716 = vmatpush1.msra.mxu0 0.0
        %2717 = vmatprep.subr.mxu0 0.0
        %2718 = vmatpush1.msra.mxu0 0.0
        %2719 = vmatprep.mubr.f32.mxu0 0.0
        %2720 = vmatmul.mubr.f32.gmra.mrb[0].mxu0 %v2560
        %v2721 = vpop.f32.mrb[0].mxu0
        %v2722 = vadd.f32 0.0, %v2721
        %v2723 = vpop.f32.mrb[0].mxu0
        %2724 = vmatprep.mubr.f32.mxu0 0.0
        %2725 = vmatmul.mubr.f32.gmra.mrb[0].mxu0 %v2563
        %v2726 = vpop.f32.mrb[0].mxu0
        %v2727 = vadd.f32 0.0, %v2726
        %v2728 = vpop.f32.mrb[0].mxu0
        %2729 = vmatprep.mubr.f32.mxu0 0.0
        %2730 = vmatmul.mubr.f32.gmra.mrb[0].mxu0 %v2566
        %v2731 = vpop.f32.mrb[0].mxu0
        %v2732 = vadd.f32 0.0, %v2731
        %v2733 = vpop.f32.mrb[0].mxu0
        %2734 = vmatprep.mubr.f32.mxu0 0.0
        %2735 = vmatmul.mubr.f32.gmra.mrb[0].mxu0 %v2569
        %v2736 = vpop.f32.mrb[0].mxu0
        %v2737 = vadd.f32 0.0, %v2736
        %v2738 = vpop.f32.mrb[0].mxu0
        %2739 = vmatprep.mubr.f32.mxu0 0.0
        %2740 = vmatmul.mubr.f32.gmra.mrb[0].mxu0 %v2572
        %v2741 = vpop.f32.mrb[0].mxu0
        %v2742 = vadd.f32 0.0, %v2741
        %v2743 = vpop.f32.mrb[0].mxu0
        %2744 = vmatprep.mubr.f32.mxu0 0.0
        %2745 = vmatmul.mubr.f32.gmra.mrb[0].mxu0 %v2575
        %v2746 = vpop.f32.mrb[0].mxu0
        %v2747 = vadd.f32 0.0, %v2746
        %v2748 = vpop.f32.mrb[0].mxu0
        %2749 = vmatprep.mubr.f32.mxu0 0.0
        %2750 = vmatmul.mubr.f32.gmra.mrb[0].mxu0 %v2578
        %v2751 = vpop.f32.mrb[0].mxu0
        %v2752 = vadd.f32 0.0, %v2751
        %v2753 = vpop.f32.mrb[0].mxu0
        %2754 = vmatprep.mubr.f32.mxu0 0.0
        %2755 = vmatmul.mubr.f32.gmra.mrb[0].mxu0 %v2581
        %v2756 = vpop.f32.mrb[0].mxu0
        %v2757 = vadd.f32 0.0, %v2756
        %v2758 = vpop.f32.mrb[0].mxu0
        %2759 = vmatprep.mubr.f32.mxu0 0.0
        %2760 = vmatmul.mubr.f32.gmra.mrb[0].mxu0 %v2584
        %v2761 = vpop.f32.mrb[0].mxu0
        %v2762 = vadd.f32 0.0, %v2761
        %v2763 = vpop.f32.mrb[0].mxu0
        %2764 = vmatprep.mubr.f32.mxu0 0.0
        %2765 = vmatmul.mubr.f32.gmra.mrb[0].mxu0 %v2587
        %v2766 = vpop.f32.mrb[0].mxu0
        %v2767 = vadd.f32 0.0, %v2766
        %v2768 = vpop.f32.mrb[0].mxu0
        %2769 = vmatprep.mubr.f32.mxu0 0.0
        %2770 = vmatmul.mubr.f32.gmra.mrb[0].mxu0 %v2590
        %v2771 = vpop.f32.mrb[0].mxu0
        %v2772 = vadd.f32 0.0, %v2771
        %v2773 = vpop.f32.mrb[0].mxu0
        %2774 = vmatprep.mubr.f32.mxu0 0.0
        %2775 = vmatmul.mubr.f32.gmra.mrb[0].mxu0 %v2593
        %v2776 = vpop.f32.mrb[0].mxu0
        %v2777 = vadd.f32 0.0, %v2776
        %v2778 = vpop.f32.mrb[0].mxu0
        %2779 = vmatprep.mubr.f32.mxu0 0.0
        %2780 = vmatmul.mubr.f32.gmra.mrb[0].mxu0 %v2596
        %v2781 = vpop.f32.mrb[0].mxu0
        %v2782 = vadd.f32 0.0, %v2781
        %v2783 = vpop.f32.mrb[0].mxu0
        %2784 = vmatprep.mubr.f32.mxu0 0.0
        %2785 = vmatmul.mubr.f32.gmra.mrb[0].mxu0 %v2599
        %v2786 = vpop.f32.mrb[0].mxu0
        %v2787 = vadd.f32 0.0, %v2786
        %v2788 = vpop.f32.mrb[0].mxu0
        %2789 = vmatprep.mubr.f32.mxu0 0.0
        %2790 = vmatmul.mubr.f32.gmra.mrb[0].mxu0 %v2602
        %v2791 = vpop.f32.mrb[0].mxu0
        %v2792 = vadd.f32 0.0, %v2791
        %v2793 = vpop.f32.mrb[0].mxu0
        %2794 = vmatprep.mubr.f32.mxu0 0.0
        %2795 = vmatmul.mubr.f32.gmra.mrb[0].mxu0 %v2605
        %v2796 = vpop.f32.mrb[0].mxu0
        %v2797 = vadd.f32 0.0, %v2796
        %v2798 = vpop.f32.mrb[0].mxu0
        %2799 = vmatprep.mubr.f32.mxu0 0.0
        %2800 = vmatmul.mubr.f32.gmra.mrb[0].mxu0 %v2608
        %v2801 = vpop.f32.mrb[0].mxu0
        %v2802 = vadd.f32 0.0, %v2801
        %v2803 = vpop.f32.mrb[0].mxu0
        %2804 = vmatprep.mubr.f32.mxu0 0.0
        %2805 = vmatmul.mubr.f32.gmra.mrb[0].mxu0 %v2611
        %v2806 = vpop.f32.mrb[0].mxu0
        %v2807 = vadd.f32 0.0, %v2806
        %v2808 = vpop.f32.mrb[0].mxu0
        %2809 = vmatprep.mubr.f32.mxu0 0.0
        %2810 = vmatmul.mubr.f32.gmra.mrb[0].mxu0 %v2614
        %v2811 = vpop.f32.mrb[0].mxu0
        %v2812 = vadd.f32 0.0, %v2811
        %v2813 = vpop.f32.mrb[0].mxu0
        %2814 = vmatprep.mubr.f32.mxu0 0.0
        %2815 = vmatmul.mubr.f32.gmra.mrb[0].mxu0 %v2617
        %v2816 = vpop.f32.mrb[0].mxu0
        %v2817 = vadd.f32 0.0, %v2816
        %v2818 = vpop.f32.mrb[0].mxu0
        %2819 = vmatprep.mubr.f32.mxu0 0.0
        %2820 = vmatmul.mubr.f32.gmra.mrb[0].mxu0 %v2620
        %v2821 = vpop.f32.mrb[0].mxu0
        %v2822 = vadd.f32 0.0, %v2821
        %v2823 = vpop.f32.mrb[0].mxu0
        %2824 = vmatprep.mubr.f32.mxu0 0.0
        %2825 = vmatmul.mubr.f32.gmra.mrb[0].mxu0 %v2623
        %v2826 = vpop.f32.mrb[0].mxu0
        %v2827 = vadd.f32 0.0, %v2826
        %v2828 = vpop.f32.mrb[0].mxu0
        %2829 = vmatprep.mubr.f32.mxu0 0.0
        %2830 = vmatmul.mubr.f32.gmra.mrb[0].mxu0 %v2626
        %v2831 = vpop.f32.mrb[0].mxu0
        %v2832 = vadd.f32 0.0, %v2831
        %v2833 = vpop.f32.mrb[0].mxu0
        %2834 = vmatprep.mubr.f32.mxu0 0.0
        %2835 = vmatmul.mubr.f32.gmra.mrb[0].mxu0 %v2629
        %v2836 = vpop.f32.mrb[0].mxu0
        %v2837 = vadd.f32 0.0, %v2836
        %v2838 = vpop.f32.mrb[0].mxu0
        %2839 = vmatprep.mubr.f32.mxu0 0.0
        %2840 = vmatmul.mubr.f32.gmra.mrb[0].mxu0 %v2632
        %v2841 = vpop.f32.mrb[0].mxu0
        %v2842 = vadd.f32 0.0, %v2841
        %v2843 = vpop.f32.mrb[0].mxu0
        %2844 = vmatprep.mubr.f32.mxu0 0.0
        %2845 = vmatmul.mubr.f32.gmra.mrb[0].mxu0 %v2635
        %v2846 = vpop.f32.mrb[0].mxu0
        %v2847 = vadd.f32 0.0, %v2846
        %v2848 = vpop.f32.mrb[0].mxu0
        %2849 = vmatprep.mubr.f32.mxu0 0.0
        %2850 = vmatmul.mubr.f32.gmra.mrb[0].mxu0 %v2638
        %v2851 = vpop.f32.mrb[0].mxu0
        %v2852 = vadd.f32 0.0, %v2851
        %v2853 = vpop.f32.mrb[0].mxu0
        %2854 = vmatprep.mubr.f32.mxu0 0.0
        %2855 = vmatmul.mubr.f32.gmra.mrb[0].mxu0 %v2641
        %v2856 = vpop.f32.mrb[0].mxu0
        %v2857 = vadd.f32 0.0, %v2856
        %v2858 = vpop.f32.mrb[0].mxu0
        %2859 = vmatprep.mubr.f32.mxu0 0.0
        %2860 = vmatmul.mubr.f32.gmra.mrb[0].mxu0 %v2644
        %v2861 = vpop.f32.mrb[0].mxu0
        %v2862 = vadd.f32 0.0, %v2861
        %v2863 = vpop.f32.mrb[0].mxu0
        %2864 = vmatprep.mubr.f32.mxu0 0.0
        %2865 = vmatmul.mubr.f32.gmra.mrb[0].mxu0 %v2647
        %v2866 = vpop.f32.mrb[0].mxu0
        %v2867 = vadd.f32 0.0, %v2866
        %v2868 = vpop.f32.mrb[0].mxu0
        %2869 = vmatprep.mubr.f32.mxu0 0.0
        %2870 = vmatmul.mubr.f32.gmra.mrb[0].mxu0 %v2650
        %v2871 = vpop.f32.mrb[0].mxu0
        %v2872 = vadd.f32 0.0, %v2871
        %v2873 = vpop.f32.mrb[0].mxu0
        %2874 = vmatprep.mubr.f32.mxu0 0.0
        %2875 = vmatmul.mubr.f32.gmra.mrb[0].mxu0 %v2653
        %v2876 = vpop.f32.mrb[0].mxu0
        %v2877 = vadd.f32 0.0, %v2876
        %v2878 = vpop.f32.mrb[0].mxu0
        %2879 = vdwg.mxu0
        %v2880 = vadd.f32 %v2493, %v2722
        %v2881 = vadd.f32 %v2494, %v2727
        %v2882 = vadd.f32 %v2495, %v2732
        %v2883 = vadd.f32 %v2496, %v2737
        %v2884 = vadd.f32 %v2497, %v2742
        %v2885 = vadd.f32 %v2498, %v2747
        %v2886 = vadd.f32 %v2499, %v2752
        %v2887 = vadd.f32 %v2500, %v2757
        %v2888 = vadd.f32 %v2501, %v2762
        %v2889 = vadd.f32 %v2502, %v2767
        %v2890 = vadd.f32 %v2503, %v2772
        %v2891 = vadd.f32 %v2504, %v2777
        %v2892 = vadd.f32 %v2505, %v2782
        %v2893 = vadd.f32 %v2506, %v2787
        %v2894 = vadd.f32 %v2507, %v2792
        %v2895 = vadd.f32 %v2508, %v2797
        %v2896 = vadd.f32 %v2509, %v2802
        %v2897 = vadd.f32 %v2510, %v2807
        %v2898 = vadd.f32 %v2511, %v2812
        %v2899 = vadd.f32 %v2512, %v2817
        %v2900 = vadd.f32 %v2513, %v2822
        %v2901 = vadd.f32 %v2514, %v2827
        %v2902 = vadd.f32 %v2515, %v2832
        %v2903 = vadd.f32 %v2516, %v2837
        %v2904 = vadd.f32 %v2517, %v2842
        %v2905 = vadd.f32 %v2518, %v2847
        %v2906 = vadd.f32 %v2519, %v2852
        %v2907 = vadd.f32 %v2520, %v2857
        %v2908 = vadd.f32 %v2521, %v2862
        %v2909 = vadd.f32 %v2522, %v2867
        %v2910 = vadd.f32 %v2523, %v2872
        %v2911 = vadd.f32 %v2524, %v2877
        %s2912 = scalar_lea.vmem [#allocation2], 48
        %v2913 = vld [vmem:[%s2912] sm:$0xff]
        %v2914 = vld [vmem:[%s2912 + $0x8] sm:$0xff]
        %v2915 = vld [vmem:[%s2912 + $0x18] sm:$0xff]
        %v2916 = vld [vmem:[%s2912 + $0x20] sm:$0xff]
        %v2917 = vld [vmem:[%s2912 + $0x30] sm:$0xff]
        %v2918 = vld [vmem:[%s2912 + $0x38] sm:$0xff]
        %v2919 = vld [vmem:[%s2912 + $0x48] sm:$0xff]
        %v2920 = vld [vmem:[%s2912 + $0x50] sm:$0xff]
        %v2921 = vld [vmem:[%s2912 + $0x60] sm:$0xff]
        %v2922 = vld [vmem:[%s2912 + $0x68] sm:$0xff]
        %v2923 = vld [vmem:[%s2912 + $0x78] sm:$0xff]
        %v2924 = vld [vmem:[%s2912 + $0x80] sm:$0xff]
        %v2925 = vld [vmem:[%s2912 + $0x90] sm:$0xff]
        %v2926 = vld [vmem:[%s2912 + $0x98] sm:$0xff]
        %v2927 = vld [vmem:[%s2912 + $0xa8] sm:$0xff]
        %v2928 = vld [vmem:[%s2912 + $0xb0] sm:$0xff]
        %v2929 = vld [vmem:[%s2912 + $0xc0] sm:$0xff]
        %v2930 = vld [vmem:[%s2912 + $0xc8] sm:$0xff]
        %v2931 = vld [vmem:[%s2912 + $0xd8] sm:$0xff]
        %v2932 = vld [vmem:[%s2912 + $0xe0] sm:$0xff]
        %v2933 = vld [vmem:[%s2912 + $0xf0] sm:$0xff]
        %v2934 = vld [vmem:[%s2912 + $0xf8] sm:$0xff]
        %v2935 = vld [vmem:[%s2912 + $0x108] sm:$0xff]
        %v2936 = vld [vmem:[%s2912 + $0x110] sm:$0xff]
        %v2937 = vld [vmem:[%s2912 + $0x120] sm:$0xff]
        %v2938 = vld [vmem:[%s2912 + $0x128] sm:$0xff]
        %v2939 = vld [vmem:[%s2912 + $0x138] sm:$0xff]
        %v2940 = vld [vmem:[%s2912 + $0x140] sm:$0xff]
        %v2941 = vld [vmem:[%s2912 + $0x150] sm:$0xff]
        %v2942 = vld [vmem:[%s2912 + $0x158] sm:$0xff]
        %v2943 = vld [vmem:[%s2912 + $0x168] sm:$0xff]
        %v2944 = vld [vmem:[%s2912 + $0x170] sm:$0xff]
        %s2945 = scalar_lea.vmem [#allocation6], 48
        %v2946 = vld [vmem:[%s2945] sm:$0xff]
        %v2948 = vsel %vm436, %v2913, 0
        %v2951 = vsel %vm436, %v2914, 0
        %v2954 = vsel %vm436, %v2915, 0
        %v2957 = vsel %vm436, %v2916, 0
        %v2960 = vsel %vm436, %v2917, 0
        %v2963 = vsel %vm436, %v2918, 0
        %v2966 = vsel %vm436, %v2919, 0
        %v2969 = vsel %vm436, %v2920, 0
        %v2972 = vsel %vm436, %v2921, 0
        %v2975 = vsel %vm436, %v2922, 0
        %v2978 = vsel %vm436, %v2923, 0
        %v2981 = vsel %vm436, %v2924, 0
        %v2984 = vsel %vm436, %v2925, 0
        %v2987 = vsel %vm436, %v2926, 0
        %v2990 = vsel %vm436, %v2927, 0
        %v2993 = vsel %vm436, %v2928, 0
        %v2996 = vsel %vm436, %v2929, 0
        %v2999 = vsel %vm436, %v2930, 0
        %v3002 = vsel %vm436, %v2931, 0
        %v3005 = vsel %vm436, %v2932, 0
        %v3008 = vsel %vm436, %v2933, 0
        %v3011 = vsel %vm436, %v2934, 0
        %v3014 = vsel %vm436, %v2935, 0
        %v3017 = vsel %vm436, %v2936, 0
        %v3020 = vsel %vm436, %v2937, 0
        %v3023 = vsel %vm436, %v2938, 0
        %v3026 = vsel %vm436, %v2939, 0
        %v3029 = vsel %vm436, %v2940, 0
        %v3032 = vsel %vm436, %v2941, 0
        %v3035 = vsel %vm436, %v2942, 0
        %v3038 = vsel %vm436, %v2943, 0
        %v3041 = vsel %vm436, %v2944, 0
        %3043 = vmatprep.subr.mxu0 0.0
        %3044 = vmatpush1.msra.mxu0 %v2946
        %3045 = vmatprep.subr.mxu0 0.0
        %3046 = vmatpush1.msra.mxu0 0.0
        %3047 = vmatprep.subr.mxu0 0.0
        %3048 = vmatpush1.msra.mxu0 0.0
        %3049 = vmatprep.subr.mxu0 0.0
        %3050 = vmatpush1.msra.mxu0 0.0
        %3051 = vmatprep.subr.mxu0 0.0
        %3052 = vmatpush1.msra.mxu0 0.0
        %3053 = vmatprep.subr.mxu0 0.0
        %3054 = vmatpush1.msra.mxu0 0.0
        %3055 = vmatprep.subr.mxu0 0.0
        %3056 = vmatpush1.msra.mxu0 0.0
        %3057 = vmatprep.subr.mxu0 0.0
        %3058 = vmatpush1.msra.mxu0 0.0
        %3059 = vmatprep.subr.mxu0 0.0
        %3060 = vmatpush1.msra.mxu0 0.0
        %3061 = vmatprep.subr.mxu0 0.0
        %3062 = vmatpush1.msra.mxu0 0.0
        %3063 = vmatprep.subr.mxu0 0.0
        %3064 = vmatpush1.msra.mxu0 0.0
        %3065 = vmatprep.subr.mxu0 0.0
        %3066 = vmatpush1.msra.mxu0 0.0
        %3067 = vmatprep.subr.mxu0 0.0
        %3068 = vmatpush1.msra.mxu0 0.0
        %3069 = vmatprep.subr.mxu0 0.0
        %3070 = vmatpush1.msra.mxu0 0.0
        %3071 = vmatprep.subr.mxu0 0.0
        %3072 = vmatpush1.msra.mxu0 0.0
        %3073 = vmatprep.subr.mxu0 0.0
        %3074 = vmatpush1.msra.mxu0 0.0
        %3075 = vmatprep.subr.mxu0 0.0
        %3076 = vmatpush1.msra.mxu0 0.0
        %3077 = vmatprep.subr.mxu0 0.0
        %3078 = vmatpush1.msra.mxu0 0.0
        %3079 = vmatprep.subr.mxu0 0.0
        %3080 = vmatpush1.msra.mxu0 0.0
        %3081 = vmatprep.subr.mxu0 0.0
        %3082 = vmatpush1.msra.mxu0 0.0
        %3083 = vmatprep.subr.mxu0 0.0
        %3084 = vmatpush1.msra.mxu0 0.0
        %3085 = vmatprep.subr.mxu0 0.0
        %3086 = vmatpush1.msra.mxu0 0.0
        %3087 = vmatprep.subr.mxu0 0.0
        %3088 = vmatpush1.msra.mxu0 0.0
        %3089 = vmatprep.subr.mxu0 0.0
        %3090 = vmatpush1.msra.mxu0 0.0
        %3091 = vmatprep.subr.mxu0 0.0
        %3092 = vmatpush1.msra.mxu0 0.0
        %3093 = vmatprep.subr.mxu0 0.0
        %3094 = vmatpush1.msra.mxu0 0.0
        %3095 = vmatprep.subr.mxu0 0.0
        %3096 = vmatpush1.msra.mxu0 0.0
        %3097 = vmatprep.subr.mxu0 0.0
        %3098 = vmatpush1.msra.mxu0 0.0
        %3099 = vmatprep.subr.mxu0 0.0
        %3100 = vmatpush1.msra.mxu0 0.0
        %3101 = vmatprep.subr.mxu0 0.0
        %3102 = vmatpush1.msra.mxu0 0.0
        %3103 = vmatprep.subr.mxu0 0.0
        %3104 = vmatpush1.msra.mxu0 0.0
        %3105 = vmatprep.subr.mxu0 0.0
        %3106 = vmatpush1.msra.mxu0 0.0
        %3107 = vmatprep.mubr.f32.mxu0 0.0
        %3108 = vmatmul.mubr.f32.gmra.mrb[0].mxu0 %v2948
        %v3109 = vpop.f32.mrb[0].mxu0
        %v3110 = vadd.f32 0.0, %v3109
        %v3111 = vpop.f32.mrb[0].mxu0
        %3112 = vmatprep.mubr.f32.mxu0 0.0
        %3113 = vmatmul.mubr.f32.gmra.mrb[0].mxu0 %v2951
        %v3114 = vpop.f32.mrb[0].mxu0
        %v3115 = vadd.f32 0.0, %v3114
        %v3116 = vpop.f32.mrb[0].mxu0
        %3117 = vmatprep.mubr.f32.mxu0 0.0
        %3118 = vmatmul.mubr.f32.gmra.mrb[0].mxu0 %v2954
        %v3119 = vpop.f32.mrb[0].mxu0
        %v3120 = vadd.f32 0.0, %v3119
        %v3121 = vpop.f32.mrb[0].mxu0
        %3122 = vmatprep.mubr.f32.mxu0 0.0
        %3123 = vmatmul.mubr.f32.gmra.mrb[0].mxu0 %v2957
        %v3124 = vpop.f32.mrb[0].mxu0
        %v3125 = vadd.f32 0.0, %v3124
        %v3126 = vpop.f32.mrb[0].mxu0
        %3127 = vmatprep.mubr.f32.mxu0 0.0
        %3128 = vmatmul.mubr.f32.gmra.mrb[0].mxu0 %v2960
        %v3129 = vpop.f32.mrb[0].mxu0
        %v3130 = vadd.f32 0.0, %v3129
        %v3131 = vpop.f32.mrb[0].mxu0
        %3132 = vmatprep.mubr.f32.mxu0 0.0
        %3133 = vmatmul.mubr.f32.gmra.mrb[0].mxu0 %v2963
        %v3134 = vpop.f32.mrb[0].mxu0
        %v3135 = vadd.f32 0.0, %v3134
        %v3136 = vpop.f32.mrb[0].mxu0
        %3137 = vmatprep.mubr.f32.mxu0 0.0
        %3138 = vmatmul.mubr.f32.gmra.mrb[0].mxu0 %v2966
        %v3139 = vpop.f32.mrb[0].mxu0
        %v3140 = vadd.f32 0.0, %v3139
        %v3141 = vpop.f32.mrb[0].mxu0
        %3142 = vmatprep.mubr.f32.mxu0 0.0
        %3143 = vmatmul.mubr.f32.gmra.mrb[0].mxu0 %v2969
        %v3144 = vpop.f32.mrb[0].mxu0
        %v3145 = vadd.f32 0.0, %v3144
        %v3146 = vpop.f32.mrb[0].mxu0
        %3147 = vmatprep.mubr.f32.mxu0 0.0
        %3148 = vmatmul.mubr.f32.gmra.mrb[0].mxu0 %v2972
        %v3149 = vpop.f32.mrb[0].mxu0
        %v3150 = vadd.f32 0.0, %v3149
        %v3151 = vpop.f32.mrb[0].mxu0
        %3152 = vmatprep.mubr.f32.mxu0 0.0
        %3153 = vmatmul.mubr.f32.gmra.mrb[0].mxu0 %v2975
        %v3154 = vpop.f32.mrb[0].mxu0
        %v3155 = vadd.f32 0.0, %v3154
        %v3156 = vpop.f32.mrb[0].mxu0
        %3157 = vmatprep.mubr.f32.mxu0 0.0
        %3158 = vmatmul.mubr.f32.gmra.mrb[0].mxu0 %v2978
        %v3159 = vpop.f32.mrb[0].mxu0
        %v3160 = vadd.f32 0.0, %v3159
        %v3161 = vpop.f32.mrb[0].mxu0
        %3162 = vmatprep.mubr.f32.mxu0 0.0
        %3163 = vmatmul.mubr.f32.gmra.mrb[0].mxu0 %v2981
        %v3164 = vpop.f32.mrb[0].mxu0
        %v3165 = vadd.f32 0.0, %v3164
        %v3166 = vpop.f32.mrb[0].mxu0
        %3167 = vmatprep.mubr.f32.mxu0 0.0
        %3168 = vmatmul.mubr.f32.gmra.mrb[0].mxu0 %v2984
        %v3169 = vpop.f32.mrb[0].mxu0
        %v3170 = vadd.f32 0.0, %v3169
        %v3171 = vpop.f32.mrb[0].mxu0
        %3172 = vmatprep.mubr.f32.mxu0 0.0
        %3173 = vmatmul.mubr.f32.gmra.mrb[0].mxu0 %v2987
        %v3174 = vpop.f32.mrb[0].mxu0
        %v3175 = vadd.f32 0.0, %v3174
        %v3176 = vpop.f32.mrb[0].mxu0
        %3177 = vmatprep.mubr.f32.mxu0 0.0
        %3178 = vmatmul.mubr.f32.gmra.mrb[0].mxu0 %v2990
        %v3179 = vpop.f32.mrb[0].mxu0
        %v3180 = vadd.f32 0.0, %v3179
        %v3181 = vpop.f32.mrb[0].mxu0
        %3182 = vmatprep.mubr.f32.mxu0 0.0
        %3183 = vmatmul.mubr.f32.gmra.mrb[0].mxu0 %v2993
        %v3184 = vpop.f32.mrb[0].mxu0
        %v3185 = vadd.f32 0.0, %v3184
        %v3186 = vpop.f32.mrb[0].mxu0
        %3187 = vmatprep.mubr.f32.mxu0 0.0
        %3188 = vmatmul.mubr.f32.gmra.mrb[0].mxu0 %v2996
        %v3189 = vpop.f32.mrb[0].mxu0
        %v3190 = vadd.f32 0.0, %v3189
        %v3191 = vpop.f32.mrb[0].mxu0
        %3192 = vmatprep.mubr.f32.mxu0 0.0
        %3193 = vmatmul.mubr.f32.gmra.mrb[0].mxu0 %v2999
        %v3194 = vpop.f32.mrb[0].mxu0
        %v3195 = vadd.f32 0.0, %v3194
        %v3196 = vpop.f32.mrb[0].mxu0
        %3197 = vmatprep.mubr.f32.mxu0 0.0
        %3198 = vmatmul.mubr.f32.gmra.mrb[0].mxu0 %v3002
        %v3199 = vpop.f32.mrb[0].mxu0
        %v3200 = vadd.f32 0.0, %v3199
        %v3201 = vpop.f32.mrb[0].mxu0
        %3202 = vmatprep.mubr.f32.mxu0 0.0
        %3203 = vmatmul.mubr.f32.gmra.mrb[0].mxu0 %v3005
        %v3204 = vpop.f32.mrb[0].mxu0
        %v3205 = vadd.f32 0.0, %v3204
        %v3206 = vpop.f32.mrb[0].mxu0
        %3207 = vmatprep.mubr.f32.mxu0 0.0
        %3208 = vmatmul.mubr.f32.gmra.mrb[0].mxu0 %v3008
        %v3209 = vpop.f32.mrb[0].mxu0
        %v3210 = vadd.f32 0.0, %v3209
        %v3211 = vpop.f32.mrb[0].mxu0
        %3212 = vmatprep.mubr.f32.mxu0 0.0
        %3213 = vmatmul.mubr.f32.gmra.mrb[0].mxu0 %v3011
        %v3214 = vpop.f32.mrb[0].mxu0
        %v3215 = vadd.f32 0.0, %v3214
        %v3216 = vpop.f32.mrb[0].mxu0
        %3217 = vmatprep.mubr.f32.mxu0 0.0
        %3218 = vmatmul.mubr.f32.gmra.mrb[0].mxu0 %v3014
        %v3219 = vpop.f32.mrb[0].mxu0
        %v3220 = vadd.f32 0.0, %v3219
        %v3221 = vpop.f32.mrb[0].mxu0
        %3222 = vmatprep.mubr.f32.mxu0 0.0
        %3223 = vmatmul.mubr.f32.gmra.mrb[0].mxu0 %v3017
        %v3224 = vpop.f32.mrb[0].mxu0
        %v3225 = vadd.f32 0.0, %v3224
        %v3226 = vpop.f32.mrb[0].mxu0
        %3227 = vmatprep.mubr.f32.mxu0 0.0
        %3228 = vmatmul.mubr.f32.gmra.mrb[0].mxu0 %v3020
        %v3229 = vpop.f32.mrb[0].mxu0
        %v3230 = vadd.f32 0.0, %v3229
        %v3231 = vpop.f32.mrb[0].mxu0
        %3232 = vmatprep.mubr.f32.mxu0 0.0
        %3233 = vmatmul.mubr.f32.gmra.mrb[0].mxu0 %v3023
        %v3234 = vpop.f32.mrb[0].mxu0
        %v3235 = vadd.f32 0.0, %v3234
        %v3236 = vpop.f32.mrb[0].mxu0
        %3237 = vmatprep.mubr.f32.mxu0 0.0
        %3238 = vmatmul.mubr.f32.gmra.mrb[0].mxu0 %v3026
        %v3239 = vpop.f32.mrb[0].mxu0
        %v3240 = vadd.f32 0.0, %v3239
        %v3241 = vpop.f32.mrb[0].mxu0
        %3242 = vmatprep.mubr.f32.mxu0 0.0
        %3243 = vmatmul.mubr.f32.gmra.mrb[0].mxu0 %v3029
        %v3244 = vpop.f32.mrb[0].mxu0
        %v3245 = vadd.f32 0.0, %v3244
        %v3246 = vpop.f32.mrb[0].mxu0
        %3247 = vmatprep.mubr.f32.mxu0 0.0
        %3248 = vmatmul.mubr.f32.gmra.mrb[0].mxu0 %v3032
        %v3249 = vpop.f32.mrb[0].mxu0
        %v3250 = vadd.f32 0.0, %v3249
        %v3251 = vpop.f32.mrb[0].mxu0
        %3252 = vmatprep.mubr.f32.mxu0 0.0
        %3253 = vmatmul.mubr.f32.gmra.mrb[0].mxu0 %v3035
        %v3254 = vpop.f32.mrb[0].mxu0
        %v3255 = vadd.f32 0.0, %v3254
        %v3256 = vpop.f32.mrb[0].mxu0
        %3257 = vmatprep.mubr.f32.mxu0 0.0
        %3258 = vmatmul.mubr.f32.gmra.mrb[0].mxu0 %v3038
        %v3259 = vpop.f32.mrb[0].mxu0
        %v3260 = vadd.f32 0.0, %v3259
        %v3261 = vpop.f32.mrb[0].mxu0
        %3262 = vmatprep.mubr.f32.mxu0 0.0
        %3263 = vmatmul.mubr.f32.gmra.mrb[0].mxu0 %v3041
        %v3264 = vpop.f32.mrb[0].mxu0
        %v3265 = vadd.f32 0.0, %v3264
        %v3266 = vpop.f32.mrb[0].mxu0
        %3267 = vdwg.mxu0
        %v3268 = vadd.f32 %v2880, %v3110
        %v3269 = vadd.f32 %v2881, %v3115
        %v3270 = vadd.f32 %v2882, %v3120
        %v3271 = vadd.f32 %v2883, %v3125
        %v3272 = vadd.f32 %v2884, %v3130
        %v3273 = vadd.f32 %v2885, %v3135
        %v3274 = vadd.f32 %v2886, %v3140
        %v3275 = vadd.f32 %v2887, %v3145
        %v3276 = vadd.f32 %v2888, %v3150
        %v3277 = vadd.f32 %v2889, %v3155
        %v3278 = vadd.f32 %v2890, %v3160
        %v3279 = vadd.f32 %v2891, %v3165
        %v3280 = vadd.f32 %v2892, %v3170
        %v3281 = vadd.f32 %v2893, %v3175
        %v3282 = vadd.f32 %v2894, %v3180
        %v3283 = vadd.f32 %v2895, %v3185
        %v3284 = vadd.f32 %v2896, %v3190
        %v3285 = vadd.f32 %v2897, %v3195
        %v3286 = vadd.f32 %v2898, %v3200
        %v3287 = vadd.f32 %v2899, %v3205
        %v3288 = vadd.f32 %v2900, %v3210
        %v3289 = vadd.f32 %v2901, %v3215
        %v3290 = vadd.f32 %v2902, %v3220
        %v3291 = vadd.f32 %v2903, %v3225
        %v3292 = vadd.f32 %v2904, %v3230
        %v3293 = vadd.f32 %v2905, %v3235
        %v3294 = vadd.f32 %v2906, %v3240
        %v3295 = vadd.f32 %v2907, %v3245
        %v3296 = vadd.f32 %v2908, %v3250
        %v3297 = vadd.f32 %v2909, %v3255
        %v3298 = vadd.f32 %v2910, %v3260
        %v3299 = vadd.f32 %v2911, %v3265
        %v3300 = vld [vmem:[%s2912 + $0x1] sm:$0xff]
        %v3301 = vld [vmem:[%s2912 + $0x9] sm:$0xff]
        %v3302 = vld [vmem:[%s2912 + $0x19] sm:$0xff]
        %v3303 = vld [vmem:[%s2912 + $0x21] sm:$0xff]
        %v3304 = vld [vmem:[%s2912 + $0x31] sm:$0xff]
        %v3305 = vld [vmem:[%s2912 + $0x39] sm:$0xff]
        %v3306 = vld [vmem:[%s2912 + $0x49] sm:$0xff]
        %v3307 = vld [vmem:[%s2912 + $0x51] sm:$0xff]
        %v3308 = vld [vmem:[%s2912 + $0x61] sm:$0xff]
        %v3309 = vld [vmem:[%s2912 + $0x69] sm:$0xff]
        %v3310 = vld [vmem:[%s2912 + $0x79] sm:$0xff]
        %v3311 = vld [vmem:[%s2912 + $0x81] sm:$0xff]
        %v3312 = vld [vmem:[%s2912 + $0x91] sm:$0xff]
        %v3313 = vld [vmem:[%s2912 + $0x99] sm:$0xff]
        %v3314 = vld [vmem:[%s2912 + $0xa9] sm:$0xff]
        %v3315 = vld [vmem:[%s2912 + $0xb1] sm:$0xff]
        %v3316 = vld [vmem:[%s2912 + $0xc1] sm:$0xff]
        %v3317 = vld [vmem:[%s2912 + $0xc9] sm:$0xff]
        %v3318 = vld [vmem:[%s2912 + $0xd9] sm:$0xff]
        %v3319 = vld [vmem:[%s2912 + $0xe1] sm:$0xff]
        %v3320 = vld [vmem:[%s2912 + $0xf1] sm:$0xff]
        %v3321 = vld [vmem:[%s2912 + $0xf9] sm:$0xff]
        %v3322 = vld [vmem:[%s2912 + $0x109] sm:$0xff]
        %v3323 = vld [vmem:[%s2912 + $0x111] sm:$0xff]
        %v3324 = vld [vmem:[%s2912 + $0x121] sm:$0xff]
        %v3325 = vld [vmem:[%s2912 + $0x129] sm:$0xff]
        %v3326 = vld [vmem:[%s2912 + $0x139] sm:$0xff]
        %v3327 = vld [vmem:[%s2912 + $0x141] sm:$0xff]
        %v3328 = vld [vmem:[%s2912 + $0x151] sm:$0xff]
        %v3329 = vld [vmem:[%s2912 + $0x159] sm:$0xff]
        %v3330 = vld [vmem:[%s2912 + $0x169] sm:$0xff]
        %v3331 = vld [vmem:[%s2912 + $0x171] sm:$0xff]
        %s3332 = scalar_lea.vmem [#allocation6], 56
        %v3333 = vld [vmem:[%s3332] sm:$0xff]
        %v3335 = vsel %vm436, %v3300, 0
        %v3338 = vsel %vm436, %v3301, 0
        %v3341 = vsel %vm436, %v3302, 0
        %v3344 = vsel %vm436, %v3303, 0
        %v3347 = vsel %vm436, %v3304, 0
        %v3350 = vsel %vm436, %v3305, 0
        %v3353 = vsel %vm436, %v3306, 0
        %v3356 = vsel %vm436, %v3307, 0
        %v3359 = vsel %vm436, %v3308, 0
        %v3362 = vsel %vm436, %v3309, 0
        %v3365 = vsel %vm436, %v3310, 0
        %v3368 = vsel %vm436, %v3311, 0
        %v3371 = vsel %vm436, %v3312, 0
        %v3374 = vsel %vm436, %v3313, 0
        %v3377 = vsel %vm436, %v3314, 0
        %v3380 = vsel %vm436, %v3315, 0
        %v3383 = vsel %vm436, %v3316, 0
        %v3386 = vsel %vm436, %v3317, 0
        %v3389 = vsel %vm436, %v3318, 0
        %v3392 = vsel %vm436, %v3319, 0
        %v3395 = vsel %vm436, %v3320, 0
        %v3398 = vsel %vm436, %v3321, 0
        %v3401 = vsel %vm436, %v3322, 0
        %v3404 = vsel %vm436, %v3323, 0
        %v3407 = vsel %vm436, %v3324, 0
        %v3410 = vsel %vm436, %v3325, 0
        %v3413 = vsel %vm436, %v3326, 0
        %v3416 = vsel %vm436, %v3327, 0
        %v3419 = vsel %vm436, %v3328, 0
        %v3422 = vsel %vm436, %v3329, 0
        %v3425 = vsel %vm436, %v3330, 0
        %v3428 = vsel %vm436, %v3331, 0
        %3430 = vmatprep.subr.mxu0 0.0
        %3431 = vmatpush1.msra.mxu0 %v3333
        %3432 = vmatprep.subr.mxu0 0.0
        %3433 = vmatpush1.msra.mxu0 0.0
        %3434 = vmatprep.subr.mxu0 0.0
        %3435 = vmatpush1.msra.mxu0 0.0
        %3436 = vmatprep.subr.mxu0 0.0
        %3437 = vmatpush1.msra.mxu0 0.0
        %3438 = vmatprep.subr.mxu0 0.0
        %3439 = vmatpush1.msra.mxu0 0.0
        %3440 = vmatprep.subr.mxu0 0.0
        %3441 = vmatpush1.msra.mxu0 0.0
        %3442 = vmatprep.subr.mxu0 0.0
        %3443 = vmatpush1.msra.mxu0 0.0
        %3444 = vmatprep.subr.mxu0 0.0
        %3445 = vmatpush1.msra.mxu0 0.0
        %3446 = vmatprep.subr.mxu0 0.0
        %3447 = vmatpush1.msra.mxu0 0.0
        %3448 = vmatprep.subr.mxu0 0.0
        %3449 = vmatpush1.msra.mxu0 0.0
        %3450 = vmatprep.subr.mxu0 0.0
        %3451 = vmatpush1.msra.mxu0 0.0
        %3452 = vmatprep.subr.mxu0 0.0
        %3453 = vmatpush1.msra.mxu0 0.0
        %3454 = vmatprep.subr.mxu0 0.0
        %3455 = vmatpush1.msra.mxu0 0.0
        %3456 = vmatprep.subr.mxu0 0.0
        %3457 = vmatpush1.msra.mxu0 0.0
        %3458 = vmatprep.subr.mxu0 0.0
        %3459 = vmatpush1.msra.mxu0 0.0
        %3460 = vmatprep.subr.mxu0 0.0
        %3461 = vmatpush1.msra.mxu0 0.0
        %3462 = vmatprep.subr.mxu0 0.0
        %3463 = vmatpush1.msra.mxu0 0.0
        %3464 = vmatprep.subr.mxu0 0.0
        %3465 = vmatpush1.msra.mxu0 0.0
        %3466 = vmatprep.subr.mxu0 0.0
        %3467 = vmatpush1.msra.mxu0 0.0
        %3468 = vmatprep.subr.mxu0 0.0
        %3469 = vmatpush1.msra.mxu0 0.0
        %3470 = vmatprep.subr.mxu0 0.0
        %3471 = vmatpush1.msra.mxu0 0.0
        %3472 = vmatprep.subr.mxu0 0.0
        %3473 = vmatpush1.msra.mxu0 0.0
        %3474 = vmatprep.subr.mxu0 0.0
        %3475 = vmatpush1.msra.mxu0 0.0
        %3476 = vmatprep.subr.mxu0 0.0
        %3477 = vmatpush1.msra.mxu0 0.0
        %3478 = vmatprep.subr.mxu0 0.0
        %3479 = vmatpush1.msra.mxu0 0.0
        %3480 = vmatprep.subr.mxu0 0.0
        %3481 = vmatpush1.msra.mxu0 0.0
        %3482 = vmatprep.subr.mxu0 0.0
        %3483 = vmatpush1.msra.mxu0 0.0
        %3484 = vmatprep.subr.mxu0 0.0
        %3485 = vmatpush1.msra.mxu0 0.0
        %3486 = vmatprep.subr.mxu0 0.0
        %3487 = vmatpush1.msra.mxu0 0.0
        %3488 = vmatprep.subr.mxu0 0.0
        %3489 = vmatpush1.msra.mxu0 0.0
        %3490 = vmatprep.subr.mxu0 0.0
        %3491 = vmatpush1.msra.mxu0 0.0
        %3492 = vmatprep.subr.mxu0 0.0
        %3493 = vmatpush1.msra.mxu0 0.0
        %3494 = vmatprep.mubr.f32.mxu0 0.0
        %3495 = vmatmul.mubr.f32.gmra.mrb[0].mxu0 %v3335
        %v3496 = vpop.f32.mrb[0].mxu0
        %v3497 = vadd.f32 0.0, %v3496
        %v3498 = vpop.f32.mrb[0].mxu0
        %3499 = vmatprep.mubr.f32.mxu0 0.0
        %3500 = vmatmul.mubr.f32.gmra.mrb[0].mxu0 %v3338
        %v3501 = vpop.f32.mrb[0].mxu0
        %v3502 = vadd.f32 0.0, %v3501
        %v3503 = vpop.f32.mrb[0].mxu0
        %3504 = vmatprep.mubr.f32.mxu0 0.0
        %3505 = vmatmul.mubr.f32.gmra.mrb[0].mxu0 %v3341
        %v3506 = vpop.f32.mrb[0].mxu0
        %v3507 = vadd.f32 0.0, %v3506
        %v3508 = vpop.f32.mrb[0].mxu0
        %3509 = vmatprep.mubr.f32.mxu0 0.0
        %3510 = vmatmul.mubr.f32.gmra.mrb[0].mxu0 %v3344
        %v3511 = vpop.f32.mrb[0].mxu0
        %v3512 = vadd.f32 0.0, %v3511
        %v3513 = vpop.f32.mrb[0].mxu0
        %3514 = vmatprep.mubr.f32.mxu0 0.0
        %3515 = vmatmul.mubr.f32.gmra.mrb[0].mxu0 %v3347
        %v3516 = vpop.f32.mrb[0].mxu0
        %v3517 = vadd.f32 0.0, %v3516
        %v3518 = vpop.f32.mrb[0].mxu0
        %3519 = vmatprep.mubr.f32.mxu0 0.0
        %3520 = vmatmul.mubr.f32.gmra.mrb[0].mxu0 %v3350
        %v3521 = vpop.f32.mrb[0].mxu0
        %v3522 = vadd.f32 0.0, %v3521
        %v3523 = vpop.f32.mrb[0].mxu0
        %3524 = vmatprep.mubr.f32.mxu0 0.0
        %3525 = vmatmul.mubr.f32.gmra.mrb[0].mxu0 %v3353
        %v3526 = vpop.f32.mrb[0].mxu0
        %v3527 = vadd.f32 0.0, %v3526
        %v3528 = vpop.f32.mrb[0].mxu0
        %3529 = vmatprep.mubr.f32.mxu0 0.0
        %3530 = vmatmul.mubr.f32.gmra.mrb[0].mxu0 %v3356
        %v3531 = vpop.f32.mrb[0].mxu0
        %v3532 = vadd.f32 0.0, %v3531
        %v3533 = vpop.f32.mrb[0].mxu0
        %3534 = vmatprep.mubr.f32.mxu0 0.0
        %3535 = vmatmul.mubr.f32.gmra.mrb[0].mxu0 %v3359
        %v3536 = vpop.f32.mrb[0].mxu0
        %v3537 = vadd.f32 0.0, %v3536
        %v3538 = vpop.f32.mrb[0].mxu0
        %3539 = vmatprep.mubr.f32.mxu0 0.0
        %3540 = vmatmul.mubr.f32.gmra.mrb[0].mxu0 %v3362
        %v3541 = vpop.f32.mrb[0].mxu0
        %v3542 = vadd.f32 0.0, %v3541
        %v3543 = vpop.f32.mrb[0].mxu0
        %3544 = vmatprep.mubr.f32.mxu0 0.0
        %3545 = vmatmul.mubr.f32.gmra.mrb[0].mxu0 %v3365
        %v3546 = vpop.f32.mrb[0].mxu0
        %v3547 = vadd.f32 0.0, %v3546
        %v3548 = vpop.f32.mrb[0].mxu0
        %3549 = vmatprep.mubr.f32.mxu0 0.0
        %3550 = vmatmul.mubr.f32.gmra.mrb[0].mxu0 %v3368
        %v3551 = vpop.f32.mrb[0].mxu0
        %v3552 = vadd.f32 0.0, %v3551
        %v3553 = vpop.f32.mrb[0].mxu0
        %3554 = vmatprep.mubr.f32.mxu0 0.0
        %3555 = vmatmul.mubr.f32.gmra.mrb[0].mxu0 %v3371
        %v3556 = vpop.f32.mrb[0].mxu0
        %v3557 = vadd.f32 0.0, %v3556
        %v3558 = vpop.f32.mrb[0].mxu0
        %3559 = vmatprep.mubr.f32.mxu0 0.0
        %3560 = vmatmul.mubr.f32.gmra.mrb[0].mxu0 %v3374
        %v3561 = vpop.f32.mrb[0].mxu0
        %v3562 = vadd.f32 0.0, %v3561
        %v3563 = vpop.f32.mrb[0].mxu0
        %3564 = vmatprep.mubr.f32.mxu0 0.0
        %3565 = vmatmul.mubr.f32.gmra.mrb[0].mxu0 %v3377
        %v3566 = vpop.f32.mrb[0].mxu0
        %v3567 = vadd.f32 0.0, %v3566
        %v3568 = vpop.f32.mrb[0].mxu0
        %3569 = vmatprep.mubr.f32.mxu0 0.0
        %3570 = vmatmul.mubr.f32.gmra.mrb[0].mxu0 %v3380
        %v3571 = vpop.f32.mrb[0].mxu0
        %v3572 = vadd.f32 0.0, %v3571
        %v3573 = vpop.f32.mrb[0].mxu0
        %3574 = vmatprep.mubr.f32.mxu0 0.0
        %3575 = vmatmul.mubr.f32.gmra.mrb[0].mxu0 %v3383
        %v3576 = vpop.f32.mrb[0].mxu0
        %v3577 = vadd.f32 0.0, %v3576
        %v3578 = vpop.f32.mrb[0].mxu0
        %3579 = vmatprep.mubr.f32.mxu0 0.0
        %3580 = vmatmul.mubr.f32.gmra.mrb[0].mxu0 %v3386
        %v3581 = vpop.f32.mrb[0].mxu0
        %v3582 = vadd.f32 0.0, %v3581
        %v3583 = vpop.f32.mrb[0].mxu0
        %3584 = vmatprep.mubr.f32.mxu0 0.0
        %3585 = vmatmul.mubr.f32.gmra.mrb[0].mxu0 %v3389
        %v3586 = vpop.f32.mrb[0].mxu0
        %v3587 = vadd.f32 0.0, %v3586
        %v3588 = vpop.f32.mrb[0].mxu0
        %3589 = vmatprep.mubr.f32.mxu0 0.0
        %3590 = vmatmul.mubr.f32.gmra.mrb[0].mxu0 %v3392
        %v3591 = vpop.f32.mrb[0].mxu0
        %v3592 = vadd.f32 0.0, %v3591
        %v3593 = vpop.f32.mrb[0].mxu0
        %3594 = vmatprep.mubr.f32.mxu0 0.0
        %3595 = vmatmul.mubr.f32.gmra.mrb[0].mxu0 %v3395
        %v3596 = vpop.f32.mrb[0].mxu0
        %v3597 = vadd.f32 0.0, %v3596
        %v3598 = vpop.f32.mrb[0].mxu0
        %3599 = vmatprep.mubr.f32.mxu0 0.0
        %3600 = vmatmul.mubr.f32.gmra.mrb[0].mxu0 %v3398
        %v3601 = vpop.f32.mrb[0].mxu0
        %v3602 = vadd.f32 0.0, %v3601
        %v3603 = vpop.f32.mrb[0].mxu0
        %3604 = vmatprep.mubr.f32.mxu0 0.0
        %3605 = vmatmul.mubr.f32.gmra.mrb[0].mxu0 %v3401
        %v3606 = vpop.f32.mrb[0].mxu0
        %v3607 = vadd.f32 0.0, %v3606
        %v3608 = vpop.f32.mrb[0].mxu0
        %3609 = vmatprep.mubr.f32.mxu0 0.0
        %3610 = vmatmul.mubr.f32.gmra.mrb[0].mxu0 %v3404
        %v3611 = vpop.f32.mrb[0].mxu0
        %v3612 = vadd.f32 0.0, %v3611
        %v3613 = vpop.f32.mrb[0].mxu0
        %3614 = vmatprep.mubr.f32.mxu0 0.0
        %3615 = vmatmul.mubr.f32.gmra.mrb[0].mxu0 %v3407
        %v3616 = vpop.f32.mrb[0].mxu0
        %v3617 = vadd.f32 0.0, %v3616
        %v3618 = vpop.f32.mrb[0].mxu0
        %3619 = vmatprep.mubr.f32.mxu0 0.0
        %3620 = vmatmul.mubr.f32.gmra.mrb[0].mxu0 %v3410
        %v3621 = vpop.f32.mrb[0].mxu0
        %v3622 = vadd.f32 0.0, %v3621
        %v3623 = vpop.f32.mrb[0].mxu0
        %3624 = vmatprep.mubr.f32.mxu0 0.0
        %3625 = vmatmul.mubr.f32.gmra.mrb[0].mxu0 %v3413
        %v3626 = vpop.f32.mrb[0].mxu0
        %v3627 = vadd.f32 0.0, %v3626
        %v3628 = vpop.f32.mrb[0].mxu0
        %3629 = vmatprep.mubr.f32.mxu0 0.0
        %3630 = vmatmul.mubr.f32.gmra.mrb[0].mxu0 %v3416
        %v3631 = vpop.f32.mrb[0].mxu0
        %v3632 = vadd.f32 0.0, %v3631
        %v3633 = vpop.f32.mrb[0].mxu0
        %3634 = vmatprep.mubr.f32.mxu0 0.0
        %3635 = vmatmul.mubr.f32.gmra.mrb[0].mxu0 %v3419
        %v3636 = vpop.f32.mrb[0].mxu0
        %v3637 = vadd.f32 0.0, %v3636
        %v3638 = vpop.f32.mrb[0].mxu0
        %3639 = vmatprep.mubr.f32.mxu0 0.0
        %3640 = vmatmul.mubr.f32.gmra.mrb[0].mxu0 %v3422
        %v3641 = vpop.f32.mrb[0].mxu0
        %v3642 = vadd.f32 0.0, %v3641
        %v3643 = vpop.f32.mrb[0].mxu0
        %3644 = vmatprep.mubr.f32.mxu0 0.0
        %3645 = vmatmul.mubr.f32.gmra.mrb[0].mxu0 %v3425
        %v3646 = vpop.f32.mrb[0].mxu0
        %v3647 = vadd.f32 0.0, %v3646
        %v3648 = vpop.f32.mrb[0].mxu0
        %3649 = vmatprep.mubr.f32.mxu0 0.0
        %3650 = vmatmul.mubr.f32.gmra.mrb[0].mxu0 %v3428
        %v3651 = vpop.f32.mrb[0].mxu0
        %v3652 = vadd.f32 0.0, %v3651
        %v3653 = vpop.f32.mrb[0].mxu0
        %3654 = vdwg.mxu0
        %v3655 = vadd.f32 %v3268, %v3497
        %v3656 = vadd.f32 %v3269, %v3502
        %v3657 = vadd.f32 %v3270, %v3507
        %v3658 = vadd.f32 %v3271, %v3512
        %v3659 = vadd.f32 %v3272, %v3517
        %v3660 = vadd.f32 %v3273, %v3522
        %v3661 = vadd.f32 %v3274, %v3527
        %v3662 = vadd.f32 %v3275, %v3532
        %v3663 = vadd.f32 %v3276, %v3537
        %v3664 = vadd.f32 %v3277, %v3542
        %v3665 = vadd.f32 %v3278, %v3547
        %v3666 = vadd.f32 %v3279, %v3552
        %v3667 = vadd.f32 %v3280, %v3557
        %v3668 = vadd.f32 %v3281, %v3562
        %v3669 = vadd.f32 %v3282, %v3567
        %v3670 = vadd.f32 %v3283, %v3572
        %v3671 = vadd.f32 %v3284, %v3577
        %v3672 = vadd.f32 %v3285, %v3582
        %v3673 = vadd.f32 %v3286, %v3587
        %v3674 = vadd.f32 %v3287, %v3592
        %v3675 = vadd.f32 %v3288, %v3597
        %v3676 = vadd.f32 %v3289, %v3602
        %v3677 = vadd.f32 %v3290, %v3607
        %v3678 = vadd.f32 %v3291, %v3612
        %v3679 = vadd.f32 %v3292, %v3617
        %v3680 = vadd.f32 %v3293, %v3622
        %v3681 = vadd.f32 %v3294, %v3627
        %v3682 = vadd.f32 %v3295, %v3632
        %v3683 = vadd.f32 %v3296, %v3637
        %v3684 = vadd.f32 %v3297, %v3642
        %v3685 = vadd.f32 %v3298, %v3647
        %v3686 = vadd.f32 %v3299, %v3652
        %v3687 = vld [vmem:[%s2912 + $0x2] sm:$0xff]
        %v3688 = vld [vmem:[%s2912 + $0xa] sm:$0xff]
        %v3689 = vld [vmem:[%s2912 + $0x1a] sm:$0xff]
        %v3690 = vld [vmem:[%s2912 + $0x22] sm:$0xff]
        %v3691 = vld [vmem:[%s2912 + $0x32] sm:$0xff]
        %v3692 = vld [vmem:[%s2912 + $0x3a] sm:$0xff]
        %v3693 = vld [vmem:[%s2912 + $0x4a] sm:$0xff]
        %v3694 = vld [vmem:[%s2912 + $0x52] sm:$0xff]
        %v3695 = vld [vmem:[%s2912 + $0x62] sm:$0xff]
        %v3696 = vld [vmem:[%s2912 + $0x6a] sm:$0xff]
        %v3697 = vld [vmem:[%s2912 + $0x7a] sm:$0xff]
        %v3698 = vld [vmem:[%s2912 + $0x82] sm:$0xff]
        %v3699 = vld [vmem:[%s2912 + $0x92] sm:$0xff]
        %v3700 = vld [vmem:[%s2912 + $0x9a] sm:$0xff]
        %v3701 = vld [vmem:[%s2912 + $0xaa] sm:$0xff]
        %v3702 = vld [vmem:[%s2912 + $0xb2] sm:$0xff]
        %v3703 = vld [vmem:[%s2912 + $0xc2] sm:$0xff]
        %v3704 = vld [vmem:[%s2912 + $0xca] sm:$0xff]
        %v3705 = vld [vmem:[%s2912 + $0xda] sm:$0xff]
        %v3706 = vld [vmem:[%s2912 + $0xe2] sm:$0xff]
        %v3707 = vld [vmem:[%s2912 + $0xf2] sm:$0xff]
        %v3708 = vld [vmem:[%s2912 + $0xfa] sm:$0xff]
        %v3709 = vld [vmem:[%s2912 + $0x10a] sm:$0xff]
        %v3710 = vld [vmem:[%s2912 + $0x112] sm:$0xff]
        %v3711 = vld [vmem:[%s2912 + $0x122] sm:$0xff]
        %v3712 = vld [vmem:[%s2912 + $0x12a] sm:$0xff]
        %v3713 = vld [vmem:[%s2912 + $0x13a] sm:$0xff]
        %v3714 = vld [vmem:[%s2912 + $0x142] sm:$0xff]
        %v3715 = vld [vmem:[%s2912 + $0x152] sm:$0xff]
        %v3716 = vld [vmem:[%s2912 + $0x15a] sm:$0xff]
        %v3717 = vld [vmem:[%s2912 + $0x16a] sm:$0xff]
        %v3718 = vld [vmem:[%s2912 + $0x172] sm:$0xff]
        %s3719 = scalar_lea.vmem [#allocation6], 64
        %v3720 = vld [vmem:[%s3719] sm:$0xff]
        %v3722 = vsel %vm436, %v3687, 0
        %v3725 = vsel %vm436, %v3688, 0
        %v3728 = vsel %vm436, %v3689, 0
        %v3731 = vsel %vm436, %v3690, 0
        %v3734 = vsel %vm436, %v3691, 0
        %v3737 = vsel %vm436, %v3692, 0
        %v3740 = vsel %vm436, %v3693, 0
        %v3743 = vsel %vm436, %v3694, 0
        %v3746 = vsel %vm436, %v3695, 0
        %v3749 = vsel %vm436, %v3696, 0
        %v3752 = vsel %vm436, %v3697, 0
        %v3755 = vsel %vm436, %v3698, 0
        %v3758 = vsel %vm436, %v3699, 0
        %v3761 = vsel %vm436, %v3700, 0
        %v3764 = vsel %vm436, %v3701, 0
        %v3767 = vsel %vm436, %v3702, 0
        %v3770 = vsel %vm436, %v3703, 0
        %v3773 = vsel %vm436, %v3704, 0
        %v3776 = vsel %vm436, %v3705, 0
        %v3779 = vsel %vm436, %v3706, 0
        %v3782 = vsel %vm436, %v3707, 0
        %v3785 = vsel %vm436, %v3708, 0
        %v3788 = vsel %vm436, %v3709, 0
        %v3791 = vsel %vm436, %v3710, 0
        %v3794 = vsel %vm436, %v3711, 0
        %v3797 = vsel %vm436, %v3712, 0
        %v3800 = vsel %vm436, %v3713, 0
        %v3803 = vsel %vm436, %v3714, 0
        %v3806 = vsel %vm436, %v3715, 0
        %v3809 = vsel %vm436, %v3716, 0
        %v3812 = vsel %vm436, %v3717, 0
        %v3815 = vsel %vm436, %v3718, 0
        %3817 = vmatprep.subr.mxu0 0.0
        %3818 = vmatpush1.msra.mxu0 %v3720
        %3819 = vmatprep.subr.mxu0 0.0
        %3820 = vmatpush1.msra.mxu0 0.0
        %3821 = vmatprep.subr.mxu0 0.0
        %3822 = vmatpush1.msra.mxu0 0.0
        %3823 = vmatprep.subr.mxu0 0.0
        %3824 = vmatpush1.msra.mxu0 0.0
        %3825 = vmatprep.subr.mxu0 0.0
        %3826 = vmatpush1.msra.mxu0 0.0
        %3827 = vmatprep.subr.mxu0 0.0
        %3828 = vmatpush1.msra.mxu0 0.0
        %3829 = vmatprep.subr.mxu0 0.0
        %3830 = vmatpush1.msra.mxu0 0.0
        %3831 = vmatprep.subr.mxu0 0.0
        %3832 = vmatpush1.msra.mxu0 0.0
        %3833 = vmatprep.subr.mxu0 0.0
        %3834 = vmatpush1.msra.mxu0 0.0
        %3835 = vmatprep.subr.mxu0 0.0
        %3836 = vmatpush1.msra.mxu0 0.0
        %3837 = vmatprep.subr.mxu0 0.0
        %3838 = vmatpush1.msra.mxu0 0.0
        %3839 = vmatprep.subr.mxu0 0.0
        %3840 = vmatpush1.msra.mxu0 0.0
        %3841 = vmatprep.subr.mxu0 0.0
        %3842 = vmatpush1.msra.mxu0 0.0
        %3843 = vmatprep.subr.mxu0 0.0
        %3844 = vmatpush1.msra.mxu0 0.0
        %3845 = vmatprep.subr.mxu0 0.0
        %3846 = vmatpush1.msra.mxu0 0.0
        %3847 = vmatprep.subr.mxu0 0.0
        %3848 = vmatpush1.msra.mxu0 0.0
        %3849 = vmatprep.subr.mxu0 0.0
        %3850 = vmatpush1.msra.mxu0 0.0
        %3851 = vmatprep.subr.mxu0 0.0
        %3852 = vmatpush1.msra.mxu0 0.0
        %3853 = vmatprep.subr.mxu0 0.0
        %3854 = vmatpush1.msra.mxu0 0.0
        %3855 = vmatprep.subr.mxu0 0.0
        %3856 = vmatpush1.msra.mxu0 0.0
        %3857 = vmatprep.subr.mxu0 0.0
        %3858 = vmatpush1.msra.mxu0 0.0
        %3859 = vmatprep.subr.mxu0 0.0
        %3860 = vmatpush1.msra.mxu0 0.0
        %3861 = vmatprep.subr.mxu0 0.0
        %3862 = vmatpush1.msra.mxu0 0.0
        %3863 = vmatprep.subr.mxu0 0.0
        %3864 = vmatpush1.msra.mxu0 0.0
        %3865 = vmatprep.subr.mxu0 0.0
        %3866 = vmatpush1.msra.mxu0 0.0
        %3867 = vmatprep.subr.mxu0 0.0
        %3868 = vmatpush1.msra.mxu0 0.0
        %3869 = vmatprep.subr.mxu0 0.0
        %3870 = vmatpush1.msra.mxu0 0.0
        %3871 = vmatprep.subr.mxu0 0.0
        %3872 = vmatpush1.msra.mxu0 0.0
        %3873 = vmatprep.subr.mxu0 0.0
        %3874 = vmatpush1.msra.mxu0 0.0
        %3875 = vmatprep.subr.mxu0 0.0
        %3876 = vmatpush1.msra.mxu0 0.0
        %3877 = vmatprep.subr.mxu0 0.0
        %3878 = vmatpush1.msra.mxu0 0.0
        %3879 = vmatprep.subr.mxu0 0.0
        %3880 = vmatpush1.msra.mxu0 0.0
        %3881 = vmatprep.mubr.f32.mxu0 0.0
        %3882 = vmatmul.mubr.f32.gmra.mrb[0].mxu0 %v3722
        %v3883 = vpop.f32.mrb[0].mxu0
        %v3884 = vadd.f32 0.0, %v3883
        %v3885 = vpop.f32.mrb[0].mxu0
        %3886 = vmatprep.mubr.f32.mxu0 0.0
        %3887 = vmatmul.mubr.f32.gmra.mrb[0].mxu0 %v3725
        %v3888 = vpop.f32.mrb[0].mxu0
        %v3889 = vadd.f32 0.0, %v3888
        %v3890 = vpop.f32.mrb[0].mxu0
        %3891 = vmatprep.mubr.f32.mxu0 0.0
        %3892 = vmatmul.mubr.f32.gmra.mrb[0].mxu0 %v3728
        %v3893 = vpop.f32.mrb[0].mxu0
        %v3894 = vadd.f32 0.0, %v3893
        %v3895 = vpop.f32.mrb[0].mxu0
        %3896 = vmatprep.mubr.f32.mxu0 0.0
        %3897 = vmatmul.mubr.f32.gmra.mrb[0].mxu0 %v3731
        %v3898 = vpop.f32.mrb[0].mxu0
        %v3899 = vadd.f32 0.0, %v3898
        %v3900 = vpop.f32.mrb[0].mxu0
        %3901 = vmatprep.mubr.f32.mxu0 0.0
        %3902 = vmatmul.mubr.f32.gmra.mrb[0].mxu0 %v3734
        %v3903 = vpop.f32.mrb[0].mxu0
        %v3904 = vadd.f32 0.0, %v3903
        %v3905 = vpop.f32.mrb[0].mxu0
        %3906 = vmatprep.mubr.f32.mxu0 0.0
        %3907 = vmatmul.mubr.f32.gmra.mrb[0].mxu0 %v3737
        %v3908 = vpop.f32.mrb[0].mxu0
        %v3909 = vadd.f32 0.0, %v3908
        %v3910 = vpop.f32.mrb[0].mxu0
        %3911 = vmatprep.mubr.f32.mxu0 0.0
        %3912 = vmatmul.mubr.f32.gmra.mrb[0].mxu0 %v3740
        %v3913 = vpop.f32.mrb[0].mxu0
        %v3914 = vadd.f32 0.0, %v3913
        %v3915 = vpop.f32.mrb[0].mxu0
        %3916 = vmatprep.mubr.f32.mxu0 0.0
        %3917 = vmatmul.mubr.f32.gmra.mrb[0].mxu0 %v3743
        %v3918 = vpop.f32.mrb[0].mxu0
        %v3919 = vadd.f32 0.0, %v3918
        %v3920 = vpop.f32.mrb[0].mxu0
        %3921 = vmatprep.mubr.f32.mxu0 0.0
        %3922 = vmatmul.mubr.f32.gmra.mrb[0].mxu0 %v3746
        %v3923 = vpop.f32.mrb[0].mxu0
        %v3924 = vadd.f32 0.0, %v3923
        %v3925 = vpop.f32.mrb[0].mxu0
        %3926 = vmatprep.mubr.f32.mxu0 0.0
        %3927 = vmatmul.mubr.f32.gmra.mrb[0].mxu0 %v3749
        %v3928 = vpop.f32.mrb[0].mxu0
        %v3929 = vadd.f32 0.0, %v3928
        %v3930 = vpop.f32.mrb[0].mxu0
        %3931 = vmatprep.mubr.f32.mxu0 0.0
        %3932 = vmatmul.mubr.f32.gmra.mrb[0].mxu0 %v3752
        %v3933 = vpop.f32.mrb[0].mxu0
        %v3934 = vadd.f32 0.0, %v3933
        %v3935 = vpop.f32.mrb[0].mxu0
        %3936 = vmatprep.mubr.f32.mxu0 0.0
        %3937 = vmatmul.mubr.f32.gmra.mrb[0].mxu0 %v3755
        %v3938 = vpop.f32.mrb[0].mxu0
        %v3939 = vadd.f32 0.0, %v3938
        %v3940 = vpop.f32.mrb[0].mxu0
        %3941 = vmatprep.mubr.f32.mxu0 0.0
        %3942 = vmatmul.mubr.f32.gmra.mrb[0].mxu0 %v3758
        %v3943 = vpop.f32.mrb[0].mxu0
        %v3944 = vadd.f32 0.0, %v3943
        %v3945 = vpop.f32.mrb[0].mxu0
        %3946 = vmatprep.mubr.f32.mxu0 0.0
        %3947 = vmatmul.mubr.f32.gmra.mrb[0].mxu0 %v3761
        %v3948 = vpop.f32.mrb[0].mxu0
        %v3949 = vadd.f32 0.0, %v3948
        %v3950 = vpop.f32.mrb[0].mxu0
        %3951 = vmatprep.mubr.f32.mxu0 0.0
        %3952 = vmatmul.mubr.f32.gmra.mrb[0].mxu0 %v3764
        %v3953 = vpop.f32.mrb[0].mxu0
        %v3954 = vadd.f32 0.0, %v3953
        %v3955 = vpop.f32.mrb[0].mxu0
        %3956 = vmatprep.mubr.f32.mxu0 0.0
        %3957 = vmatmul.mubr.f32.gmra.mrb[0].mxu0 %v3767
        %v3958 = vpop.f32.mrb[0].mxu0
        %v3959 = vadd.f32 0.0, %v3958
        %v3960 = vpop.f32.mrb[0].mxu0
        %3961 = vmatprep.mubr.f32.mxu0 0.0
        %3962 = vmatmul.mubr.f32.gmra.mrb[0].mxu0 %v3770
        %v3963 = vpop.f32.mrb[0].mxu0
        %v3964 = vadd.f32 0.0, %v3963
        %v3965 = vpop.f32.mrb[0].mxu0
        %3966 = vmatprep.mubr.f32.mxu0 0.0
        %3967 = vmatmul.mubr.f32.gmra.mrb[0].mxu0 %v3773
        %v3968 = vpop.f32.mrb[0].mxu0
        %v3969 = vadd.f32 0.0, %v3968
        %v3970 = vpop.f32.mrb[0].mxu0
        %3971 = vmatprep.mubr.f32.mxu0 0.0
        %3972 = vmatmul.mubr.f32.gmra.mrb[0].mxu0 %v3776
        %v3973 = vpop.f32.mrb[0].mxu0
        %v3974 = vadd.f32 0.0, %v3973
        %v3975 = vpop.f32.mrb[0].mxu0
        %3976 = vmatprep.mubr.f32.mxu0 0.0
        %3977 = vmatmul.mubr.f32.gmra.mrb[0].mxu0 %v3779
        %v3978 = vpop.f32.mrb[0].mxu0
        %v3979 = vadd.f32 0.0, %v3978
        %v3980 = vpop.f32.mrb[0].mxu0
        %3981 = vmatprep.mubr.f32.mxu0 0.0
        %3982 = vmatmul.mubr.f32.gmra.mrb[0].mxu0 %v3782
        %v3983 = vpop.f32.mrb[0].mxu0
        %v3984 = vadd.f32 0.0, %v3983
        %v3985 = vpop.f32.mrb[0].mxu0
        %3986 = vmatprep.mubr.f32.mxu0 0.0
        %3987 = vmatmul.mubr.f32.gmra.mrb[0].mxu0 %v3785
        %v3988 = vpop.f32.mrb[0].mxu0
        %v3989 = vadd.f32 0.0, %v3988
        %v3990 = vpop.f32.mrb[0].mxu0
        %3991 = vmatprep.mubr.f32.mxu0 0.0
        %3992 = vmatmul.mubr.f32.gmra.mrb[0].mxu0 %v3788
        %v3993 = vpop.f32.mrb[0].mxu0
        %v3994 = vadd.f32 0.0, %v3993
        %v3995 = vpop.f32.mrb[0].mxu0
        %3996 = vmatprep.mubr.f32.mxu0 0.0
        %3997 = vmatmul.mubr.f32.gmra.mrb[0].mxu0 %v3791
        %v3998 = vpop.f32.mrb[0].mxu0
        %v3999 = vadd.f32 0.0, %v3998
        %v4000 = vpop.f32.mrb[0].mxu0
        %4001 = vmatprep.mubr.f32.mxu0 0.0
        %4002 = vmatmul.mubr.f32.gmra.mrb[0].mxu0 %v3794
        %v4003 = vpop.f32.mrb[0].mxu0
        %v4004 = vadd.f32 0.0, %v4003
        %v4005 = vpop.f32.mrb[0].mxu0
        %4006 = vmatprep.mubr.f32.mxu0 0.0
        %4007 = vmatmul.mubr.f32.gmra.mrb[0].mxu0 %v3797
        %v4008 = vpop.f32.mrb[0].mxu0
        %v4009 = vadd.f32 0.0, %v4008
        %v4010 = vpop.f32.mrb[0].mxu0
        %4011 = vmatprep.mubr.f32.mxu0 0.0
        %4012 = vmatmul.mubr.f32.gmra.mrb[0].mxu0 %v3800
        %v4013 = vpop.f32.mrb[0].mxu0
        %v4014 = vadd.f32 0.0, %v4013
        %v4015 = vpop.f32.mrb[0].mxu0
        %4016 = vmatprep.mubr.f32.mxu0 0.0
        %4017 = vmatmul.mubr.f32.gmra.mrb[0].mxu0 %v3803
        %v4018 = vpop.f32.mrb[0].mxu0
        %v4019 = vadd.f32 0.0, %v4018
        %v4020 = vpop.f32.mrb[0].mxu0
        %4021 = vmatprep.mubr.f32.mxu0 0.0
        %4022 = vmatmul.mubr.f32.gmra.mrb[0].mxu0 %v3806
        %v4023 = vpop.f32.mrb[0].mxu0
        %v4024 = vadd.f32 0.0, %v4023
        %v4025 = vpop.f32.mrb[0].mxu0
        %4026 = vmatprep.mubr.f32.mxu0 0.0
        %4027 = vmatmul.mubr.f32.gmra.mrb[0].mxu0 %v3809
        %v4028 = vpop.f32.mrb[0].mxu0
        %v4029 = vadd.f32 0.0, %v4028
        %v4030 = vpop.f32.mrb[0].mxu0
        %4031 = vmatprep.mubr.f32.mxu0 0.0
        %4032 = vmatmul.mubr.f32.gmra.mrb[0].mxu0 %v3812
        %v4033 = vpop.f32.mrb[0].mxu0
        %v4034 = vadd.f32 0.0, %v4033
        %v4035 = vpop.f32.mrb[0].mxu0
        %4036 = vmatprep.mubr.f32.mxu0 0.0
        %4037 = vmatmul.mubr.f32.gmra.mrb[0].mxu0 %v3815
        %v4038 = vpop.f32.mrb[0].mxu0
        %v4039 = vadd.f32 0.0, %v4038
        %v4040 = vpop.f32.mrb[0].mxu0
        %4041 = vdwg.mxu0
        %v4042 = vadd.f32 %v3655, %v3884
        %v4043 = vadd.f32 %v3656, %v3889
        %v4044 = vadd.f32 %v3657, %v3894
        %v4045 = vadd.f32 %v3658, %v3899
        %v4046 = vadd.f32 %v3659, %v3904
        %v4047 = vadd.f32 %v3660, %v3909
        %v4048 = vadd.f32 %v3661, %v3914
        %v4049 = vadd.f32 %v3662, %v3919
        %v4050 = vadd.f32 %v3663, %v3924
        %v4051 = vadd.f32 %v3664, %v3929
        %v4052 = vadd.f32 %v3665, %v3934
        %v4053 = vadd.f32 %v3666, %v3939
        %v4054 = vadd.f32 %v3667, %v3944
        %v4055 = vadd.f32 %v3668, %v3949
        %v4056 = vadd.f32 %v3669, %v3954
        %v4057 = vadd.f32 %v3670, %v3959
        %v4058 = vadd.f32 %v3671, %v3964
        %v4059 = vadd.f32 %v3672, %v3969
        %v4060 = vadd.f32 %v3673, %v3974
        %v4061 = vadd.f32 %v3674, %v3979
        %v4062 = vadd.f32 %v3675, %v3984
        %v4063 = vadd.f32 %v3676, %v3989
        %v4064 = vadd.f32 %v3677, %v3994
        %v4065 = vadd.f32 %v3678, %v3999
        %v4066 = vadd.f32 %v3679, %v4004
        %v4067 = vadd.f32 %v3680, %v4009
        %v4068 = vadd.f32 %v3681, %v4014
        %v4069 = vadd.f32 %v3682, %v4019
        %v4070 = vadd.f32 %v3683, %v4024
        %v4071 = vadd.f32 %v3684, %v4029
        %v4072 = vadd.f32 %v3685, %v4034
        %v4073 = vadd.f32 %v3686, %v4039
        %4074 = vst.msk [vmem:[%s286] sm:$0xff] %vm436, %v4042
        %4075 = vst.msk [vmem:[%s286 + $0x8] sm:$0xff] %vm436, %v4043
        %4076 = vst.msk [vmem:[%s286 + $0x10] sm:$0xff] %vm436, %v4044
        %4077 = vst.msk [vmem:[%s286 + $0x18] sm:$0xff] %vm436, %v4045
        %4078 = vst.msk [vmem:[%s286 + $0x20] sm:$0xff] %vm436, %v4046
        %4079 = vst.msk [vmem:[%s286 + $0x28] sm:$0xff] %vm436, %v4047
        %4080 = vst.msk [vmem:[%s286 + $0x30] sm:$0xff] %vm436, %v4048
        %4081 = vst.msk [vmem:[%s286 + $0x38] sm:$0xff] %vm436, %v4049
        %4082 = vst.msk [vmem:[%s286 + $0x40] sm:$0xff] %vm436, %v4050
        %4083 = vst.msk [vmem:[%s286 + $0x48] sm:$0xff] %vm436, %v4051
        %4084 = vst.msk [vmem:[%s286 + $0x50] sm:$0xff] %vm436, %v4052
        %4085 = vst.msk [vmem:[%s286 + $0x58] sm:$0xff] %vm436, %v4053
        %4086 = vst.msk [vmem:[%s286 + $0x60] sm:$0xff] %vm436, %v4054
        %4087 = vst.msk [vmem:[%s286 + $0x68] sm:$0xff] %vm436, %v4055
        %4088 = vst.msk [vmem:[%s286 + $0x70] sm:$0xff] %vm436, %v4056
        %4089 = vst.msk [vmem:[%s286 + $0x78] sm:$0xff] %vm436, %v4057
        %4090 = vst.msk [vmem:[%s286 + $0x80] sm:$0xff] %vm436, %v4058
        %4091 = vst.msk [vmem:[%s286 + $0x88] sm:$0xff] %vm436, %v4059
        %4092 = vst.msk [vmem:[%s286 + $0x90] sm:$0xff] %vm436, %v4060
        %4093 = vst.msk [vmem:[%s286 + $0x98] sm:$0xff] %vm436, %v4061
        %4094 = vst.msk [vmem:[%s286 + $0xa0] sm:$0xff] %vm436, %v4062
        %4095 = vst.msk [vmem:[%s286 + $0xa8] sm:$0xff] %vm436, %v4063
        %4096 = vst.msk [vmem:[%s286 + $0xb0] sm:$0xff] %vm436, %v4064
        %4097 = vst.msk [vmem:[%s286 + $0xb8] sm:$0xff] %vm436, %v4065
        %4098 = vst.msk [vmem:[%s286 + $0xc0] sm:$0xff] %vm436, %v4066
        %4099 = vst.msk [vmem:[%s286 + $0xc8] sm:$0xff] %vm436, %v4067
        %4100 = vst.msk [vmem:[%s286 + $0xd0] sm:$0xff] %vm436, %v4068
        %4101 = vst.msk [vmem:[%s286 + $0xd8] sm:$0xff] %vm436, %v4069
        %4102 = vst.msk [vmem:[%s286 + $0xe0] sm:$0xff] %vm436, %v4070
        %4103 = vst.msk [vmem:[%s286 + $0xe8] sm:$0xff] %vm436, %v4071
        %4104 = vst.msk [vmem:[%s286 + $0xf0] sm:$0xff] %vm436, %v4072
        %4105 = vst.msk [vmem:[%s286 + $0xf8] sm:$0xff] %vm436, %v4073
        %v4106 = vsel %vm436, %v4042, 0.0
        %v4107 = vsel %vm436, %v4043, 0.0
        %v4108 = vadd.f32 %v4106, %v4107
        %v4109 = vsel %vm436, %v4044, 0.0
        %v4110 = vadd.f32 %v4108, %v4109
        %v4111 = vsel %vm436, %v4045, 0.0
        %v4112 = vadd.f32 %v4110, %v4111
        %v4113 = vsel %vm436, %v4046, 0.0
        %v4114 = vadd.f32 %v4112, %v4113
        %v4115 = vsel %vm436, %v4047, 0.0
        %v4116 = vadd.f32 %v4114, %v4115
        %v4117 = vsel %vm436, %v4048, 0.0
        %v4118 = vadd.f32 %v4116, %v4117
        %v4119 = vsel %vm436, %v4049, 0.0
        %v4120 = vadd.f32 %v4118, %v4119
        %v4121 = vsel %vm436, %v4050, 0.0
        %v4122 = vadd.f32 %v4120, %v4121
        %v4123 = vsel %vm436, %v4051, 0.0
        %v4124 = vadd.f32 %v4122, %v4123
        %v4125 = vsel %vm436, %v4052, 0.0
        %v4126 = vadd.f32 %v4124, %v4125
        %v4127 = vsel %vm436, %v4053, 0.0
        %v4128 = vadd.f32 %v4126, %v4127
        %v4129 = vsel %vm436, %v4054, 0.0
        %v4130 = vadd.f32 %v4128, %v4129
        %v4131 = vsel %vm436, %v4055, 0.0
        %v4132 = vadd.f32 %v4130, %v4131
        %v4133 = vsel %vm436, %v4056, 0.0
        %v4134 = vadd.f32 %v4132, %v4133
        %v4135 = vsel %vm436, %v4057, 0.0
        %v4136 = vadd.f32 %v4134, %v4135
        %v4137 = vsel %vm436, %v4058, 0.0
        %v4138 = vadd.f32 %v4136, %v4137
        %v4139 = vsel %vm436, %v4059, 0.0
        %v4140 = vadd.f32 %v4138, %v4139
        %v4141 = vsel %vm436, %v4060, 0.0
        %v4142 = vadd.f32 %v4140, %v4141
        %v4143 = vsel %vm436, %v4061, 0.0
        %v4144 = vadd.f32 %v4142, %v4143
        %v4145 = vsel %vm436, %v4062, 0.0
        %v4146 = vadd.f32 %v4144, %v4145
        %v4147 = vsel %vm436, %v4063, 0.0
        %v4148 = vadd.f32 %v4146, %v4147
        %v4149 = vsel %vm436, %v4064, 0.0
        %v4150 = vadd.f32 %v4148, %v4149
        %v4151 = vsel %vm436, %v4065, 0.0
        %v4152 = vadd.f32 %v4150, %v4151
        %v4153 = vsel %vm436, %v4066, 0.0
        %v4154 = vadd.f32 %v4152, %v4153
        %v4155 = vsel %vm436, %v4067, 0.0
        %v4156 = vadd.f32 %v4154, %v4155
        %v4157 = vsel %vm436, %v4068, 0.0
        %v4158 = vadd.f32 %v4156, %v4157
        %v4159 = vsel %vm436, %v4069, 0.0
        %v4160 = vadd.f32 %v4158, %v4159
        %v4161 = vsel %vm436, %v4070, 0.0
        %v4162 = vadd.f32 %v4160, %v4161
        %v4163 = vsel %vm436, %v4071, 0.0
        %v4164 = vadd.f32 %v4162, %v4163
        %v4165 = vsel %vm436, %v4072, 0.0
        %v4166 = vadd.f32 %v4164, %v4165
        %v4167 = vsel %vm436, %v4073, 0.0
        %v4168 = vadd.f32 %v4166, %v4167
        %v4169 = vrot.slane %v4168, 4
        %v4170 = vadd.f32 %v4168, %v4169
        %v4171 = vrot.slane %v4170, 2
        %v4172 = vadd.f32 %v4170, %v4171
        %v4173 = vrot.slane %v4172, 1
        %v4174 = vadd.f32 %v4172, %v4173
        %v4175 = vmul.f32 %v4042, %v4042
        %v4176 = vmul.f32 %v4043, %v4043
        %v4177 = vmul.f32 %v4044, %v4044
        %v4178 = vmul.f32 %v4045, %v4045
        %v4179 = vmul.f32 %v4046, %v4046
        %v4180 = vmul.f32 %v4047, %v4047
        %v4181 = vmul.f32 %v4048, %v4048
        %v4182 = vmul.f32 %v4049, %v4049
        %v4183 = vmul.f32 %v4050, %v4050
        %v4184 = vmul.f32 %v4051, %v4051
        %v4185 = vmul.f32 %v4052, %v4052
        %v4186 = vmul.f32 %v4053, %v4053
        %v4187 = vmul.f32 %v4054, %v4054
        %v4188 = vmul.f32 %v4055, %v4055
        %v4189 = vmul.f32 %v4056, %v4056
        %v4190 = vmul.f32 %v4057, %v4057
        %v4191 = vmul.f32 %v4058, %v4058
        %v4192 = vmul.f32 %v4059, %v4059
        %v4193 = vmul.f32 %v4060, %v4060
        %v4194 = vmul.f32 %v4061, %v4061
        %v4195 = vmul.f32 %v4062, %v4062
        %v4196 = vmul.f32 %v4063, %v4063
        %v4197 = vmul.f32 %v4064, %v4064
        %v4198 = vmul.f32 %v4065, %v4065
        %v4199 = vmul.f32 %v4066, %v4066
        %v4200 = vmul.f32 %v4067, %v4067
        %v4201 = vmul.f32 %v4068, %v4068
        %v4202 = vmul.f32 %v4069, %v4069
        %v4203 = vmul.f32 %v4070, %v4070
        %v4204 = vmul.f32 %v4071, %v4071
        %v4205 = vmul.f32 %v4072, %v4072
        %v4206 = vmul.f32 %v4073, %v4073
        %v4207 = vsel %vm436, %v4175, 0.0
        %v4208 = vsel %vm436, %v4176, 0.0
        %v4209 = vadd.f32 %v4207, %v4208
        %v4210 = vsel %vm436, %v4177, 0.0
        %v4211 = vadd.f32 %v4209, %v4210
        %v4212 = vsel %vm436, %v4178, 0.0
        %v4213 = vadd.f32 %v4211, %v4212
        %v4214 = vsel %vm436, %v4179, 0.0
        %v4215 = vadd.f32 %v4213, %v4214
        %v4216 = vsel %vm436, %v4180, 0.0
        %v4217 = vadd.f32 %v4215, %v4216
        %v4218 = vsel %vm436, %v4181, 0.0
        %v4219 = vadd.f32 %v4217, %v4218
        %v4220 = vsel %vm436, %v4182, 0.0
        %v4221 = vadd.f32 %v4219, %v4220
        %v4222 = vsel %vm436, %v4183, 0.0
        %v4223 = vadd.f32 %v4221, %v4222
        %v4224 = vsel %vm436, %v4184, 0.0
        %v4225 = vadd.f32 %v4223, %v4224
        %v4226 = vsel %vm436, %v4185, 0.0
        %v4227 = vadd.f32 %v4225, %v4226
        %v4228 = vsel %vm436, %v4186, 0.0
        %v4229 = vadd.f32 %v4227, %v4228
        %v4230 = vsel %vm436, %v4187, 0.0
        %v4231 = vadd.f32 %v4229, %v4230
        %v4232 = vsel %vm436, %v4188, 0.0
        %v4233 = vadd.f32 %v4231, %v4232
        %v4234 = vsel %vm436, %v4189, 0.0
        %v4235 = vadd.f32 %v4233, %v4234
        %v4236 = vsel %vm436, %v4190, 0.0
        %v4237 = vadd.f32 %v4235, %v4236
        %v4238 = vsel %vm436, %v4191, 0.0
        %v4239 = vadd.f32 %v4237, %v4238
        %v4240 = vsel %vm436, %v4192, 0.0
        %v4241 = vadd.f32 %v4239, %v4240
        %v4242 = vsel %vm436, %v4193, 0.0
        %v4243 = vadd.f32 %v4241, %v4242
        %v4244 = vsel %vm436, %v4194, 0.0
        %v4245 = vadd.f32 %v4243, %v4244
        %v4246 = vsel %vm436, %v4195, 0.0
        %v4247 = vadd.f32 %v4245, %v4246
        %v4248 = vsel %vm436, %v4196, 0.0
        %v4249 = vadd.f32 %v4247, %v4248
        %v4250 = vsel %vm436, %v4197, 0.0
        %v4251 = vadd.f32 %v4249, %v4250
        %v4252 = vsel %vm436, %v4198, 0.0
        %v4253 = vadd.f32 %v4251, %v4252
        %v4254 = vsel %vm436, %v4199, 0.0
        %v4255 = vadd.f32 %v4253, %v4254
        %v4256 = vsel %vm436, %v4200, 0.0
        %v4257 = vadd.f32 %v4255, %v4256
        %v4258 = vsel %vm436, %v4201, 0.0
        %v4259 = vadd.f32 %v4257, %v4258
        %v4260 = vsel %vm436, %v4202, 0.0
        %v4261 = vadd.f32 %v4259, %v4260
        %v4262 = vsel %vm436, %v4203, 0.0
        %v4263 = vadd.f32 %v4261, %v4262
        %v4264 = vsel %vm436, %v4204, 0.0
        %v4265 = vadd.f32 %v4263, %v4264
        %v4266 = vsel %vm436, %v4205, 0.0
        %v4267 = vadd.f32 %v4265, %v4266
        %v4268 = vsel %vm436, %v4206, 0.0
        %v4269 = vadd.f32 %v4267, %v4268
        %v4270 = vrot.slane %v4269, 4
        %v4271 = vadd.f32 %v4269, %v4270
        %v4272 = vrot.slane %v4271, 2
        %v4273 = vadd.f32 %v4271, %v4272
        %v4274 = vrot.slane %v4273, 1
        %v4275 = vadd.f32 %v4273, %v4274
        %v4276 = vsel %vm477, %v4174, %v4275
        %4277 = vst.msk [vmem:[%s293] sm:$0x3] %vm439, %v4276
        %s4278 = sand.u32 %s125, 1
        %s4279 = scalar_lea.sflag [#allocation5], %s4278
        %s4280 = sand.u32 %s125, 1
        %s4281 = smul.addr %s4280, 256
        %s4282 = scalar_lea.vmem [#allocation11], %s4281
        %s4283 = sand.u32 %s151, 1
        %s4284 = scalar_lea.sflag [#allocation13], %s4283
        %s4285 = sand.u32 %s151, 1
        %s4286 = smul.addr %s4285, 2
        %s4287 = scalar_lea.vmem [#allocation12], %s4286
        // Predicated region
        $region53: #{residual_block.5} parent=35 // pred_check
          %p4288 = pneg %p135
        $region54: #{residual_block.5} parent=35 // pred_check_branch
          %4290 = sbr.rel (%p4288) target = $region56
        $region55: #{residual_block.5} parent=35 // pred_region
          %s4292 = ssub.s32 4096, 4096
          %4293 = vsyncadd %s4279, %s4292
          %s4294 = smul.addr %s28, 32
          %s4295 = smul.addr %s4294, 128
          %s4296 = scalar_lea.hbm %s4, %s4295
          %s4297 = sshll.u32 %s4282, 4
          %s4298 = int_to_ptr.vmem [resolvable:$true] %s4297
          %4303 = dma.vmem_to_hbm [thread:$0]  %s4298, 4096, %s4296, %s4279, 128, 128, 8
        $region56: #{residual_block.5} parent=35 // pred_fallthru
          _
        // Predicated region
        $region57: #{residual_block.5} parent=35 // pred_check
          %p4304 = pneg %p161
        $region58: #{residual_block.5} parent=35 // pred_check_branch
          %4306 = sbr.rel (%p4304) target = $region60
        $region59: #{residual_block.5} parent=35 // pred_region
          %s4308 = ssub.s32 32, 32
          %4309 = vsyncadd %s4284, %s4308
          %s4310 = smul.addr %s28, 32
          %s4311 = scalar_lea.hbm %s5, %s4310
          %s4313 = sshll.u32 %s4287, 4
          %s4314 = int_to_ptr.vmem [resolvable:$true] %s4313
          %4316 = dma.vmem_to_hbm [thread:$0]  %s4314, 32, %s4311, %s4284
        $region60: #{residual_block.5} parent=35 // pred_fallthru
          _
      $region36: #{residual_block.5} parent=5 // pred_fallthru
        _
      %p4317 = scmp.le.s32.totalorder 2, %s23
      // Predicated region
      $region61: #{residual_block.5} parent=5 // pred_check
        %p4318 = pneg %p4317
      $region62: #{residual_block.5} parent=5 // pred_check_branch
        %4320 = sbr.rel (%p4318) target = $region64
      $region63: #{residual_block.5} parent=5 // pred_region
        %s4321 = ssub.s32 %s23, 2
        // Predicated region
        $region65: #{residual_block.5} parent=63 // pred_check
          %p4322 = pneg %p141
        $region66: #{residual_block.5} parent=63 // pred_check_branch
          %4324 = sbr.rel (%p4322) target = $region68
        $region67: #{residual_block.5} parent=63 // pred_region
          %s4325 = sand.u32 %s126, 1
          %s4326 = scalar_lea.sflag [#allocation5], %s4325
          %s4327 = sand.u32 %s126, 1
          %s4328 = smul.addr %s4327, 256
          %s4329 = scalar_lea.vmem [#allocation11], %s4328
          %4330 = dma.done %s4326, 4096
        $region68: #{residual_block.5} parent=63 // pred_fallthru
          _
        // Predicated region
        $region69: #{residual_block.5} parent=63 // pred_check
          %p4331 = pneg %p167
        $region70: #{residual_block.5} parent=63 // pred_check_branch
          %4333 = sbr.rel (%p4331) target = $region72
        $region71: #{residual_block.5} parent=63 // pred_region
          %s4334 = sand.u32 %s152, 1
          %s4335 = scalar_lea.sflag [#allocation13], %s4334
          %s4336 = sand.u32 %s152, 1
          %s4337 = smul.addr %s4336, 2
          %s4338 = scalar_lea.vmem [#allocation12], %s4337
          %4339 = dma.done %s4335, 32
        $region72: #{residual_block.5} parent=63 // pred_fallthru
          _
      $region64: #{residual_block.5} parent=5 // pred_fallthru
        _
    $region6: #{residual_block.5} parent=1 // loop_footer
      %s27 = sadd.s32 1, %s23
    $region7: #{residual_block.5} parent=1 // loop_footer_branch
      %22 = sbr.rel target = $region3
    $region8: #{residual_block.5} parent=1 // loop_exit
      _
    %4340 = vsyncpa [#allocation4], 1
    %s4341 = scalar_lea.sflag [#allocation4], 1
    %4342 = vsyncpa %s4341, 1
    %4343 = vsyncpa [#allocation7], 1
    %4344 = vsyncpa [#allocation10], 1
    %4345 = vsyncpa [#allocation5], 1
    %s4346 = scalar_lea.sflag [#allocation5], 1
    %4347 = vsyncpa %s4346, 1
    %4348 = vsyncpa [#allocation13], 1
    %s4349 = scalar_lea.sflag [#allocation13], 1
    %4350 = vsyncpa %s4349, 1

</llo_original>
